<compile_context>
chip_gen: v6e
topology: v6e:2x2x1
jax: 0.10.0
libtpu: 0.0.40
codegen_flags: <defaults>
</compile_context>

<pallas_src>
import functools
import math

import jax
import jax.numpy as jnp
from jax.experimental import pallas as pl
from jax.experimental.pallas import tpu as pltpu

EPS = 1e-5       # nn.LayerNorm default
MAX_POS = 50     # position_embedding table size


def _layer_norm(x, gamma, beta):
    mu = jnp.mean(x, axis=-1, keepdims=True)
    var = jnp.mean((x - mu) ** 2, axis=-1, keepdims=True)
    return (x - mu) * jax.lax.rsqrt(var + EPS) * gamma + beta


def fused_forward_kernel(x_ref, *refs, B, S, H, Dh, num_layers):
    """Full forward for one batch tile: num_layers post-norm encoder layers
    + last-token output head.

    refs layout: num_layers * 16 per-layer weight refs
                 (Wq,bq,Wk,bk,Wv,bv,Wo,bo,g1,be1,W1,b1,W2,b2,g2,be2),
                 then out_w, out_b, then the output ref.
    """
    out_ref = refs[-1]
    D = H * Dh
    scale = 1.0 / math.sqrt(Dh)

    def mm(a, w_ref, b_ref):
        # bf16 x bf16 MXU matmul with f32 accumulation; f32 bias add.
        return jnp.dot(a.astype(w_ref.dtype), w_ref[...],
                       preferred_element_type=jnp.float32) + b_ref[...]

    def softmax_last(s):
        s = s - jnp.max(s, axis=-1, keepdims=True)
        p = jnp.exp(s)
        return p * pl.reciprocal(jnp.sum(p, axis=-1, keepdims=True), approx=True)

    x = x_ref[...].reshape(B * S, D)                          # (B*S, D) f32
    for l in range(num_layers):
        (wq, bq, wk, bk, wv, bv, wo, bo,
         g1, be1, w1, b1, w2, b2, g2, be2) = refs[l * 16:(l + 1) * 16]
        last = l == num_layers - 1

        k = mm(x, wk, bk).reshape(B, S, D)                    # (B, S, D)
        v = mm(x, wv, bv).reshape(B, S, D)
        if last:
            # Only the last-token rows matter downstream: Q / Wo / FFN / norms /
            # head operate on B rows; K/V still see every token.
            x_in = x.reshape(B, S, D)[:, S - 1, :]            # (B, D)
            q = (mm(x_in, wq, bq) * scale).reshape(B, 1, D)
            rows = B
        else:
            x_in = x
            q = (mm(x, wq, bq) * scale).reshape(B, S, D)
            rows = B * S

        # Batched (over B) attention per head; lane-dense concat of head outputs
        # feeds straight into the Wo matmul (no per-head masked scratch stores).
        heads = []
        for h in range(H):
            sl = slice(h * Dh, (h + 1) * Dh)
            s = jnp.einsum('bqd,bkd->bqk', q[:, :, sl], k[:, :, sl],
                           preferred_element_type=jnp.float32)
            p = softmax_last(s)
            heads.append(jnp.einsum('bqk,bkd->bqd', p, v[:, :, sl],
                                    preferred_element_type=jnp.float32))
        ctx = jnp.concatenate(heads, axis=-1).reshape(rows, D)

        attn_out = mm(ctx, wo, bo)
        # TODO(synk): dropout layers are identity here (eval/inference semantics).
        h1 = _layer_norm(x_in.reshape(rows, D) + attn_out, g1[...], be1[...])
        f = jnp.maximum(mm(h1, w1, b1), 0.0)                  # ReLU FFN
        x = _layer_norm(h1 + mm(f, w2, b2), g2[...], be2[...])

    out_w, out_b = refs[num_layers * 16], refs[num_layers * 16 + 1]
    out_ref[...] = mm(x, out_w, out_b)                        # (block_b, n_products)


def _pick_block_b(B):
    """Batch tile: multiple of 8 (output-spec sublane rule) that divides B,
    else the whole batch in one grid step."""
    if B <= 8:
        return B
    for cand in (64, 32, 16, 8):
        if B % cand == 0:
            return cand
    return B


def session_transformer_forward(params, session_items, *, d_model, nhead):
    B, S = session_items.shape
    assert S <= MAX_POS, "session length exceeds position-embedding table (50)"
    Dh = d_model // nhead

    # Embedding gathers are glue (plain JAX); everything else is one fused kernel.
    item_embeds = jnp.take(params["prod_emb"], session_items, axis=0)      # (B, S, D)
    pos_embeds = jnp.take(params["pos_emb"], jnp.arange(S), axis=0)[None]  # (1, S, D)
    x = (item_embeds + pos_embeds).astype(jnp.float32)                     # (B, S, D)

    flat = []
    for layer_params in params["layers"]:
        flat.extend(layer_params)
    flat += [params["out_w"], params["out_b"]]
    n_products = params["out_w"].shape[1]

    block_b = _pick_block_b(B)
    grid = (B // block_b,)

    kernel = functools.partial(fused_forward_kernel, B=block_b, S=S, H=nhead,
                               Dh=Dh, num_layers=len(params["layers"]))

    x_spec = pl.BlockSpec((block_b, S, d_model), lambda i: (i, 0, 0))
    # Constant index_map -> weights are DMA'd once and stay resident across the
    # batch grid (no re-fetch per grid step).
    w_specs = [pl.BlockSpec(w.shape, lambda i: (0, 0)) for w in flat]
    out_spec = pl.BlockSpec((block_b, n_products), lambda i: (i, 0))

    return pl.pallas_call(
        kernel,
        out_shape=jax.ShapeDtypeStruct((B, n_products), jnp.float32),
        grid_spec=pltpu.PrefetchScalarGridSpec(
            num_scalar_prefetch=0,
            grid=grid,
            in_specs=[x_spec] + w_specs,
            out_specs=out_spec,
        ),
        compiler_params=pltpu.CompilerParams(
            dimension_semantics=("parallel",)),
    )(x, *flat)


def init_model(key, n_products, d_model, nhead, num_layers, dim_ff, max_pos=MAX_POS):
    def dense(k, shape, dtype=jnp.bfloat16):
        return (0.02 * jax.random.normal(k, shape, dtype=jnp.float32)).astype(dtype)

    def zeros(n):
        return jnp.zeros((1, n), jnp.float32)

    def ones(n):
        return jnp.ones((1, n), jnp.float32)

    ks = iter(jax.random.split(key, 2 + num_layers * 6 + 1))
    params = {
        "prod_emb": dense(next(ks), (n_products, d_model), jnp.float32),
        "pos_emb": dense(next(ks), (max_pos, d_model), jnp.float32),
        "layers": [],
    }
    for _ in range(num_layers):
        layer = (
            dense(next(ks), (d_model, d_model)), zeros(d_model),   # Wq, bq
            dense(next(ks), (d_model, d_model)), zeros(d_model),   # Wk, bk
            dense(next(ks), (d_model, d_model)), zeros(d_model),   # Wv, bv
            dense(next(ks), (d_model, d_model)), zeros(d_model),   # Wo, bo
            ones(d_model), zeros(d_model),                         # LN1 gamma, beta
            dense(next(ks), (d_model, dim_ff)), zeros(dim_ff),     # W1, b1
            dense(next(ks), (dim_ff, d_model)), zeros(d_model),    # W2, b2
            ones(d_model), zeros(d_model),                         # LN2 gamma, beta
        )
        params["layers"].append(layer)
    params["out_w"] = dense(next(ks), (d_model, n_products))       # bf16
    params["out_b"] = zeros(n_products)
    return params


if __name__ == "__main__":
    n_products, d_model, nhead, num_layers = 256, 128, 4, 2
    dim_ff = 2048   # nn.TransformerEncoderLayer default dim_feedforward
    B, S = 2, 8

    key = jax.random.PRNGKey(0)
    k_param, k_items = jax.random.split(key)
    params = init_model(k_param, n_products, d_model, nhead, num_layers, dim_ff)
    session_items = jax.random.randint(k_items, (B, S), 0, n_products, dtype=jnp.int32)

    logits = session_transformer_forward(params, session_items,
                                         d_model=d_model, nhead=nhead)
    jax.block_until_ready(logits)
    assert logits.shape == (B, n_products) and logits.dtype == jnp.float32
    print("KERNEL_OK")
</pallas_src>

<mosaic_0001>
module attributes {stable_mosaic.version = 11 : i64} {
  func.func @fused_forward_kernel(%arg0: i32, %arg1: memref<2x8x128xf32, #tpu.memory_space<vmem>>, %arg2: memref<128x128xbf16, #tpu.memory_space<vmem>>, %arg3: memref<1x128xf32, #tpu.memory_space<vmem>>, %arg4: memref<128x128xbf16, #tpu.memory_space<vmem>>, %arg5: memref<1x128xf32, #tpu.memory_space<vmem>>, %arg6: memref<128x128xbf16, #tpu.memory_space<vmem>>, %arg7: memref<1x128xf32, #tpu.memory_space<vmem>>, %arg8: memref<128x128xbf16, #tpu.memory_space<vmem>>, %arg9: memref<1x128xf32, #tpu.memory_space<vmem>>, %arg10: memref<1x128xf32, #tpu.memory_space<vmem>>, %arg11: memref<1x128xf32, #tpu.memory_space<vmem>>, %arg12: memref<128x2048xbf16, #tpu.memory_space<vmem>>, %arg13: memref<1x2048xf32, #tpu.memory_space<vmem>>, %arg14: memref<2048x128xbf16, #tpu.memory_space<vmem>>, %arg15: memref<1x128xf32, #tpu.memory_space<vmem>>, %arg16: memref<1x128xf32, #tpu.memory_space<vmem>>, %arg17: memref<1x128xf32, #tpu.memory_space<vmem>>, %arg18: memref<128x128xbf16, #tpu.memory_space<vmem>>, %arg19: memref<1x128xf32, #tpu.memory_space<vmem>>, %arg20: memref<128x128xbf16, #tpu.memory_space<vmem>>, %arg21: memref<1x128xf32, #tpu.memory_space<vmem>>, %arg22: memref<128x128xbf16, #tpu.memory_space<vmem>>, %arg23: memref<1x128xf32, #tpu.memory_space<vmem>>, %arg24: memref<128x128xbf16, #tpu.memory_space<vmem>>, %arg25: memref<1x128xf32, #tpu.memory_space<vmem>>, %arg26: memref<1x128xf32, #tpu.memory_space<vmem>>, %arg27: memref<1x128xf32, #tpu.memory_space<vmem>>, %arg28: memref<128x2048xbf16, #tpu.memory_space<vmem>>, %arg29: memref<1x2048xf32, #tpu.memory_space<vmem>>, %arg30: memref<2048x128xbf16, #tpu.memory_space<vmem>>, %arg31: memref<1x128xf32, #tpu.memory_space<vmem>>, %arg32: memref<1x128xf32, #tpu.memory_space<vmem>>, %arg33: memref<1x128xf32, #tpu.memory_space<vmem>>, %arg34: memref<128x256xbf16, #tpu.memory_space<vmem>>, %arg35: memref<1x256xf32, #tpu.memory_space<vmem>>, %arg36: memref<2x256xf32, #tpu.memory_space<vmem>>) attributes {dimension_semantics = [#tpu.dimension_semantics<parallel>], iteration_bounds = array<i64: 1>, scalar_prefetch = 0 : i64, scratch_operands = 0 : i64, tpu.core_type = #tpu.core_type<tc>, window_params = [{transform_indices = @transform_0, window_bounds = array<i64: 2, 8, 128>}, {pipeline_mode = #tpu.pipeline_mode<synchronous>, transform_indices = @transform_1, window_bounds = array<i64: 128, 128>}, {pipeline_mode = #tpu.pipeline_mode<synchronous>, transform_indices = @transform_2, window_bounds = array<i64: 1, 128>}, {pipeline_mode = #tpu.pipeline_mode<synchronous>, transform_indices = @transform_3, window_bounds = array<i64: 128, 128>}, {pipeline_mode = #tpu.pipeline_mode<synchronous>, transform_indices = @transform_4, window_bounds = array<i64: 1, 128>}, {pipeline_mode = #tpu.pipeline_mode<synchronous>, transform_indices = @transform_5, window_bounds = array<i64: 128, 128>}, {pipeline_mode = #tpu.pipeline_mode<synchronous>, transform_indices = @transform_6, window_bounds = array<i64: 1, 128>}, {pipeline_mode = #tpu.pipeline_mode<synchronous>, transform_indices = @transform_7, window_bounds = array<i64: 128, 128>}, {pipeline_mode = #tpu.pipeline_mode<synchronous>, transform_indices = @transform_8, window_bounds = array<i64: 1, 128>}, {pipeline_mode = #tpu.pipeline_mode<synchronous>, transform_indices = @transform_9, window_bounds = array<i64: 1, 128>}, {pipeline_mode = #tpu.pipeline_mode<synchronous>, transform_indices = @transform_10, window_bounds = array<i64: 1, 128>}, {pipeline_mode = #tpu.pipeline_mode<synchronous>, transform_indices = @transform_11, window_bounds = array<i64: 128, 2048>}, {pipeline_mode = #tpu.pipeline_mode<synchronous>, transform_indices = @transform_12, window_bounds = array<i64: 1, 2048>}, {pipeline_mode = #tpu.pipeline_mode<synchronous>, transform_indices = @transform_13, window_bounds = array<i64: 2048, 128>}, {pipeline_mode = #tpu.pipeline_mode<synchronous>, transform_indices = @transform_14, window_bounds = array<i64: 1, 128>}, {pipeline_mode = #tpu.pipeline_mode<synchronous>, transform_indices = @transform_15, window_bounds = array<i64: 1, 128>}, {pipeline_mode = #tpu.pipeline_mode<synchronous>, transform_indices = @transform_16, window_bounds = array<i64: 1, 128>}, {pipeline_mode = #tpu.pipeline_mode<synchronous>, transform_indices = @transform_17, window_bounds = array<i64: 128, 128>}, {pipeline_mode = #tpu.pipeline_mode<synchronous>, transform_indices = @transform_18, window_bounds = array<i64: 1, 128>}, {pipeline_mode = #tpu.pipeline_mode<synchronous>, transform_indices = @transform_19, window_bounds = array<i64: 128, 128>}, {pipeline_mode = #tpu.pipeline_mode<synchronous>, transform_indices = @transform_20, window_bounds = array<i64: 1, 128>}, {pipeline_mode = #tpu.pipeline_mode<synchronous>, transform_indices = @transform_21, window_bounds = array<i64: 128, 128>}, {pipeline_mode = #tpu.pipeline_mode<synchronous>, transform_indices = @transform_22, window_bounds = array<i64: 1, 128>}, {pipeline_mode = #tpu.pipeline_mode<synchronous>, transform_indices = @transform_23, window_bounds = array<i64: 128, 128>}, {pipeline_mode = #tpu.pipeline_mode<synchronous>, transform_indices = @transform_24, window_bounds = array<i64: 1, 128>}, {pipeline_mode = #tpu.pipeline_mode<synchronous>, transform_indices = @transform_25, window_bounds = array<i64: 1, 128>}, {pipeline_mode = #tpu.pipeline_mode<synchronous>, transform_indices = @transform_26, window_bounds = array<i64: 1, 128>}, {pipeline_mode = #tpu.pipeline_mode<synchronous>, transform_indices = @transform_27, window_bounds = array<i64: 128, 2048>}, {pipeline_mode = #tpu.pipeline_mode<synchronous>, transform_indices = @transform_28, window_bounds = array<i64: 1, 2048>}, {pipeline_mode = #tpu.pipeline_mode<synchronous>, transform_indices = @transform_29, window_bounds = array<i64: 2048, 128>}, {pipeline_mode = #tpu.pipeline_mode<synchronous>, transform_indices = @transform_30, window_bounds = array<i64: 1, 128>}, {pipeline_mode = #tpu.pipeline_mode<synchronous>, transform_indices = @transform_31, window_bounds = array<i64: 1, 128>}, {pipeline_mode = #tpu.pipeline_mode<synchronous>, transform_indices = @transform_32, window_bounds = array<i64: 1, 128>}, {pipeline_mode = #tpu.pipeline_mode<synchronous>, transform_indices = @transform_33, window_bounds = array<i64: 128, 256>}, {pipeline_mode = #tpu.pipeline_mode<synchronous>, transform_indices = @transform_34, window_bounds = array<i64: 1, 256>}, {transform_indices = @transform_35, window_bounds = array<i64: 2, 256>}]} {
    %c0 = arith.constant 0 : index
    %c0_0 = arith.constant 0 : index
    %c0_1 = arith.constant 0 : index
    %0 = vector.load %arg1[%c0, %c0_0, %c0_1] : memref<2x8x128xf32, #tpu.memory_space<vmem>>, vector<2x8x128xf32>
    %1 = vector.shape_cast %0 : vector<2x8x128xf32> to vector<16x128xf32>
    %2 = arith.truncf %1 : vector<16x128xf32> to vector<16x128xbf16>
    %c0_2 = arith.constant 0 : index
    %c0_3 = arith.constant 0 : index
    %3 = vector.load %arg4[%c0_2, %c0_3] : memref<128x128xbf16, #tpu.memory_space<vmem>>, vector<128x128xbf16>
    %cst = arith.constant dense<0.000000e+00> : vector<16x128xf32>
    %4 = tpu.matmul %2, %3, %cst {dimension_numbers = #tpu.dot_dimension_numbers<[1], [0], [0], [1], [0, 0, 1, 1], [], []>} : vector<16x128xbf16>, vector<128x128xbf16>, vector<16x128xf32> -> vector<16x128xf32>
    %c0_4 = arith.constant 0 : index
    %c0_5 = arith.constant 0 : index
    %5 = vector.load %arg5[%c0_4, %c0_5] : memref<1x128xf32, #tpu.memory_space<vmem>>, vector<1x128xf32>
    %6 = vector.broadcast %5 : vector<1x128xf32> to vector<16x128xf32>
    %7 = arith.addf %4, %6 : vector<16x128xf32>
    %8 = vector.shape_cast %7 : vector<16x128xf32> to vector<2x8x128xf32>
    %9 = arith.truncf %1 : vector<16x128xf32> to vector<16x128xbf16>
    %c0_6 = arith.constant 0 : index
    %c0_7 = arith.constant 0 : index
    %10 = vector.load %arg6[%c0_6, %c0_7] : memref<128x128xbf16, #tpu.memory_space<vmem>>, vector<128x128xbf16>
    %cst_8 = arith.constant dense<0.000000e+00> : vector<16x128xf32>
    %11 = tpu.matmul %9, %10, %cst_8 {dimension_numbers = #tpu.dot_dimension_numbers<[1], [0], [0], [1], [0, 0, 1, 1], [], []>} : vector<16x128xbf16>, vector<128x128xbf16>, vector<16x128xf32> -> vector<16x128xf32>
    %c0_9 = arith.constant 0 : index
    %c0_10 = arith.constant 0 : index
    %12 = vector.load %arg7[%c0_9, %c0_10] : memref<1x128xf32, #tpu.memory_space<vmem>>, vector<1x128xf32>
    %13 = vector.broadcast %12 : vector<1x128xf32> to vector<16x128xf32>
    %14 = arith.addf %11, %13 : vector<16x128xf32>
    %15 = vector.shape_cast %14 : vector<16x128xf32> to vector<2x8x128xf32>
    %16 = arith.truncf %1 : vector<16x128xf32> to vector<16x128xbf16>
    %c0_11 = arith.constant 0 : index
    %c0_12 = arith.constant 0 : index
    %17 = vector.load %arg2[%c0_11, %c0_12] : memref<128x128xbf16, #tpu.memory_space<vmem>>, vector<128x128xbf16>
    %cst_13 = arith.constant dense<0.000000e+00> : vector<16x128xf32>
    %18 = tpu.matmul %16, %17, %cst_13 {dimension_numbers = #tpu.dot_dimension_numbers<[1], [0], [0], [1], [0, 0, 1, 1], [], []>} : vector<16x128xbf16>, vector<128x128xbf16>, vector<16x128xf32> -> vector<16x128xf32>
    %c0_14 = arith.constant 0 : index
    %c0_15 = arith.constant 0 : index
    %19 = vector.load %arg3[%c0_14, %c0_15] : memref<1x128xf32, #tpu.memory_space<vmem>>, vector<1x128xf32>
    %20 = vector.broadcast %19 : vector<1x128xf32> to vector<16x128xf32>
    %21 = arith.addf %18, %20 : vector<16x128xf32>
    %cst_16 = arith.constant 0.176776692 : f32
    %22 = vector.broadcast %cst_16 : f32 to vector<16x128xf32>
    %23 = arith.mulf %21, %22 : vector<16x128xf32>
    %24 = vector.shape_cast %23 : vector<16x128xf32> to vector<2x8x128xf32>
    %25 = vector.extract_strided_slice %24 {offsets = [0, 0, 0], sizes = [2, 8, 32], strides = [1, 1, 1]} : vector<2x8x128xf32> to vector<2x8x32xf32>
    %26 = vector.extract_strided_slice %8 {offsets = [0, 0, 0], sizes = [2, 8, 32], strides = [1, 1, 1]} : vector<2x8x128xf32> to vector<2x8x32xf32>
    "tpu.trace_start"() <{level = 10 : i32, message = "bqd,bkd->bqk"}> : () -> ()
    %cst_17 = arith.constant dense<0.000000e+00> : vector<2x8x8xf32>
    %27 = tpu.matmul %25, %26, %cst_17 {dimension_numbers = #tpu.dot_dimension_numbers<[2], [2], [1], [1], [0, 0, 0, 1, 1, 1], [0], [0]>} : vector<2x8x32xf32>, vector<2x8x32xf32>, vector<2x8x8xf32> -> vector<2x8x8xf32>
    "tpu.trace_stop"() : () -> ()
    %cst_18 = arith.constant dense<0xFF800000> : vector<2x8xf32>
    %28 = vector.multi_reduction <maximumf>, %27, %cst_18 [2] : vector<2x8x8xf32> to vector<2x8xf32>
    %29 = vector.shape_cast %28 : vector<2x8xf32> to vector<2x8x1xf32>
    %30 = vector.broadcast %29 : vector<2x8x1xf32> to vector<2x8x8xf32>
    %31 = arith.subf %27, %30 : vector<2x8x8xf32>
    %32 = math.exp %31 : vector<2x8x8xf32>
    %cst_19 = arith.constant dense<0.000000e+00> : vector<2x8xf32>
    %33 = vector.multi_reduction <add>, %32, %cst_19 [2] : vector<2x8x8xf32> to vector<2x8xf32>
    %34 = vector.shape_cast %33 : vector<2x8xf32> to vector<2x8x1xf32>
    %35 = tpu.reciprocal %34 {approx = true} : vector<2x8x1xf32> -> vector<2x8x1xf32>
    %36 = vector.broadcast %35 : vector<2x8x1xf32> to vector<2x8x8xf32>
    %37 = arith.mulf %32, %36 : vector<2x8x8xf32>
    %38 = vector.extract_strided_slice %15 {offsets = [0, 0, 0], sizes = [2, 8, 32], strides = [1, 1, 1]} : vector<2x8x128xf32> to vector<2x8x32xf32>
    "tpu.trace_start"() <{level = 10 : i32, message = "bqk,bkd->bqd"}> : () -> ()
    %cst_20 = arith.constant dense<0.000000e+00> : vector<2x8x32xf32>
    %39 = tpu.matmul %37, %38, %cst_20 {dimension_numbers = #tpu.dot_dimension_numbers<[2], [1], [1], [2], [0, 0, 0, 1, 1, 2], [0], [0]>} : vector<2x8x8xf32>, vector<2x8x32xf32>, vector<2x8x32xf32> -> vector<2x8x32xf32>
    "tpu.trace_stop"() : () -> ()
    %40 = vector.extract_strided_slice %24 {offsets = [0, 0, 32], sizes = [2, 8, 32], strides = [1, 1, 1]} : vector<2x8x128xf32> to vector<2x8x32xf32>
    %41 = vector.extract_strided_slice %8 {offsets = [0, 0, 32], sizes = [2, 8, 32], strides = [1, 1, 1]} : vector<2x8x128xf32> to vector<2x8x32xf32>
    "tpu.trace_start"() <{level = 10 : i32, message = "bqd,bkd->bqk"}> : () -> ()
    %cst_21 = arith.constant dense<0.000000e+00> : vector<2x8x8xf32>
    %42 = tpu.matmul %40, %41, %cst_21 {dimension_numbers = #tpu.dot_dimension_numbers<[2], [2], [1], [1], [0, 0, 0, 1, 1, 1], [0], [0]>} : vector<2x8x32xf32>, vector<2x8x32xf32>, vector<2x8x8xf32> -> vector<2x8x8xf32>
    "tpu.trace_stop"() : () -> ()
    %cst_22 = arith.constant dense<0xFF800000> : vector<2x8xf32>
    %43 = vector.multi_reduction <maximumf>, %42, %cst_22 [2] : vector<2x8x8xf32> to vector<2x8xf32>
    %44 = vector.shape_cast %43 : vector<2x8xf32> to vector<2x8x1xf32>
    %45 = vector.broadcast %44 : vector<2x8x1xf32> to vector<2x8x8xf32>
    %46 = arith.subf %42, %45 : vector<2x8x8xf32>
    %47 = math.exp %46 : vector<2x8x8xf32>
    %cst_23 = arith.constant dense<0.000000e+00> : vector<2x8xf32>
    %48 = vector.multi_reduction <add>, %47, %cst_23 [2] : vector<2x8x8xf32> to vector<2x8xf32>
    %49 = vector.shape_cast %48 : vector<2x8xf32> to vector<2x8x1xf32>
    %50 = tpu.reciprocal %49 {approx = true} : vector<2x8x1xf32> -> vector<2x8x1xf32>
    %51 = vector.broadcast %50 : vector<2x8x1xf32> to vector<2x8x8xf32>
    %52 = arith.mulf %47, %51 : vector<2x8x8xf32>
    %53 = vector.extract_strided_slice %15 {offsets = [0, 0, 32], sizes = [2, 8, 32], strides = [1, 1, 1]} : vector<2x8x128xf32> to vector<2x8x32xf32>
    "tpu.trace_start"() <{level = 10 : i32, message = "bqk,bkd->bqd"}> : () -> ()
    %cst_24 = arith.constant dense<0.000000e+00> : vector<2x8x32xf32>
    %54 = tpu.matmul %52, %53, %cst_24 {dimension_numbers = #tpu.dot_dimension_numbers<[2], [1], [1], [2], [0, 0, 0, 1, 1, 2], [0], [0]>} : vector<2x8x8xf32>, vector<2x8x32xf32>, vector<2x8x32xf32> -> vector<2x8x32xf32>
    "tpu.trace_stop"() : () -> ()
    %55 = vector.extract_strided_slice %24 {offsets = [0, 0, 64], sizes = [2, 8, 32], strides = [1, 1, 1]} : vector<2x8x128xf32> to vector<2x8x32xf32>
    %56 = vector.extract_strided_slice %8 {offsets = [0, 0, 64], sizes = [2, 8, 32], strides = [1, 1, 1]} : vector<2x8x128xf32> to vector<2x8x32xf32>
    "tpu.trace_start"() <{level = 10 : i32, message = "bqd,bkd->bqk"}> : () -> ()
    %cst_25 = arith.constant dense<0.000000e+00> : vector<2x8x8xf32>
    %57 = tpu.matmul %55, %56, %cst_25 {dimension_numbers = #tpu.dot_dimension_numbers<[2], [2], [1], [1], [0, 0, 0, 1, 1, 1], [0], [0]>} : vector<2x8x32xf32>, vector<2x8x32xf32>, vector<2x8x8xf32> -> vector<2x8x8xf32>
    "tpu.trace_stop"() : () -> ()
    %cst_26 = arith.constant dense<0xFF800000> : vector<2x8xf32>
    %58 = vector.multi_reduction <maximumf>, %57, %cst_26 [2] : vector<2x8x8xf32> to vector<2x8xf32>
    %59 = vector.shape_cast %58 : vector<2x8xf32> to vector<2x8x1xf32>
    %60 = vector.broadcast %59 : vector<2x8x1xf32> to vector<2x8x8xf32>
    %61 = arith.subf %57, %60 : vector<2x8x8xf32>
    %62 = math.exp %61 : vector<2x8x8xf32>
    %cst_27 = arith.constant dense<0.000000e+00> : vector<2x8xf32>
    %63 = vector.multi_reduction <add>, %62, %cst_27 [2] : vector<2x8x8xf32> to vector<2x8xf32>
    %64 = vector.shape_cast %63 : vector<2x8xf32> to vector<2x8x1xf32>
    %65 = tpu.reciprocal %64 {approx = true} : vector<2x8x1xf32> -> vector<2x8x1xf32>
    %66 = vector.broadcast %65 : vector<2x8x1xf32> to vector<2x8x8xf32>
    %67 = arith.mulf %62, %66 : vector<2x8x8xf32>
    %68 = vector.extract_strided_slice %15 {offsets = [0, 0, 64], sizes = [2, 8, 32], strides = [1, 1, 1]} : vector<2x8x128xf32> to vector<2x8x32xf32>
    "tpu.trace_start"() <{level = 10 : i32, message = "bqk,bkd->bqd"}> : () -> ()
    %cst_28 = arith.constant dense<0.000000e+00> : vector<2x8x32xf32>
    %69 = tpu.matmul %67, %68, %cst_28 {dimension_numbers = #tpu.dot_dimension_numbers<[2], [1], [1], [2], [0, 0, 0, 1, 1, 2], [0], [0]>} : vector<2x8x8xf32>, vector<2x8x32xf32>, vector<2x8x32xf32> -> vector<2x8x32xf32>
    "tpu.trace_stop"() : () -> ()
    %70 = vector.extract_strided_slice %24 {offsets = [0, 0, 96], sizes = [2, 8, 32], strides = [1, 1, 1]} : vector<2x8x128xf32> to vector<2x8x32xf32>
    %71 = vector.extract_strided_slice %8 {offsets = [0, 0, 96], sizes = [2, 8, 32], strides = [1, 1, 1]} : vector<2x8x128xf32> to vector<2x8x32xf32>
    "tpu.trace_start"() <{level = 10 : i32, message = "bqd,bkd->bqk"}> : () -> ()
    %cst_29 = arith.constant dense<0.000000e+00> : vector<2x8x8xf32>
    %72 = tpu.matmul %70, %71, %cst_29 {dimension_numbers = #tpu.dot_dimension_numbers<[2], [2], [1], [1], [0, 0, 0, 1, 1, 1], [0], [0]>} : vector<2x8x32xf32>, vector<2x8x32xf32>, vector<2x8x8xf32> -> vector<2x8x8xf32>
    "tpu.trace_stop"() : () -> ()
    %cst_30 = arith.constant dense<0xFF800000> : vector<2x8xf32>
    %73 = vector.multi_reduction <maximumf>, %72, %cst_30 [2] : vector<2x8x8xf32> to vector<2x8xf32>
    %74 = vector.shape_cast %73 : vector<2x8xf32> to vector<2x8x1xf32>
    %75 = vector.broadcast %74 : vector<2x8x1xf32> to vector<2x8x8xf32>
    %76 = arith.subf %72, %75 : vector<2x8x8xf32>
    %77 = math.exp %76 : vector<2x8x8xf32>
    %cst_31 = arith.constant dense<0.000000e+00> : vector<2x8xf32>
    %78 = vector.multi_reduction <add>, %77, %cst_31 [2] : vector<2x8x8xf32> to vector<2x8xf32>
    %79 = vector.shape_cast %78 : vector<2x8xf32> to vector<2x8x1xf32>
    %80 = tpu.reciprocal %79 {approx = true} : vector<2x8x1xf32> -> vector<2x8x1xf32>
    %81 = vector.broadcast %80 : vector<2x8x1xf32> to vector<2x8x8xf32>
    %82 = arith.mulf %77, %81 : vector<2x8x8xf32>
    %83 = vector.extract_strided_slice %15 {offsets = [0, 0, 96], sizes = [2, 8, 32], strides = [1, 1, 1]} : vector<2x8x128xf32> to vector<2x8x32xf32>
    "tpu.trace_start"() <{level = 10 : i32, message = "bqk,bkd->bqd"}> : () -> ()
    %cst_32 = arith.constant dense<0.000000e+00> : vector<2x8x32xf32>
    %84 = tpu.matmul %82, %83, %cst_32 {dimension_numbers = #tpu.dot_dimension_numbers<[2], [1], [1], [2], [0, 0, 0, 1, 1, 2], [0], [0]>} : vector<2x8x8xf32>, vector<2x8x32xf32>, vector<2x8x32xf32> -> vector<2x8x32xf32>
    "tpu.trace_stop"() : () -> ()
    %85 = tpu.concatenate %39, %54, %69, %84 in 2 : vector<2x8x32xf32>, vector<2x8x32xf32>, vector<2x8x32xf32>, vector<2x8x32xf32> -> vector<2x8x128xf32>
    %86 = vector.shape_cast %85 : vector<2x8x128xf32> to vector<16x128xf32>
    %87 = arith.truncf %86 : vector<16x128xf32> to vector<16x128xbf16>
    %c0_33 = arith.constant 0 : index
    %c0_34 = arith.constant 0 : index
    %88 = vector.load %arg8[%c0_33, %c0_34] : memref<128x128xbf16, #tpu.memory_space<vmem>>, vector<128x128xbf16>
    %cst_35 = arith.constant dense<0.000000e+00> : vector<16x128xf32>
    %89 = tpu.matmul %87, %88, %cst_35 {dimension_numbers = #tpu.dot_dimension_numbers<[1], [0], [0], [1], [0, 0, 1, 1], [], []>} : vector<16x128xbf16>, vector<128x128xbf16>, vector<16x128xf32> -> vector<16x128xf32>
    %c0_36 = arith.constant 0 : index
    %c0_37 = arith.constant 0 : index
    %90 = vector.load %arg9[%c0_36, %c0_37] : memref<1x128xf32, #tpu.memory_space<vmem>>, vector<1x128xf32>
    %91 = vector.broadcast %90 : vector<1x128xf32> to vector<16x128xf32>
    %92 = arith.addf %89, %91 : vector<16x128xf32>
    %93 = arith.addf %1, %92 : vector<16x128xf32>
    %c0_38 = arith.constant 0 : index
    %c0_39 = arith.constant 0 : index
    %94 = vector.load %arg10[%c0_38, %c0_39] : memref<1x128xf32, #tpu.memory_space<vmem>>, vector<1x128xf32>
    %c0_40 = arith.constant 0 : index
    %c0_41 = arith.constant 0 : index
    %95 = vector.load %arg11[%c0_40, %c0_41] : memref<1x128xf32, #tpu.memory_space<vmem>>, vector<1x128xf32>
    %cst_42 = arith.constant dense<0.000000e+00> : vector<16xf32>
    %96 = vector.multi_reduction <add>, %93, %cst_42 [1] : vector<16x128xf32> to vector<16xf32>
    %97 = vector.shape_cast %96 : vector<16xf32> to vector<16x1xf32>
    %cst_43 = arith.constant 1.280000e+02 : f32
    %98 = vector.broadcast %cst_43 : f32 to vector<16x1xf32>
    %99 = arith.divf %97, %98 : vector<16x1xf32>
    %100 = vector.broadcast %99 : vector<16x1xf32> to vector<16x128xf32>
    %101 = arith.subf %93, %100 : vector<16x128xf32>
    %102 = arith.mulf %101, %101 : vector<16x128xf32>
    %cst_44 = arith.constant dense<0.000000e+00> : vector<16xf32>
    %103 = vector.multi_reduction <add>, %102, %cst_44 [1] : vector<16x128xf32> to vector<16xf32>
    %104 = vector.shape_cast %103 : vector<16xf32> to vector<16x1xf32>
    %cst_45 = arith.constant 1.280000e+02 : f32
    %105 = vector.broadcast %cst_45 : f32 to vector<16x1xf32>
    %106 = arith.divf %104, %105 : vector<16x1xf32>
    %107 = vector.broadcast %99 : vector<16x1xf32> to vector<16x128xf32>
    %108 = arith.subf %93, %107 : vector<16x128xf32>
    %cst_46 = arith.constant 9.99999974E-6 : f32
    %109 = vector.broadcast %cst_46 : f32 to vector<16x1xf32>
    %110 = arith.addf %106, %109 : vector<16x1xf32>
    %111 = math.rsqrt %110 : vector<16x1xf32>
    %112 = vector.broadcast %111 : vector<16x1xf32> to vector<16x128xf32>
    %113 = arith.mulf %108, %112 : vector<16x128xf32>
    %114 = vector.broadcast %94 : vector<1x128xf32> to vector<16x128xf32>
    %115 = arith.mulf %113, %114 : vector<16x128xf32>
    %116 = vector.broadcast %95 : vector<1x128xf32> to vector<16x128xf32>
    %117 = arith.addf %115, %116 : vector<16x128xf32>
    %118 = arith.truncf %117 : vector<16x128xf32> to vector<16x128xbf16>
    %c0_47 = arith.constant 0 : index
    %c0_48 = arith.constant 0 : index
    %119 = vector.load %arg12[%c0_47, %c0_48] : memref<128x2048xbf16, #tpu.memory_space<vmem>>, vector<128x2048xbf16>
    %cst_49 = arith.constant dense<0.000000e+00> : vector<16x2048xf32>
    %120 = tpu.matmul %118, %119, %cst_49 {dimension_numbers = #tpu.dot_dimension_numbers<[1], [0], [0], [1], [0, 0, 1, 1], [], []>} : vector<16x128xbf16>, vector<128x2048xbf16>, vector<16x2048xf32> -> vector<16x2048xf32>
    %c0_50 = arith.constant 0 : index
    %c0_51 = arith.constant 0 : index
    %121 = vector.load %arg13[%c0_50, %c0_51] : memref<1x2048xf32, #tpu.memory_space<vmem>>, vector<1x2048xf32>
    %122 = vector.broadcast %121 : vector<1x2048xf32> to vector<16x2048xf32>
    %123 = arith.addf %120, %122 : vector<16x2048xf32>
    %cst_52 = arith.constant 0.000000e+00 : f32
    %124 = vector.broadcast %cst_52 : f32 to vector<16x2048xf32>
    %125 = arith.maximumf %123, %124 : vector<16x2048xf32>
    %126 = arith.truncf %125 : vector<16x2048xf32> to vector<16x2048xbf16>
    %c0_53 = arith.constant 0 : index
    %c0_54 = arith.constant 0 : index
    %127 = vector.load %arg14[%c0_53, %c0_54] : memref<2048x128xbf16, #tpu.memory_space<vmem>>, vector<2048x128xbf16>
    %cst_55 = arith.constant dense<0.000000e+00> : vector<16x128xf32>
    %128 = tpu.matmul %126, %127, %cst_55 {dimension_numbers = #tpu.dot_dimension_numbers<[1], [0], [0], [1], [0, 0, 1, 1], [], []>} : vector<16x2048xbf16>, vector<2048x128xbf16>, vector<16x128xf32> -> vector<16x128xf32>
    %c0_56 = arith.constant 0 : index
    %c0_57 = arith.constant 0 : index
    %129 = vector.load %arg15[%c0_56, %c0_57] : memref<1x128xf32, #tpu.memory_space<vmem>>, vector<1x128xf32>
    %130 = vector.broadcast %129 : vector<1x128xf32> to vector<16x128xf32>
    %131 = arith.addf %128, %130 : vector<16x128xf32>
    %132 = arith.addf %117, %131 : vector<16x128xf32>
    %c0_58 = arith.constant 0 : index
    %c0_59 = arith.constant 0 : index
    %133 = vector.load %arg16[%c0_58, %c0_59] : memref<1x128xf32, #tpu.memory_space<vmem>>, vector<1x128xf32>
    %c0_60 = arith.constant 0 : index
    %c0_61 = arith.constant 0 : index
    %134 = vector.load %arg17[%c0_60, %c0_61] : memref<1x128xf32, #tpu.memory_space<vmem>>, vector<1x128xf32>
    %cst_62 = arith.constant dense<0.000000e+00> : vector<16xf32>
    %135 = vector.multi_reduction <add>, %132, %cst_62 [1] : vector<16x128xf32> to vector<16xf32>
    %136 = vector.shape_cast %135 : vector<16xf32> to vector<16x1xf32>
    %cst_63 = arith.constant 1.280000e+02 : f32
    %137 = vector.broadcast %cst_63 : f32 to vector<16x1xf32>
    %138 = arith.divf %136, %137 : vector<16x1xf32>
    %139 = vector.broadcast %138 : vector<16x1xf32> to vector<16x128xf32>
    %140 = arith.subf %132, %139 : vector<16x128xf32>
    %141 = arith.mulf %140, %140 : vector<16x128xf32>
    %cst_64 = arith.constant dense<0.000000e+00> : vector<16xf32>
    %142 = vector.multi_reduction <add>, %141, %cst_64 [1] : vector<16x128xf32> to vector<16xf32>
    %143 = vector.shape_cast %142 : vector<16xf32> to vector<16x1xf32>
    %cst_65 = arith.constant 1.280000e+02 : f32
    %144 = vector.broadcast %cst_65 : f32 to vector<16x1xf32>
    %145 = arith.divf %143, %144 : vector<16x1xf32>
    %146 = vector.broadcast %138 : vector<16x1xf32> to vector<16x128xf32>
    %147 = arith.subf %132, %146 : vector<16x128xf32>
    %cst_66 = arith.constant 9.99999974E-6 : f32
    %148 = vector.broadcast %cst_66 : f32 to vector<16x1xf32>
    %149 = arith.addf %145, %148 : vector<16x1xf32>
    %150 = math.rsqrt %149 : vector<16x1xf32>
    %151 = vector.broadcast %150 : vector<16x1xf32> to vector<16x128xf32>
    %152 = arith.mulf %147, %151 : vector<16x128xf32>
    %153 = vector.broadcast %133 : vector<1x128xf32> to vector<16x128xf32>
    %154 = arith.mulf %152, %153 : vector<16x128xf32>
    %155 = vector.broadcast %134 : vector<1x128xf32> to vector<16x128xf32>
    %156 = arith.addf %154, %155 : vector<16x128xf32>
    %157 = arith.truncf %156 : vector<16x128xf32> to vector<16x128xbf16>
    %c0_67 = arith.constant 0 : index
    %c0_68 = arith.constant 0 : index
    %158 = vector.load %arg20[%c0_67, %c0_68] : memref<128x128xbf16, #tpu.memory_space<vmem>>, vector<128x128xbf16>
    %cst_69 = arith.constant dense<0.000000e+00> : vector<16x128xf32>
    %159 = tpu.matmul %157, %158, %cst_69 {dimension_numbers = #tpu.dot_dimension_numbers<[1], [0], [0], [1], [0, 0, 1, 1], [], []>} : vector<16x128xbf16>, vector<128x128xbf16>, vector<16x128xf32> -> vector<16x128xf32>
    %c0_70 = arith.constant 0 : index
    %c0_71 = arith.constant 0 : index
    %160 = vector.load %arg21[%c0_70, %c0_71] : memref<1x128xf32, #tpu.memory_space<vmem>>, vector<1x128xf32>
    %161 = vector.broadcast %160 : vector<1x128xf32> to vector<16x128xf32>
    %162 = arith.addf %159, %161 : vector<16x128xf32>
    %163 = vector.shape_cast %162 : vector<16x128xf32> to vector<2x8x128xf32>
    %164 = arith.truncf %156 : vector<16x128xf32> to vector<16x128xbf16>
    %c0_72 = arith.constant 0 : index
    %c0_73 = arith.constant 0 : index
    %165 = vector.load %arg22[%c0_72, %c0_73] : memref<128x128xbf16, #tpu.memory_space<vmem>>, vector<128x128xbf16>
    %cst_74 = arith.constant dense<0.000000e+00> : vector<16x128xf32>
    %166 = tpu.matmul %164, %165, %cst_74 {dimension_numbers = #tpu.dot_dimension_numbers<[1], [0], [0], [1], [0, 0, 1, 1], [], []>} : vector<16x128xbf16>, vector<128x128xbf16>, vector<16x128xf32> -> vector<16x128xf32>
    %c0_75 = arith.constant 0 : index
    %c0_76 = arith.constant 0 : index
    %167 = vector.load %arg23[%c0_75, %c0_76] : memref<1x128xf32, #tpu.memory_space<vmem>>, vector<1x128xf32>
    %168 = vector.broadcast %167 : vector<1x128xf32> to vector<16x128xf32>
    %169 = arith.addf %166, %168 : vector<16x128xf32>
    %170 = vector.shape_cast %169 : vector<16x128xf32> to vector<2x8x128xf32>
    %171 = vector.shape_cast %156 : vector<16x128xf32> to vector<2x8x128xf32>
    %172 = vector.extract_strided_slice %171 {offsets = [0, 7, 0], sizes = [2, 1, 128], strides = [1, 1, 1]} : vector<2x8x128xf32> to vector<2x1x128xf32>
    %173 = vector.shape_cast %172 : vector<2x1x128xf32> to vector<2x128xf32>
    %174 = arith.truncf %173 : vector<2x128xf32> to vector<2x128xbf16>
    %c0_77 = arith.constant 0 : index
    %c0_78 = arith.constant 0 : index
    %175 = vector.load %arg18[%c0_77, %c0_78] : memref<128x128xbf16, #tpu.memory_space<vmem>>, vector<128x128xbf16>
    %cst_79 = arith.constant dense<0.000000e+00> : vector<2x128xf32>
    %176 = tpu.matmul %174, %175, %cst_79 {dimension_numbers = #tpu.dot_dimension_numbers<[1], [0], [0], [1], [0, 0, 1, 1], [], []>} : vector<2x128xbf16>, vector<128x128xbf16>, vector<2x128xf32> -> vector<2x128xf32>
    %c0_80 = arith.constant 0 : index
    %c0_81 = arith.constant 0 : index
    %177 = vector.load %arg19[%c0_80, %c0_81] : memref<1x128xf32, #tpu.memory_space<vmem>>, vector<1x128xf32>
    %178 = vector.broadcast %177 : vector<1x128xf32> to vector<2x128xf32>
    %179 = arith.addf %176, %178 : vector<2x128xf32>
    %cst_82 = arith.constant 0.176776692 : f32
    %180 = vector.broadcast %cst_82 : f32 to vector<2x128xf32>
    %181 = arith.mulf %179, %180 : vector<2x128xf32>
    %182 = vector.shape_cast %181 : vector<2x128xf32> to vector<2x1x128xf32>
    %183 = vector.extract_strided_slice %182 {offsets = [0, 0, 0], sizes = [2, 1, 32], strides = [1, 1, 1]} : vector<2x1x128xf32> to vector<2x1x32xf32>
    %184 = vector.extract_strided_slice %163 {offsets = [0, 0, 0], sizes = [2, 8, 32], strides = [1, 1, 1]} : vector<2x8x128xf32> to vector<2x8x32xf32>
    "tpu.trace_start"() <{level = 10 : i32, message = "bqd,bkd->bqk"}> : () -> ()
    %cst_83 = arith.constant dense<0.000000e+00> : vector<2x1x8xf32>
    %185 = tpu.matmul %183, %184, %cst_83 {dimension_numbers = #tpu.dot_dimension_numbers<[2], [2], [1], [1], [0, 0, 0, 1, 1, 1], [0], [0]>} : vector<2x1x32xf32>, vector<2x8x32xf32>, vector<2x1x8xf32> -> vector<2x1x8xf32>
    "tpu.trace_stop"() : () -> ()
    %cst_84 = arith.constant dense<0xFF800000> : vector<2x1xf32>
    %186 = vector.multi_reduction <maximumf>, %185, %cst_84 [2] : vector<2x1x8xf32> to vector<2x1xf32>
    %187 = vector.shape_cast %186 : vector<2x1xf32> to vector<2x1x1xf32>
    %188 = vector.broadcast %187 : vector<2x1x1xf32> to vector<2x1x8xf32>
    %189 = arith.subf %185, %188 : vector<2x1x8xf32>
    %190 = math.exp %189 : vector<2x1x8xf32>
    %cst_85 = arith.constant dense<0.000000e+00> : vector<2x1xf32>
    %191 = vector.multi_reduction <add>, %190, %cst_85 [2] : vector<2x1x8xf32> to vector<2x1xf32>
    %192 = vector.shape_cast %191 : vector<2x1xf32> to vector<2x1x1xf32>
    %193 = tpu.reciprocal %192 {approx = true} : vector<2x1x1xf32> -> vector<2x1x1xf32>
    %194 = vector.broadcast %193 : vector<2x1x1xf32> to vector<2x1x8xf32>
    %195 = arith.mulf %190, %194 : vector<2x1x8xf32>
    %196 = vector.extract_strided_slice %170 {offsets = [0, 0, 0], sizes = [2, 8, 32], strides = [1, 1, 1]} : vector<2x8x128xf32> to vector<2x8x32xf32>
    "tpu.trace_start"() <{level = 10 : i32, message = "bqk,bkd->bqd"}> : () -> ()
    %cst_86 = arith.constant dense<0.000000e+00> : vector<2x1x32xf32>
    %197 = tpu.matmul %195, %196, %cst_86 {dimension_numbers = #tpu.dot_dimension_numbers<[2], [1], [1], [2], [0, 0, 0, 1, 1, 2], [0], [0]>} : vector<2x1x8xf32>, vector<2x8x32xf32>, vector<2x1x32xf32> -> vector<2x1x32xf32>
    "tpu.trace_stop"() : () -> ()
    %198 = vector.extract_strided_slice %182 {offsets = [0, 0, 32], sizes = [2, 1, 32], strides = [1, 1, 1]} : vector<2x1x128xf32> to vector<2x1x32xf32>
    %199 = vector.extract_strided_slice %163 {offsets = [0, 0, 32], sizes = [2, 8, 32], strides = [1, 1, 1]} : vector<2x8x128xf32> to vector<2x8x32xf32>
    "tpu.trace_start"() <{level = 10 : i32, message = "bqd,bkd->bqk"}> : () -> ()
    %cst_87 = arith.constant dense<0.000000e+00> : vector<2x1x8xf32>
    %200 = tpu.matmul %198, %199, %cst_87 {dimension_numbers = #tpu.dot_dimension_numbers<[2], [2], [1], [1], [0, 0, 0, 1, 1, 1], [0], [0]>} : vector<2x1x32xf32>, vector<2x8x32xf32>, vector<2x1x8xf32> -> vector<2x1x8xf32>
    "tpu.trace_stop"() : () -> ()
    %cst_88 = arith.constant dense<0xFF800000> : vector<2x1xf32>
    %201 = vector.multi_reduction <maximumf>, %200, %cst_88 [2] : vector<2x1x8xf32> to vector<2x1xf32>
    %202 = vector.shape_cast %201 : vector<2x1xf32> to vector<2x1x1xf32>
    %203 = vector.broadcast %202 : vector<2x1x1xf32> to vector<2x1x8xf32>
    %204 = arith.subf %200, %203 : vector<2x1x8xf32>
    %205 = math.exp %204 : vector<2x1x8xf32>
    %cst_89 = arith.constant dense<0.000000e+00> : vector<2x1xf32>
    %206 = vector.multi_reduction <add>, %205, %cst_89 [2] : vector<2x1x8xf32> to vector<2x1xf32>
    %207 = vector.shape_cast %206 : vector<2x1xf32> to vector<2x1x1xf32>
    %208 = tpu.reciprocal %207 {approx = true} : vector<2x1x1xf32> -> vector<2x1x1xf32>
    %209 = vector.broadcast %208 : vector<2x1x1xf32> to vector<2x1x8xf32>
    %210 = arith.mulf %205, %209 : vector<2x1x8xf32>
    %211 = vector.extract_strided_slice %170 {offsets = [0, 0, 32], sizes = [2, 8, 32], strides = [1, 1, 1]} : vector<2x8x128xf32> to vector<2x8x32xf32>
    "tpu.trace_start"() <{level = 10 : i32, message = "bqk,bkd->bqd"}> : () -> ()
    %cst_90 = arith.constant dense<0.000000e+00> : vector<2x1x32xf32>
    %212 = tpu.matmul %210, %211, %cst_90 {dimension_numbers = #tpu.dot_dimension_numbers<[2], [1], [1], [2], [0, 0, 0, 1, 1, 2], [0], [0]>} : vector<2x1x8xf32>, vector<2x8x32xf32>, vector<2x1x32xf32> -> vector<2x1x32xf32>
    "tpu.trace_stop"() : () -> ()
    %213 = vector.extract_strided_slice %182 {offsets = [0, 0, 64], sizes = [2, 1, 32], strides = [1, 1, 1]} : vector<2x1x128xf32> to vector<2x1x32xf32>
    %214 = vector.extract_strided_slice %163 {offsets = [0, 0, 64], sizes = [2, 8, 32], strides = [1, 1, 1]} : vector<2x8x128xf32> to vector<2x8x32xf32>
    "tpu.trace_start"() <{level = 10 : i32, message = "bqd,bkd->bqk"}> : () -> ()
    %cst_91 = arith.constant dense<0.000000e+00> : vector<2x1x8xf32>
    %215 = tpu.matmul %213, %214, %cst_91 {dimension_numbers = #tpu.dot_dimension_numbers<[2], [2], [1], [1], [0, 0, 0, 1, 1, 1], [0], [0]>} : vector<2x1x32xf32>, vector<2x8x32xf32>, vector<2x1x8xf32> -> vector<2x1x8xf32>
    "tpu.trace_stop"() : () -> ()
    %cst_92 = arith.constant dense<0xFF800000> : vector<2x1xf32>
    %216 = vector.multi_reduction <maximumf>, %215, %cst_92 [2] : vector<2x1x8xf32> to vector<2x1xf32>
    %217 = vector.shape_cast %216 : vector<2x1xf32> to vector<2x1x1xf32>
    %218 = vector.broadcast %217 : vector<2x1x1xf32> to vector<2x1x8xf32>
    %219 = arith.subf %215, %218 : vector<2x1x8xf32>
    %220 = math.exp %219 : vector<2x1x8xf32>
    %cst_93 = arith.constant dense<0.000000e+00> : vector<2x1xf32>
    %221 = vector.multi_reduction <add>, %220, %cst_93 [2] : vector<2x1x8xf32> to vector<2x1xf32>
    %222 = vector.shape_cast %221 : vector<2x1xf32> to vector<2x1x1xf32>
    %223 = tpu.reciprocal %222 {approx = true} : vector<2x1x1xf32> -> vector<2x1x1xf32>
    %224 = vector.broadcast %223 : vector<2x1x1xf32> to vector<2x1x8xf32>
    %225 = arith.mulf %220, %224 : vector<2x1x8xf32>
    %226 = vector.extract_strided_slice %170 {offsets = [0, 0, 64], sizes = [2, 8, 32], strides = [1, 1, 1]} : vector<2x8x128xf32> to vector<2x8x32xf32>
    "tpu.trace_start"() <{level = 10 : i32, message = "bqk,bkd->bqd"}> : () -> ()
    %cst_94 = arith.constant dense<0.000000e+00> : vector<2x1x32xf32>
    %227 = tpu.matmul %225, %226, %cst_94 {dimension_numbers = #tpu.dot_dimension_numbers<[2], [1], [1], [2], [0, 0, 0, 1, 1, 2], [0], [0]>} : vector<2x1x8xf32>, vector<2x8x32xf32>, vector<2x1x32xf32> -> vector<2x1x32xf32>
    "tpu.trace_stop"() : () -> ()
    %228 = vector.extract_strided_slice %182 {offsets = [0, 0, 96], sizes = [2, 1, 32], strides = [1, 1, 1]} : vector<2x1x128xf32> to vector<2x1x32xf32>
    %229 = vector.extract_strided_slice %163 {offsets = [0, 0, 96], sizes = [2, 8, 32], strides = [1, 1, 1]} : vector<2x8x128xf32> to vector<2x8x32xf32>
    "tpu.trace_start"() <{level = 10 : i32, message = "bqd,bkd->bqk"}> : () -> ()
    %cst_95 = arith.constant dense<0.000000e+00> : vector<2x1x8xf32>
    %230 = tpu.matmul %228, %229, %cst_95 {dimension_numbers = #tpu.dot_dimension_numbers<[2], [2], [1], [1], [0, 0, 0, 1, 1, 1], [0], [0]>} : vector<2x1x32xf32>, vector<2x8x32xf32>, vector<2x1x8xf32> -> vector<2x1x8xf32>
    "tpu.trace_stop"() : () -> ()
    %cst_96 = arith.constant dense<0xFF800000> : vector<2x1xf32>
    %231 = vector.multi_reduction <maximumf>, %230, %cst_96 [2] : vector<2x1x8xf32> to vector<2x1xf32>
    %232 = vector.shape_cast %231 : vector<2x1xf32> to vector<2x1x1xf32>
    %233 = vector.broadcast %232 : vector<2x1x1xf32> to vector<2x1x8xf32>
    %234 = arith.subf %230, %233 : vector<2x1x8xf32>
    %235 = math.exp %234 : vector<2x1x8xf32>
    %cst_97 = arith.constant dense<0.000000e+00> : vector<2x1xf32>
    %236 = vector.multi_reduction <add>, %235, %cst_97 [2] : vector<2x1x8xf32> to vector<2x1xf32>
    %237 = vector.shape_cast %236 : vector<2x1xf32> to vector<2x1x1xf32>
    %238 = tpu.reciprocal %237 {approx = true} : vector<2x1x1xf32> -> vector<2x1x1xf32>
    %239 = vector.broadcast %238 : vector<2x1x1xf32> to vector<2x1x8xf32>
    %240 = arith.mulf %235, %239 : vector<2x1x8xf32>
    %241 = vector.extract_strided_slice %170 {offsets = [0, 0, 96], sizes = [2, 8, 32], strides = [1, 1, 1]} : vector<2x8x128xf32> to vector<2x8x32xf32>
    "tpu.trace_start"() <{level = 10 : i32, message = "bqk,bkd->bqd"}> : () -> ()
    %cst_98 = arith.constant dense<0.000000e+00> : vector<2x1x32xf32>
    %242 = tpu.matmul %240, %241, %cst_98 {dimension_numbers = #tpu.dot_dimension_numbers<[2], [1], [1], [2], [0, 0, 0, 1, 1, 2], [0], [0]>} : vector<2x1x8xf32>, vector<2x8x32xf32>, vector<2x1x32xf32> -> vector<2x1x32xf32>
    "tpu.trace_stop"() : () -> ()
    %243 = tpu.concatenate %197, %212, %227, %242 in 2 : vector<2x1x32xf32>, vector<2x1x32xf32>, vector<2x1x32xf32>, vector<2x1x32xf32> -> vector<2x1x128xf32>
    %244 = vector.shape_cast %243 : vector<2x1x128xf32> to vector<2x128xf32>
    %245 = arith.truncf %244 : vector<2x128xf32> to vector<2x128xbf16>
    %c0_99 = arith.constant 0 : index
    %c0_100 = arith.constant 0 : index
    %246 = vector.load %arg24[%c0_99, %c0_100] : memref<128x128xbf16, #tpu.memory_space<vmem>>, vector<128x128xbf16>
    %cst_101 = arith.constant dense<0.000000e+00> : vector<2x128xf32>
    %247 = tpu.matmul %245, %246, %cst_101 {dimension_numbers = #tpu.dot_dimension_numbers<[1], [0], [0], [1], [0, 0, 1, 1], [], []>} : vector<2x128xbf16>, vector<128x128xbf16>, vector<2x128xf32> -> vector<2x128xf32>
    %c0_102 = arith.constant 0 : index
    %c0_103 = arith.constant 0 : index
    %248 = vector.load %arg25[%c0_102, %c0_103] : memref<1x128xf32, #tpu.memory_space<vmem>>, vector<1x128xf32>
    %249 = vector.broadcast %248 : vector<1x128xf32> to vector<2x128xf32>
    %250 = arith.addf %247, %249 : vector<2x128xf32>
    %251 = arith.addf %173, %250 : vector<2x128xf32>
    %c0_104 = arith.constant 0 : index
    %c0_105 = arith.constant 0 : index
    %252 = vector.load %arg26[%c0_104, %c0_105] : memref<1x128xf32, #tpu.memory_space<vmem>>, vector<1x128xf32>
    %c0_106 = arith.constant 0 : index
    %c0_107 = arith.constant 0 : index
    %253 = vector.load %arg27[%c0_106, %c0_107] : memref<1x128xf32, #tpu.memory_space<vmem>>, vector<1x128xf32>
    %cst_108 = arith.constant dense<0.000000e+00> : vector<2xf32>
    %254 = vector.multi_reduction <add>, %251, %cst_108 [1] : vector<2x128xf32> to vector<2xf32>
    %255 = vector.shape_cast %254 : vector<2xf32> to vector<2x1xf32>
    %cst_109 = arith.constant 1.280000e+02 : f32
    %256 = vector.broadcast %cst_109 : f32 to vector<2x1xf32>
    %257 = arith.divf %255, %256 : vector<2x1xf32>
    %258 = vector.broadcast %257 : vector<2x1xf32> to vector<2x128xf32>
    %259 = arith.subf %251, %258 : vector<2x128xf32>
    %260 = arith.mulf %259, %259 : vector<2x128xf32>
    %cst_110 = arith.constant dense<0.000000e+00> : vector<2xf32>
    %261 = vector.multi_reduction <add>, %260, %cst_110 [1] : vector<2x128xf32> to vector<2xf32>
    %262 = vector.shape_cast %261 : vector<2xf32> to vector<2x1xf32>
    %cst_111 = arith.constant 1.280000e+02 : f32
    %263 = vector.broadcast %cst_111 : f32 to vector<2x1xf32>
    %264 = arith.divf %262, %263 : vector<2x1xf32>
    %265 = vector.broadcast %257 : vector<2x1xf32> to vector<2x128xf32>
    %266 = arith.subf %251, %265 : vector<2x128xf32>
    %cst_112 = arith.constant 9.99999974E-6 : f32
    %267 = vector.broadcast %cst_112 : f32 to vector<2x1xf32>
    %268 = arith.addf %264, %267 : vector<2x1xf32>
    %269 = math.rsqrt %268 : vector<2x1xf32>
    %270 = vector.broadcast %269 : vector<2x1xf32> to vector<2x128xf32>
    %271 = arith.mulf %266, %270 : vector<2x128xf32>
    %272 = vector.broadcast %252 : vector<1x128xf32> to vector<2x128xf32>
    %273 = arith.mulf %271, %272 : vector<2x128xf32>
    %274 = vector.broadcast %253 : vector<1x128xf32> to vector<2x128xf32>
    %275 = arith.addf %273, %274 : vector<2x128xf32>
    %276 = arith.truncf %275 : vector<2x128xf32> to vector<2x128xbf16>
    %c0_113 = arith.constant 0 : index
    %c0_114 = arith.constant 0 : index
    %277 = vector.load %arg28[%c0_113, %c0_114] : memref<128x2048xbf16, #tpu.memory_space<vmem>>, vector<128x2048xbf16>
    %cst_115 = arith.constant dense<0.000000e+00> : vector<2x2048xf32>
    %278 = tpu.matmul %276, %277, %cst_115 {dimension_numbers = #tpu.dot_dimension_numbers<[1], [0], [0], [1], [0, 0, 1, 1], [], []>} : vector<2x128xbf16>, vector<128x2048xbf16>, vector<2x2048xf32> -> vector<2x2048xf32>
    %c0_116 = arith.constant 0 : index
    %c0_117 = arith.constant 0 : index
    %279 = vector.load %arg29[%c0_116, %c0_117] : memref<1x2048xf32, #tpu.memory_space<vmem>>, vector<1x2048xf32>
    %280 = vector.broadcast %279 : vector<1x2048xf32> to vector<2x2048xf32>
    %281 = arith.addf %278, %280 : vector<2x2048xf32>
    %cst_118 = arith.constant 0.000000e+00 : f32
    %282 = vector.broadcast %cst_118 : f32 to vector<2x2048xf32>
    %283 = arith.maximumf %281, %282 : vector<2x2048xf32>
    %284 = arith.truncf %283 : vector<2x2048xf32> to vector<2x2048xbf16>
    %c0_119 = arith.constant 0 : index
    %c0_120 = arith.constant 0 : index
    %285 = vector.load %arg30[%c0_119, %c0_120] : memref<2048x128xbf16, #tpu.memory_space<vmem>>, vector<2048x128xbf16>
    %cst_121 = arith.constant dense<0.000000e+00> : vector<2x128xf32>
    %286 = tpu.matmul %284, %285, %cst_121 {dimension_numbers = #tpu.dot_dimension_numbers<[1], [0], [0], [1], [0, 0, 1, 1], [], []>} : vector<2x2048xbf16>, vector<2048x128xbf16>, vector<2x128xf32> -> vector<2x128xf32>
    %c0_122 = arith.constant 0 : index
    %c0_123 = arith.constant 0 : index
    %287 = vector.load %arg31[%c0_122, %c0_123] : memref<1x128xf32, #tpu.memory_space<vmem>>, vector<1x128xf32>
    %288 = vector.broadcast %287 : vector<1x128xf32> to vector<2x128xf32>
    %289 = arith.addf %286, %288 : vector<2x128xf32>
    %290 = arith.addf %275, %289 : vector<2x128xf32>
    %c0_124 = arith.constant 0 : index
    %c0_125 = arith.constant 0 : index
    %291 = vector.load %arg32[%c0_124, %c0_125] : memref<1x128xf32, #tpu.memory_space<vmem>>, vector<1x128xf32>
    %c0_126 = arith.constant 0 : index
    %c0_127 = arith.constant 0 : index
    %292 = vector.load %arg33[%c0_126, %c0_127] : memref<1x128xf32, #tpu.memory_space<vmem>>, vector<1x128xf32>
    %cst_128 = arith.constant dense<0.000000e+00> : vector<2xf32>
    %293 = vector.multi_reduction <add>, %290, %cst_128 [1] : vector<2x128xf32> to vector<2xf32>
    %294 = vector.shape_cast %293 : vector<2xf32> to vector<2x1xf32>
    %cst_129 = arith.constant 1.280000e+02 : f32
    %295 = vector.broadcast %cst_129 : f32 to vector<2x1xf32>
    %296 = arith.divf %294, %295 : vector<2x1xf32>
    %297 = vector.broadcast %296 : vector<2x1xf32> to vector<2x128xf32>
    %298 = arith.subf %290, %297 : vector<2x128xf32>
    %299 = arith.mulf %298, %298 : vector<2x128xf32>
    %cst_130 = arith.constant dense<0.000000e+00> : vector<2xf32>
    %300 = vector.multi_reduction <add>, %299, %cst_130 [1] : vector<2x128xf32> to vector<2xf32>
    %301 = vector.shape_cast %300 : vector<2xf32> to vector<2x1xf32>
    %cst_131 = arith.constant 1.280000e+02 : f32
    %302 = vector.broadcast %cst_131 : f32 to vector<2x1xf32>
    %303 = arith.divf %301, %302 : vector<2x1xf32>
    %304 = vector.broadcast %296 : vector<2x1xf32> to vector<2x128xf32>
    %305 = arith.subf %290, %304 : vector<2x128xf32>
    %cst_132 = arith.constant 9.99999974E-6 : f32
    %306 = vector.broadcast %cst_132 : f32 to vector<2x1xf32>
    %307 = arith.addf %303, %306 : vector<2x1xf32>
    %308 = math.rsqrt %307 : vector<2x1xf32>
    %309 = vector.broadcast %308 : vector<2x1xf32> to vector<2x128xf32>
    %310 = arith.mulf %305, %309 : vector<2x128xf32>
    %311 = vector.broadcast %291 : vector<1x128xf32> to vector<2x128xf32>
    %312 = arith.mulf %310, %311 : vector<2x128xf32>
    %313 = vector.broadcast %292 : vector<1x128xf32> to vector<2x128xf32>
    %314 = arith.addf %312, %313 : vector<2x128xf32>
    %315 = arith.truncf %314 : vector<2x128xf32> to vector<2x128xbf16>
    %c0_133 = arith.constant 0 : index
    %c0_134 = arith.constant 0 : index
    %316 = vector.load %arg34[%c0_133, %c0_134] : memref<128x256xbf16, #tpu.memory_space<vmem>>, vector<128x256xbf16>
    %cst_135 = arith.constant dense<0.000000e+00> : vector<2x256xf32>
    %317 = tpu.matmul %315, %316, %cst_135 {dimension_numbers = #tpu.dot_dimension_numbers<[1], [0], [0], [1], [0, 0, 1, 1], [], []>} : vector<2x128xbf16>, vector<128x256xbf16>, vector<2x256xf32> -> vector<2x256xf32>
    %c0_136 = arith.constant 0 : index
    %c0_137 = arith.constant 0 : index
    %318 = vector.load %arg35[%c0_136, %c0_137] : memref<1x256xf32, #tpu.memory_space<vmem>>, vector<1x256xf32>
    %319 = vector.broadcast %318 : vector<1x256xf32> to vector<2x256xf32>
    %320 = arith.addf %317, %319 : vector<2x256xf32>
    %c0_138 = arith.constant 0 : index
    %c0_139 = arith.constant 0 : index
    %321 = vector.load %arg36[%c0_138, %c0_139] : memref<2x256xf32, #tpu.memory_space<vmem>>, vector<2x256xf32>
    tpu.vector_store %arg36[%c0_138, %c0_139], %320 {strides = array<i32>} : memref<2x256xf32, #tpu.memory_space<vmem>>, vector<2x256xf32>,
    return
  }
  func.func @transform_0(%arg0: i32) -> (i32, i32, i32) {
    %c0_i32 = arith.constant 0 : i32
    %c0_i32_0 = arith.constant 0 : i32
    %c0_i32_1 = arith.constant 0 : i32
    return %arg0, %c0_i32, %c0_i32_0 : i32, i32, i32
  }
  func.func @transform_1(%arg0: i32) -> (i32, i32) {
    %c0_i32 = arith.constant 0 : i32
    %c0_i32_0 = arith.constant 0 : i32
    %c0_i32_1 = arith.constant 0 : i32
    return %c0_i32, %c0_i32_0 : i32, i32
  }
  func.func @transform_2(%arg0: i32) -> (i32, i32) {
    %c0_i32 = arith.constant 0 : i32
    %c0_i32_0 = arith.constant 0 : i32
    %c0_i32_1 = arith.constant 0 : i32
    return %c0_i32, %c0_i32_0 : i32, i32
  }
  func.func @transform_3(%arg0: i32) -> (i32, i32) {
    %c0_i32 = arith.constant 0 : i32
    %c0_i32_0 = arith.constant 0 : i32
    %c0_i32_1 = arith.constant 0 : i32
    return %c0_i32, %c0_i32_0 : i32, i32
  }
  func.func @transform_4(%arg0: i32) -> (i32, i32) {
    %c0_i32 = arith.constant 0 : i32
    %c0_i32_0 = arith.constant 0 : i32
    %c0_i32_1 = arith.constant 0 : i32
    return %c0_i32, %c0_i32_0 : i32, i32
  }
  func.func @transform_5(%arg0: i32) -> (i32, i32) {
    %c0_i32 = arith.constant 0 : i32
    %c0_i32_0 = arith.constant 0 : i32
    %c0_i32_1 = arith.constant 0 : i32
    return %c0_i32, %c0_i32_0 : i32, i32
  }
  func.func @transform_6(%arg0: i32) -> (i32, i32) {
    %c0_i32 = arith.constant 0 : i32
    %c0_i32_0 = arith.constant 0 : i32
    %c0_i32_1 = arith.constant 0 : i32
    return %c0_i32, %c0_i32_0 : i32, i32
  }
  func.func @transform_7(%arg0: i32) -> (i32, i32) {
    %c0_i32 = arith.constant 0 : i32
    %c0_i32_0 = arith.constant 0 : i32
    %c0_i32_1 = arith.constant 0 : i32
    return %c0_i32, %c0_i32_0 : i32, i32
  }
  func.func @transform_8(%arg0: i32) -> (i32, i32) {
    %c0_i32 = arith.constant 0 : i32
    %c0_i32_0 = arith.constant 0 : i32
    %c0_i32_1 = arith.constant 0 : i32
    return %c0_i32, %c0_i32_0 : i32, i32
  }
  func.func @transform_9(%arg0: i32) -> (i32, i32) {
    %c0_i32 = arith.constant 0 : i32
    %c0_i32_0 = arith.constant 0 : i32
    %c0_i32_1 = arith.constant 0 : i32
    return %c0_i32, %c0_i32_0 : i32, i32
  }
  func.func @transform_10(%arg0: i32) -> (i32, i32) {
    %c0_i32 = arith.constant 0 : i32
    %c0_i32_0 = arith.constant 0 : i32
    %c0_i32_1 = arith.constant 0 : i32
    return %c0_i32, %c0_i32_0 : i32, i32
  }
  func.func @transform_11(%arg0: i32) -> (i32, i32) {
    %c0_i32 = arith.constant 0 : i32
    %c0_i32_0 = arith.constant 0 : i32
    %c0_i32_1 = arith.constant 0 : i32
    return %c0_i32, %c0_i32_0 : i32, i32
  }
  func.func @transform_12(%arg0: i32) -> (i32, i32) {
    %c0_i32 = arith.constant 0 : i32
    %c0_i32_0 = arith.constant 0 : i32
    %c0_i32_1 = arith.constant 0 : i32
    return %c0_i32, %c0_i32_0 : i32, i32
  }
  func.func @transform_13(%arg0: i32) -> (i32, i32) {
    %c0_i32 = arith.constant 0 : i32
    %c0_i32_0 = arith.constant 0 : i32
    %c0_i32_1 = arith.constant 0 : i32
    return %c0_i32, %c0_i32_0 : i32, i32
  }
  func.func @transform_14(%arg0: i32) -> (i32, i32) {
    %c0_i32 = arith.constant 0 : i32
    %c0_i32_0 = arith.constant 0 : i32
    %c0_i32_1 = arith.constant 0 : i32
    return %c0_i32, %c0_i32_0 : i32, i32
  }
  func.func @transform_15(%arg0: i32) -> (i32, i32) {
    %c0_i32 = arith.constant 0 : i32
    %c0_i32_0 = arith.constant 0 : i32
    %c0_i32_1 = arith.constant 0 : i32
    return %c0_i32, %c0_i32_0 : i32, i32
  }
  func.func @transform_16(%arg0: i32) -> (i32, i32) {
    %c0_i32 = arith.constant 0 : i32
    %c0_i32_0 = arith.constant 0 : i32
    %c0_i32_1 = arith.constant 0 : i32
    return %c0_i32, %c0_i32_0 : i32, i32
  }
  func.func @transform_17(%arg0: i32) -> (i32, i32) {
    %c0_i32 = arith.constant 0 : i32
    %c0_i32_0 = arith.constant 0 : i32
    %c0_i32_1 = arith.constant 0 : i32
    return %c0_i32, %c0_i32_0 : i32, i32
  }
  func.func @transform_18(%arg0: i32) -> (i32, i32) {
    %c0_i32 = arith.constant 0 : i32
    %c0_i32_0 = arith.constant 0 : i32
    %c0_i32_1 = arith.constant 0 : i32
    return %c0_i32, %c0_i32_0 : i32, i32
  }
  func.func @transform_19(%arg0: i32) -> (i32, i32) {
    %c0_i32 = arith.constant 0 : i32
    %c0_i32_0 = arith.constant 0 : i32
    %c0_i32_1 = arith.constant 0 : i32
    return %c0_i32, %c0_i32_0 : i32, i32
  }
  func.func @transform_20(%arg0: i32) -> (i32, i32) {
    %c0_i32 = arith.constant 0 : i32
    %c0_i32_0 = arith.constant 0 : i32
    %c0_i32_1 = arith.constant 0 : i32
    return %c0_i32, %c0_i32_0 : i32, i32
  }
  func.func @transform_21(%arg0: i32) -> (i32, i32) {
    %c0_i32 = arith.constant 0 : i32
    %c0_i32_0 = arith.constant 0 : i32
    %c0_i32_1 = arith.constant 0 : i32
    return %c0_i32, %c0_i32_0 : i32, i32
  }
  func.func @transform_22(%arg0: i32) -> (i32, i32) {
    %c0_i32 = arith.constant 0 : i32
    %c0_i32_0 = arith.constant 0 : i32
    %c0_i32_1 = arith.constant 0 : i32
    return %c0_i32, %c0_i32_0 : i32, i32
  }
  func.func @transform_23(%arg0: i32) -> (i32, i32) {
    %c0_i32 = arith.constant 0 : i32
    %c0_i32_0 = arith.constant 0 : i32
    %c0_i32_1 = arith.constant 0 : i32
    return %c0_i32, %c0_i32_0 : i32, i32
  }
  func.func @transform_24(%arg0: i32) -> (i32, i32) {
    %c0_i32 = arith.constant 0 : i32
    %c0_i32_0 = arith.constant 0 : i32
    %c0_i32_1 = arith.constant 0 : i32
    return %c0_i32, %c0_i32_0 : i32, i32
  }
  func.func @transform_25(%arg0: i32) -> (i32, i32) {
    %c0_i32 = arith.constant 0 : i32
    %c0_i32_0 = arith.constant 0 : i32
    %c0_i32_1 = arith.constant 0 : i32
    return %c0_i32, %c0_i32_0 : i32, i32
  }
  func.func @transform_26(%arg0: i32) -> (i32, i32) {
    %c0_i32 = arith.constant 0 : i32
    %c0_i32_0 = arith.constant 0 : i32
    %c0_i32_1 = arith.constant 0 : i32
    return %c0_i32, %c0_i32_0 : i32, i32
  }
  func.func @transform_27(%arg0: i32) -> (i32, i32) {
    %c0_i32 = arith.constant 0 : i32
    %c0_i32_0 = arith.constant 0 : i32
    %c0_i32_1 = arith.constant 0 : i32
    return %c0_i32, %c0_i32_0 : i32, i32
  }
  func.func @transform_28(%arg0: i32) -> (i32, i32) {
    %c0_i32 = arith.constant 0 : i32
    %c0_i32_0 = arith.constant 0 : i32
    %c0_i32_1 = arith.constant 0 : i32
    return %c0_i32, %c0_i32_0 : i32, i32
  }
  func.func @transform_29(%arg0: i32) -> (i32, i32) {
    %c0_i32 = arith.constant 0 : i32
    %c0_i32_0 = arith.constant 0 : i32
    %c0_i32_1 = arith.constant 0 : i32
    return %c0_i32, %c0_i32_0 : i32, i32
  }
  func.func @transform_30(%arg0: i32) -> (i32, i32) {
    %c0_i32 = arith.constant 0 : i32
    %c0_i32_0 = arith.constant 0 : i32
    %c0_i32_1 = arith.constant 0 : i32
    return %c0_i32, %c0_i32_0 : i32, i32
  }
  func.func @transform_31(%arg0: i32) -> (i32, i32) {
    %c0_i32 = arith.constant 0 : i32
    %c0_i32_0 = arith.constant 0 : i32
    %c0_i32_1 = arith.constant 0 : i32
    return %c0_i32, %c0_i32_0 : i32, i32
  }
  func.func @transform_32(%arg0: i32) -> (i32, i32) {
    %c0_i32 = arith.constant 0 : i32
    %c0_i32_0 = arith.constant 0 : i32
    %c0_i32_1 = arith.constant 0 : i32
    return %c0_i32, %c0_i32_0 : i32, i32
  }
  func.func @transform_33(%arg0: i32) -> (i32, i32) {
    %c0_i32 = arith.constant 0 : i32
    %c0_i32_0 = arith.constant 0 : i32
    %c0_i32_1 = arith.constant 0 : i32
    return %c0_i32, %c0_i32_0 : i32, i32
  }
  func.func @transform_34(%arg0: i32) -> (i32, i32) {
    %c0_i32 = arith.constant 0 : i32
    %c0_i32_0 = arith.constant 0 : i32
    %c0_i32_1 = arith.constant 0 : i32
    return %c0_i32, %c0_i32_0 : i32, i32
  }
  func.func @transform_35(%arg0: i32) -> (i32, i32) {
    %c0_i32 = arith.constant 0 : i32
    %c0_i32_0 = arith.constant 0 : i32
    return %arg0, %c0_i32 : i32, i32
  }
}

</mosaic_0001>

<llo_original>
// kernel: tpu_custom_call.1
$region0: #{tpu_custom_call.1}
  #allocation0 [shape = 'u32[]', space=smem, size = 0x4, offset = 0x4, fixed_abs, tag = 'smem constant byte address 0x4 - core index']
  #allocation1 [shape = 'u32[144,128]{1,0:T(1,128)}', space=vmem, size = 0x12000, scoped, tag = 'internal scratch']
  %s0 = inlined_call_operand.smem [shape: u32[36], index: -1, kind: input, shape index: {}]
  %s1 = sld [smem:[%s0]]
  %s2 = scalar_lea.smem %s0, 1
  %s3 = sld [smem:[%s2]]
  %s4 = scalar_lea.smem %s0, 2
  %s5 = sld [smem:[%s4]]
  %s6 = scalar_lea.smem %s0, 3
  %s7 = sld [smem:[%s6]]
  %s8 = scalar_lea.smem %s0, 4
  %s9 = sld [smem:[%s8]]
  %s10 = scalar_lea.smem %s0, 5
  %s11 = sld [smem:[%s10]]
  %s12 = scalar_lea.smem %s0, 6
  %s13 = sld [smem:[%s12]]
  %s14 = scalar_lea.smem %s0, 7
  %s15 = sld [smem:[%s14]]
  %s16 = scalar_lea.smem %s0, 8
  %s17 = sld [smem:[%s16]]
  %s18 = scalar_lea.smem %s0, 9
  %s19 = sld [smem:[%s18]]
  %s20 = scalar_lea.smem %s0, 10
  %s21 = sld [smem:[%s20]]
  %s22 = scalar_lea.smem %s0, 11
  %s23 = sld [smem:[%s22]]
  %s24 = scalar_lea.smem %s0, 12
  %s25 = sld [smem:[%s24]]
  %s26 = scalar_lea.smem %s0, 13
  %s27 = sld [smem:[%s26]]
  %s28 = scalar_lea.smem %s0, 14
  %s29 = sld [smem:[%s28]]
  %s30 = scalar_lea.smem %s0, 15
  %s31 = sld [smem:[%s30]]
  %s32 = scalar_lea.smem %s0, 16
  %s33 = sld [smem:[%s32]]
  %s34 = scalar_lea.smem %s0, 17
  %s35 = sld [smem:[%s34]]
  %s36 = scalar_lea.smem %s0, 18
  %s37 = sld [smem:[%s36]]
  %s38 = scalar_lea.smem %s0, 19
  %s39 = sld [smem:[%s38]]
  %s40 = scalar_lea.smem %s0, 20
  %s41 = sld [smem:[%s40]]
  %s42 = scalar_lea.smem %s0, 21
  %s43 = sld [smem:[%s42]]
  %s44 = scalar_lea.smem %s0, 22
  %s45 = sld [smem:[%s44]]
  %s46 = scalar_lea.smem %s0, 23
  %s47 = sld [smem:[%s46]]
  %s48 = scalar_lea.smem %s0, 24
  %s49 = sld [smem:[%s48]]
  %s50 = scalar_lea.smem %s0, 25
  %s51 = sld [smem:[%s50]]
  %s52 = scalar_lea.smem %s0, 26
  %s53 = sld [smem:[%s52]]
  %s54 = scalar_lea.smem %s0, 27
  %s55 = sld [smem:[%s54]]
  %s56 = scalar_lea.smem %s0, 28
  %s57 = sld [smem:[%s56]]
  %s58 = scalar_lea.smem %s0, 29
  %s59 = sld [smem:[%s58]]
  %s60 = scalar_lea.smem %s0, 30
  %s61 = sld [smem:[%s60]]
  %s62 = scalar_lea.smem %s0, 31
  %s63 = sld [smem:[%s62]]
  %s64 = scalar_lea.smem %s0, 32
  %s65 = sld [smem:[%s64]]
  %s66 = scalar_lea.smem %s0, 33
  %s67 = sld [smem:[%s66]]
  %s68 = scalar_lea.smem %s0, 34
  %s69 = sld [smem:[%s68]]
  %s70 = scalar_lea.smem %s0, 35
  %s71 = sld [smem:[%s70]]
  %s72 = sld [smem:[#allocation0]]
  $region246: #{tpu_custom_call.1} parent=0
    _
  %s74 = ssub.s32 1, %s72
  %s75 = scalar_select 0, %s74, %s72
  $region1: #{tpu_custom_call.1} parent=0
    #allocation2 [shape = 'u8[8192]{0}', space=vmem, size = 0x2000, scoped, tag = 'input window, operand 0, single buffered']
    #allocation3 [shape = 's32[1]{0}', space=sflag, size = 0x4, scoped, tag = 'scoped memory for tpu_custom_call.1']
    #allocation4 [shape = 's32[1]{0}', space=sflag, size = 0x4, scoped, tag = 'scoped memory for tpu_custom_call.1']
    #allocation5 [shape = 'u8[32768]{0}', space=vmem, size = 0x8000, scoped, tag = 'input window, operand 1, single buffered']
    #allocation6 [shape = 's32[1]{0}', space=sflag, size = 0x4, scoped, tag = 'scoped memory for tpu_custom_call.1']
    #allocation7 [shape = 'u8[512]{0}', space=vmem, size = 0x400, scoped, tag = 'input window, operand 2, single buffered']
    #allocation8 [shape = 'u8[32768]{0}', space=vmem, size = 0x8000, scoped, tag = 'input window, operand 3, single buffered']
    #allocation9 [shape = 's32[1]{0}', space=sflag, size = 0x4, scoped, tag = 'scoped memory for tpu_custom_call.1']
    #allocation10 [shape = 'u8[512]{0}', space=vmem, size = 0x400, scoped, tag = 'input window, operand 4, single buffered']
    #allocation11 [shape = 'u8[32768]{0}', space=vmem, size = 0x8000, scoped, tag = 'input window, operand 5, single buffered']
    #allocation12 [shape = 's32[1]{0}', space=sflag, size = 0x4, scoped, tag = 'scoped memory for tpu_custom_call.1']
    #allocation13 [shape = 'u8[512]{0}', space=vmem, size = 0x400, scoped, tag = 'input window, operand 6, single buffered']
    #allocation14 [shape = 'u8[32768]{0}', space=vmem, size = 0x8000, scoped, tag = 'input window, operand 7, single buffered']
    #allocation15 [shape = 's32[1]{0}', space=sflag, size = 0x4, scoped, tag = 'scoped memory for tpu_custom_call.1']
    #allocation16 [shape = 'u8[512]{0}', space=vmem, size = 0x400, scoped, tag = 'input window, operand 8, single buffered']
    #allocation17 [shape = 'u8[512]{0}', space=vmem, size = 0x400, scoped, tag = 'input window, operand 9, single buffered']
    #allocation18 [shape = 's32[1]{0}', space=sflag, size = 0x4, scoped, tag = 'scoped memory for tpu_custom_call.1']
    #allocation19 [shape = 'u8[512]{0}', space=vmem, size = 0x400, scoped, tag = 'input window, operand 10, single buffered']
    #allocation20 [shape = 'u8[524288]{0}', space=vmem, size = 0x80000, scoped, tag = 'input window, operand 11, single buffered']
    #allocation21 [shape = 's32[1]{0}', space=sflag, size = 0x4, scoped, tag = 'scoped memory for tpu_custom_call.1']
    #allocation22 [shape = 'u8[524288]{0}', space=vmem, size = 0x80000, scoped, tag = 'input window, operand 13, single buffered']
    #allocation23 [shape = 'u8[512]{0}', space=vmem, size = 0x400, scoped, tag = 'input window, operand 14, single buffered']
    #allocation24 [shape = 's32[1]{0}', space=sflag, size = 0x4, scoped, tag = 'scoped memory for tpu_custom_call.1']
    #allocation25 [shape = 'u8[512]{0}', space=vmem, size = 0x400, scoped, tag = 'input window, operand 15, single buffered']
    #allocation26 [shape = 'u8[512]{0}', space=vmem, size = 0x400, scoped, tag = 'input window, operand 16, single buffered']
    #allocation27 [shape = 's32[1]{0}', space=sflag, size = 0x4, scoped, tag = 'scoped memory for tpu_custom_call.1']
    #allocation28 [shape = 'u8[32768]{0}', space=vmem, size = 0x8000, scoped, tag = 'input window, operand 17, single buffered']
    #allocation29 [shape = 'u8[512]{0}', space=vmem, size = 0x400, scoped, tag = 'input window, operand 18, single buffered']
    #allocation30 [shape = 's32[1]{0}', space=sflag, size = 0x4, scoped, tag = 'scoped memory for tpu_custom_call.1']
    #allocation31 [shape = 'u8[32768]{0}', space=vmem, size = 0x8000, scoped, tag = 'input window, operand 19, single buffered']
    #allocation32 [shape = 'u8[32768]{0}', space=vmem, size = 0x8000, scoped, tag = 'input window, operand 21, single buffered']
    #allocation33 [shape = 's32[1]{0}', space=sflag, size = 0x4, scoped, tag = 'scoped memory for tpu_custom_call.1']
    #allocation34 [shape = 'u8[32768]{0}', space=vmem, size = 0x8000, scoped, tag = 'input window, operand 23, single buffered']
    #allocation35 [shape = 'u8[524288]{0}', space=vmem, size = 0x80000, scoped, tag = 'input window, operand 27, single buffered']
    #allocation36 [shape = 's32[1]{0}', space=sflag, size = 0x4, scoped, tag = 'scoped memory for tpu_custom_call.1']
    #allocation37 [shape = 'u8[524288]{0}', space=vmem, size = 0x80000, scoped, tag = 'input window, operand 29, single buffered']
    #allocation38 [shape = 'u8[65536]{0}', space=vmem, size = 0x10000, scoped, tag = 'input window, operand 33, single buffered']
    #allocation39 [shape = 's32[1]{0}', space=sflag, size = 0x4, scoped, tag = 'scoped memory for tpu_custom_call.1']
    #allocation40 [shape = 'u8[2048]{0}', space=vmem, size = 0x800, scoped, tag = 'output window, operand 0, single buffered']
    %76 = vsyncpa [#allocation3], 0
    %77 = vsyncpa [#allocation6], 0
    %78 = vsyncpa [#allocation9], 0
    %79 = vsyncpa [#allocation12], 0
    %80 = vsyncpa [#allocation15], 0
    %81 = vsyncpa [#allocation18], 0
    %82 = vsyncpa [#allocation21], 0
    %83 = vsyncpa [#allocation24], 0
    %84 = vsyncpa [#allocation27], 0
    %85 = vsyncpa [#allocation30], 0
    %86 = vsyncpa [#allocation33], 0
    %87 = vsyncpa [#allocation36], 0
    %88 = vsyncpa [#allocation39], 0
    %89 = vsyncpa [#allocation4], 0
    // Predicated region
    $region2: #{tpu_custom_call.1} parent=1 // pred_check
      _
    $region3: #{tpu_custom_call.1} parent=1 // pred_check_branch
      %91 = sbr.rel (0) target = $region5
    $region4: #{tpu_custom_call.1} parent=1 // pred_region
      %s93 = ssub.s32 256, 256
      %94 = vsyncadd [#allocation3], %s93
      %s95 = sshll.u32 [#allocation2], 4
      %s96 = int_to_ptr.vmem [resolvable:$true] %s95
      %101 = dma.hbm_to_vmem [thread:$0]  %s1, 256, %s96, [#allocation3], 128, 128, 8
    $region5: #{tpu_custom_call.1} parent=1 // pred_fallthru
      _
    // Predicated region
    $region6: #{tpu_custom_call.1} parent=1 // pred_check
      _
    $region7: #{tpu_custom_call.1} parent=1 // pred_check_branch
      %103 = sbr.rel (0) target = $region9
    $region8: #{tpu_custom_call.1} parent=1 // pred_region
      %s105 = ssub.s32 1024, 1024
      %106 = vsyncadd [#allocation6], %s105
      %s107 = sshll.u32 [#allocation5], 4
      %s108 = int_to_ptr.vmem [resolvable:$true] %s107
      %113 = dma.hbm_to_vmem [thread:$0]  %s3, 1024, %s108, [#allocation6], 64, 64, 4
    $region9: #{tpu_custom_call.1} parent=1 // pred_fallthru
      _
    // Predicated region
    $region10: #{tpu_custom_call.1} parent=1 // pred_check
      _
    $region11: #{tpu_custom_call.1} parent=1 // pred_check_branch
      %115 = sbr.rel (0) target = $region13
    $region12: #{tpu_custom_call.1} parent=1 // pred_region
      %s117 = ssub.s32 16, 16
      %118 = vsyncadd [#allocation6], %s117
      %s120 = sshll.u32 [#allocation7], 4
      %s121 = int_to_ptr.vmem [resolvable:$true] %s120
      %123 = dma.hbm_to_vmem [thread:$0]  %s5, 16, %s121, [#allocation6]
    $region13: #{tpu_custom_call.1} parent=1 // pred_fallthru
      _
    // Predicated region
    $region14: #{tpu_custom_call.1} parent=1 // pred_check
      _
    $region15: #{tpu_custom_call.1} parent=1 // pred_check_branch
      %125 = sbr.rel (0) target = $region17
    $region16: #{tpu_custom_call.1} parent=1 // pred_region
      %s127 = ssub.s32 1024, 1024
      %128 = vsyncadd [#allocation9], %s127
      %s129 = sshll.u32 [#allocation8], 4
      %s130 = int_to_ptr.vmem [resolvable:$true] %s129
      %135 = dma.hbm_to_vmem [thread:$0]  %s7, 1024, %s130, [#allocation9], 64, 64, 4
    $region17: #{tpu_custom_call.1} parent=1 // pred_fallthru
      _
    // Predicated region
    $region18: #{tpu_custom_call.1} parent=1 // pred_check
      _
    $region19: #{tpu_custom_call.1} parent=1 // pred_check_branch
      %137 = sbr.rel (0) target = $region21
    $region20: #{tpu_custom_call.1} parent=1 // pred_region
      %s139 = ssub.s32 16, 16
      %140 = vsyncadd [#allocation9], %s139
      %s142 = sshll.u32 [#allocation10], 4
      %s143 = int_to_ptr.vmem [resolvable:$true] %s142
      %145 = dma.hbm_to_vmem [thread:$0]  %s9, 16, %s143, [#allocation9]
    $region21: #{tpu_custom_call.1} parent=1 // pred_fallthru
      _
    // Predicated region
    $region22: #{tpu_custom_call.1} parent=1 // pred_check
      _
    $region23: #{tpu_custom_call.1} parent=1 // pred_check_branch
      %147 = sbr.rel (0) target = $region25
    $region24: #{tpu_custom_call.1} parent=1 // pred_region
      %s149 = ssub.s32 1024, 1024
      %150 = vsyncadd [#allocation12], %s149
      %s151 = sshll.u32 [#allocation11], 4
      %s152 = int_to_ptr.vmem [resolvable:$true] %s151
      %157 = dma.hbm_to_vmem [thread:$0]  %s11, 1024, %s152, [#allocation12], 64, 64, 4
    $region25: #{tpu_custom_call.1} parent=1 // pred_fallthru
      _
    // Predicated region
    $region26: #{tpu_custom_call.1} parent=1 // pred_check
      _
    $region27: #{tpu_custom_call.1} parent=1 // pred_check_branch
      %159 = sbr.rel (0) target = $region29
    $region28: #{tpu_custom_call.1} parent=1 // pred_region
      %s161 = ssub.s32 16, 16
      %162 = vsyncadd [#allocation12], %s161
      %s164 = sshll.u32 [#allocation13], 4
      %s165 = int_to_ptr.vmem [resolvable:$true] %s164
      %167 = dma.hbm_to_vmem [thread:$0]  %s13, 16, %s165, [#allocation12]
    $region29: #{tpu_custom_call.1} parent=1 // pred_fallthru
      _
    // Predicated region
    $region30: #{tpu_custom_call.1} parent=1 // pred_check
      _
    $region31: #{tpu_custom_call.1} parent=1 // pred_check_branch
      %169 = sbr.rel (0) target = $region33
    $region32: #{tpu_custom_call.1} parent=1 // pred_region
      %s171 = ssub.s32 1024, 1024
      %172 = vsyncadd [#allocation15], %s171
      %s173 = sshll.u32 [#allocation14], 4
      %s174 = int_to_ptr.vmem [resolvable:$true] %s173
      %179 = dma.hbm_to_vmem [thread:$0]  %s15, 1024, %s174, [#allocation15], 64, 64, 4
    $region33: #{tpu_custom_call.1} parent=1 // pred_fallthru
      _
    // Predicated region
    $region34: #{tpu_custom_call.1} parent=1 // pred_check
      _
    $region35: #{tpu_custom_call.1} parent=1 // pred_check_branch
      %181 = sbr.rel (0) target = $region37
    $region36: #{tpu_custom_call.1} parent=1 // pred_region
      %s183 = ssub.s32 16, 16
      %184 = vsyncadd [#allocation15], %s183
      %s186 = sshll.u32 [#allocation16], 4
      %s187 = int_to_ptr.vmem [resolvable:$true] %s186
      %189 = dma.hbm_to_vmem [thread:$0]  %s17, 16, %s187, [#allocation15]
    $region37: #{tpu_custom_call.1} parent=1 // pred_fallthru
      _
    // Predicated region
    $region38: #{tpu_custom_call.1} parent=1 // pred_check
      _
    $region39: #{tpu_custom_call.1} parent=1 // pred_check_branch
      %191 = sbr.rel (0) target = $region41
    $region40: #{tpu_custom_call.1} parent=1 // pred_region
      %s193 = ssub.s32 16, 16
      %194 = vsyncadd [#allocation18], %s193
      %s196 = sshll.u32 [#allocation17], 4
      %s197 = int_to_ptr.vmem [resolvable:$true] %s196
      %199 = dma.hbm_to_vmem [thread:$0]  %s19, 16, %s197, [#allocation18]
    $region41: #{tpu_custom_call.1} parent=1 // pred_fallthru
      _
    // Predicated region
    $region42: #{tpu_custom_call.1} parent=1 // pred_check
      _
    $region43: #{tpu_custom_call.1} parent=1 // pred_check_branch
      %201 = sbr.rel (0) target = $region45
    $region44: #{tpu_custom_call.1} parent=1 // pred_region
      %s203 = ssub.s32 16, 16
      %204 = vsyncadd [#allocation18], %s203
      %s206 = sshll.u32 [#allocation19], 4
      %s207 = int_to_ptr.vmem [resolvable:$true] %s206
      %209 = dma.hbm_to_vmem [thread:$0]  %s21, 16, %s207, [#allocation18]
    $region45: #{tpu_custom_call.1} parent=1 // pred_fallthru
      _
    // Predicated region
    $region46: #{tpu_custom_call.1} parent=1 // pred_check
      _
    $region47: #{tpu_custom_call.1} parent=1 // pred_check_branch
      %211 = sbr.rel (0) target = $region49
    $region48: #{tpu_custom_call.1} parent=1 // pred_region
      %s213 = ssub.s32 16384, 16384
      %214 = vsyncadd [#allocation21], %s213
      %s215 = sshll.u32 [#allocation20], 4
      %s216 = int_to_ptr.vmem [resolvable:$true] %s215
      %221 = dma.hbm_to_vmem [thread:$0]  %s23, 16384, %s216, [#allocation21], 1024, 1024, 64
    $region49: #{tpu_custom_call.1} parent=1 // pred_fallthru
      _
    // Predicated region
    $region50: #{tpu_custom_call.1} parent=1 // pred_check
      _
    $region51: #{tpu_custom_call.1} parent=1 // pred_check_branch
      %223 = sbr.rel (0) target = $region53
    $region52: #{tpu_custom_call.1} parent=1 // pred_region
      _
    $region53: #{tpu_custom_call.1} parent=1 // pred_fallthru
      _
    // Predicated region
    $region54: #{tpu_custom_call.1} parent=1 // pred_check
      _
    $region55: #{tpu_custom_call.1} parent=1 // pred_check_branch
      %225 = sbr.rel (0) target = $region57
    $region56: #{tpu_custom_call.1} parent=1 // pred_region
      %s227 = ssub.s32 16384, 16384
      %228 = vsyncadd [#allocation21], %s227
      %s229 = sshll.u32 [#allocation22], 4
      %s230 = int_to_ptr.vmem [resolvable:$true] %s229
      %235 = dma.hbm_to_vmem [thread:$0]  %s27, 16384, %s230, [#allocation21], 64, 64, 4
    $region57: #{tpu_custom_call.1} parent=1 // pred_fallthru
      _
    // Predicated region
    $region58: #{tpu_custom_call.1} parent=1 // pred_check
      _
    $region59: #{tpu_custom_call.1} parent=1 // pred_check_branch
      %237 = sbr.rel (0) target = $region61
    $region60: #{tpu_custom_call.1} parent=1 // pred_region
      %s239 = ssub.s32 16, 16
      %240 = vsyncadd [#allocation24], %s239
      %s242 = sshll.u32 [#allocation23], 4
      %s243 = int_to_ptr.vmem [resolvable:$true] %s242
      %245 = dma.hbm_to_vmem [thread:$0]  %s29, 16, %s243, [#allocation24]
    $region61: #{tpu_custom_call.1} parent=1 // pred_fallthru
      _
    // Predicated region
    $region62: #{tpu_custom_call.1} parent=1 // pred_check
      _
    $region63: #{tpu_custom_call.1} parent=1 // pred_check_branch
      %247 = sbr.rel (0) target = $region65
    $region64: #{tpu_custom_call.1} parent=1 // pred_region
      %s249 = ssub.s32 16, 16
      %250 = vsyncadd [#allocation24], %s249
      %s252 = sshll.u32 [#allocation25], 4
      %s253 = int_to_ptr.vmem [resolvable:$true] %s252
      %255 = dma.hbm_to_vmem [thread:$0]  %s31, 16, %s253, [#allocation24]
    $region65: #{tpu_custom_call.1} parent=1 // pred_fallthru
      _
    // Predicated region
    $region66: #{tpu_custom_call.1} parent=1 // pred_check
      _
    $region67: #{tpu_custom_call.1} parent=1 // pred_check_branch
      %257 = sbr.rel (0) target = $region69
    $region68: #{tpu_custom_call.1} parent=1 // pred_region
      %s259 = ssub.s32 16, 16
      %260 = vsyncadd [#allocation27], %s259
      %s262 = sshll.u32 [#allocation26], 4
      %s263 = int_to_ptr.vmem [resolvable:$true] %s262
      %265 = dma.hbm_to_vmem [thread:$0]  %s33, 16, %s263, [#allocation27]
    $region69: #{tpu_custom_call.1} parent=1 // pred_fallthru
      _
    // Predicated region
    $region70: #{tpu_custom_call.1} parent=1 // pred_check
      _
    $region71: #{tpu_custom_call.1} parent=1 // pred_check_branch
      %267 = sbr.rel (0) target = $region73
    $region72: #{tpu_custom_call.1} parent=1 // pred_region
      %s269 = ssub.s32 1024, 1024
      %270 = vsyncadd [#allocation27], %s269
      %s271 = sshll.u32 [#allocation28], 4
      %s272 = int_to_ptr.vmem [resolvable:$true] %s271
      %277 = dma.hbm_to_vmem [thread:$0]  %s35, 1024, %s272, [#allocation27], 64, 64, 4
    $region73: #{tpu_custom_call.1} parent=1 // pred_fallthru
      _
    // Predicated region
    $region74: #{tpu_custom_call.1} parent=1 // pred_check
      _
    $region75: #{tpu_custom_call.1} parent=1 // pred_check_branch
      %279 = sbr.rel (0) target = $region77
    $region76: #{tpu_custom_call.1} parent=1 // pred_region
      %s281 = ssub.s32 16, 16
      %282 = vsyncadd [#allocation30], %s281
      %s284 = sshll.u32 [#allocation29], 4
      %s285 = int_to_ptr.vmem [resolvable:$true] %s284
      %287 = dma.hbm_to_vmem [thread:$0]  %s37, 16, %s285, [#allocation30]
    $region77: #{tpu_custom_call.1} parent=1 // pred_fallthru
      _
    // Predicated region
    $region78: #{tpu_custom_call.1} parent=1 // pred_check
      _
    $region79: #{tpu_custom_call.1} parent=1 // pred_check_branch
      %289 = sbr.rel (0) target = $region81
    $region80: #{tpu_custom_call.1} parent=1 // pred_region
      %s291 = ssub.s32 1024, 1024
      %292 = vsyncadd [#allocation30], %s291
      %s293 = sshll.u32 [#allocation31], 4
      %s294 = int_to_ptr.vmem [resolvable:$true] %s293
      %299 = dma.hbm_to_vmem [thread:$0]  %s39, 1024, %s294, [#allocation30], 64, 64, 4
    $region81: #{tpu_custom_call.1} parent=1 // pred_fallthru
      _
    // Predicated region
    $region82: #{tpu_custom_call.1} parent=1 // pred_check
      _
    $region83: #{tpu_custom_call.1} parent=1 // pred_check_branch
      %301 = sbr.rel (0) target = $region85
    $region84: #{tpu_custom_call.1} parent=1 // pred_region
      _
    $region85: #{tpu_custom_call.1} parent=1 // pred_fallthru
      _
    // Predicated region
    $region86: #{tpu_custom_call.1} parent=1 // pred_check
      _
    $region87: #{tpu_custom_call.1} parent=1 // pred_check_branch
      %303 = sbr.rel (0) target = $region89
    $region88: #{tpu_custom_call.1} parent=1 // pred_region
      %s305 = ssub.s32 1024, 1024
      %306 = vsyncadd [#allocation33], %s305
      %s307 = sshll.u32 [#allocation32], 4
      %s308 = int_to_ptr.vmem [resolvable:$true] %s307
      %313 = dma.hbm_to_vmem [thread:$0]  %s43, 1024, %s308, [#allocation33], 64, 64, 4
    $region89: #{tpu_custom_call.1} parent=1 // pred_fallthru
      _
    // Predicated region
    $region90: #{tpu_custom_call.1} parent=1 // pred_check
      _
    $region91: #{tpu_custom_call.1} parent=1 // pred_check_branch
      %315 = sbr.rel (0) target = $region93
    $region92: #{tpu_custom_call.1} parent=1 // pred_region
      _
    $region93: #{tpu_custom_call.1} parent=1 // pred_fallthru
      _
    // Predicated region
    $region94: #{tpu_custom_call.1} parent=1 // pred_check
      _
    $region95: #{tpu_custom_call.1} parent=1 // pred_check_branch
      %317 = sbr.rel (0) target = $region97
    $region96: #{tpu_custom_call.1} parent=1 // pred_region
      %s319 = ssub.s32 1024, 1024
      %320 = vsyncadd [#allocation33], %s319
      %s321 = sshll.u32 [#allocation34], 4
      %s322 = int_to_ptr.vmem [resolvable:$true] %s321
      %327 = dma.hbm_to_vmem [thread:$0]  %s47, 1024, %s322, [#allocation33], 64, 64, 4
    $region97: #{tpu_custom_call.1} parent=1 // pred_fallthru
      _
    // Predicated region
    $region98: #{tpu_custom_call.1} parent=1 // pred_check
      _
    $region99: #{tpu_custom_call.1} parent=1 // pred_check_branch
      %329 = sbr.rel (0) target = $region101
    $region100: #{tpu_custom_call.1} parent=1 // pred_region
      _
    $region101: #{tpu_custom_call.1} parent=1 // pred_fallthru
      _
    // Predicated region
    $region102: #{tpu_custom_call.1} parent=1 // pred_check
      _
    $region103: #{tpu_custom_call.1} parent=1 // pred_check_branch
      %331 = sbr.rel (0) target = $region105
    $region104: #{tpu_custom_call.1} parent=1 // pred_region
      _
    $region105: #{tpu_custom_call.1} parent=1 // pred_fallthru
      _
    // Predicated region
    $region106: #{tpu_custom_call.1} parent=1 // pred_check
      _
    $region107: #{tpu_custom_call.1} parent=1 // pred_check_branch
      %333 = sbr.rel (0) target = $region109
    $region108: #{tpu_custom_call.1} parent=1 // pred_region
      _
    $region109: #{tpu_custom_call.1} parent=1 // pred_fallthru
      _
    // Predicated region
    $region110: #{tpu_custom_call.1} parent=1 // pred_check
      _
    $region111: #{tpu_custom_call.1} parent=1 // pred_check_branch
      %335 = sbr.rel (0) target = $region113
    $region112: #{tpu_custom_call.1} parent=1 // pred_region
      %s337 = ssub.s32 16384, 16384
      %338 = vsyncadd [#allocation36], %s337
      %s339 = sshll.u32 [#allocation35], 4
      %s340 = int_to_ptr.vmem [resolvable:$true] %s339
      %345 = dma.hbm_to_vmem [thread:$0]  %s55, 16384, %s340, [#allocation36], 1024, 1024, 64
    $region113: #{tpu_custom_call.1} parent=1 // pred_fallthru
      _
    // Predicated region
    $region114: #{tpu_custom_call.1} parent=1 // pred_check
      _
    $region115: #{tpu_custom_call.1} parent=1 // pred_check_branch
      %347 = sbr.rel (0) target = $region117
    $region116: #{tpu_custom_call.1} parent=1 // pred_region
      _
    $region117: #{tpu_custom_call.1} parent=1 // pred_fallthru
      _
    // Predicated region
    $region118: #{tpu_custom_call.1} parent=1 // pred_check
      _
    $region119: #{tpu_custom_call.1} parent=1 // pred_check_branch
      %349 = sbr.rel (0) target = $region121
    $region120: #{tpu_custom_call.1} parent=1 // pred_region
      %s351 = ssub.s32 16384, 16384
      %352 = vsyncadd [#allocation36], %s351
      %s353 = sshll.u32 [#allocation37], 4
      %s354 = int_to_ptr.vmem [resolvable:$true] %s353
      %359 = dma.hbm_to_vmem [thread:$0]  %s59, 16384, %s354, [#allocation36], 64, 64, 4
    $region121: #{tpu_custom_call.1} parent=1 // pred_fallthru
      _
    // Predicated region
    $region122: #{tpu_custom_call.1} parent=1 // pred_check
      _
    $region123: #{tpu_custom_call.1} parent=1 // pred_check_branch
      %361 = sbr.rel (0) target = $region125
    $region124: #{tpu_custom_call.1} parent=1 // pred_region
      _
    $region125: #{tpu_custom_call.1} parent=1 // pred_fallthru
      _
    // Predicated region
    $region126: #{tpu_custom_call.1} parent=1 // pred_check
      _
    $region127: #{tpu_custom_call.1} parent=1 // pred_check_branch
      %363 = sbr.rel (0) target = $region129
    $region128: #{tpu_custom_call.1} parent=1 // pred_region
      _
    $region129: #{tpu_custom_call.1} parent=1 // pred_fallthru
      _
    // Predicated region
    $region130: #{tpu_custom_call.1} parent=1 // pred_check
      _
    $region131: #{tpu_custom_call.1} parent=1 // pred_check_branch
      %365 = sbr.rel (0) target = $region133
    $region132: #{tpu_custom_call.1} parent=1 // pred_region
      _
    $region133: #{tpu_custom_call.1} parent=1 // pred_fallthru
      _
    // Predicated region
    $region134: #{tpu_custom_call.1} parent=1 // pred_check
      _
    $region135: #{tpu_custom_call.1} parent=1 // pred_check_branch
      %367 = sbr.rel (0) target = $region137
    $region136: #{tpu_custom_call.1} parent=1 // pred_region
      %s369 = ssub.s32 2048, 2048
      %370 = vsyncadd [#allocation39], %s369
      %s371 = sshll.u32 [#allocation38], 4
      %s372 = int_to_ptr.vmem [resolvable:$true] %s371
      %377 = dma.hbm_to_vmem [thread:$0]  %s67, 2048, %s372, [#allocation39], 128, 128, 8
    $region137: #{tpu_custom_call.1} parent=1 // pred_fallthru
      _
    // Predicated region
    $region138: #{tpu_custom_call.1} parent=1 // pred_check
      _
    $region139: #{tpu_custom_call.1} parent=1 // pred_check_branch
      %379 = sbr.rel (0) target = $region141
    $region140: #{tpu_custom_call.1} parent=1 // pred_region
      _
    $region141: #{tpu_custom_call.1} parent=1 // pred_fallthru
      _
    // Predicated region
    $region142: #{tpu_custom_call.1} parent=1 // pred_check
      _
    $region143: #{tpu_custom_call.1} parent=1 // pred_check_branch
      %381 = sbr.rel (0) target = $region145
    $region144: #{tpu_custom_call.1} parent=1 // pred_region
      %382 = dma.done [#allocation3], 256
    $region145: #{tpu_custom_call.1} parent=1 // pred_fallthru
      _
    // Predicated region
    $region146: #{tpu_custom_call.1} parent=1 // pred_check
      _
    $region147: #{tpu_custom_call.1} parent=1 // pred_check_branch
      %384 = sbr.rel (0) target = $region149
    $region148: #{tpu_custom_call.1} parent=1 // pred_region
      %385 = dma.done [#allocation6], 1024
    $region149: #{tpu_custom_call.1} parent=1 // pred_fallthru
      _
    // Predicated region
    $region150: #{tpu_custom_call.1} parent=1 // pred_check
      _
    $region151: #{tpu_custom_call.1} parent=1 // pred_check_branch
      %387 = sbr.rel (0) target = $region153
    $region152: #{tpu_custom_call.1} parent=1 // pred_region
      %388 = dma.done [#allocation6], 16
    $region153: #{tpu_custom_call.1} parent=1 // pred_fallthru
      _
    // Predicated region
    $region154: #{tpu_custom_call.1} parent=1 // pred_check
      _
    $region155: #{tpu_custom_call.1} parent=1 // pred_check_branch
      %390 = sbr.rel (0) target = $region157
    $region156: #{tpu_custom_call.1} parent=1 // pred_region
      %391 = dma.done [#allocation9], 1024
    $region157: #{tpu_custom_call.1} parent=1 // pred_fallthru
      _
    // Predicated region
    $region158: #{tpu_custom_call.1} parent=1 // pred_check
      _
    $region159: #{tpu_custom_call.1} parent=1 // pred_check_branch
      %393 = sbr.rel (0) target = $region161
    $region160: #{tpu_custom_call.1} parent=1 // pred_region
      %394 = dma.done [#allocation9], 16
    $region161: #{tpu_custom_call.1} parent=1 // pred_fallthru
      _
    // Predicated region
    $region162: #{tpu_custom_call.1} parent=1 // pred_check
      _
    $region163: #{tpu_custom_call.1} parent=1 // pred_check_branch
      %396 = sbr.rel (0) target = $region165
    $region164: #{tpu_custom_call.1} parent=1 // pred_region
      %397 = dma.done [#allocation12], 1024
    $region165: #{tpu_custom_call.1} parent=1 // pred_fallthru
      _
    // Predicated region
    $region166: #{tpu_custom_call.1} parent=1 // pred_check
      _
    $region167: #{tpu_custom_call.1} parent=1 // pred_check_branch
      %399 = sbr.rel (0) target = $region169
    $region168: #{tpu_custom_call.1} parent=1 // pred_region
      %400 = dma.done [#allocation12], 16
    $region169: #{tpu_custom_call.1} parent=1 // pred_fallthru
      _
    // Predicated region
    $region170: #{tpu_custom_call.1} parent=1 // pred_check
      _
    $region171: #{tpu_custom_call.1} parent=1 // pred_check_branch
      %402 = sbr.rel (0) target = $region173
    $region172: #{tpu_custom_call.1} parent=1 // pred_region
      %403 = dma.done [#allocation15], 1024
    $region173: #{tpu_custom_call.1} parent=1 // pred_fallthru
      _
    // Predicated region
    $region174: #{tpu_custom_call.1} parent=1 // pred_check
      _
    $region175: #{tpu_custom_call.1} parent=1 // pred_check_branch
      %405 = sbr.rel (0) target = $region177
    $region176: #{tpu_custom_call.1} parent=1 // pred_region
      %406 = dma.done [#allocation15], 16
    $region177: #{tpu_custom_call.1} parent=1 // pred_fallthru
      _
    // Predicated region
    $region178: #{tpu_custom_call.1} parent=1 // pred_check
      _
    $region179: #{tpu_custom_call.1} parent=1 // pred_check_branch
      %408 = sbr.rel (0) target = $region181
    $region180: #{tpu_custom_call.1} parent=1 // pred_region
      %409 = dma.done [#allocation18], 16
    $region181: #{tpu_custom_call.1} parent=1 // pred_fallthru
      _
    // Predicated region
    $region182: #{tpu_custom_call.1} parent=1 // pred_check
      _
    $region183: #{tpu_custom_call.1} parent=1 // pred_check_branch
      %411 = sbr.rel (0) target = $region185
    $region184: #{tpu_custom_call.1} parent=1 // pred_region
      %412 = dma.done [#allocation18], 16
    $region185: #{tpu_custom_call.1} parent=1 // pred_fallthru
      _
    // Predicated region
    $region186: #{tpu_custom_call.1} parent=1 // pred_check
      _
    $region187: #{tpu_custom_call.1} parent=1 // pred_check_branch
      %414 = sbr.rel (0) target = $region189
    $region188: #{tpu_custom_call.1} parent=1 // pred_region
      %415 = dma.done [#allocation21], 16384
    $region189: #{tpu_custom_call.1} parent=1 // pred_fallthru
      _
    // Predicated region
    $region190: #{tpu_custom_call.1} parent=1 // pred_check
      _
    $region191: #{tpu_custom_call.1} parent=1 // pred_check_branch
      %417 = sbr.rel (0) target = $region193
    $region192: #{tpu_custom_call.1} parent=1 // pred_region
      %418 = dma.done [#allocation21], 16384
    $region193: #{tpu_custom_call.1} parent=1 // pred_fallthru
      _
    // Predicated region
    $region194: #{tpu_custom_call.1} parent=1 // pred_check
      _
    $region195: #{tpu_custom_call.1} parent=1 // pred_check_branch
      %420 = sbr.rel (0) target = $region197
    $region196: #{tpu_custom_call.1} parent=1 // pred_region
      %421 = dma.done [#allocation24], 16
    $region197: #{tpu_custom_call.1} parent=1 // pred_fallthru
      _
    // Predicated region
    $region198: #{tpu_custom_call.1} parent=1 // pred_check
      _
    $region199: #{tpu_custom_call.1} parent=1 // pred_check_branch
      %423 = sbr.rel (0) target = $region201
    $region200: #{tpu_custom_call.1} parent=1 // pred_region
      %424 = dma.done [#allocation24], 16
    $region201: #{tpu_custom_call.1} parent=1 // pred_fallthru
      _
    // Predicated region
    $region202: #{tpu_custom_call.1} parent=1 // pred_check
      _
    $region203: #{tpu_custom_call.1} parent=1 // pred_check_branch
      %426 = sbr.rel (0) target = $region205
    $region204: #{tpu_custom_call.1} parent=1 // pred_region
      %427 = dma.done [#allocation27], 16
    $region205: #{tpu_custom_call.1} parent=1 // pred_fallthru
      _
    // Predicated region
    $region206: #{tpu_custom_call.1} parent=1 // pred_check
      _
    $region207: #{tpu_custom_call.1} parent=1 // pred_check_branch
      %429 = sbr.rel (0) target = $region209
    $region208: #{tpu_custom_call.1} parent=1 // pred_region
      %430 = dma.done [#allocation27], 1024
    $region209: #{tpu_custom_call.1} parent=1 // pred_fallthru
      _
    // Predicated region
    $region210: #{tpu_custom_call.1} parent=1 // pred_check
      _
    $region211: #{tpu_custom_call.1} parent=1 // pred_check_branch
      %432 = sbr.rel (0) target = $region213
    $region212: #{tpu_custom_call.1} parent=1 // pred_region
      %433 = dma.done [#allocation30], 16
    $region213: #{tpu_custom_call.1} parent=1 // pred_fallthru
      _
    // Predicated region
    $region214: #{tpu_custom_call.1} parent=1 // pred_check
      _
    $region215: #{tpu_custom_call.1} parent=1 // pred_check_branch
      %435 = sbr.rel (0) target = $region217
    $region216: #{tpu_custom_call.1} parent=1 // pred_region
      %436 = dma.done [#allocation30], 1024
    $region217: #{tpu_custom_call.1} parent=1 // pred_fallthru
      _
    // Predicated region
    $region218: #{tpu_custom_call.1} parent=1 // pred_check
      _
    $region219: #{tpu_custom_call.1} parent=1 // pred_check_branch
      %438 = sbr.rel (0) target = $region221
    $region220: #{tpu_custom_call.1} parent=1 // pred_region
      %439 = dma.done [#allocation33], 1024
    $region221: #{tpu_custom_call.1} parent=1 // pred_fallthru
      _
    // Predicated region
    $region222: #{tpu_custom_call.1} parent=1 // pred_check
      _
    $region223: #{tpu_custom_call.1} parent=1 // pred_check_branch
      %441 = sbr.rel (0) target = $region225
    $region224: #{tpu_custom_call.1} parent=1 // pred_region
      %442 = dma.done [#allocation33], 1024
    $region225: #{tpu_custom_call.1} parent=1 // pred_fallthru
      _
    // Predicated region
    $region226: #{tpu_custom_call.1} parent=1 // pred_check
      _
    $region227: #{tpu_custom_call.1} parent=1 // pred_check_branch
      %444 = sbr.rel (0) target = $region229
    $region228: #{tpu_custom_call.1} parent=1 // pred_region
      %445 = dma.done [#allocation36], 16384
    $region229: #{tpu_custom_call.1} parent=1 // pred_fallthru
      _
    // Predicated region
    $region230: #{tpu_custom_call.1} parent=1 // pred_check
      _
    $region231: #{tpu_custom_call.1} parent=1 // pred_check_branch
      %447 = sbr.rel (0) target = $region233
    $region232: #{tpu_custom_call.1} parent=1 // pred_region
      %448 = dma.done [#allocation36], 16384
    $region233: #{tpu_custom_call.1} parent=1 // pred_fallthru
      _
    // Predicated region
    $region234: #{tpu_custom_call.1} parent=1 // pred_check
      _
    $region235: #{tpu_custom_call.1} parent=1 // pred_check_branch
      %450 = sbr.rel (0) target = $region237
    $region236: #{tpu_custom_call.1} parent=1 // pred_region
      %451 = dma.done [#allocation39], 2048
    $region237: #{tpu_custom_call.1} parent=1 // pred_fallthru
      _
    %v453 = vld [vmem:[#allocation2] sm:$0xff]
    %v454 = vld [vmem:[#allocation2 + $0x8] sm:$0xff]
    %v455 = vpack.c.bf16 %v454, %v453
    %v456 = vld [vmem:[#allocation8] sm:$0xf]
    %v457 = vld [vmem:[#allocation8 + $0x4] sm:$0xf]
    %v458 = vld [vmem:[#allocation8 + $0x8] sm:$0xf]
    %v459 = vld [vmem:[#allocation8 + $0xc] sm:$0xf]
    %v460 = vld [vmem:[#allocation8 + $0x10] sm:$0xf]
    %v461 = vld [vmem:[#allocation8 + $0x14] sm:$0xf]
    %v462 = vld [vmem:[#allocation8 + $0x18] sm:$0xf]
    %v463 = vld [vmem:[#allocation8 + $0x1c] sm:$0xf]
    %v464 = vld [vmem:[#allocation8 + $0x20] sm:$0xf]
    %v465 = vld [vmem:[#allocation8 + $0x24] sm:$0xf]
    %v466 = vld [vmem:[#allocation8 + $0x28] sm:$0xf]
    %v467 = vld [vmem:[#allocation8 + $0x2c] sm:$0xf]
    %v468 = vld [vmem:[#allocation8 + $0x30] sm:$0xf]
    %v469 = vld [vmem:[#allocation8 + $0x34] sm:$0xf]
    %v470 = vld [vmem:[#allocation8 + $0x38] sm:$0xf]
    %v471 = vld [vmem:[#allocation8 + $0x3c] sm:$0xf]
    %v472 = vld [vmem:[#allocation10] sm:$0x1]
    %v474 = vlaneseq
    %v475 = vshrl.u32 %v474, 7
    %v476 = vsub.s32 0, %v475
    %v477 = vrot.slane %v472, %v476
    %v495 = vunpack.c.l.b16 %v456
    %v496 = vunpack.c.l.b16 %v457
    %v497 = vunpack.c.l.b16 %v458
    %v498 = vunpack.c.l.b16 %v459
    %v499 = vunpack.c.l.b16 %v460
    %v500 = vunpack.c.l.b16 %v461
    %v501 = vunpack.c.l.b16 %v462
    %v502 = vunpack.c.l.b16 %v463
    %v503 = vunpack.c.l.b16 %v464
    %v504 = vunpack.c.l.b16 %v465
    %v505 = vunpack.c.l.b16 %v466
    %v506 = vunpack.c.l.b16 %v467
    %v507 = vunpack.c.l.b16 %v468
    %v508 = vunpack.c.l.b16 %v469
    %v509 = vunpack.c.l.b16 %v470
    %v510 = vunpack.c.l.b16 %v471
    %v511 = vpack.c.b16 %v496, %v495
    %v512 = vpack.c.b16 %v498, %v497
    %v513 = vpack.c.b16 %v500, %v499
    %v514 = vpack.c.b16 %v502, %v501
    %v515 = vpack.c.b16 %v504, %v503
    %v516 = vpack.c.b16 %v506, %v505
    %v517 = vpack.c.b16 %v508, %v507
    %v518 = vpack.c.b16 %v510, %v509
    %527 = vmatprep.subr.bf16.mxu0 0
    %528 = vmatpush1.bf16.msra.mxu0 %v518
    %529 = vmatprep.subr.bf16.mxu0 0
    %530 = vmatpush1.bf16.msra.mxu0 %v517
    %531 = vmatprep.subr.bf16.mxu0 0
    %532 = vmatpush1.bf16.msra.mxu0 %v516
    %533 = vmatprep.subr.bf16.mxu0 0
    %534 = vmatpush1.bf16.msra.mxu0 %v515
    %535 = vmatprep.subr.bf16.mxu0 0
    %536 = vmatpush1.bf16.msra.mxu0 %v514
    %537 = vmatprep.subr.bf16.mxu0 0
    %538 = vmatpush1.bf16.msra.mxu0 %v513
    %539 = vmatprep.subr.bf16.mxu0 0
    %540 = vmatpush1.bf16.msra.mxu0 %v512
    %541 = vmatprep.subr.bf16.mxu0 0
    %542 = vmatpush1.bf16.msra.mxu0 %v511
    %543 = vmatprep.subr.bf16.mxu0 0
    %544 = vmatpush2.bf16.msra.mxu0 0
    %545 = vmatprep.subr.bf16.mxu0 0
    %546 = vmatpush2.bf16.msra.mxu0 0
    %547 = vmatprep.subr.bf16.mxu0 0
    %548 = vmatpush2.bf16.msra.mxu0 0
    %549 = vmatprep.subr.bf16.mxu0 0
    %550 = vmatpush2.bf16.msra.mxu0 0
    %551 = vmatprep.subr.bf16.mxu0 0
    %552 = vmatpush2.bf16.msra.mxu0 0
    %553 = vmatprep.subr.bf16.mxu0 0
    %554 = vmatpush2.bf16.msra.mxu0 0
    %555 = vmatprep.subr.bf16.mxu0 0
    %556 = vmatpush2.bf16.msra.mxu0 0
    %557 = vmatprep.subr.bf16.mxu0 0
    %558 = vmatpush2.bf16.msra.mxu0 0
    %559 = vmatprep.mubr.bf16.mxu0 0
    %560 = vmatmul.mubr.bf16.gmra.mxu0 %v455
    %v561 = vpop.f32.mrf.mxu0
    %v562 = vadd.f32 %v477, %v561
    %v563 = vpop.f32.mrf.mxu0
    %v564 = vpop.f32.mrf.mxu0
    %v565 = vadd.f32 %v477, %v564
    %v566 = vpop.f32.mrf.mxu0
    %567 = vdwg.mxu0
    %v568 = vld [vmem:[#allocation11] sm:$0xf]
    %v569 = vld [vmem:[#allocation11 + $0x4] sm:$0xf]
    %v570 = vld [vmem:[#allocation11 + $0x8] sm:$0xf]
    %v571 = vld [vmem:[#allocation11 + $0xc] sm:$0xf]
    %v572 = vld [vmem:[#allocation11 + $0x10] sm:$0xf]
    %v573 = vld [vmem:[#allocation11 + $0x14] sm:$0xf]
    %v574 = vld [vmem:[#allocation11 + $0x18] sm:$0xf]
    %v575 = vld [vmem:[#allocation11 + $0x1c] sm:$0xf]
    %v576 = vld [vmem:[#allocation11 + $0x20] sm:$0xf]
    %v577 = vld [vmem:[#allocation11 + $0x24] sm:$0xf]
    %v578 = vld [vmem:[#allocation11 + $0x28] sm:$0xf]
    %v579 = vld [vmem:[#allocation11 + $0x2c] sm:$0xf]
    %v580 = vld [vmem:[#allocation11 + $0x30] sm:$0xf]
    %v581 = vld [vmem:[#allocation11 + $0x34] sm:$0xf]
    %v582 = vld [vmem:[#allocation11 + $0x38] sm:$0xf]
    %v583 = vld [vmem:[#allocation11 + $0x3c] sm:$0xf]
    %v584 = vld [vmem:[#allocation13] sm:$0x1]
    %v586 = vlaneseq
    %v587 = vshrl.u32 %v586, 7
    %v588 = vsub.s32 0, %v587
    %v589 = vrot.slane %v584, %v588
    %v607 = vunpack.c.l.b16 %v568
    %v608 = vunpack.c.l.b16 %v569
    %v609 = vunpack.c.l.b16 %v570
    %v610 = vunpack.c.l.b16 %v571
    %v611 = vunpack.c.l.b16 %v572
    %v612 = vunpack.c.l.b16 %v573
    %v613 = vunpack.c.l.b16 %v574
    %v614 = vunpack.c.l.b16 %v575
    %v615 = vunpack.c.l.b16 %v576
    %v616 = vunpack.c.l.b16 %v577
    %v617 = vunpack.c.l.b16 %v578
    %v618 = vunpack.c.l.b16 %v579
    %v619 = vunpack.c.l.b16 %v580
    %v620 = vunpack.c.l.b16 %v581
    %v621 = vunpack.c.l.b16 %v582
    %v622 = vunpack.c.l.b16 %v583
    %v623 = vpack.c.b16 %v608, %v607
    %v624 = vpack.c.b16 %v610, %v609
    %v625 = vpack.c.b16 %v612, %v611
    %v626 = vpack.c.b16 %v614, %v613
    %v627 = vpack.c.b16 %v616, %v615
    %v628 = vpack.c.b16 %v618, %v617
    %v629 = vpack.c.b16 %v620, %v619
    %v630 = vpack.c.b16 %v622, %v621
    %639 = vmatprep.subr.bf16.mxu0 0
    %640 = vmatpush1.bf16.msra.mxu0 %v630
    %641 = vmatprep.subr.bf16.mxu0 0
    %642 = vmatpush1.bf16.msra.mxu0 %v629
    %643 = vmatprep.subr.bf16.mxu0 0
    %644 = vmatpush1.bf16.msra.mxu0 %v628
    %645 = vmatprep.subr.bf16.mxu0 0
    %646 = vmatpush1.bf16.msra.mxu0 %v627
    %647 = vmatprep.subr.bf16.mxu0 0
    %648 = vmatpush1.bf16.msra.mxu0 %v626
    %649 = vmatprep.subr.bf16.mxu0 0
    %650 = vmatpush1.bf16.msra.mxu0 %v625
    %651 = vmatprep.subr.bf16.mxu0 0
    %652 = vmatpush1.bf16.msra.mxu0 %v624
    %653 = vmatprep.subr.bf16.mxu0 0
    %654 = vmatpush1.bf16.msra.mxu0 %v623
    %655 = vmatprep.subr.bf16.mxu0 0
    %656 = vmatpush2.bf16.msra.mxu0 0
    %657 = vmatprep.subr.bf16.mxu0 0
    %658 = vmatpush2.bf16.msra.mxu0 0
    %659 = vmatprep.subr.bf16.mxu0 0
    %660 = vmatpush2.bf16.msra.mxu0 0
    %661 = vmatprep.subr.bf16.mxu0 0
    %662 = vmatpush2.bf16.msra.mxu0 0
    %663 = vmatprep.subr.bf16.mxu0 0
    %664 = vmatpush2.bf16.msra.mxu0 0
    %665 = vmatprep.subr.bf16.mxu0 0
    %666 = vmatpush2.bf16.msra.mxu0 0
    %667 = vmatprep.subr.bf16.mxu0 0
    %668 = vmatpush2.bf16.msra.mxu0 0
    %669 = vmatprep.subr.bf16.mxu0 0
    %670 = vmatpush2.bf16.msra.mxu0 0
    %671 = vmatprep.mubr.bf16.mxu0 0
    %672 = vmatmul.mubr.bf16.gmra.mxu0 %v455
    %v673 = vpop.f32.mrf.mxu0
    %v674 = vadd.f32 %v589, %v673
    %v675 = vpop.f32.mrf.mxu0
    %v676 = vpop.f32.mrf.mxu0
    %v677 = vadd.f32 %v589, %v676
    %v678 = vpop.f32.mrf.mxu0
    %679 = vdwg.mxu0
    %v680 = vld [vmem:[#allocation5] sm:$0xf]
    %v681 = vld [vmem:[#allocation5 + $0x4] sm:$0xf]
    %v682 = vld [vmem:[#allocation5 + $0x8] sm:$0xf]
    %v683 = vld [vmem:[#allocation5 + $0xc] sm:$0xf]
    %v684 = vld [vmem:[#allocation5 + $0x10] sm:$0xf]
    %v685 = vld [vmem:[#allocation5 + $0x14] sm:$0xf]
    %v686 = vld [vmem:[#allocation5 + $0x18] sm:$0xf]
    %v687 = vld [vmem:[#allocation5 + $0x1c] sm:$0xf]
    %v688 = vld [vmem:[#allocation5 + $0x20] sm:$0xf]
    %v689 = vld [vmem:[#allocation5 + $0x24] sm:$0xf]
    %v690 = vld [vmem:[#allocation5 + $0x28] sm:$0xf]
    %v691 = vld [vmem:[#allocation5 + $0x2c] sm:$0xf]
    %v692 = vld [vmem:[#allocation5 + $0x30] sm:$0xf]
    %v693 = vld [vmem:[#allocation5 + $0x34] sm:$0xf]
    %v694 = vld [vmem:[#allocation5 + $0x38] sm:$0xf]
    %v695 = vld [vmem:[#allocation5 + $0x3c] sm:$0xf]
    %v696 = vld [vmem:[#allocation7] sm:$0x1]
    %v698 = vlaneseq
    %v699 = vshrl.u32 %v698, 7
    %v700 = vsub.s32 0, %v699
    %v701 = vrot.slane %v696, %v700
    %v719 = vunpack.c.l.b16 %v680
    %v720 = vunpack.c.l.b16 %v681
    %v721 = vunpack.c.l.b16 %v682
    %v722 = vunpack.c.l.b16 %v683
    %v723 = vunpack.c.l.b16 %v684
    %v724 = vunpack.c.l.b16 %v685
    %v725 = vunpack.c.l.b16 %v686
    %v726 = vunpack.c.l.b16 %v687
    %v727 = vunpack.c.l.b16 %v688
    %v728 = vunpack.c.l.b16 %v689
    %v729 = vunpack.c.l.b16 %v690
    %v730 = vunpack.c.l.b16 %v691
    %v731 = vunpack.c.l.b16 %v692
    %v732 = vunpack.c.l.b16 %v693
    %v733 = vunpack.c.l.b16 %v694
    %v734 = vunpack.c.l.b16 %v695
    %v735 = vpack.c.b16 %v720, %v719
    %v736 = vpack.c.b16 %v722, %v721
    %v737 = vpack.c.b16 %v724, %v723
    %v738 = vpack.c.b16 %v726, %v725
    %v739 = vpack.c.b16 %v728, %v727
    %v740 = vpack.c.b16 %v730, %v729
    %v741 = vpack.c.b16 %v732, %v731
    %v742 = vpack.c.b16 %v734, %v733
    %751 = vmatprep.subr.bf16.mxu0 0
    %752 = vmatpush1.bf16.msra.mxu0 %v742
    %753 = vmatprep.subr.bf16.mxu0 0
    %754 = vmatpush1.bf16.msra.mxu0 %v741
    %755 = vmatprep.subr.bf16.mxu0 0
    %756 = vmatpush1.bf16.msra.mxu0 %v740
    %757 = vmatprep.subr.bf16.mxu0 0
    %758 = vmatpush1.bf16.msra.mxu0 %v739
    %759 = vmatprep.subr.bf16.mxu0 0
    %760 = vmatpush1.bf16.msra.mxu0 %v738
    %761 = vmatprep.subr.bf16.mxu0 0
    %762 = vmatpush1.bf16.msra.mxu0 %v737
    %763 = vmatprep.subr.bf16.mxu0 0
    %764 = vmatpush1.bf16.msra.mxu0 %v736
    %765 = vmatprep.subr.bf16.mxu0 0
    %766 = vmatpush1.bf16.msra.mxu0 %v735
    %767 = vmatprep.subr.bf16.mxu0 0
    %768 = vmatpush2.bf16.msra.mxu0 0
    %769 = vmatprep.subr.bf16.mxu0 0
    %770 = vmatpush2.bf16.msra.mxu0 0
    %771 = vmatprep.subr.bf16.mxu0 0
    %772 = vmatpush2.bf16.msra.mxu0 0
    %773 = vmatprep.subr.bf16.mxu0 0
    %774 = vmatpush2.bf16.msra.mxu0 0
    %775 = vmatprep.subr.bf16.mxu0 0
    %776 = vmatpush2.bf16.msra.mxu0 0
    %777 = vmatprep.subr.bf16.mxu0 0
    %778 = vmatpush2.bf16.msra.mxu0 0
    %779 = vmatprep.subr.bf16.mxu0 0
    %780 = vmatpush2.bf16.msra.mxu0 0
    %781 = vmatprep.subr.bf16.mxu0 0
    %782 = vmatpush2.bf16.msra.mxu0 0
    %783 = vmatprep.mubr.bf16.mxu0 0
    %784 = vmatmul.mubr.bf16.gmra.mxu0 %v455
    %v785 = vpop.f32.mrf.mxu0
    %v786 = vadd.f32 %v701, %v785
    %v787 = vpop.f32.mrf.mxu0
    %v788 = vpop.f32.mrf.mxu0
    %v789 = vadd.f32 %v701, %v788
    %v790 = vpop.f32.mrf.mxu0
    %791 = vdwg.mxu0
    %v792 = vmul.f32 %v786, 0.17677669
    %v793 = vmul.f32 %v789, 0.17677669
    %vm794 = vcmask 261120
    %v796 = vsel %vm794, %v792, 0
    %v799 = vsel %vm794, %v562, 0
    %801 = vmatprep.subr.mxu0 0.0
    %802 = vmatpush1.xpose.msra.mxu0 0.0
    %803 = vmatprep.subr.mxu0 0.0
    %804 = vmatpush1.xpose.msra.mxu0 0.0
    %805 = vmatprep.subr.mxu0 0.0
    %806 = vmatpush1.xpose.msra.mxu0 0.0
    %807 = vmatprep.subr.mxu0 0.0
    %808 = vmatpush1.xpose.msra.mxu0 0.0
    %809 = vmatprep.subr.mxu0 0.0
    %810 = vmatpush1.xpose.msra.mxu0 0.0
    %811 = vmatprep.subr.mxu0 0.0
    %812 = vmatpush1.xpose.msra.mxu0 0.0
    %813 = vmatprep.subr.mxu0 0.0
    %814 = vmatpush1.xpose.msra.mxu0 0.0
    %815 = vmatprep.subr.mxu0 0.0
    %816 = vmatpush1.xpose.msra.mxu0 0.0
    %817 = vmatprep.subr.mxu0 0.0
    %818 = vmatpush1.xpose.msra.mxu0 0.0
    %819 = vmatprep.subr.mxu0 0.0
    %820 = vmatpush1.xpose.msra.mxu0 0.0
    %821 = vmatprep.subr.mxu0 0.0
    %822 = vmatpush1.xpose.msra.mxu0 0.0
    %823 = vmatprep.subr.mxu0 0.0
    %824 = vmatpush1.xpose.msra.mxu0 0.0
    %825 = vmatprep.subr.mxu0 0.0
    %826 = vmatpush1.xpose.msra.mxu0 0.0
    %827 = vmatprep.subr.mxu0 0.0
    %828 = vmatpush1.xpose.msra.mxu0 0.0
    %829 = vmatprep.subr.mxu0 0.0
    %830 = vmatpush1.xpose.msra.mxu0 0.0
    %831 = vmatprep.subr.mxu0 0.0
    %832 = vmatpush1.xpose.msra.mxu0 %v799
    %833 = vmatprep.subr.mxu0 0.0
    %834 = vmatpush2.xpose.msra.mxu0 0.0
    %835 = vmatprep.subr.mxu0 0.0
    %836 = vmatpush2.xpose.msra.mxu0 0.0
    %837 = vmatprep.subr.mxu0 0.0
    %838 = vmatpush2.xpose.msra.mxu0 0.0
    %839 = vmatprep.subr.mxu0 0.0
    %840 = vmatpush2.xpose.msra.mxu0 0.0
    %841 = vmatprep.subr.mxu0 0.0
    %842 = vmatpush2.xpose.msra.mxu0 0.0
    %843 = vmatprep.subr.mxu0 0.0
    %844 = vmatpush2.xpose.msra.mxu0 0.0
    %845 = vmatprep.subr.mxu0 0.0
    %846 = vmatpush2.xpose.msra.mxu0 0.0
    %847 = vmatprep.subr.mxu0 0.0
    %848 = vmatpush2.xpose.msra.mxu0 0.0
    %849 = vmatprep.subr.mxu0 0.0
    %850 = vmatpush2.xpose.msra.mxu0 0.0
    %851 = vmatprep.subr.mxu0 0.0
    %852 = vmatpush2.xpose.msra.mxu0 0.0
    %853 = vmatprep.subr.mxu0 0.0
    %854 = vmatpush2.xpose.msra.mxu0 0.0
    %855 = vmatprep.subr.mxu0 0.0
    %856 = vmatpush2.xpose.msra.mxu0 0.0
    %857 = vmatprep.subr.mxu0 0.0
    %858 = vmatpush2.xpose.msra.mxu0 0.0
    %859 = vmatprep.subr.mxu0 0.0
    %860 = vmatpush2.xpose.msra.mxu0 0.0
    %861 = vmatprep.subr.mxu0 0.0
    %862 = vmatpush2.xpose.msra.mxu0 0.0
    %863 = vmatprep.subr.mxu0 0.0
    %864 = vmatpush2.xpose.msra.mxu0 0.0
    %865 = vmatprep.mubr.f32.mxu0 0.0
    %866 = vmatmul.mubr.f32.gmra.mxu0 %v796
    %v867 = vpop.f32.mrf.mxu0
    %v868 = vadd.f32 0.0, %v867
    %v869 = vpop.f32.mrf.mxu0
    %870 = vdwg.mxu0
    %v872 = vsel %vm794, %v793, 0
    %v875 = vsel %vm794, %v565, 0
    %877 = vmatprep.subr.mxu0 0.0
    %878 = vmatpush1.xpose.msra.mxu0 0.0
    %879 = vmatprep.subr.mxu0 0.0
    %880 = vmatpush1.xpose.msra.mxu0 0.0
    %881 = vmatprep.subr.mxu0 0.0
    %882 = vmatpush1.xpose.msra.mxu0 0.0
    %883 = vmatprep.subr.mxu0 0.0
    %884 = vmatpush1.xpose.msra.mxu0 0.0
    %885 = vmatprep.subr.mxu0 0.0
    %886 = vmatpush1.xpose.msra.mxu0 0.0
    %887 = vmatprep.subr.mxu0 0.0
    %888 = vmatpush1.xpose.msra.mxu0 0.0
    %889 = vmatprep.subr.mxu0 0.0
    %890 = vmatpush1.xpose.msra.mxu0 0.0
    %891 = vmatprep.subr.mxu0 0.0
    %892 = vmatpush1.xpose.msra.mxu0 0.0
    %893 = vmatprep.subr.mxu0 0.0
    %894 = vmatpush1.xpose.msra.mxu0 0.0
    %895 = vmatprep.subr.mxu0 0.0
    %896 = vmatpush1.xpose.msra.mxu0 0.0
    %897 = vmatprep.subr.mxu0 0.0
    %898 = vmatpush1.xpose.msra.mxu0 0.0
    %899 = vmatprep.subr.mxu0 0.0
    %900 = vmatpush1.xpose.msra.mxu0 0.0
    %901 = vmatprep.subr.mxu0 0.0
    %902 = vmatpush1.xpose.msra.mxu0 0.0
    %903 = vmatprep.subr.mxu0 0.0
    %904 = vmatpush1.xpose.msra.mxu0 0.0
    %905 = vmatprep.subr.mxu0 0.0
    %906 = vmatpush1.xpose.msra.mxu0 0.0
    %907 = vmatprep.subr.mxu0 0.0
    %908 = vmatpush1.xpose.msra.mxu0 %v875
    %909 = vmatprep.subr.mxu0 0.0
    %910 = vmatpush2.xpose.msra.mxu0 0.0
    %911 = vmatprep.subr.mxu0 0.0
    %912 = vmatpush2.xpose.msra.mxu0 0.0
    %913 = vmatprep.subr.mxu0 0.0
    %914 = vmatpush2.xpose.msra.mxu0 0.0
    %915 = vmatprep.subr.mxu0 0.0
    %916 = vmatpush2.xpose.msra.mxu0 0.0
    %917 = vmatprep.subr.mxu0 0.0
    %918 = vmatpush2.xpose.msra.mxu0 0.0
    %919 = vmatprep.subr.mxu0 0.0
    %920 = vmatpush2.xpose.msra.mxu0 0.0
    %921 = vmatprep.subr.mxu0 0.0
    %922 = vmatpush2.xpose.msra.mxu0 0.0
    %923 = vmatprep.subr.mxu0 0.0
    %924 = vmatpush2.xpose.msra.mxu0 0.0
    %925 = vmatprep.subr.mxu0 0.0
    %926 = vmatpush2.xpose.msra.mxu0 0.0
    %927 = vmatprep.subr.mxu0 0.0
    %928 = vmatpush2.xpose.msra.mxu0 0.0
    %929 = vmatprep.subr.mxu0 0.0
    %930 = vmatpush2.xpose.msra.mxu0 0.0
    %931 = vmatprep.subr.mxu0 0.0
    %932 = vmatpush2.xpose.msra.mxu0 0.0
    %933 = vmatprep.subr.mxu0 0.0
    %934 = vmatpush2.xpose.msra.mxu0 0.0
    %935 = vmatprep.subr.mxu0 0.0
    %936 = vmatpush2.xpose.msra.mxu0 0.0
    %937 = vmatprep.subr.mxu0 0.0
    %938 = vmatpush2.xpose.msra.mxu0 0.0
    %939 = vmatprep.subr.mxu0 0.0
    %940 = vmatpush2.xpose.msra.mxu0 0.0
    %941 = vmatprep.mubr.f32.mxu0 0.0
    %942 = vmatmul.mubr.f32.gmra.mxu0 %v872
    %v943 = vpop.f32.mrf.mxu0
    %v944 = vadd.f32 0.0, %v943
    %v945 = vpop.f32.mrf.mxu0
    %946 = vdwg.mxu0
    %vm947 = vcmask 64512
    %v948 = vsel %vm947, %v868, -inf
    %949 = vmax.xlane.f32.xlu0 %v948
    %v950 = vpop.xlane.xlu0 %949
    %v951 = vsel %vm947, %v944, -inf
    %952 = vmax.xlane.f32.xlu0 %v951
    %v953 = vpop.xlane.xlu0 %952
    %v954 = vsub.f32 %v868, %v950
    %v955 = vsub.f32 %v944, %v953
    %v956 = vmul.f32 %v954, 1.442695
    %v957 = vpow.pop %v956
    %v958 = vmul.f32 %v955, 1.442695
    %v959 = vpow.pop %v958
    %v960 = vsel %vm947, %v957, 0.0
    %961 = vadd.xlane.f32.xlu0 %v960
    %v962 = vpop.xlane.xlu0 %961
    %v963 = vsel %vm947, %v959, 0.0
    %964 = vadd.xlane.f32.xlu0 %v963
    %v965 = vpop.xlane.xlu0 %964
    %v966 = vrcp.pop %v962
    %v967 = vrcp.pop %v965
    %v968 = vmul.f32 %v957, %v966
    %v969 = vmul.f32 %v959, %v967
    %v971 = vsel %vm947, %v968, 0
    %973 = vmatprep.subr.mxu0 0.0
    %974 = vmatpush1.msra.mxu0 0.0
    %975 = vmatprep.subr.mxu0 0.0
    %976 = vmatpush1.msra.mxu0 0.0
    %977 = vmatprep.subr.mxu0 0.0
    %978 = vmatpush1.msra.mxu0 0.0
    %979 = vmatprep.subr.mxu0 0.0
    %980 = vmatpush1.msra.mxu0 0.0
    %981 = vmatprep.subr.mxu0 0.0
    %982 = vmatpush1.msra.mxu0 0.0
    %983 = vmatprep.subr.mxu0 0.0
    %984 = vmatpush1.msra.mxu0 0.0
    %985 = vmatprep.subr.mxu0 0.0
    %986 = vmatpush1.msra.mxu0 0.0
    %987 = vmatprep.subr.mxu0 0.0
    %988 = vmatpush1.msra.mxu0 0.0
    %989 = vmatprep.subr.mxu0 0.0
    %990 = vmatpush1.msra.mxu0 0.0
    %991 = vmatprep.subr.mxu0 0.0
    %992 = vmatpush1.msra.mxu0 0.0
    %993 = vmatprep.subr.mxu0 0.0
    %994 = vmatpush1.msra.mxu0 0.0
    %995 = vmatprep.subr.mxu0 0.0
    %996 = vmatpush1.msra.mxu0 0.0
    %997 = vmatprep.subr.mxu0 0.0
    %998 = vmatpush1.msra.mxu0 0.0
    %999 = vmatprep.subr.mxu0 0.0
    %1000 = vmatpush1.msra.mxu0 0.0
    %1001 = vmatprep.subr.mxu0 0.0
    %1002 = vmatpush1.msra.mxu0 0.0
    %1003 = vmatprep.subr.mxu0 0.0
    %1004 = vmatpush1.msra.mxu0 %v674
    %1005 = vmatprep.subr.mxu0 0.0
    %1006 = vmatpush2.msra.mxu0 0.0
    %1007 = vmatprep.subr.mxu0 0.0
    %1008 = vmatpush2.msra.mxu0 0.0
    %1009 = vmatprep.subr.mxu0 0.0
    %1010 = vmatpush2.msra.mxu0 0.0
    %1011 = vmatprep.subr.mxu0 0.0
    %1012 = vmatpush2.msra.mxu0 0.0
    %1013 = vmatprep.subr.mxu0 0.0
    %1014 = vmatpush2.msra.mxu0 0.0
    %1015 = vmatprep.subr.mxu0 0.0
    %1016 = vmatpush2.msra.mxu0 0.0
    %1017 = vmatprep.subr.mxu0 0.0
    %1018 = vmatpush2.msra.mxu0 0.0
    %1019 = vmatprep.subr.mxu0 0.0
    %1020 = vmatpush2.msra.mxu0 0.0
    %1021 = vmatprep.subr.mxu0 0.0
    %1022 = vmatpush2.msra.mxu0 0.0
    %1023 = vmatprep.subr.mxu0 0.0
    %1024 = vmatpush2.msra.mxu0 0.0
    %1025 = vmatprep.subr.mxu0 0.0
    %1026 = vmatpush2.msra.mxu0 0.0
    %1027 = vmatprep.subr.mxu0 0.0
    %1028 = vmatpush2.msra.mxu0 0.0
    %1029 = vmatprep.subr.mxu0 0.0
    %1030 = vmatpush2.msra.mxu0 0.0
    %1031 = vmatprep.subr.mxu0 0.0
    %1032 = vmatpush2.msra.mxu0 0.0
    %1033 = vmatprep.subr.mxu0 0.0
    %1034 = vmatpush2.msra.mxu0 0.0
    %1035 = vmatprep.subr.mxu0 0.0
    %1036 = vmatpush2.msra.mxu0 0.0
    %1037 = vmatprep.mubr.f32.mxu0 0.0
    %1038 = vmatmul.mubr.f32.gmra.mxu0 %v971
    %v1039 = vpop.f32.mrf.mxu0
    %v1040 = vadd.f32 0.0, %v1039
    %v1041 = vpop.f32.mrf.mxu0
    %1042 = vdwg.mxu0
    %v1044 = vsel %vm947, %v969, 0
    %1046 = vmatprep.subr.mxu0 0.0
    %1047 = vmatpush1.msra.mxu0 0.0
    %1048 = vmatprep.subr.mxu0 0.0
    %1049 = vmatpush1.msra.mxu0 0.0
    %1050 = vmatprep.subr.mxu0 0.0
    %1051 = vmatpush1.msra.mxu0 0.0
    %1052 = vmatprep.subr.mxu0 0.0
    %1053 = vmatpush1.msra.mxu0 0.0
    %1054 = vmatprep.subr.mxu0 0.0
    %1055 = vmatpush1.msra.mxu0 0.0
    %1056 = vmatprep.subr.mxu0 0.0
    %1057 = vmatpush1.msra.mxu0 0.0
    %1058 = vmatprep.subr.mxu0 0.0
    %1059 = vmatpush1.msra.mxu0 0.0
    %1060 = vmatprep.subr.mxu0 0.0
    %1061 = vmatpush1.msra.mxu0 0.0
    %1062 = vmatprep.subr.mxu0 0.0
    %1063 = vmatpush1.msra.mxu0 0.0
    %1064 = vmatprep.subr.mxu0 0.0
    %1065 = vmatpush1.msra.mxu0 0.0
    %1066 = vmatprep.subr.mxu0 0.0
    %1067 = vmatpush1.msra.mxu0 0.0
    %1068 = vmatprep.subr.mxu0 0.0
    %1069 = vmatpush1.msra.mxu0 0.0
    %1070 = vmatprep.subr.mxu0 0.0
    %1071 = vmatpush1.msra.mxu0 0.0
    %1072 = vmatprep.subr.mxu0 0.0
    %1073 = vmatpush1.msra.mxu0 0.0
    %1074 = vmatprep.subr.mxu0 0.0
    %1075 = vmatpush1.msra.mxu0 0.0
    %1076 = vmatprep.subr.mxu0 0.0
    %1077 = vmatpush1.msra.mxu0 %v677
    %1078 = vmatprep.subr.mxu0 0.0
    %1079 = vmatpush2.msra.mxu0 0.0
    %1080 = vmatprep.subr.mxu0 0.0
    %1081 = vmatpush2.msra.mxu0 0.0
    %1082 = vmatprep.subr.mxu0 0.0
    %1083 = vmatpush2.msra.mxu0 0.0
    %1084 = vmatprep.subr.mxu0 0.0
    %1085 = vmatpush2.msra.mxu0 0.0
    %1086 = vmatprep.subr.mxu0 0.0
    %1087 = vmatpush2.msra.mxu0 0.0
    %1088 = vmatprep.subr.mxu0 0.0
    %1089 = vmatpush2.msra.mxu0 0.0
    %1090 = vmatprep.subr.mxu0 0.0
    %1091 = vmatpush2.msra.mxu0 0.0
    %1092 = vmatprep.subr.mxu0 0.0
    %1093 = vmatpush2.msra.mxu0 0.0
    %1094 = vmatprep.subr.mxu0 0.0
    %1095 = vmatpush2.msra.mxu0 0.0
    %1096 = vmatprep.subr.mxu0 0.0
    %1097 = vmatpush2.msra.mxu0 0.0
    %1098 = vmatprep.subr.mxu0 0.0
    %1099 = vmatpush2.msra.mxu0 0.0
    %1100 = vmatprep.subr.mxu0 0.0
    %1101 = vmatpush2.msra.mxu0 0.0
    %1102 = vmatprep.subr.mxu0 0.0
    %1103 = vmatpush2.msra.mxu0 0.0
    %1104 = vmatprep.subr.mxu0 0.0
    %1105 = vmatpush2.msra.mxu0 0.0
    %1106 = vmatprep.subr.mxu0 0.0
    %1107 = vmatpush2.msra.mxu0 0.0
    %1108 = vmatprep.subr.mxu0 0.0
    %1109 = vmatpush2.msra.mxu0 0.0
    %1110 = vmatprep.mubr.f32.mxu0 0.0
    %1111 = vmatmul.mubr.f32.gmra.mxu0 %v1044
    %v1112 = vpop.f32.mrf.mxu0
    %v1113 = vadd.f32 0.0, %v1112
    %v1114 = vpop.f32.mrf.mxu0
    %1115 = vdwg.mxu0
    %1116 = vrot.lane.b32.xlu0 %v792, 96
    %v1117 = vpop.permute.xlu0 %1116
    %1118 = vrot.lane.b32.xlu0 %v562, 96
    %v1119 = vpop.permute.xlu0 %1118
    %v1120 = vsel %vm794, %v1117, 0
    %v1122 = vsel %vm794, %v1119, 0
    %1124 = vmatprep.subr.mxu0 0.0
    %1125 = vmatpush1.xpose.msra.mxu0 0.0
    %1126 = vmatprep.subr.mxu0 0.0
    %1127 = vmatpush1.xpose.msra.mxu0 0.0
    %1128 = vmatprep.subr.mxu0 0.0
    %1129 = vmatpush1.xpose.msra.mxu0 0.0
    %1130 = vmatprep.subr.mxu0 0.0
    %1131 = vmatpush1.xpose.msra.mxu0 0.0
    %1132 = vmatprep.subr.mxu0 0.0
    %1133 = vmatpush1.xpose.msra.mxu0 0.0
    %1134 = vmatprep.subr.mxu0 0.0
    %1135 = vmatpush1.xpose.msra.mxu0 0.0
    %1136 = vmatprep.subr.mxu0 0.0
    %1137 = vmatpush1.xpose.msra.mxu0 0.0
    %1138 = vmatprep.subr.mxu0 0.0
    %1139 = vmatpush1.xpose.msra.mxu0 0.0
    %1140 = vmatprep.subr.mxu0 0.0
    %1141 = vmatpush1.xpose.msra.mxu0 0.0
    %1142 = vmatprep.subr.mxu0 0.0
    %1143 = vmatpush1.xpose.msra.mxu0 0.0
    %1144 = vmatprep.subr.mxu0 0.0
    %1145 = vmatpush1.xpose.msra.mxu0 0.0
    %1146 = vmatprep.subr.mxu0 0.0
    %1147 = vmatpush1.xpose.msra.mxu0 0.0
    %1148 = vmatprep.subr.mxu0 0.0
    %1149 = vmatpush1.xpose.msra.mxu0 0.0
    %1150 = vmatprep.subr.mxu0 0.0
    %1151 = vmatpush1.xpose.msra.mxu0 0.0
    %1152 = vmatprep.subr.mxu0 0.0
    %1153 = vmatpush1.xpose.msra.mxu0 0.0
    %1154 = vmatprep.subr.mxu0 0.0
    %1155 = vmatpush1.xpose.msra.mxu0 %v1122
    %1156 = vmatprep.subr.mxu0 0.0
    %1157 = vmatpush2.xpose.msra.mxu0 0.0
    %1158 = vmatprep.subr.mxu0 0.0
    %1159 = vmatpush2.xpose.msra.mxu0 0.0
    %1160 = vmatprep.subr.mxu0 0.0
    %1161 = vmatpush2.xpose.msra.mxu0 0.0
    %1162 = vmatprep.subr.mxu0 0.0
    %1163 = vmatpush2.xpose.msra.mxu0 0.0
    %1164 = vmatprep.subr.mxu0 0.0
    %1165 = vmatpush2.xpose.msra.mxu0 0.0
    %1166 = vmatprep.subr.mxu0 0.0
    %1167 = vmatpush2.xpose.msra.mxu0 0.0
    %1168 = vmatprep.subr.mxu0 0.0
    %1169 = vmatpush2.xpose.msra.mxu0 0.0
    %1170 = vmatprep.subr.mxu0 0.0
    %1171 = vmatpush2.xpose.msra.mxu0 0.0
    %1172 = vmatprep.subr.mxu0 0.0
    %1173 = vmatpush2.xpose.msra.mxu0 0.0
    %1174 = vmatprep.subr.mxu0 0.0
    %1175 = vmatpush2.xpose.msra.mxu0 0.0
    %1176 = vmatprep.subr.mxu0 0.0
    %1177 = vmatpush2.xpose.msra.mxu0 0.0
    %1178 = vmatprep.subr.mxu0 0.0
    %1179 = vmatpush2.xpose.msra.mxu0 0.0
    %1180 = vmatprep.subr.mxu0 0.0
    %1181 = vmatpush2.xpose.msra.mxu0 0.0
    %1182 = vmatprep.subr.mxu0 0.0
    %1183 = vmatpush2.xpose.msra.mxu0 0.0
    %1184 = vmatprep.subr.mxu0 0.0
    %1185 = vmatpush2.xpose.msra.mxu0 0.0
    %1186 = vmatprep.subr.mxu0 0.0
    %1187 = vmatpush2.xpose.msra.mxu0 0.0
    %1188 = vmatprep.mubr.f32.mxu0 0.0
    %1189 = vmatmul.mubr.f32.gmra.mxu0 %v1120
    %v1190 = vpop.f32.mrf.mxu0
    %v1191 = vadd.f32 0.0, %v1190
    %v1192 = vpop.f32.mrf.mxu0
    %1193 = vdwg.mxu0
    %1194 = vrot.lane.b32.xlu0 %v793, 96
    %v1195 = vpop.permute.xlu0 %1194
    %1196 = vrot.lane.b32.xlu0 %v565, 96
    %v1197 = vpop.permute.xlu0 %1196
    %v1198 = vsel %vm794, %v1195, 0
    %v1200 = vsel %vm794, %v1197, 0
    %1202 = vmatprep.subr.mxu0 0.0
    %1203 = vmatpush1.xpose.msra.mxu0 0.0
    %1204 = vmatprep.subr.mxu0 0.0
    %1205 = vmatpush1.xpose.msra.mxu0 0.0
    %1206 = vmatprep.subr.mxu0 0.0
    %1207 = vmatpush1.xpose.msra.mxu0 0.0
    %1208 = vmatprep.subr.mxu0 0.0
    %1209 = vmatpush1.xpose.msra.mxu0 0.0
    %1210 = vmatprep.subr.mxu0 0.0
    %1211 = vmatpush1.xpose.msra.mxu0 0.0
    %1212 = vmatprep.subr.mxu0 0.0
    %1213 = vmatpush1.xpose.msra.mxu0 0.0
    %1214 = vmatprep.subr.mxu0 0.0
    %1215 = vmatpush1.xpose.msra.mxu0 0.0
    %1216 = vmatprep.subr.mxu0 0.0
    %1217 = vmatpush1.xpose.msra.mxu0 0.0
    %1218 = vmatprep.subr.mxu0 0.0
    %1219 = vmatpush1.xpose.msra.mxu0 0.0
    %1220 = vmatprep.subr.mxu0 0.0
    %1221 = vmatpush1.xpose.msra.mxu0 0.0
    %1222 = vmatprep.subr.mxu0 0.0
    %1223 = vmatpush1.xpose.msra.mxu0 0.0
    %1224 = vmatprep.subr.mxu0 0.0
    %1225 = vmatpush1.xpose.msra.mxu0 0.0
    %1226 = vmatprep.subr.mxu0 0.0
    %1227 = vmatpush1.xpose.msra.mxu0 0.0
    %1228 = vmatprep.subr.mxu0 0.0
    %1229 = vmatpush1.xpose.msra.mxu0 0.0
    %1230 = vmatprep.subr.mxu0 0.0
    %1231 = vmatpush1.xpose.msra.mxu0 0.0
    %1232 = vmatprep.subr.mxu0 0.0
    %1233 = vmatpush1.xpose.msra.mxu0 %v1200
    %1234 = vmatprep.subr.mxu0 0.0
    %1235 = vmatpush2.xpose.msra.mxu0 0.0
    %1236 = vmatprep.subr.mxu0 0.0
    %1237 = vmatpush2.xpose.msra.mxu0 0.0
    %1238 = vmatprep.subr.mxu0 0.0
    %1239 = vmatpush2.xpose.msra.mxu0 0.0
    %1240 = vmatprep.subr.mxu0 0.0
    %1241 = vmatpush2.xpose.msra.mxu0 0.0
    %1242 = vmatprep.subr.mxu0 0.0
    %1243 = vmatpush2.xpose.msra.mxu0 0.0
    %1244 = vmatprep.subr.mxu0 0.0
    %1245 = vmatpush2.xpose.msra.mxu0 0.0
    %1246 = vmatprep.subr.mxu0 0.0
    %1247 = vmatpush2.xpose.msra.mxu0 0.0
    %1248 = vmatprep.subr.mxu0 0.0
    %1249 = vmatpush2.xpose.msra.mxu0 0.0
    %1250 = vmatprep.subr.mxu0 0.0
    %1251 = vmatpush2.xpose.msra.mxu0 0.0
    %1252 = vmatprep.subr.mxu0 0.0
    %1253 = vmatpush2.xpose.msra.mxu0 0.0
    %1254 = vmatprep.subr.mxu0 0.0
    %1255 = vmatpush2.xpose.msra.mxu0 0.0
    %1256 = vmatprep.subr.mxu0 0.0
    %1257 = vmatpush2.xpose.msra.mxu0 0.0
    %1258 = vmatprep.subr.mxu0 0.0
    %1259 = vmatpush2.xpose.msra.mxu0 0.0
    %1260 = vmatprep.subr.mxu0 0.0
    %1261 = vmatpush2.xpose.msra.mxu0 0.0
    %1262 = vmatprep.subr.mxu0 0.0
    %1263 = vmatpush2.xpose.msra.mxu0 0.0
    %1264 = vmatprep.subr.mxu0 0.0
    %1265 = vmatpush2.xpose.msra.mxu0 0.0
    %1266 = vmatprep.mubr.f32.mxu0 0.0
    %1267 = vmatmul.mubr.f32.gmra.mxu0 %v1198
    %v1268 = vpop.f32.mrf.mxu0
    %v1269 = vadd.f32 0.0, %v1268
    %v1270 = vpop.f32.mrf.mxu0
    %1271 = vdwg.mxu0
    %v1272 = vsel %vm947, %v1191, -inf
    %1273 = vmax.xlane.f32.xlu0 %v1272
    %v1274 = vpop.xlane.xlu0 %1273
    %v1275 = vsel %vm947, %v1269, -inf
    %1276 = vmax.xlane.f32.xlu0 %v1275
    %v1277 = vpop.xlane.xlu0 %1276
    %v1278 = vsub.f32 %v1191, %v1274
    %v1279 = vsub.f32 %v1269, %v1277
    %v1280 = vmul.f32 %v1278, 1.442695
    %v1281 = vpow.pop %v1280
    %v1282 = vmul.f32 %v1279, 1.442695
    %v1283 = vpow.pop %v1282
    %v1284 = vsel %vm947, %v1281, 0.0
    %1285 = vadd.xlane.f32.xlu0 %v1284
    %v1286 = vpop.xlane.xlu0 %1285
    %v1287 = vsel %vm947, %v1283, 0.0
    %1288 = vadd.xlane.f32.xlu0 %v1287
    %v1289 = vpop.xlane.xlu0 %1288
    %v1290 = vrcp.pop %v1286
    %v1291 = vrcp.pop %v1289
    %v1292 = vmul.f32 %v1281, %v1290
    %v1293 = vmul.f32 %v1283, %v1291
    %1295 = vrot.lane.b32.xlu0 %v674, 96
    %v1296 = vpop.permute.xlu0 %1295
    %v1299 = vsel %vm947, %v1292, 0
    %1301 = vmatprep.subr.mxu0 0.0
    %1302 = vmatpush1.msra.mxu0 0.0
    %1303 = vmatprep.subr.mxu0 0.0
    %1304 = vmatpush1.msra.mxu0 0.0
    %1305 = vmatprep.subr.mxu0 0.0
    %1306 = vmatpush1.msra.mxu0 0.0
    %1307 = vmatprep.subr.mxu0 0.0
    %1308 = vmatpush1.msra.mxu0 0.0
    %1309 = vmatprep.subr.mxu0 0.0
    %1310 = vmatpush1.msra.mxu0 0.0
    %1311 = vmatprep.subr.mxu0 0.0
    %1312 = vmatpush1.msra.mxu0 0.0
    %1313 = vmatprep.subr.mxu0 0.0
    %1314 = vmatpush1.msra.mxu0 0.0
    %1315 = vmatprep.subr.mxu0 0.0
    %1316 = vmatpush1.msra.mxu0 0.0
    %1317 = vmatprep.subr.mxu0 0.0
    %1318 = vmatpush1.msra.mxu0 0.0
    %1319 = vmatprep.subr.mxu0 0.0
    %1320 = vmatpush1.msra.mxu0 0.0
    %1321 = vmatprep.subr.mxu0 0.0
    %1322 = vmatpush1.msra.mxu0 0.0
    %1323 = vmatprep.subr.mxu0 0.0
    %1324 = vmatpush1.msra.mxu0 0.0
    %1325 = vmatprep.subr.mxu0 0.0
    %1326 = vmatpush1.msra.mxu0 0.0
    %1327 = vmatprep.subr.mxu0 0.0
    %1328 = vmatpush1.msra.mxu0 0.0
    %1329 = vmatprep.subr.mxu0 0.0
    %1330 = vmatpush1.msra.mxu0 0.0
    %1331 = vmatprep.subr.mxu0 0.0
    %1332 = vmatpush1.msra.mxu0 %v1296
    %1333 = vmatprep.subr.mxu0 0.0
    %1334 = vmatpush2.msra.mxu0 0.0
    %1335 = vmatprep.subr.mxu0 0.0
    %1336 = vmatpush2.msra.mxu0 0.0
    %1337 = vmatprep.subr.mxu0 0.0
    %1338 = vmatpush2.msra.mxu0 0.0
    %1339 = vmatprep.subr.mxu0 0.0
    %1340 = vmatpush2.msra.mxu0 0.0
    %1341 = vmatprep.subr.mxu0 0.0
    %1342 = vmatpush2.msra.mxu0 0.0
    %1343 = vmatprep.subr.mxu0 0.0
    %1344 = vmatpush2.msra.mxu0 0.0
    %1345 = vmatprep.subr.mxu0 0.0
    %1346 = vmatpush2.msra.mxu0 0.0
    %1347 = vmatprep.subr.mxu0 0.0
    %1348 = vmatpush2.msra.mxu0 0.0
    %1349 = vmatprep.subr.mxu0 0.0
    %1350 = vmatpush2.msra.mxu0 0.0
    %1351 = vmatprep.subr.mxu0 0.0
    %1352 = vmatpush2.msra.mxu0 0.0
    %1353 = vmatprep.subr.mxu0 0.0
    %1354 = vmatpush2.msra.mxu0 0.0
    %1355 = vmatprep.subr.mxu0 0.0
    %1356 = vmatpush2.msra.mxu0 0.0
    %1357 = vmatprep.subr.mxu0 0.0
    %1358 = vmatpush2.msra.mxu0 0.0
    %1359 = vmatprep.subr.mxu0 0.0
    %1360 = vmatpush2.msra.mxu0 0.0
    %1361 = vmatprep.subr.mxu0 0.0
    %1362 = vmatpush2.msra.mxu0 0.0
    %1363 = vmatprep.subr.mxu0 0.0
    %1364 = vmatpush2.msra.mxu0 0.0
    %1365 = vmatprep.mubr.f32.mxu0 0.0
    %1366 = vmatmul.mubr.f32.gmra.mxu0 %v1299
    %v1367 = vpop.f32.mrf.mxu0
    %v1368 = vadd.f32 0.0, %v1367
    %v1369 = vpop.f32.mrf.mxu0
    %1370 = vdwg.mxu0
    %1372 = vrot.lane.b32.xlu0 %v677, 96
    %v1373 = vpop.permute.xlu0 %1372
    %v1376 = vsel %vm947, %v1293, 0
    %1378 = vmatprep.subr.mxu0 0.0
    %1379 = vmatpush1.msra.mxu0 0.0
    %1380 = vmatprep.subr.mxu0 0.0
    %1381 = vmatpush1.msra.mxu0 0.0
    %1382 = vmatprep.subr.mxu0 0.0
    %1383 = vmatpush1.msra.mxu0 0.0
    %1384 = vmatprep.subr.mxu0 0.0
    %1385 = vmatpush1.msra.mxu0 0.0
    %1386 = vmatprep.subr.mxu0 0.0
    %1387 = vmatpush1.msra.mxu0 0.0
    %1388 = vmatprep.subr.mxu0 0.0
    %1389 = vmatpush1.msra.mxu0 0.0
    %1390 = vmatprep.subr.mxu0 0.0
    %1391 = vmatpush1.msra.mxu0 0.0
    %1392 = vmatprep.subr.mxu0 0.0
    %1393 = vmatpush1.msra.mxu0 0.0
    %1394 = vmatprep.subr.mxu0 0.0
    %1395 = vmatpush1.msra.mxu0 0.0
    %1396 = vmatprep.subr.mxu0 0.0
    %1397 = vmatpush1.msra.mxu0 0.0
    %1398 = vmatprep.subr.mxu0 0.0
    %1399 = vmatpush1.msra.mxu0 0.0
    %1400 = vmatprep.subr.mxu0 0.0
    %1401 = vmatpush1.msra.mxu0 0.0
    %1402 = vmatprep.subr.mxu0 0.0
    %1403 = vmatpush1.msra.mxu0 0.0
    %1404 = vmatprep.subr.mxu0 0.0
    %1405 = vmatpush1.msra.mxu0 0.0
    %1406 = vmatprep.subr.mxu0 0.0
    %1407 = vmatpush1.msra.mxu0 0.0
    %1408 = vmatprep.subr.mxu0 0.0
    %1409 = vmatpush1.msra.mxu0 %v1373
    %1410 = vmatprep.subr.mxu0 0.0
    %1411 = vmatpush2.msra.mxu0 0.0
    %1412 = vmatprep.subr.mxu0 0.0
    %1413 = vmatpush2.msra.mxu0 0.0
    %1414 = vmatprep.subr.mxu0 0.0
    %1415 = vmatpush2.msra.mxu0 0.0
    %1416 = vmatprep.subr.mxu0 0.0
    %1417 = vmatpush2.msra.mxu0 0.0
    %1418 = vmatprep.subr.mxu0 0.0
    %1419 = vmatpush2.msra.mxu0 0.0
    %1420 = vmatprep.subr.mxu0 0.0
    %1421 = vmatpush2.msra.mxu0 0.0
    %1422 = vmatprep.subr.mxu0 0.0
    %1423 = vmatpush2.msra.mxu0 0.0
    %1424 = vmatprep.subr.mxu0 0.0
    %1425 = vmatpush2.msra.mxu0 0.0
    %1426 = vmatprep.subr.mxu0 0.0
    %1427 = vmatpush2.msra.mxu0 0.0
    %1428 = vmatprep.subr.mxu0 0.0
    %1429 = vmatpush2.msra.mxu0 0.0
    %1430 = vmatprep.subr.mxu0 0.0
    %1431 = vmatpush2.msra.mxu0 0.0
    %1432 = vmatprep.subr.mxu0 0.0
    %1433 = vmatpush2.msra.mxu0 0.0
    %1434 = vmatprep.subr.mxu0 0.0
    %1435 = vmatpush2.msra.mxu0 0.0
    %1436 = vmatprep.subr.mxu0 0.0
    %1437 = vmatpush2.msra.mxu0 0.0
    %1438 = vmatprep.subr.mxu0 0.0
    %1439 = vmatpush2.msra.mxu0 0.0
    %1440 = vmatprep.subr.mxu0 0.0
    %1441 = vmatpush2.msra.mxu0 0.0
    %1442 = vmatprep.mubr.f32.mxu0 0.0
    %1443 = vmatmul.mubr.f32.gmra.mxu0 %v1376
    %v1444 = vpop.f32.mrf.mxu0
    %v1445 = vadd.f32 0.0, %v1444
    %v1446 = vpop.f32.mrf.mxu0
    %1447 = vdwg.mxu0
    %1448 = vrot.lane.b32.xlu0 %v792, 64
    %v1449 = vpop.permute.xlu0 %1448
    %1450 = vrot.lane.b32.xlu0 %v562, 64
    %v1451 = vpop.permute.xlu0 %1450
    %v1452 = vsel %vm794, %v1449, 0
    %v1454 = vsel %vm794, %v1451, 0
    %1456 = vmatprep.subr.mxu0 0.0
    %1457 = vmatpush1.xpose.msra.mxu0 0.0
    %1458 = vmatprep.subr.mxu0 0.0
    %1459 = vmatpush1.xpose.msra.mxu0 0.0
    %1460 = vmatprep.subr.mxu0 0.0
    %1461 = vmatpush1.xpose.msra.mxu0 0.0
    %1462 = vmatprep.subr.mxu0 0.0
    %1463 = vmatpush1.xpose.msra.mxu0 0.0
    %1464 = vmatprep.subr.mxu0 0.0
    %1465 = vmatpush1.xpose.msra.mxu0 0.0
    %1466 = vmatprep.subr.mxu0 0.0
    %1467 = vmatpush1.xpose.msra.mxu0 0.0
    %1468 = vmatprep.subr.mxu0 0.0
    %1469 = vmatpush1.xpose.msra.mxu0 0.0
    %1470 = vmatprep.subr.mxu0 0.0
    %1471 = vmatpush1.xpose.msra.mxu0 0.0
    %1472 = vmatprep.subr.mxu0 0.0
    %1473 = vmatpush1.xpose.msra.mxu0 0.0
    %1474 = vmatprep.subr.mxu0 0.0
    %1475 = vmatpush1.xpose.msra.mxu0 0.0
    %1476 = vmatprep.subr.mxu0 0.0
    %1477 = vmatpush1.xpose.msra.mxu0 0.0
    %1478 = vmatprep.subr.mxu0 0.0
    %1479 = vmatpush1.xpose.msra.mxu0 0.0
    %1480 = vmatprep.subr.mxu0 0.0
    %1481 = vmatpush1.xpose.msra.mxu0 0.0
    %1482 = vmatprep.subr.mxu0 0.0
    %1483 = vmatpush1.xpose.msra.mxu0 0.0
    %1484 = vmatprep.subr.mxu0 0.0
    %1485 = vmatpush1.xpose.msra.mxu0 0.0
    %1486 = vmatprep.subr.mxu0 0.0
    %1487 = vmatpush1.xpose.msra.mxu0 %v1454
    %1488 = vmatprep.subr.mxu0 0.0
    %1489 = vmatpush2.xpose.msra.mxu0 0.0
    %1490 = vmatprep.subr.mxu0 0.0
    %1491 = vmatpush2.xpose.msra.mxu0 0.0
    %1492 = vmatprep.subr.mxu0 0.0
    %1493 = vmatpush2.xpose.msra.mxu0 0.0
    %1494 = vmatprep.subr.mxu0 0.0
    %1495 = vmatpush2.xpose.msra.mxu0 0.0
    %1496 = vmatprep.subr.mxu0 0.0
    %1497 = vmatpush2.xpose.msra.mxu0 0.0
    %1498 = vmatprep.subr.mxu0 0.0
    %1499 = vmatpush2.xpose.msra.mxu0 0.0
    %1500 = vmatprep.subr.mxu0 0.0
    %1501 = vmatpush2.xpose.msra.mxu0 0.0
    %1502 = vmatprep.subr.mxu0 0.0
    %1503 = vmatpush2.xpose.msra.mxu0 0.0
    %1504 = vmatprep.subr.mxu0 0.0
    %1505 = vmatpush2.xpose.msra.mxu0 0.0
    %1506 = vmatprep.subr.mxu0 0.0
    %1507 = vmatpush2.xpose.msra.mxu0 0.0
    %1508 = vmatprep.subr.mxu0 0.0
    %1509 = vmatpush2.xpose.msra.mxu0 0.0
    %1510 = vmatprep.subr.mxu0 0.0
    %1511 = vmatpush2.xpose.msra.mxu0 0.0
    %1512 = vmatprep.subr.mxu0 0.0
    %1513 = vmatpush2.xpose.msra.mxu0 0.0
    %1514 = vmatprep.subr.mxu0 0.0
    %1515 = vmatpush2.xpose.msra.mxu0 0.0
    %1516 = vmatprep.subr.mxu0 0.0
    %1517 = vmatpush2.xpose.msra.mxu0 0.0
    %1518 = vmatprep.subr.mxu0 0.0
    %1519 = vmatpush2.xpose.msra.mxu0 0.0
    %1520 = vmatprep.mubr.f32.mxu0 0.0
    %1521 = vmatmul.mubr.f32.gmra.mxu0 %v1452
    %v1522 = vpop.f32.mrf.mxu0
    %v1523 = vadd.f32 0.0, %v1522
    %v1524 = vpop.f32.mrf.mxu0
    %1525 = vdwg.mxu0
    %1526 = vrot.lane.b32.xlu0 %v793, 64
    %v1527 = vpop.permute.xlu0 %1526
    %1528 = vrot.lane.b32.xlu0 %v565, 64
    %v1529 = vpop.permute.xlu0 %1528
    %v1530 = vsel %vm794, %v1527, 0
    %v1532 = vsel %vm794, %v1529, 0
    %1534 = vmatprep.subr.mxu0 0.0
    %1535 = vmatpush1.xpose.msra.mxu0 0.0
    %1536 = vmatprep.subr.mxu0 0.0
    %1537 = vmatpush1.xpose.msra.mxu0 0.0
    %1538 = vmatprep.subr.mxu0 0.0
    %1539 = vmatpush1.xpose.msra.mxu0 0.0
    %1540 = vmatprep.subr.mxu0 0.0
    %1541 = vmatpush1.xpose.msra.mxu0 0.0
    %1542 = vmatprep.subr.mxu0 0.0
    %1543 = vmatpush1.xpose.msra.mxu0 0.0
    %1544 = vmatprep.subr.mxu0 0.0
    %1545 = vmatpush1.xpose.msra.mxu0 0.0
    %1546 = vmatprep.subr.mxu0 0.0
    %1547 = vmatpush1.xpose.msra.mxu0 0.0
    %1548 = vmatprep.subr.mxu0 0.0
    %1549 = vmatpush1.xpose.msra.mxu0 0.0
    %1550 = vmatprep.subr.mxu0 0.0
    %1551 = vmatpush1.xpose.msra.mxu0 0.0
    %1552 = vmatprep.subr.mxu0 0.0
    %1553 = vmatpush1.xpose.msra.mxu0 0.0
    %1554 = vmatprep.subr.mxu0 0.0
    %1555 = vmatpush1.xpose.msra.mxu0 0.0
    %1556 = vmatprep.subr.mxu0 0.0
    %1557 = vmatpush1.xpose.msra.mxu0 0.0
    %1558 = vmatprep.subr.mxu0 0.0
    %1559 = vmatpush1.xpose.msra.mxu0 0.0
    %1560 = vmatprep.subr.mxu0 0.0
    %1561 = vmatpush1.xpose.msra.mxu0 0.0
    %1562 = vmatprep.subr.mxu0 0.0
    %1563 = vmatpush1.xpose.msra.mxu0 0.0
    %1564 = vmatprep.subr.mxu0 0.0
    %1565 = vmatpush1.xpose.msra.mxu0 %v1532
    %1566 = vmatprep.subr.mxu0 0.0
    %1567 = vmatpush2.xpose.msra.mxu0 0.0
    %1568 = vmatprep.subr.mxu0 0.0
    %1569 = vmatpush2.xpose.msra.mxu0 0.0
    %1570 = vmatprep.subr.mxu0 0.0
    %1571 = vmatpush2.xpose.msra.mxu0 0.0
    %1572 = vmatprep.subr.mxu0 0.0
    %1573 = vmatpush2.xpose.msra.mxu0 0.0
    %1574 = vmatprep.subr.mxu0 0.0
    %1575 = vmatpush2.xpose.msra.mxu0 0.0
    %1576 = vmatprep.subr.mxu0 0.0
    %1577 = vmatpush2.xpose.msra.mxu0 0.0
    %1578 = vmatprep.subr.mxu0 0.0
    %1579 = vmatpush2.xpose.msra.mxu0 0.0
    %1580 = vmatprep.subr.mxu0 0.0
    %1581 = vmatpush2.xpose.msra.mxu0 0.0
    %1582 = vmatprep.subr.mxu0 0.0
    %1583 = vmatpush2.xpose.msra.mxu0 0.0
    %1584 = vmatprep.subr.mxu0 0.0
    %1585 = vmatpush2.xpose.msra.mxu0 0.0
    %1586 = vmatprep.subr.mxu0 0.0
    %1587 = vmatpush2.xpose.msra.mxu0 0.0
    %1588 = vmatprep.subr.mxu0 0.0
    %1589 = vmatpush2.xpose.msra.mxu0 0.0
    %1590 = vmatprep.subr.mxu0 0.0
    %1591 = vmatpush2.xpose.msra.mxu0 0.0
    %1592 = vmatprep.subr.mxu0 0.0
    %1593 = vmatpush2.xpose.msra.mxu0 0.0
    %1594 = vmatprep.subr.mxu0 0.0
    %1595 = vmatpush2.xpose.msra.mxu0 0.0
    %1596 = vmatprep.subr.mxu0 0.0
    %1597 = vmatpush2.xpose.msra.mxu0 0.0
    %1598 = vmatprep.mubr.f32.mxu0 0.0
    %1599 = vmatmul.mubr.f32.gmra.mxu0 %v1530
    %v1600 = vpop.f32.mrf.mxu0
    %v1601 = vadd.f32 0.0, %v1600
    %v1602 = vpop.f32.mrf.mxu0
    %1603 = vdwg.mxu0
    %v1604 = vsel %vm947, %v1523, -inf
    %1605 = vmax.xlane.f32.xlu0 %v1604
    %v1606 = vpop.xlane.xlu0 %1605
    %v1607 = vsel %vm947, %v1601, -inf
    %1608 = vmax.xlane.f32.xlu0 %v1607
    %v1609 = vpop.xlane.xlu0 %1608
    %v1610 = vsub.f32 %v1523, %v1606
    %v1611 = vsub.f32 %v1601, %v1609
    %v1612 = vmul.f32 %v1610, 1.442695
    %v1613 = vpow.pop %v1612
    %v1614 = vmul.f32 %v1611, 1.442695
    %v1615 = vpow.pop %v1614
    %v1616 = vsel %vm947, %v1613, 0.0
    %1617 = vadd.xlane.f32.xlu0 %v1616
    %v1618 = vpop.xlane.xlu0 %1617
    %v1619 = vsel %vm947, %v1615, 0.0
    %1620 = vadd.xlane.f32.xlu0 %v1619
    %v1621 = vpop.xlane.xlu0 %1620
    %v1622 = vrcp.pop %v1618
    %v1623 = vrcp.pop %v1621
    %v1624 = vmul.f32 %v1613, %v1622
    %v1625 = vmul.f32 %v1615, %v1623
    %1626 = vrot.lane.b32.xlu0 %v674, 64
    %v1627 = vpop.permute.xlu0 %1626
    %v1630 = vsel %vm947, %v1624, 0
    %1632 = vmatprep.subr.mxu0 0.0
    %1633 = vmatpush1.msra.mxu0 0.0
    %1634 = vmatprep.subr.mxu0 0.0
    %1635 = vmatpush1.msra.mxu0 0.0
    %1636 = vmatprep.subr.mxu0 0.0
    %1637 = vmatpush1.msra.mxu0 0.0
    %1638 = vmatprep.subr.mxu0 0.0
    %1639 = vmatpush1.msra.mxu0 0.0
    %1640 = vmatprep.subr.mxu0 0.0
    %1641 = vmatpush1.msra.mxu0 0.0
    %1642 = vmatprep.subr.mxu0 0.0
    %1643 = vmatpush1.msra.mxu0 0.0
    %1644 = vmatprep.subr.mxu0 0.0
    %1645 = vmatpush1.msra.mxu0 0.0
    %1646 = vmatprep.subr.mxu0 0.0
    %1647 = vmatpush1.msra.mxu0 0.0
    %1648 = vmatprep.subr.mxu0 0.0
    %1649 = vmatpush1.msra.mxu0 0.0
    %1650 = vmatprep.subr.mxu0 0.0
    %1651 = vmatpush1.msra.mxu0 0.0
    %1652 = vmatprep.subr.mxu0 0.0
    %1653 = vmatpush1.msra.mxu0 0.0
    %1654 = vmatprep.subr.mxu0 0.0
    %1655 = vmatpush1.msra.mxu0 0.0
    %1656 = vmatprep.subr.mxu0 0.0
    %1657 = vmatpush1.msra.mxu0 0.0
    %1658 = vmatprep.subr.mxu0 0.0
    %1659 = vmatpush1.msra.mxu0 0.0
    %1660 = vmatprep.subr.mxu0 0.0
    %1661 = vmatpush1.msra.mxu0 0.0
    %1662 = vmatprep.subr.mxu0 0.0
    %1663 = vmatpush1.msra.mxu0 %v1627
    %1664 = vmatprep.subr.mxu0 0.0
    %1665 = vmatpush2.msra.mxu0 0.0
    %1666 = vmatprep.subr.mxu0 0.0
    %1667 = vmatpush2.msra.mxu0 0.0
    %1668 = vmatprep.subr.mxu0 0.0
    %1669 = vmatpush2.msra.mxu0 0.0
    %1670 = vmatprep.subr.mxu0 0.0
    %1671 = vmatpush2.msra.mxu0 0.0
    %1672 = vmatprep.subr.mxu0 0.0
    %1673 = vmatpush2.msra.mxu0 0.0
    %1674 = vmatprep.subr.mxu0 0.0
    %1675 = vmatpush2.msra.mxu0 0.0
    %1676 = vmatprep.subr.mxu0 0.0
    %1677 = vmatpush2.msra.mxu0 0.0
    %1678 = vmatprep.subr.mxu0 0.0
    %1679 = vmatpush2.msra.mxu0 0.0
    %1680 = vmatprep.subr.mxu0 0.0
    %1681 = vmatpush2.msra.mxu0 0.0
    %1682 = vmatprep.subr.mxu0 0.0
    %1683 = vmatpush2.msra.mxu0 0.0
    %1684 = vmatprep.subr.mxu0 0.0
    %1685 = vmatpush2.msra.mxu0 0.0
    %1686 = vmatprep.subr.mxu0 0.0
    %1687 = vmatpush2.msra.mxu0 0.0
    %1688 = vmatprep.subr.mxu0 0.0
    %1689 = vmatpush2.msra.mxu0 0.0
    %1690 = vmatprep.subr.mxu0 0.0
    %1691 = vmatpush2.msra.mxu0 0.0
    %1692 = vmatprep.subr.mxu0 0.0
    %1693 = vmatpush2.msra.mxu0 0.0
    %1694 = vmatprep.subr.mxu0 0.0
    %1695 = vmatpush2.msra.mxu0 0.0
    %1696 = vmatprep.mubr.f32.mxu0 0.0
    %1697 = vmatmul.mubr.f32.gmra.mxu0 %v1630
    %v1698 = vpop.f32.mrf.mxu0
    %v1699 = vadd.f32 0.0, %v1698
    %v1700 = vpop.f32.mrf.mxu0
    %1701 = vdwg.mxu0
    %1702 = vrot.lane.b32.xlu0 %v677, 64
    %v1703 = vpop.permute.xlu0 %1702
    %v1706 = vsel %vm947, %v1625, 0
    %1708 = vmatprep.subr.mxu0 0.0
    %1709 = vmatpush1.msra.mxu0 0.0
    %1710 = vmatprep.subr.mxu0 0.0
    %1711 = vmatpush1.msra.mxu0 0.0
    %1712 = vmatprep.subr.mxu0 0.0
    %1713 = vmatpush1.msra.mxu0 0.0
    %1714 = vmatprep.subr.mxu0 0.0
    %1715 = vmatpush1.msra.mxu0 0.0
    %1716 = vmatprep.subr.mxu0 0.0
    %1717 = vmatpush1.msra.mxu0 0.0
    %1718 = vmatprep.subr.mxu0 0.0
    %1719 = vmatpush1.msra.mxu0 0.0
    %1720 = vmatprep.subr.mxu0 0.0
    %1721 = vmatpush1.msra.mxu0 0.0
    %1722 = vmatprep.subr.mxu0 0.0
    %1723 = vmatpush1.msra.mxu0 0.0
    %1724 = vmatprep.subr.mxu0 0.0
    %1725 = vmatpush1.msra.mxu0 0.0
    %1726 = vmatprep.subr.mxu0 0.0
    %1727 = vmatpush1.msra.mxu0 0.0
    %1728 = vmatprep.subr.mxu0 0.0
    %1729 = vmatpush1.msra.mxu0 0.0
    %1730 = vmatprep.subr.mxu0 0.0
    %1731 = vmatpush1.msra.mxu0 0.0
    %1732 = vmatprep.subr.mxu0 0.0
    %1733 = vmatpush1.msra.mxu0 0.0
    %1734 = vmatprep.subr.mxu0 0.0
    %1735 = vmatpush1.msra.mxu0 0.0
    %1736 = vmatprep.subr.mxu0 0.0
    %1737 = vmatpush1.msra.mxu0 0.0
    %1738 = vmatprep.subr.mxu0 0.0
    %1739 = vmatpush1.msra.mxu0 %v1703
    %1740 = vmatprep.subr.mxu0 0.0
    %1741 = vmatpush2.msra.mxu0 0.0
    %1742 = vmatprep.subr.mxu0 0.0
    %1743 = vmatpush2.msra.mxu0 0.0
    %1744 = vmatprep.subr.mxu0 0.0
    %1745 = vmatpush2.msra.mxu0 0.0
    %1746 = vmatprep.subr.mxu0 0.0
    %1747 = vmatpush2.msra.mxu0 0.0
    %1748 = vmatprep.subr.mxu0 0.0
    %1749 = vmatpush2.msra.mxu0 0.0
    %1750 = vmatprep.subr.mxu0 0.0
    %1751 = vmatpush2.msra.mxu0 0.0
    %1752 = vmatprep.subr.mxu0 0.0
    %1753 = vmatpush2.msra.mxu0 0.0
    %1754 = vmatprep.subr.mxu0 0.0
    %1755 = vmatpush2.msra.mxu0 0.0
    %1756 = vmatprep.subr.mxu0 0.0
    %1757 = vmatpush2.msra.mxu0 0.0
    %1758 = vmatprep.subr.mxu0 0.0
    %1759 = vmatpush2.msra.mxu0 0.0
    %1760 = vmatprep.subr.mxu0 0.0
    %1761 = vmatpush2.msra.mxu0 0.0
    %1762 = vmatprep.subr.mxu0 0.0
    %1763 = vmatpush2.msra.mxu0 0.0
    %1764 = vmatprep.subr.mxu0 0.0
    %1765 = vmatpush2.msra.mxu0 0.0
    %1766 = vmatprep.subr.mxu0 0.0
    %1767 = vmatpush2.msra.mxu0 0.0
    %1768 = vmatprep.subr.mxu0 0.0
    %1769 = vmatpush2.msra.mxu0 0.0
    %1770 = vmatprep.subr.mxu0 0.0
    %1771 = vmatpush2.msra.mxu0 0.0
    %1772 = vmatprep.mubr.f32.mxu0 0.0
    %1773 = vmatmul.mubr.f32.gmra.mxu0 %v1706
    %v1774 = vpop.f32.mrf.mxu0
    %v1775 = vadd.f32 0.0, %v1774
    %v1776 = vpop.f32.mrf.mxu0
    %1777 = vdwg.mxu0
    %1778 = vrot.lane.b32.xlu0 %v792, 32
    %v1779 = vpop.permute.xlu0 %1778
    %1780 = vrot.lane.b32.xlu0 %v562, 32
    %v1781 = vpop.permute.xlu0 %1780
    %v1782 = vsel %vm794, %v1779, 0
    %v1784 = vsel %vm794, %v1781, 0
    %1786 = vmatprep.subr.mxu0 0.0
    %1787 = vmatpush1.xpose.msra.mxu0 0.0
    %1788 = vmatprep.subr.mxu0 0.0
    %1789 = vmatpush1.xpose.msra.mxu0 0.0
    %1790 = vmatprep.subr.mxu0 0.0
    %1791 = vmatpush1.xpose.msra.mxu0 0.0
    %1792 = vmatprep.subr.mxu0 0.0
    %1793 = vmatpush1.xpose.msra.mxu0 0.0
    %1794 = vmatprep.subr.mxu0 0.0
    %1795 = vmatpush1.xpose.msra.mxu0 0.0
    %1796 = vmatprep.subr.mxu0 0.0
    %1797 = vmatpush1.xpose.msra.mxu0 0.0
    %1798 = vmatprep.subr.mxu0 0.0
    %1799 = vmatpush1.xpose.msra.mxu0 0.0
    %1800 = vmatprep.subr.mxu0 0.0
    %1801 = vmatpush1.xpose.msra.mxu0 0.0
    %1802 = vmatprep.subr.mxu0 0.0
    %1803 = vmatpush1.xpose.msra.mxu0 0.0
    %1804 = vmatprep.subr.mxu0 0.0
    %1805 = vmatpush1.xpose.msra.mxu0 0.0
    %1806 = vmatprep.subr.mxu0 0.0
    %1807 = vmatpush1.xpose.msra.mxu0 0.0
    %1808 = vmatprep.subr.mxu0 0.0
    %1809 = vmatpush1.xpose.msra.mxu0 0.0
    %1810 = vmatprep.subr.mxu0 0.0
    %1811 = vmatpush1.xpose.msra.mxu0 0.0
    %1812 = vmatprep.subr.mxu0 0.0
    %1813 = vmatpush1.xpose.msra.mxu0 0.0
    %1814 = vmatprep.subr.mxu0 0.0
    %1815 = vmatpush1.xpose.msra.mxu0 0.0
    %1816 = vmatprep.subr.mxu0 0.0
    %1817 = vmatpush1.xpose.msra.mxu0 %v1784
    %1818 = vmatprep.subr.mxu0 0.0
    %1819 = vmatpush2.xpose.msra.mxu0 0.0
    %1820 = vmatprep.subr.mxu0 0.0
    %1821 = vmatpush2.xpose.msra.mxu0 0.0
    %1822 = vmatprep.subr.mxu0 0.0
    %1823 = vmatpush2.xpose.msra.mxu0 0.0
    %1824 = vmatprep.subr.mxu0 0.0
    %1825 = vmatpush2.xpose.msra.mxu0 0.0
    %1826 = vmatprep.subr.mxu0 0.0
    %1827 = vmatpush2.xpose.msra.mxu0 0.0
    %1828 = vmatprep.subr.mxu0 0.0
    %1829 = vmatpush2.xpose.msra.mxu0 0.0
    %1830 = vmatprep.subr.mxu0 0.0
    %1831 = vmatpush2.xpose.msra.mxu0 0.0
    %1832 = vmatprep.subr.mxu0 0.0
    %1833 = vmatpush2.xpose.msra.mxu0 0.0
    %1834 = vmatprep.subr.mxu0 0.0
    %1835 = vmatpush2.xpose.msra.mxu0 0.0
    %1836 = vmatprep.subr.mxu0 0.0
    %1837 = vmatpush2.xpose.msra.mxu0 0.0
    %1838 = vmatprep.subr.mxu0 0.0
    %1839 = vmatpush2.xpose.msra.mxu0 0.0
    %1840 = vmatprep.subr.mxu0 0.0
    %1841 = vmatpush2.xpose.msra.mxu0 0.0
    %1842 = vmatprep.subr.mxu0 0.0
    %1843 = vmatpush2.xpose.msra.mxu0 0.0
    %1844 = vmatprep.subr.mxu0 0.0
    %1845 = vmatpush2.xpose.msra.mxu0 0.0
    %1846 = vmatprep.subr.mxu0 0.0
    %1847 = vmatpush2.xpose.msra.mxu0 0.0
    %1848 = vmatprep.subr.mxu0 0.0
    %1849 = vmatpush2.xpose.msra.mxu0 0.0
    %1850 = vmatprep.mubr.f32.mxu0 0.0
    %1851 = vmatmul.mubr.f32.gmra.mxu0 %v1782
    %v1852 = vpop.f32.mrf.mxu0
    %v1853 = vadd.f32 0.0, %v1852
    %v1854 = vpop.f32.mrf.mxu0
    %1855 = vdwg.mxu0
    %1856 = vrot.lane.b32.xlu0 %v793, 32
    %v1857 = vpop.permute.xlu0 %1856
    %1858 = vrot.lane.b32.xlu0 %v565, 32
    %v1859 = vpop.permute.xlu0 %1858
    %v1860 = vsel %vm794, %v1857, 0
    %v1862 = vsel %vm794, %v1859, 0
    %1864 = vmatprep.subr.mxu0 0.0
    %1865 = vmatpush1.xpose.msra.mxu0 0.0
    %1866 = vmatprep.subr.mxu0 0.0
    %1867 = vmatpush1.xpose.msra.mxu0 0.0
    %1868 = vmatprep.subr.mxu0 0.0
    %1869 = vmatpush1.xpose.msra.mxu0 0.0
    %1870 = vmatprep.subr.mxu0 0.0
    %1871 = vmatpush1.xpose.msra.mxu0 0.0
    %1872 = vmatprep.subr.mxu0 0.0
    %1873 = vmatpush1.xpose.msra.mxu0 0.0
    %1874 = vmatprep.subr.mxu0 0.0
    %1875 = vmatpush1.xpose.msra.mxu0 0.0
    %1876 = vmatprep.subr.mxu0 0.0
    %1877 = vmatpush1.xpose.msra.mxu0 0.0
    %1878 = vmatprep.subr.mxu0 0.0
    %1879 = vmatpush1.xpose.msra.mxu0 0.0
    %1880 = vmatprep.subr.mxu0 0.0
    %1881 = vmatpush1.xpose.msra.mxu0 0.0
    %1882 = vmatprep.subr.mxu0 0.0
    %1883 = vmatpush1.xpose.msra.mxu0 0.0
    %1884 = vmatprep.subr.mxu0 0.0
    %1885 = vmatpush1.xpose.msra.mxu0 0.0
    %1886 = vmatprep.subr.mxu0 0.0
    %1887 = vmatpush1.xpose.msra.mxu0 0.0
    %1888 = vmatprep.subr.mxu0 0.0
    %1889 = vmatpush1.xpose.msra.mxu0 0.0
    %1890 = vmatprep.subr.mxu0 0.0
    %1891 = vmatpush1.xpose.msra.mxu0 0.0
    %1892 = vmatprep.subr.mxu0 0.0
    %1893 = vmatpush1.xpose.msra.mxu0 0.0
    %1894 = vmatprep.subr.mxu0 0.0
    %1895 = vmatpush1.xpose.msra.mxu0 %v1862
    %1896 = vmatprep.subr.mxu0 0.0
    %1897 = vmatpush2.xpose.msra.mxu0 0.0
    %1898 = vmatprep.subr.mxu0 0.0
    %1899 = vmatpush2.xpose.msra.mxu0 0.0
    %1900 = vmatprep.subr.mxu0 0.0
    %1901 = vmatpush2.xpose.msra.mxu0 0.0
    %1902 = vmatprep.subr.mxu0 0.0
    %1903 = vmatpush2.xpose.msra.mxu0 0.0
    %1904 = vmatprep.subr.mxu0 0.0
    %1905 = vmatpush2.xpose.msra.mxu0 0.0
    %1906 = vmatprep.subr.mxu0 0.0
    %1907 = vmatpush2.xpose.msra.mxu0 0.0
    %1908 = vmatprep.subr.mxu0 0.0
    %1909 = vmatpush2.xpose.msra.mxu0 0.0
    %1910 = vmatprep.subr.mxu0 0.0
    %1911 = vmatpush2.xpose.msra.mxu0 0.0
    %1912 = vmatprep.subr.mxu0 0.0
    %1913 = vmatpush2.xpose.msra.mxu0 0.0
    %1914 = vmatprep.subr.mxu0 0.0
    %1915 = vmatpush2.xpose.msra.mxu0 0.0
    %1916 = vmatprep.subr.mxu0 0.0
    %1917 = vmatpush2.xpose.msra.mxu0 0.0
    %1918 = vmatprep.subr.mxu0 0.0
    %1919 = vmatpush2.xpose.msra.mxu0 0.0
    %1920 = vmatprep.subr.mxu0 0.0
    %1921 = vmatpush2.xpose.msra.mxu0 0.0
    %1922 = vmatprep.subr.mxu0 0.0
    %1923 = vmatpush2.xpose.msra.mxu0 0.0
    %1924 = vmatprep.subr.mxu0 0.0
    %1925 = vmatpush2.xpose.msra.mxu0 0.0
    %1926 = vmatprep.subr.mxu0 0.0
    %1927 = vmatpush2.xpose.msra.mxu0 0.0
    %1928 = vmatprep.mubr.f32.mxu0 0.0
    %1929 = vmatmul.mubr.f32.gmra.mxu0 %v1860
    %v1930 = vpop.f32.mrf.mxu0
    %v1931 = vadd.f32 0.0, %v1930
    %v1932 = vpop.f32.mrf.mxu0
    %1933 = vdwg.mxu0
    %v1934 = vsel %vm947, %v1853, -inf
    %1935 = vmax.xlane.f32.xlu0 %v1934
    %v1936 = vpop.xlane.xlu0 %1935
    %v1937 = vsel %vm947, %v1931, -inf
    %1938 = vmax.xlane.f32.xlu0 %v1937
    %v1939 = vpop.xlane.xlu0 %1938
    %v1940 = vsub.f32 %v1853, %v1936
    %v1941 = vsub.f32 %v1931, %v1939
    %v1942 = vmul.f32 %v1940, 1.442695
    %v1943 = vpow.pop %v1942
    %v1944 = vmul.f32 %v1941, 1.442695
    %v1945 = vpow.pop %v1944
    %v1946 = vsel %vm947, %v1943, 0.0
    %1947 = vadd.xlane.f32.xlu0 %v1946
    %v1948 = vpop.xlane.xlu0 %1947
    %v1949 = vsel %vm947, %v1945, 0.0
    %1950 = vadd.xlane.f32.xlu0 %v1949
    %v1951 = vpop.xlane.xlu0 %1950
    %v1952 = vrcp.pop %v1948
    %v1953 = vrcp.pop %v1951
    %v1954 = vmul.f32 %v1943, %v1952
    %v1955 = vmul.f32 %v1945, %v1953
    %1956 = vrot.lane.b32.xlu0 %v674, 32
    %v1957 = vpop.permute.xlu0 %1956
    %v1960 = vsel %vm947, %v1954, 0
    %1962 = vmatprep.subr.mxu0 0.0
    %1963 = vmatpush1.msra.mxu0 0.0
    %1964 = vmatprep.subr.mxu0 0.0
    %1965 = vmatpush1.msra.mxu0 0.0
    %1966 = vmatprep.subr.mxu0 0.0
    %1967 = vmatpush1.msra.mxu0 0.0
    %1968 = vmatprep.subr.mxu0 0.0
    %1969 = vmatpush1.msra.mxu0 0.0
    %1970 = vmatprep.subr.mxu0 0.0
    %1971 = vmatpush1.msra.mxu0 0.0
    %1972 = vmatprep.subr.mxu0 0.0
    %1973 = vmatpush1.msra.mxu0 0.0
    %1974 = vmatprep.subr.mxu0 0.0
    %1975 = vmatpush1.msra.mxu0 0.0
    %1976 = vmatprep.subr.mxu0 0.0
    %1977 = vmatpush1.msra.mxu0 0.0
    %1978 = vmatprep.subr.mxu0 0.0
    %1979 = vmatpush1.msra.mxu0 0.0
    %1980 = vmatprep.subr.mxu0 0.0
    %1981 = vmatpush1.msra.mxu0 0.0
    %1982 = vmatprep.subr.mxu0 0.0
    %1983 = vmatpush1.msra.mxu0 0.0
    %1984 = vmatprep.subr.mxu0 0.0
    %1985 = vmatpush1.msra.mxu0 0.0
    %1986 = vmatprep.subr.mxu0 0.0
    %1987 = vmatpush1.msra.mxu0 0.0
    %1988 = vmatprep.subr.mxu0 0.0
    %1989 = vmatpush1.msra.mxu0 0.0
    %1990 = vmatprep.subr.mxu0 0.0
    %1991 = vmatpush1.msra.mxu0 0.0
    %1992 = vmatprep.subr.mxu0 0.0
    %1993 = vmatpush1.msra.mxu0 %v1957
    %1994 = vmatprep.subr.mxu0 0.0
    %1995 = vmatpush2.msra.mxu0 0.0
    %1996 = vmatprep.subr.mxu0 0.0
    %1997 = vmatpush2.msra.mxu0 0.0
    %1998 = vmatprep.subr.mxu0 0.0
    %1999 = vmatpush2.msra.mxu0 0.0
    %2000 = vmatprep.subr.mxu0 0.0
    %2001 = vmatpush2.msra.mxu0 0.0
    %2002 = vmatprep.subr.mxu0 0.0
    %2003 = vmatpush2.msra.mxu0 0.0
    %2004 = vmatprep.subr.mxu0 0.0
    %2005 = vmatpush2.msra.mxu0 0.0
    %2006 = vmatprep.subr.mxu0 0.0
    %2007 = vmatpush2.msra.mxu0 0.0
    %2008 = vmatprep.subr.mxu0 0.0
    %2009 = vmatpush2.msra.mxu0 0.0
    %2010 = vmatprep.subr.mxu0 0.0
    %2011 = vmatpush2.msra.mxu0 0.0
    %2012 = vmatprep.subr.mxu0 0.0
    %2013 = vmatpush2.msra.mxu0 0.0
    %2014 = vmatprep.subr.mxu0 0.0
    %2015 = vmatpush2.msra.mxu0 0.0
    %2016 = vmatprep.subr.mxu0 0.0
    %2017 = vmatpush2.msra.mxu0 0.0
    %2018 = vmatprep.subr.mxu0 0.0
    %2019 = vmatpush2.msra.mxu0 0.0
    %2020 = vmatprep.subr.mxu0 0.0
    %2021 = vmatpush2.msra.mxu0 0.0
    %2022 = vmatprep.subr.mxu0 0.0
    %2023 = vmatpush2.msra.mxu0 0.0
    %2024 = vmatprep.subr.mxu0 0.0
    %2025 = vmatpush2.msra.mxu0 0.0
    %2026 = vmatprep.mubr.f32.mxu0 0.0
    %2027 = vmatmul.mubr.f32.gmra.mxu0 %v1960
    %v2028 = vpop.f32.mrf.mxu0
    %v2029 = vadd.f32 0.0, %v2028
    %v2030 = vpop.f32.mrf.mxu0
    %2031 = vdwg.mxu0
    %2032 = vrot.lane.b32.xlu0 %v677, 32
    %v2033 = vpop.permute.xlu0 %2032
    %v2036 = vsel %vm947, %v1955, 0
    %2038 = vmatprep.subr.mxu0 0.0
    %2039 = vmatpush1.msra.mxu0 0.0
    %2040 = vmatprep.subr.mxu0 0.0
    %2041 = vmatpush1.msra.mxu0 0.0
    %2042 = vmatprep.subr.mxu0 0.0
    %2043 = vmatpush1.msra.mxu0 0.0
    %2044 = vmatprep.subr.mxu0 0.0
    %2045 = vmatpush1.msra.mxu0 0.0
    %2046 = vmatprep.subr.mxu0 0.0
    %2047 = vmatpush1.msra.mxu0 0.0
    %2048 = vmatprep.subr.mxu0 0.0
    %2049 = vmatpush1.msra.mxu0 0.0
    %2050 = vmatprep.subr.mxu0 0.0
    %2051 = vmatpush1.msra.mxu0 0.0
    %2052 = vmatprep.subr.mxu0 0.0
    %2053 = vmatpush1.msra.mxu0 0.0
    %2054 = vmatprep.subr.mxu0 0.0
    %2055 = vmatpush1.msra.mxu0 0.0
    %2056 = vmatprep.subr.mxu0 0.0
    %2057 = vmatpush1.msra.mxu0 0.0
    %2058 = vmatprep.subr.mxu0 0.0
    %2059 = vmatpush1.msra.mxu0 0.0
    %2060 = vmatprep.subr.mxu0 0.0
    %2061 = vmatpush1.msra.mxu0 0.0
    %2062 = vmatprep.subr.mxu0 0.0
    %2063 = vmatpush1.msra.mxu0 0.0
    %2064 = vmatprep.subr.mxu0 0.0
    %2065 = vmatpush1.msra.mxu0 0.0
    %2066 = vmatprep.subr.mxu0 0.0
    %2067 = vmatpush1.msra.mxu0 0.0
    %2068 = vmatprep.subr.mxu0 0.0
    %2069 = vmatpush1.msra.mxu0 %v2033
    %2070 = vmatprep.subr.mxu0 0.0
    %2071 = vmatpush2.msra.mxu0 0.0
    %2072 = vmatprep.subr.mxu0 0.0
    %2073 = vmatpush2.msra.mxu0 0.0
    %2074 = vmatprep.subr.mxu0 0.0
    %2075 = vmatpush2.msra.mxu0 0.0
    %2076 = vmatprep.subr.mxu0 0.0
    %2077 = vmatpush2.msra.mxu0 0.0
    %2078 = vmatprep.subr.mxu0 0.0
    %2079 = vmatpush2.msra.mxu0 0.0
    %2080 = vmatprep.subr.mxu0 0.0
    %2081 = vmatpush2.msra.mxu0 0.0
    %2082 = vmatprep.subr.mxu0 0.0
    %2083 = vmatpush2.msra.mxu0 0.0
    %2084 = vmatprep.subr.mxu0 0.0
    %2085 = vmatpush2.msra.mxu0 0.0
    %2086 = vmatprep.subr.mxu0 0.0
    %2087 = vmatpush2.msra.mxu0 0.0
    %2088 = vmatprep.subr.mxu0 0.0
    %2089 = vmatpush2.msra.mxu0 0.0
    %2090 = vmatprep.subr.mxu0 0.0
    %2091 = vmatpush2.msra.mxu0 0.0
    %2092 = vmatprep.subr.mxu0 0.0
    %2093 = vmatpush2.msra.mxu0 0.0
    %2094 = vmatprep.subr.mxu0 0.0
    %2095 = vmatpush2.msra.mxu0 0.0
    %2096 = vmatprep.subr.mxu0 0.0
    %2097 = vmatpush2.msra.mxu0 0.0
    %2098 = vmatprep.subr.mxu0 0.0
    %2099 = vmatpush2.msra.mxu0 0.0
    %2100 = vmatprep.subr.mxu0 0.0
    %2101 = vmatpush2.msra.mxu0 0.0
    %2102 = vmatprep.mubr.f32.mxu0 0.0
    %2103 = vmatmul.mubr.f32.gmra.mxu0 %v2036
    %v2104 = vpop.f32.mrf.mxu0
    %v2105 = vadd.f32 0.0, %v2104
    %v2106 = vpop.f32.mrf.mxu0
    %2107 = vdwg.mxu0
    %2110 = vrot.lane.b32.xlu0 %v1368, 32
    %v2111 = vpop.permute.xlu0 %2110
    %2112 = vrot.lane.b32.xlu0 %v1445, 32
    %v2113 = vpop.permute.xlu0 %2112
    %2118 = vrot.lane.b32.xlu0 %v1699, 64
    %v2119 = vpop.permute.xlu0 %2118
    %2120 = vrot.lane.b32.xlu0 %v1775, 64
    %v2121 = vpop.permute.xlu0 %2120
    %2126 = vrot.lane.b32.xlu0 %v2029, 96
    %v2127 = vpop.permute.xlu0 %2126
    %2128 = vrot.lane.b32.xlu0 %v2105, 96
    %v2129 = vpop.permute.xlu0 %2128
    %v2132 = vsel %vm794, %v1040, %v2111
    %v2133 = vsel %vm794, %v1113, %v2113
    %vm2134 = vcmask 523264
    %v2135 = vsel %vm2134, %v2132, %v2119
    %v2136 = vsel %vm2134, %v2133, %v2121
    %vm2137 = vcmask 785408
    %v2138 = vsel %vm2137, %v2135, %v2127
    %v2139 = vsel %vm2137, %v2136, %v2129
    %v2140 = vpack.c.bf16 %v2139, %v2138
    %v2141 = vld [vmem:[#allocation14] sm:$0xf]
    %v2142 = vld [vmem:[#allocation14 + $0x4] sm:$0xf]
    %v2143 = vld [vmem:[#allocation14 + $0x8] sm:$0xf]
    %v2144 = vld [vmem:[#allocation14 + $0xc] sm:$0xf]
    %v2145 = vld [vmem:[#allocation14 + $0x10] sm:$0xf]
    %v2146 = vld [vmem:[#allocation14 + $0x14] sm:$0xf]
    %v2147 = vld [vmem:[#allocation14 + $0x18] sm:$0xf]
    %v2148 = vld [vmem:[#allocation14 + $0x1c] sm:$0xf]
    %v2149 = vld [vmem:[#allocation14 + $0x20] sm:$0xf]
    %v2150 = vld [vmem:[#allocation14 + $0x24] sm:$0xf]
    %v2151 = vld [vmem:[#allocation14 + $0x28] sm:$0xf]
    %v2152 = vld [vmem:[#allocation14 + $0x2c] sm:$0xf]
    %v2153 = vld [vmem:[#allocation14 + $0x30] sm:$0xf]
    %v2154 = vld [vmem:[#allocation14 + $0x34] sm:$0xf]
    %v2155 = vld [vmem:[#allocation14 + $0x38] sm:$0xf]
    %v2156 = vld [vmem:[#allocation14 + $0x3c] sm:$0xf]
    %v2157 = vld [vmem:[#allocation16] sm:$0x1]
    %v2159 = vlaneseq
    %v2160 = vshrl.u32 %v2159, 7
    %v2161 = vsub.s32 0, %v2160
    %v2162 = vrot.slane %v2157, %v2161
    %v2180 = vunpack.c.l.b16 %v2141
    %v2181 = vunpack.c.l.b16 %v2142
    %v2182 = vunpack.c.l.b16 %v2143
    %v2183 = vunpack.c.l.b16 %v2144
    %v2184 = vunpack.c.l.b16 %v2145
    %v2185 = vunpack.c.l.b16 %v2146
    %v2186 = vunpack.c.l.b16 %v2147
    %v2187 = vunpack.c.l.b16 %v2148
    %v2188 = vunpack.c.l.b16 %v2149
    %v2189 = vunpack.c.l.b16 %v2150
    %v2190 = vunpack.c.l.b16 %v2151
    %v2191 = vunpack.c.l.b16 %v2152
    %v2192 = vunpack.c.l.b16 %v2153
    %v2193 = vunpack.c.l.b16 %v2154
    %v2194 = vunpack.c.l.b16 %v2155
    %v2195 = vunpack.c.l.b16 %v2156
    %v2196 = vpack.c.b16 %v2181, %v2180
    %v2197 = vpack.c.b16 %v2183, %v2182
    %v2198 = vpack.c.b16 %v2185, %v2184
    %v2199 = vpack.c.b16 %v2187, %v2186
    %v2200 = vpack.c.b16 %v2189, %v2188
    %v2201 = vpack.c.b16 %v2191, %v2190
    %v2202 = vpack.c.b16 %v2193, %v2192
    %v2203 = vpack.c.b16 %v2195, %v2194
    %2212 = vmatprep.subr.bf16.mxu0 0
    %2213 = vmatpush1.bf16.msra.mxu0 %v2203
    %2214 = vmatprep.subr.bf16.mxu0 0
    %2215 = vmatpush1.bf16.msra.mxu0 %v2202
    %2216 = vmatprep.subr.bf16.mxu0 0
    %2217 = vmatpush1.bf16.msra.mxu0 %v2201
    %2218 = vmatprep.subr.bf16.mxu0 0
    %2219 = vmatpush1.bf16.msra.mxu0 %v2200
    %2220 = vmatprep.subr.bf16.mxu0 0
    %2221 = vmatpush1.bf16.msra.mxu0 %v2199
    %2222 = vmatprep.subr.bf16.mxu0 0
    %2223 = vmatpush1.bf16.msra.mxu0 %v2198
    %2224 = vmatprep.subr.bf16.mxu0 0
    %2225 = vmatpush1.bf16.msra.mxu0 %v2197
    %2226 = vmatprep.subr.bf16.mxu0 0
    %2227 = vmatpush1.bf16.msra.mxu0 %v2196
    %2228 = vmatprep.subr.bf16.mxu0 0
    %2229 = vmatpush2.bf16.msra.mxu0 0
    %2230 = vmatprep.subr.bf16.mxu0 0
    %2231 = vmatpush2.bf16.msra.mxu0 0
    %2232 = vmatprep.subr.bf16.mxu0 0
    %2233 = vmatpush2.bf16.msra.mxu0 0
    %2234 = vmatprep.subr.bf16.mxu0 0
    %2235 = vmatpush2.bf16.msra.mxu0 0
    %2236 = vmatprep.subr.bf16.mxu0 0
    %2237 = vmatpush2.bf16.msra.mxu0 0
    %2238 = vmatprep.subr.bf16.mxu0 0
    %2239 = vmatpush2.bf16.msra.mxu0 0
    %2240 = vmatprep.subr.bf16.mxu0 0
    %2241 = vmatpush2.bf16.msra.mxu0 0
    %2242 = vmatprep.subr.bf16.mxu0 0
    %2243 = vmatpush2.bf16.msra.mxu0 0
    %2244 = vmatprep.mubr.bf16.mxu0 0
    %2245 = vmatmul.mubr.bf16.gmra.mxu0 %v2140
    %v2246 = vpop.f32.mrf.mxu0
    %v2247 = vadd.f32 %v2162, %v2246
    %v2248 = vpop.f32.mrf.mxu0
    %v2249 = vpop.f32.mrf.mxu0
    %v2250 = vadd.f32 %v2162, %v2249
    %v2251 = vpop.f32.mrf.mxu0
    %2252 = vdwg.mxu0
    %v2253 = vadd.f32 %v453, %v2247
    %v2254 = vadd.f32 %v454, %v2250
    %v2255 = vld [vmem:[#allocation17] sm:$0x1]
    %v2256 = vld [vmem:[#allocation19] sm:$0x1]
    %2257 = vadd.xlane.f32.xlu0 %v2253
    %v2258 = vpop.xlane.xlu0 %2257
    %2259 = vadd.xlane.f32.xlu0 %v2254
    %v2260 = vpop.xlane.xlu0 %2259
    %v2261 = vrcp.pop 128.0
    %v2262 = vmul.f32 %v2258, %v2261
    %v2263 = vmul.f32 %v2260, %v2261
    %v2264 = vsub.f32 %v2253, %v2262
    %v2265 = vsub.f32 %v2254, %v2263
    %v2266 = vmul.f32 %v2264, %v2264
    %v2267 = vmul.f32 %v2265, %v2265
    %2268 = vadd.xlane.f32.xlu0 %v2266
    %v2269 = vpop.xlane.xlu0 %2268
    %2270 = vadd.xlane.f32.xlu0 %v2267
    %v2271 = vpop.xlane.xlu0 %2270
    %v2272 = vmul.f32 %v2269, %v2261
    %v2273 = vmul.f32 %v2271, %v2261
    %v2274 = vadd.f32 %v2272, 1e-05
    %v2275 = vadd.f32 %v2273, 1e-05
    %v2276 = vrsqrt.pop %v2274
    %v2277 = vrsqrt.pop %v2275
    %v2278 = vmul.f32 %v2264, %v2276
    %v2279 = vmul.f32 %v2265, %v2277
    %v2281 = vlaneseq
    %v2282 = vshrl.u32 %v2281, 7
    %v2283 = vsub.s32 0, %v2282
    %v2284 = vrot.slane %v2255, %v2283
    %v2286 = vmul.f32 %v2278, %v2284
    %v2287 = vmul.f32 %v2279, %v2284
    %v2289 = vlaneseq
    %v2290 = vshrl.u32 %v2289, 7
    %v2291 = vsub.s32 0, %v2290
    %v2292 = vrot.slane %v2256, %v2291
    %v2294 = vadd.f32 %v2286, %v2292
    %v2295 = vadd.f32 %v2287, %v2292
    %v2296 = vpack.c.bf16 %v2295, %v2294
    %v2297 = vld [vmem:[#allocation20] sm:$0xff]
    %v2298 = vld [vmem:[#allocation20 + $0x8] sm:$0xff]
    %v2299 = vld [vmem:[#allocation20 + $0x10] sm:$0xff]
    %v2300 = vld [vmem:[#allocation20 + $0x18] sm:$0xff]
    %v2301 = vld [vmem:[#allocation20 + $0x20] sm:$0xff]
    %v2302 = vld [vmem:[#allocation20 + $0x28] sm:$0xff]
    %v2303 = vld [vmem:[#allocation20 + $0x30] sm:$0xff]
    %v2304 = vld [vmem:[#allocation20 + $0x38] sm:$0xff]
    %v2305 = vld [vmem:[#allocation20 + $0x40] sm:$0xff]
    %v2306 = vld [vmem:[#allocation20 + $0x48] sm:$0xff]
    %v2307 = vld [vmem:[#allocation20 + $0x50] sm:$0xff]
    %v2308 = vld [vmem:[#allocation20 + $0x58] sm:$0xff]
    %v2309 = vld [vmem:[#allocation20 + $0x60] sm:$0xff]
    %v2310 = vld [vmem:[#allocation20 + $0x68] sm:$0xff]
    %v2311 = vld [vmem:[#allocation20 + $0x70] sm:$0xff]
    %v2312 = vld [vmem:[#allocation20 + $0x78] sm:$0xff]
    %v2313 = vld [vmem:[#allocation20 + $0x80] sm:$0xff]
    %v2314 = vld [vmem:[#allocation20 + $0x88] sm:$0xff]
    %v2315 = vld [vmem:[#allocation20 + $0x90] sm:$0xff]
    %v2316 = vld [vmem:[#allocation20 + $0x98] sm:$0xff]
    %v2317 = vld [vmem:[#allocation20 + $0xa0] sm:$0xff]
    %v2318 = vld [vmem:[#allocation20 + $0xa8] sm:$0xff]
    %v2319 = vld [vmem:[#allocation20 + $0xb0] sm:$0xff]
    %v2320 = vld [vmem:[#allocation20 + $0xb8] sm:$0xff]
    %v2321 = vld [vmem:[#allocation20 + $0xc0] sm:$0xff]
    %v2322 = vld [vmem:[#allocation20 + $0xc8] sm:$0xff]
    %v2323 = vld [vmem:[#allocation20 + $0xd0] sm:$0xff]
    %v2324 = vld [vmem:[#allocation20 + $0xd8] sm:$0xff]
    %v2325 = vld [vmem:[#allocation20 + $0xe0] sm:$0xff]
    %v2326 = vld [vmem:[#allocation20 + $0xe8] sm:$0xff]
    %v2327 = vld [vmem:[#allocation20 + $0xf0] sm:$0xff]
    %v2328 = vld [vmem:[#allocation20 + $0xf8] sm:$0xff]
    %v2329 = vld [vmem:[#allocation20 + $0x100] sm:$0xff]
    %v2330 = vld [vmem:[#allocation20 + $0x108] sm:$0xff]
    %v2331 = vld [vmem:[#allocation20 + $0x110] sm:$0xff]
    %v2332 = vld [vmem:[#allocation20 + $0x118] sm:$0xff]
    %v2333 = vld [vmem:[#allocation20 + $0x120] sm:$0xff]
    %v2334 = vld [vmem:[#allocation20 + $0x128] sm:$0xff]
    %v2335 = vld [vmem:[#allocation20 + $0x130] sm:$0xff]
    %v2336 = vld [vmem:[#allocation20 + $0x138] sm:$0xff]
    %v2337 = vld [vmem:[#allocation20 + $0x140] sm:$0xff]
    %v2338 = vld [vmem:[#allocation20 + $0x148] sm:$0xff]
    %v2339 = vld [vmem:[#allocation20 + $0x150] sm:$0xff]
    %v2340 = vld [vmem:[#allocation20 + $0x158] sm:$0xff]
    %v2341 = vld [vmem:[#allocation20 + $0x160] sm:$0xff]
    %v2342 = vld [vmem:[#allocation20 + $0x168] sm:$0xff]
    %v2343 = vld [vmem:[#allocation20 + $0x170] sm:$0xff]
    %v2344 = vld [vmem:[#allocation20 + $0x178] sm:$0xff]
    %v2345 = vld [vmem:[#allocation20 + $0x180] sm:$0xff]
    %v2346 = vld [vmem:[#allocation20 + $0x188] sm:$0xff]
    %v2347 = vld [vmem:[#allocation20 + $0x190] sm:$0xff]
    %v2348 = vld [vmem:[#allocation20 + $0x198] sm:$0xff]
    %v2349 = vld [vmem:[#allocation20 + $0x1a0] sm:$0xff]
    %v2350 = vld [vmem:[#allocation20 + $0x1a8] sm:$0xff]
    %v2351 = vld [vmem:[#allocation20 + $0x1b0] sm:$0xff]
    %v2352 = vld [vmem:[#allocation20 + $0x1b8] sm:$0xff]
    %v2353 = vld [vmem:[#allocation20 + $0x1c0] sm:$0xff]
    %v2354 = vld [vmem:[#allocation20 + $0x1c8] sm:$0xff]
    %v2355 = vld [vmem:[#allocation20 + $0x1d0] sm:$0xff]
    %v2356 = vld [vmem:[#allocation20 + $0x1d8] sm:$0xff]
    %v2357 = vld [vmem:[#allocation20 + $0x1e0] sm:$0xff]
    %v2358 = vld [vmem:[#allocation20 + $0x1e8] sm:$0xff]
    %v2359 = vld [vmem:[#allocation20 + $0x1f0] sm:$0xff]
    %v2360 = vld [vmem:[#allocation20 + $0x1f8] sm:$0xff]
    %v2361 = vld [vmem:[#allocation20 + $0x200] sm:$0xff]
    %v2362 = vld [vmem:[#allocation20 + $0x208] sm:$0xff]
    %v2363 = vld [vmem:[#allocation20 + $0x210] sm:$0xff]
    %v2364 = vld [vmem:[#allocation20 + $0x218] sm:$0xff]
    %v2365 = vld [vmem:[#allocation20 + $0x220] sm:$0xff]
    %v2366 = vld [vmem:[#allocation20 + $0x228] sm:$0xff]
    %v2367 = vld [vmem:[#allocation20 + $0x230] sm:$0xff]
    %v2368 = vld [vmem:[#allocation20 + $0x238] sm:$0xff]
    %v2369 = vld [vmem:[#allocation20 + $0x240] sm:$0xff]
    %v2370 = vld [vmem:[#allocation20 + $0x248] sm:$0xff]
    %v2371 = vld [vmem:[#allocation20 + $0x250] sm:$0xff]
    %v2372 = vld [vmem:[#allocation20 + $0x258] sm:$0xff]
    %v2373 = vld [vmem:[#allocation20 + $0x260] sm:$0xff]
    %v2374 = vld [vmem:[#allocation20 + $0x268] sm:$0xff]
    %v2375 = vld [vmem:[#allocation20 + $0x270] sm:$0xff]
    %v2376 = vld [vmem:[#allocation20 + $0x278] sm:$0xff]
    %v2377 = vld [vmem:[#allocation20 + $0x280] sm:$0xff]
    %v2378 = vld [vmem:[#allocation20 + $0x288] sm:$0xff]
    %v2379 = vld [vmem:[#allocation20 + $0x290] sm:$0xff]
    %v2380 = vld [vmem:[#allocation20 + $0x298] sm:$0xff]
    %v2381 = vld [vmem:[#allocation20 + $0x2a0] sm:$0xff]
    %v2382 = vld [vmem:[#allocation20 + $0x2a8] sm:$0xff]
    %v2383 = vld [vmem:[#allocation20 + $0x2b0] sm:$0xff]
    %v2384 = vld [vmem:[#allocation20 + $0x2b8] sm:$0xff]
    %v2385 = vld [vmem:[#allocation20 + $0x2c0] sm:$0xff]
    %v2386 = vld [vmem:[#allocation20 + $0x2c8] sm:$0xff]
    %v2387 = vld [vmem:[#allocation20 + $0x2d0] sm:$0xff]
    %v2388 = vld [vmem:[#allocation20 + $0x2d8] sm:$0xff]
    %v2389 = vld [vmem:[#allocation20 + $0x2e0] sm:$0xff]
    %v2390 = vld [vmem:[#allocation20 + $0x2e8] sm:$0xff]
    %v2391 = vld [vmem:[#allocation20 + $0x2f0] sm:$0xff]
    %v2392 = vld [vmem:[#allocation20 + $0x2f8] sm:$0xff]
    %v2393 = vld [vmem:[#allocation20 + $0x300] sm:$0xff]
    %v2394 = vld [vmem:[#allocation20 + $0x308] sm:$0xff]
    %v2395 = vld [vmem:[#allocation20 + $0x310] sm:$0xff]
    %v2396 = vld [vmem:[#allocation20 + $0x318] sm:$0xff]
    %v2397 = vld [vmem:[#allocation20 + $0x320] sm:$0xff]
    %v2398 = vld [vmem:[#allocation20 + $0x328] sm:$0xff]
    %v2399 = vld [vmem:[#allocation20 + $0x330] sm:$0xff]
    %v2400 = vld [vmem:[#allocation20 + $0x338] sm:$0xff]
    %v2401 = vld [vmem:[#allocation20 + $0x340] sm:$0xff]
    %v2402 = vld [vmem:[#allocation20 + $0x348] sm:$0xff]
    %v2403 = vld [vmem:[#allocation20 + $0x350] sm:$0xff]
    %v2404 = vld [vmem:[#allocation20 + $0x358] sm:$0xff]
    %v2405 = vld [vmem:[#allocation20 + $0x360] sm:$0xff]
    %v2406 = vld [vmem:[#allocation20 + $0x368] sm:$0xff]
    %v2407 = vld [vmem:[#allocation20 + $0x370] sm:$0xff]
    %v2408 = vld [vmem:[#allocation20 + $0x378] sm:$0xff]
    %v2409 = vld [vmem:[#allocation20 + $0x380] sm:$0xff]
    %v2410 = vld [vmem:[#allocation20 + $0x388] sm:$0xff]
    %v2411 = vld [vmem:[#allocation20 + $0x390] sm:$0xff]
    %v2412 = vld [vmem:[#allocation20 + $0x398] sm:$0xff]
    %v2413 = vld [vmem:[#allocation20 + $0x3a0] sm:$0xff]
    %v2414 = vld [vmem:[#allocation20 + $0x3a8] sm:$0xff]
    %v2415 = vld [vmem:[#allocation20 + $0x3b0] sm:$0xff]
    %v2416 = vld [vmem:[#allocation20 + $0x3b8] sm:$0xff]
    %v2417 = vld [vmem:[#allocation20 + $0x3c0] sm:$0xff]
    %v2418 = vld [vmem:[#allocation20 + $0x3c8] sm:$0xff]
    %v2419 = vld [vmem:[#allocation20 + $0x3d0] sm:$0xff]
    %v2420 = vld [vmem:[#allocation20 + $0x3d8] sm:$0xff]
    %v2421 = vld [vmem:[#allocation20 + $0x3e0] sm:$0xff]
    %v2422 = vld [vmem:[#allocation20 + $0x3e8] sm:$0xff]
    %v2423 = vld [vmem:[#allocation20 + $0x3f0] sm:$0xff]
    %v2424 = vld [vmem:[#allocation20 + $0x3f8] sm:$0xff]
    %v2425 = vld [vmem:[%s25] sm:$0xff]
    %v2426 = vld [vmem:[%s25 + $0x8] sm:$0xff]
    %v2429 = vlaneseq
    %v2430 = vshrl.u32 %v2429, 7
    %v2431 = vsub.s32 0, %v2430
    %v2432 = vrot.slane %v2425, %v2431
    %v2433 = vlaneseq
    %v2434 = vshrl.u32 %v2433, 7
    %v2435 = vsub.s32 1, %v2434
    %v2436 = vrot.slane %v2425, %v2435
    %v2437 = vlaneseq
    %v2438 = vshrl.u32 %v2437, 7
    %v2439 = vsub.s32 2, %v2438
    %v2440 = vrot.slane %v2425, %v2439
    %v2441 = vlaneseq
    %v2442 = vshrl.u32 %v2441, 7
    %v2443 = vsub.s32 3, %v2442
    %v2444 = vrot.slane %v2425, %v2443
    %v2445 = vlaneseq
    %v2446 = vshrl.u32 %v2445, 7
    %v2447 = vsub.s32 4, %v2446
    %v2448 = vrot.slane %v2425, %v2447
    %v2449 = vlaneseq
    %v2450 = vshrl.u32 %v2449, 7
    %v2451 = vsub.s32 5, %v2450
    %v2452 = vrot.slane %v2425, %v2451
    %v2453 = vlaneseq
    %v2454 = vshrl.u32 %v2453, 7
    %v2455 = vsub.s32 6, %v2454
    %v2456 = vrot.slane %v2425, %v2455
    %v2457 = vlaneseq
    %v2458 = vshrl.u32 %v2457, 7
    %v2459 = vsub.s32 7, %v2458
    %v2460 = vrot.slane %v2425, %v2459
    %v2461 = vlaneseq
    %v2462 = vshrl.u32 %v2461, 7
    %v2463 = vsub.s32 0, %v2462
    %v2464 = vrot.slane %v2426, %v2463
    %v2465 = vlaneseq
    %v2466 = vshrl.u32 %v2465, 7
    %v2467 = vsub.s32 1, %v2466
    %v2468 = vrot.slane %v2426, %v2467
    %v2469 = vlaneseq
    %v2470 = vshrl.u32 %v2469, 7
    %v2471 = vsub.s32 2, %v2470
    %v2472 = vrot.slane %v2426, %v2471
    %v2473 = vlaneseq
    %v2474 = vshrl.u32 %v2473, 7
    %v2475 = vsub.s32 3, %v2474
    %v2476 = vrot.slane %v2426, %v2475
    %v2477 = vlaneseq
    %v2478 = vshrl.u32 %v2477, 7
    %v2479 = vsub.s32 4, %v2478
    %v2480 = vrot.slane %v2426, %v2479
    %v2481 = vlaneseq
    %v2482 = vshrl.u32 %v2481, 7
    %v2483 = vsub.s32 5, %v2482
    %v2484 = vrot.slane %v2426, %v2483
    %v2485 = vlaneseq
    %v2486 = vshrl.u32 %v2485, 7
    %v2487 = vsub.s32 6, %v2486
    %v2488 = vrot.slane %v2426, %v2487
    %v2489 = vlaneseq
    %v2490 = vshrl.u32 %v2489, 7
    %v2491 = vsub.s32 7, %v2490
    %v2492 = vrot.slane %v2426, %v2491
    %v2637 = vunpack.c.l.b16 %v2297
    %v2638 = vunpack.c.h.b16 %v2297
    %v2639 = vunpack.c.l.b16 %v2298
    %v2640 = vunpack.c.h.b16 %v2298
    %v2641 = vunpack.c.l.b16 %v2299
    %v2642 = vunpack.c.h.b16 %v2299
    %v2643 = vunpack.c.l.b16 %v2300
    %v2644 = vunpack.c.h.b16 %v2300
    %v2645 = vunpack.c.l.b16 %v2301
    %v2646 = vunpack.c.h.b16 %v2301
    %v2647 = vunpack.c.l.b16 %v2302
    %v2648 = vunpack.c.h.b16 %v2302
    %v2649 = vunpack.c.l.b16 %v2303
    %v2650 = vunpack.c.h.b16 %v2303
    %v2651 = vunpack.c.l.b16 %v2304
    %v2652 = vunpack.c.h.b16 %v2304
    %v2653 = vunpack.c.l.b16 %v2305
    %v2654 = vunpack.c.h.b16 %v2305
    %v2655 = vunpack.c.l.b16 %v2306
    %v2656 = vunpack.c.h.b16 %v2306
    %v2657 = vunpack.c.l.b16 %v2307
    %v2658 = vunpack.c.h.b16 %v2307
    %v2659 = vunpack.c.l.b16 %v2308
    %v2660 = vunpack.c.h.b16 %v2308
    %v2661 = vunpack.c.l.b16 %v2309
    %v2662 = vunpack.c.h.b16 %v2309
    %v2663 = vunpack.c.l.b16 %v2310
    %v2664 = vunpack.c.h.b16 %v2310
    %v2665 = vunpack.c.l.b16 %v2311
    %v2666 = vunpack.c.h.b16 %v2311
    %v2667 = vunpack.c.l.b16 %v2312
    %v2668 = vunpack.c.h.b16 %v2312
    %v2669 = vunpack.c.l.b16 %v2313
    %v2670 = vunpack.c.h.b16 %v2313
    %v2671 = vunpack.c.l.b16 %v2314
    %v2672 = vunpack.c.h.b16 %v2314
    %v2673 = vunpack.c.l.b16 %v2315
    %v2674 = vunpack.c.h.b16 %v2315
    %v2675 = vunpack.c.l.b16 %v2316
    %v2676 = vunpack.c.h.b16 %v2316
    %v2677 = vunpack.c.l.b16 %v2317
    %v2678 = vunpack.c.h.b16 %v2317
    %v2679 = vunpack.c.l.b16 %v2318
    %v2680 = vunpack.c.h.b16 %v2318
    %v2681 = vunpack.c.l.b16 %v2319
    %v2682 = vunpack.c.h.b16 %v2319
    %v2683 = vunpack.c.l.b16 %v2320
    %v2684 = vunpack.c.h.b16 %v2320
    %v2685 = vunpack.c.l.b16 %v2321
    %v2686 = vunpack.c.h.b16 %v2321
    %v2687 = vunpack.c.l.b16 %v2322
    %v2688 = vunpack.c.h.b16 %v2322
    %v2689 = vunpack.c.l.b16 %v2323
    %v2690 = vunpack.c.h.b16 %v2323
    %v2691 = vunpack.c.l.b16 %v2324
    %v2692 = vunpack.c.h.b16 %v2324
    %v2693 = vunpack.c.l.b16 %v2325
    %v2694 = vunpack.c.h.b16 %v2325
    %v2695 = vunpack.c.l.b16 %v2326
    %v2696 = vunpack.c.h.b16 %v2326
    %v2697 = vunpack.c.l.b16 %v2327
    %v2698 = vunpack.c.h.b16 %v2327
    %v2699 = vunpack.c.l.b16 %v2328
    %v2700 = vunpack.c.h.b16 %v2328
    %v2701 = vunpack.c.l.b16 %v2329
    %v2702 = vunpack.c.h.b16 %v2329
    %v2703 = vunpack.c.l.b16 %v2330
    %v2704 = vunpack.c.h.b16 %v2330
    %v2705 = vunpack.c.l.b16 %v2331
    %v2706 = vunpack.c.h.b16 %v2331
    %v2707 = vunpack.c.l.b16 %v2332
    %v2708 = vunpack.c.h.b16 %v2332
    %v2709 = vunpack.c.l.b16 %v2333
    %v2710 = vunpack.c.h.b16 %v2333
    %v2711 = vunpack.c.l.b16 %v2334
    %v2712 = vunpack.c.h.b16 %v2334
    %v2713 = vunpack.c.l.b16 %v2335
    %v2714 = vunpack.c.h.b16 %v2335
    %v2715 = vunpack.c.l.b16 %v2336
    %v2716 = vunpack.c.h.b16 %v2336
    %v2717 = vunpack.c.l.b16 %v2337
    %v2718 = vunpack.c.h.b16 %v2337
    %v2719 = vunpack.c.l.b16 %v2338
    %v2720 = vunpack.c.h.b16 %v2338
    %v2721 = vunpack.c.l.b16 %v2339
    %v2722 = vunpack.c.h.b16 %v2339
    %v2723 = vunpack.c.l.b16 %v2340
    %v2724 = vunpack.c.h.b16 %v2340
    %v2725 = vunpack.c.l.b16 %v2341
    %v2726 = vunpack.c.h.b16 %v2341
    %v2727 = vunpack.c.l.b16 %v2342
    %v2728 = vunpack.c.h.b16 %v2342
    %v2729 = vunpack.c.l.b16 %v2343
    %v2730 = vunpack.c.h.b16 %v2343
    %v2731 = vunpack.c.l.b16 %v2344
    %v2732 = vunpack.c.h.b16 %v2344
    %v2733 = vunpack.c.l.b16 %v2345
    %v2734 = vunpack.c.h.b16 %v2345
    %v2735 = vunpack.c.l.b16 %v2346
    %v2736 = vunpack.c.h.b16 %v2346
    %v2737 = vunpack.c.l.b16 %v2347
    %v2738 = vunpack.c.h.b16 %v2347
    %v2739 = vunpack.c.l.b16 %v2348
    %v2740 = vunpack.c.h.b16 %v2348
    %v2741 = vunpack.c.l.b16 %v2349
    %v2742 = vunpack.c.h.b16 %v2349
    %v2743 = vunpack.c.l.b16 %v2350
    %v2744 = vunpack.c.h.b16 %v2350
    %v2745 = vunpack.c.l.b16 %v2351
    %v2746 = vunpack.c.h.b16 %v2351
    %v2747 = vunpack.c.l.b16 %v2352
    %v2748 = vunpack.c.h.b16 %v2352
    %v2749 = vunpack.c.l.b16 %v2353
    %v2750 = vunpack.c.h.b16 %v2353
    %v2751 = vunpack.c.l.b16 %v2354
    %v2752 = vunpack.c.h.b16 %v2354
    %v2753 = vunpack.c.l.b16 %v2355
    %v2754 = vunpack.c.h.b16 %v2355
    %v2755 = vunpack.c.l.b16 %v2356
    %v2756 = vunpack.c.h.b16 %v2356
    %v2757 = vunpack.c.l.b16 %v2357
    %v2758 = vunpack.c.h.b16 %v2357
    %v2759 = vunpack.c.l.b16 %v2358
    %v2760 = vunpack.c.h.b16 %v2358
    %v2761 = vunpack.c.l.b16 %v2359
    %v2762 = vunpack.c.h.b16 %v2359
    %v2763 = vunpack.c.l.b16 %v2360
    %v2764 = vunpack.c.h.b16 %v2360
    %v2765 = vunpack.c.l.b16 %v2361
    %v2766 = vunpack.c.h.b16 %v2361
    %v2767 = vunpack.c.l.b16 %v2362
    %v2768 = vunpack.c.h.b16 %v2362
    %v2769 = vunpack.c.l.b16 %v2363
    %v2770 = vunpack.c.h.b16 %v2363
    %v2771 = vunpack.c.l.b16 %v2364
    %v2772 = vunpack.c.h.b16 %v2364
    %v2773 = vunpack.c.l.b16 %v2365
    %v2774 = vunpack.c.h.b16 %v2365
    %v2775 = vunpack.c.l.b16 %v2366
    %v2776 = vunpack.c.h.b16 %v2366
    %v2777 = vunpack.c.l.b16 %v2367
    %v2778 = vunpack.c.h.b16 %v2367
    %v2779 = vunpack.c.l.b16 %v2368
    %v2780 = vunpack.c.h.b16 %v2368
    %v2781 = vunpack.c.l.b16 %v2369
    %v2782 = vunpack.c.h.b16 %v2369
    %v2783 = vunpack.c.l.b16 %v2370
    %v2784 = vunpack.c.h.b16 %v2370
    %v2785 = vunpack.c.l.b16 %v2371
    %v2786 = vunpack.c.h.b16 %v2371
    %v2787 = vunpack.c.l.b16 %v2372
    %v2788 = vunpack.c.h.b16 %v2372
    %v2789 = vunpack.c.l.b16 %v2373
    %v2790 = vunpack.c.h.b16 %v2373
    %v2791 = vunpack.c.l.b16 %v2374
    %v2792 = vunpack.c.h.b16 %v2374
    %v2793 = vunpack.c.l.b16 %v2375
    %v2794 = vunpack.c.h.b16 %v2375
    %v2795 = vunpack.c.l.b16 %v2376
    %v2796 = vunpack.c.h.b16 %v2376
    %v2797 = vunpack.c.l.b16 %v2377
    %v2798 = vunpack.c.h.b16 %v2377
    %v2799 = vunpack.c.l.b16 %v2378
    %v2800 = vunpack.c.h.b16 %v2378
    %v2801 = vunpack.c.l.b16 %v2379
    %v2802 = vunpack.c.h.b16 %v2379
    %v2803 = vunpack.c.l.b16 %v2380
    %v2804 = vunpack.c.h.b16 %v2380
    %v2805 = vunpack.c.l.b16 %v2381
    %v2806 = vunpack.c.h.b16 %v2381
    %v2807 = vunpack.c.l.b16 %v2382
    %v2808 = vunpack.c.h.b16 %v2382
    %v2809 = vunpack.c.l.b16 %v2383
    %v2810 = vunpack.c.h.b16 %v2383
    %v2811 = vunpack.c.l.b16 %v2384
    %v2812 = vunpack.c.h.b16 %v2384
    %v2813 = vunpack.c.l.b16 %v2385
    %v2814 = vunpack.c.h.b16 %v2385
    %v2815 = vunpack.c.l.b16 %v2386
    %v2816 = vunpack.c.h.b16 %v2386
    %v2817 = vunpack.c.l.b16 %v2387
    %v2818 = vunpack.c.h.b16 %v2387
    %v2819 = vunpack.c.l.b16 %v2388
    %v2820 = vunpack.c.h.b16 %v2388
    %v2821 = vunpack.c.l.b16 %v2389
    %v2822 = vunpack.c.h.b16 %v2389
    %v2823 = vunpack.c.l.b16 %v2390
    %v2824 = vunpack.c.h.b16 %v2390
    %v2825 = vunpack.c.l.b16 %v2391
    %v2826 = vunpack.c.h.b16 %v2391
    %v2827 = vunpack.c.l.b16 %v2392
    %v2828 = vunpack.c.h.b16 %v2392
    %v2829 = vunpack.c.l.b16 %v2393
    %v2830 = vunpack.c.h.b16 %v2393
    %v2831 = vunpack.c.l.b16 %v2394
    %v2832 = vunpack.c.h.b16 %v2394
    %v2833 = vunpack.c.l.b16 %v2395
    %v2834 = vunpack.c.h.b16 %v2395
    %v2835 = vunpack.c.l.b16 %v2396
    %v2836 = vunpack.c.h.b16 %v2396
    %v2837 = vunpack.c.l.b16 %v2397
    %v2838 = vunpack.c.h.b16 %v2397
    %v2839 = vunpack.c.l.b16 %v2398
    %v2840 = vunpack.c.h.b16 %v2398
    %v2841 = vunpack.c.l.b16 %v2399
    %v2842 = vunpack.c.h.b16 %v2399
    %v2843 = vunpack.c.l.b16 %v2400
    %v2844 = vunpack.c.h.b16 %v2400
    %v2845 = vunpack.c.l.b16 %v2401
    %v2846 = vunpack.c.h.b16 %v2401
    %v2847 = vunpack.c.l.b16 %v2402
    %v2848 = vunpack.c.h.b16 %v2402
    %v2849 = vunpack.c.l.b16 %v2403
    %v2850 = vunpack.c.h.b16 %v2403
    %v2851 = vunpack.c.l.b16 %v2404
    %v2852 = vunpack.c.h.b16 %v2404
    %v2853 = vunpack.c.l.b16 %v2405
    %v2854 = vunpack.c.h.b16 %v2405
    %v2855 = vunpack.c.l.b16 %v2406
    %v2856 = vunpack.c.h.b16 %v2406
    %v2857 = vunpack.c.l.b16 %v2407
    %v2858 = vunpack.c.h.b16 %v2407
    %v2859 = vunpack.c.l.b16 %v2408
    %v2860 = vunpack.c.h.b16 %v2408
    %v2861 = vunpack.c.l.b16 %v2409
    %v2862 = vunpack.c.h.b16 %v2409
    %v2863 = vunpack.c.l.b16 %v2410
    %v2864 = vunpack.c.h.b16 %v2410
    %v2865 = vunpack.c.l.b16 %v2411
    %v2866 = vunpack.c.h.b16 %v2411
    %v2867 = vunpack.c.l.b16 %v2412
    %v2868 = vunpack.c.h.b16 %v2412
    %v2869 = vunpack.c.l.b16 %v2413
    %v2870 = vunpack.c.h.b16 %v2413
    %v2871 = vunpack.c.l.b16 %v2414
    %v2872 = vunpack.c.h.b16 %v2414
    %v2873 = vunpack.c.l.b16 %v2415
    %v2874 = vunpack.c.h.b16 %v2415
    %v2875 = vunpack.c.l.b16 %v2416
    %v2876 = vunpack.c.h.b16 %v2416
    %v2877 = vunpack.c.l.b16 %v2417
    %v2878 = vunpack.c.h.b16 %v2417
    %v2879 = vunpack.c.l.b16 %v2418
    %v2880 = vunpack.c.h.b16 %v2418
    %v2881 = vunpack.c.l.b16 %v2419
    %v2882 = vunpack.c.h.b16 %v2419
    %v2883 = vunpack.c.l.b16 %v2420
    %v2884 = vunpack.c.h.b16 %v2420
    %v2885 = vunpack.c.l.b16 %v2421
    %v2886 = vunpack.c.h.b16 %v2421
    %v2887 = vunpack.c.l.b16 %v2422
    %v2888 = vunpack.c.h.b16 %v2422
    %v2889 = vunpack.c.l.b16 %v2423
    %v2890 = vunpack.c.h.b16 %v2423
    %v2891 = vunpack.c.l.b16 %v2424
    %v2892 = vunpack.c.h.b16 %v2424
    %v2893 = vpack.c.b16 %v2653, %v2637
    %v2894 = vpack.c.b16 %v2654, %v2638
    %v2895 = vpack.c.b16 %v2655, %v2639
    %v2896 = vpack.c.b16 %v2656, %v2640
    %v2897 = vpack.c.b16 %v2657, %v2641
    %v2898 = vpack.c.b16 %v2658, %v2642
    %v2899 = vpack.c.b16 %v2659, %v2643
    %v2900 = vpack.c.b16 %v2660, %v2644
    %v2901 = vpack.c.b16 %v2661, %v2645
    %v2902 = vpack.c.b16 %v2662, %v2646
    %v2903 = vpack.c.b16 %v2663, %v2647
    %v2904 = vpack.c.b16 %v2664, %v2648
    %v2905 = vpack.c.b16 %v2665, %v2649
    %v2906 = vpack.c.b16 %v2666, %v2650
    %v2907 = vpack.c.b16 %v2667, %v2651
    %v2908 = vpack.c.b16 %v2668, %v2652
    %v2909 = vpack.c.b16 %v2685, %v2669
    %v2910 = vpack.c.b16 %v2686, %v2670
    %v2911 = vpack.c.b16 %v2687, %v2671
    %v2912 = vpack.c.b16 %v2688, %v2672
    %v2913 = vpack.c.b16 %v2689, %v2673
    %v2914 = vpack.c.b16 %v2690, %v2674
    %v2915 = vpack.c.b16 %v2691, %v2675
    %v2916 = vpack.c.b16 %v2692, %v2676
    %v2917 = vpack.c.b16 %v2693, %v2677
    %v2918 = vpack.c.b16 %v2694, %v2678
    %v2919 = vpack.c.b16 %v2695, %v2679
    %v2920 = vpack.c.b16 %v2696, %v2680
    %v2921 = vpack.c.b16 %v2697, %v2681
    %v2922 = vpack.c.b16 %v2698, %v2682
    %v2923 = vpack.c.b16 %v2699, %v2683
    %v2924 = vpack.c.b16 %v2700, %v2684
    %v2925 = vpack.c.b16 %v2717, %v2701
    %v2926 = vpack.c.b16 %v2718, %v2702
    %v2927 = vpack.c.b16 %v2719, %v2703
    %v2928 = vpack.c.b16 %v2720, %v2704
    %v2929 = vpack.c.b16 %v2721, %v2705
    %v2930 = vpack.c.b16 %v2722, %v2706
    %v2931 = vpack.c.b16 %v2723, %v2707
    %v2932 = vpack.c.b16 %v2724, %v2708
    %v2933 = vpack.c.b16 %v2725, %v2709
    %v2934 = vpack.c.b16 %v2726, %v2710
    %v2935 = vpack.c.b16 %v2727, %v2711
    %v2936 = vpack.c.b16 %v2728, %v2712
    %v2937 = vpack.c.b16 %v2729, %v2713
    %v2938 = vpack.c.b16 %v2730, %v2714
    %v2939 = vpack.c.b16 %v2731, %v2715
    %v2940 = vpack.c.b16 %v2732, %v2716
    %v2941 = vpack.c.b16 %v2749, %v2733
    %v2942 = vpack.c.b16 %v2750, %v2734
    %v2943 = vpack.c.b16 %v2751, %v2735
    %v2944 = vpack.c.b16 %v2752, %v2736
    %v2945 = vpack.c.b16 %v2753, %v2737
    %v2946 = vpack.c.b16 %v2754, %v2738
    %v2947 = vpack.c.b16 %v2755, %v2739
    %v2948 = vpack.c.b16 %v2756, %v2740
    %v2949 = vpack.c.b16 %v2757, %v2741
    %v2950 = vpack.c.b16 %v2758, %v2742
    %v2951 = vpack.c.b16 %v2759, %v2743
    %v2952 = vpack.c.b16 %v2760, %v2744
    %v2953 = vpack.c.b16 %v2761, %v2745
    %v2954 = vpack.c.b16 %v2762, %v2746
    %v2955 = vpack.c.b16 %v2763, %v2747
    %v2956 = vpack.c.b16 %v2764, %v2748
    %v2957 = vpack.c.b16 %v2781, %v2765
    %v2958 = vpack.c.b16 %v2782, %v2766
    %v2959 = vpack.c.b16 %v2783, %v2767
    %v2960 = vpack.c.b16 %v2784, %v2768
    %v2961 = vpack.c.b16 %v2785, %v2769
    %v2962 = vpack.c.b16 %v2786, %v2770
    %v2963 = vpack.c.b16 %v2787, %v2771
    %v2964 = vpack.c.b16 %v2788, %v2772
    %v2965 = vpack.c.b16 %v2789, %v2773
    %v2966 = vpack.c.b16 %v2790, %v2774
    %v2967 = vpack.c.b16 %v2791, %v2775
    %v2968 = vpack.c.b16 %v2792, %v2776
    %v2969 = vpack.c.b16 %v2793, %v2777
    %v2970 = vpack.c.b16 %v2794, %v2778
    %v2971 = vpack.c.b16 %v2795, %v2779
    %v2972 = vpack.c.b16 %v2796, %v2780
    %v2973 = vpack.c.b16 %v2813, %v2797
    %v2974 = vpack.c.b16 %v2814, %v2798
    %v2975 = vpack.c.b16 %v2815, %v2799
    %v2976 = vpack.c.b16 %v2816, %v2800
    %v2977 = vpack.c.b16 %v2817, %v2801
    %v2978 = vpack.c.b16 %v2818, %v2802
    %v2979 = vpack.c.b16 %v2819, %v2803
    %v2980 = vpack.c.b16 %v2820, %v2804
    %v2981 = vpack.c.b16 %v2821, %v2805
    %v2982 = vpack.c.b16 %v2822, %v2806
    %v2983 = vpack.c.b16 %v2823, %v2807
    %v2984 = vpack.c.b16 %v2824, %v2808
    %v2985 = vpack.c.b16 %v2825, %v2809
    %v2986 = vpack.c.b16 %v2826, %v2810
    %v2987 = vpack.c.b16 %v2827, %v2811
    %v2988 = vpack.c.b16 %v2828, %v2812
    %v2989 = vpack.c.b16 %v2845, %v2829
    %v2990 = vpack.c.b16 %v2846, %v2830
    %v2991 = vpack.c.b16 %v2847, %v2831
    %v2992 = vpack.c.b16 %v2848, %v2832
    %v2993 = vpack.c.b16 %v2849, %v2833
    %v2994 = vpack.c.b16 %v2850, %v2834
    %v2995 = vpack.c.b16 %v2851, %v2835
    %v2996 = vpack.c.b16 %v2852, %v2836
    %v2997 = vpack.c.b16 %v2853, %v2837
    %v2998 = vpack.c.b16 %v2854, %v2838
    %v2999 = vpack.c.b16 %v2855, %v2839
    %v3000 = vpack.c.b16 %v2856, %v2840
    %v3001 = vpack.c.b16 %v2857, %v2841
    %v3002 = vpack.c.b16 %v2858, %v2842
    %v3003 = vpack.c.b16 %v2859, %v2843
    %v3004 = vpack.c.b16 %v2860, %v2844
    %v3005 = vpack.c.b16 %v2877, %v2861
    %v3006 = vpack.c.b16 %v2878, %v2862
    %v3007 = vpack.c.b16 %v2879, %v2863
    %v3008 = vpack.c.b16 %v2880, %v2864
    %v3009 = vpack.c.b16 %v2881, %v2865
    %v3010 = vpack.c.b16 %v2882, %v2866
    %v3011 = vpack.c.b16 %v2883, %v2867
    %v3012 = vpack.c.b16 %v2884, %v2868
    %v3013 = vpack.c.b16 %v2885, %v2869
    %v3014 = vpack.c.b16 %v2886, %v2870
    %v3015 = vpack.c.b16 %v2887, %v2871
    %v3016 = vpack.c.b16 %v2888, %v2872
    %v3017 = vpack.c.b16 %v2889, %v2873
    %v3018 = vpack.c.b16 %v2890, %v2874
    %v3019 = vpack.c.b16 %v2891, %v2875
    %v3020 = vpack.c.b16 %v2892, %v2876
    %3149 = vmatprep.subr.bf16.mxu0 %v3006
    %3150 = vmatpush1.bf16.msra.mxu0 %v3005
    %3151 = vmatprep.subr.bf16.mxu0 %v2990
    %3152 = vmatpush1.bf16.msra.mxu0 %v2989
    %3153 = vmatprep.subr.bf16.mxu0 %v2974
    %3154 = vmatpush1.bf16.msra.mxu0 %v2973
    %3155 = vmatprep.subr.bf16.mxu0 %v2958
    %3156 = vmatpush1.bf16.msra.mxu0 %v2957
    %3157 = vmatprep.subr.bf16.mxu0 %v2942
    %3158 = vmatpush1.bf16.msra.mxu0 %v2941
    %3159 = vmatprep.subr.bf16.mxu0 %v2926
    %3160 = vmatpush1.bf16.msra.mxu0 %v2925
    %3161 = vmatprep.subr.bf16.mxu0 %v2910
    %3162 = vmatpush1.bf16.msra.mxu0 %v2909
    %3163 = vmatprep.subr.bf16.mxu0 %v2894
    %3164 = vmatpush1.bf16.msra.mxu0 %v2893
    %3165 = vmatprep.subr.bf16.mxu0 0
    %3166 = vmatpush2.bf16.msra.mxu0 0
    %3167 = vmatprep.subr.bf16.mxu0 0
    %3168 = vmatpush2.bf16.msra.mxu0 0
    %3169 = vmatprep.subr.bf16.mxu0 0
    %3170 = vmatpush2.bf16.msra.mxu0 0
    %3171 = vmatprep.subr.bf16.mxu0 0
    %3172 = vmatpush2.bf16.msra.mxu0 0
    %3173 = vmatprep.subr.bf16.mxu0 0
    %3174 = vmatpush2.bf16.msra.mxu0 0
    %3175 = vmatprep.subr.bf16.mxu0 0
    %3176 = vmatpush2.bf16.msra.mxu0 0
    %3177 = vmatprep.subr.bf16.mxu0 0
    %3178 = vmatpush2.bf16.msra.mxu0 0
    %3179 = vmatprep.subr.bf16.mxu0 0
    %3180 = vmatpush2.bf16.msra.mxu0 0
    %3181 = vmatprep.mubr.bf16.mxu0 0
    %3182 = vmatmul.mubr.bf16.gmra.mxu0 %v2296
    %v3183 = vpop.f32.mrf.mxu0
    %v3184 = vadd.f32 %v2432, %v3183
    %v3185 = vpop.f32.mrf.mxu0
    %v3186 = vadd.f32 %v2436, %v3185
    %v3187 = vpop.f32.mrf.mxu0
    %v3188 = vadd.f32 %v2432, %v3187
    %v3189 = vpop.f32.mrf.mxu0
    %v3190 = vadd.f32 %v2436, %v3189
    %3191 = vdwg.mxu0
    %3192 = vmatprep.subr.bf16.mxu0 %v3008
    %3193 = vmatpush1.bf16.msra.mxu0 %v3007
    %3194 = vmatprep.subr.bf16.mxu0 %v2992
    %3195 = vmatpush1.bf16.msra.mxu0 %v2991
    %3196 = vmatprep.subr.bf16.mxu0 %v2976
    %3197 = vmatpush1.bf16.msra.mxu0 %v2975
    %3198 = vmatprep.subr.bf16.mxu0 %v2960
    %3199 = vmatpush1.bf16.msra.mxu0 %v2959
    %3200 = vmatprep.subr.bf16.mxu0 %v2944
    %3201 = vmatpush1.bf16.msra.mxu0 %v2943
    %3202 = vmatprep.subr.bf16.mxu0 %v2928
    %3203 = vmatpush1.bf16.msra.mxu0 %v2927
    %3204 = vmatprep.subr.bf16.mxu0 %v2912
    %3205 = vmatpush1.bf16.msra.mxu0 %v2911
    %3206 = vmatprep.subr.bf16.mxu0 %v2896
    %3207 = vmatpush1.bf16.msra.mxu0 %v2895
    %3208 = vmatprep.subr.bf16.mxu0 0
    %3209 = vmatpush2.bf16.msra.mxu0 0
    %3210 = vmatprep.subr.bf16.mxu0 0
    %3211 = vmatpush2.bf16.msra.mxu0 0
    %3212 = vmatprep.subr.bf16.mxu0 0
    %3213 = vmatpush2.bf16.msra.mxu0 0
    %3214 = vmatprep.subr.bf16.mxu0 0
    %3215 = vmatpush2.bf16.msra.mxu0 0
    %3216 = vmatprep.subr.bf16.mxu0 0
    %3217 = vmatpush2.bf16.msra.mxu0 0
    %3218 = vmatprep.subr.bf16.mxu0 0
    %3219 = vmatpush2.bf16.msra.mxu0 0
    %3220 = vmatprep.subr.bf16.mxu0 0
    %3221 = vmatpush2.bf16.msra.mxu0 0
    %3222 = vmatprep.subr.bf16.mxu0 0
    %3223 = vmatpush2.bf16.msra.mxu0 0
    %3224 = vmatprep.mubr.bf16.mxu0 0
    %3225 = vmatmul.mubr.bf16.gmra.mxu0 %v2296
    %v3226 = vpop.f32.mrf.mxu0
    %v3227 = vadd.f32 %v2440, %v3226
    %v3228 = vpop.f32.mrf.mxu0
    %v3229 = vadd.f32 %v2444, %v3228
    %v3230 = vpop.f32.mrf.mxu0
    %v3231 = vadd.f32 %v2440, %v3230
    %v3232 = vpop.f32.mrf.mxu0
    %v3233 = vadd.f32 %v2444, %v3232
    %3234 = vdwg.mxu0
    %3235 = vmatprep.subr.bf16.mxu0 %v3010
    %3236 = vmatpush1.bf16.msra.mxu0 %v3009
    %3237 = vmatprep.subr.bf16.mxu0 %v2994
    %3238 = vmatpush1.bf16.msra.mxu0 %v2993
    %3239 = vmatprep.subr.bf16.mxu0 %v2978
    %3240 = vmatpush1.bf16.msra.mxu0 %v2977
    %3241 = vmatprep.subr.bf16.mxu0 %v2962
    %3242 = vmatpush1.bf16.msra.mxu0 %v2961
    %3243 = vmatprep.subr.bf16.mxu0 %v2946
    %3244 = vmatpush1.bf16.msra.mxu0 %v2945
    %3245 = vmatprep.subr.bf16.mxu0 %v2930
    %3246 = vmatpush1.bf16.msra.mxu0 %v2929
    %3247 = vmatprep.subr.bf16.mxu0 %v2914
    %3248 = vmatpush1.bf16.msra.mxu0 %v2913
    %3249 = vmatprep.subr.bf16.mxu0 %v2898
    %3250 = vmatpush1.bf16.msra.mxu0 %v2897
    %3251 = vmatprep.subr.bf16.mxu0 0
    %3252 = vmatpush2.bf16.msra.mxu0 0
    %3253 = vmatprep.subr.bf16.mxu0 0
    %3254 = vmatpush2.bf16.msra.mxu0 0
    %3255 = vmatprep.subr.bf16.mxu0 0
    %3256 = vmatpush2.bf16.msra.mxu0 0
    %3257 = vmatprep.subr.bf16.mxu0 0
    %3258 = vmatpush2.bf16.msra.mxu0 0
    %3259 = vmatprep.subr.bf16.mxu0 0
    %3260 = vmatpush2.bf16.msra.mxu0 0
    %3261 = vmatprep.subr.bf16.mxu0 0
    %3262 = vmatpush2.bf16.msra.mxu0 0
    %3263 = vmatprep.subr.bf16.mxu0 0
    %3264 = vmatpush2.bf16.msra.mxu0 0
    %3265 = vmatprep.subr.bf16.mxu0 0
    %3266 = vmatpush2.bf16.msra.mxu0 0
    %3267 = vmatprep.mubr.bf16.mxu0 0
    %3268 = vmatmul.mubr.bf16.gmra.mxu0 %v2296
    %v3269 = vpop.f32.mrf.mxu0
    %v3270 = vadd.f32 %v2448, %v3269
    %v3271 = vpop.f32.mrf.mxu0
    %v3272 = vadd.f32 %v2452, %v3271
    %v3273 = vpop.f32.mrf.mxu0
    %v3274 = vadd.f32 %v2448, %v3273
    %v3275 = vpop.f32.mrf.mxu0
    %v3276 = vadd.f32 %v2452, %v3275
    %3277 = vdwg.mxu0
    %3278 = vmatprep.subr.bf16.mxu0 %v3012
    %3279 = vmatpush1.bf16.msra.mxu0 %v3011
    %3280 = vmatprep.subr.bf16.mxu0 %v2996
    %3281 = vmatpush1.bf16.msra.mxu0 %v2995
    %3282 = vmatprep.subr.bf16.mxu0 %v2980
    %3283 = vmatpush1.bf16.msra.mxu0 %v2979
    %3284 = vmatprep.subr.bf16.mxu0 %v2964
    %3285 = vmatpush1.bf16.msra.mxu0 %v2963
    %3286 = vmatprep.subr.bf16.mxu0 %v2948
    %3287 = vmatpush1.bf16.msra.mxu0 %v2947
    %3288 = vmatprep.subr.bf16.mxu0 %v2932
    %3289 = vmatpush1.bf16.msra.mxu0 %v2931
    %3290 = vmatprep.subr.bf16.mxu0 %v2916
    %3291 = vmatpush1.bf16.msra.mxu0 %v2915
    %3292 = vmatprep.subr.bf16.mxu0 %v2900
    %3293 = vmatpush1.bf16.msra.mxu0 %v2899
    %3294 = vmatprep.subr.bf16.mxu0 0
    %3295 = vmatpush2.bf16.msra.mxu0 0
    %3296 = vmatprep.subr.bf16.mxu0 0
    %3297 = vmatpush2.bf16.msra.mxu0 0
    %3298 = vmatprep.subr.bf16.mxu0 0
    %3299 = vmatpush2.bf16.msra.mxu0 0
    %3300 = vmatprep.subr.bf16.mxu0 0
    %3301 = vmatpush2.bf16.msra.mxu0 0
    %3302 = vmatprep.subr.bf16.mxu0 0
    %3303 = vmatpush2.bf16.msra.mxu0 0
    %3304 = vmatprep.subr.bf16.mxu0 0
    %3305 = vmatpush2.bf16.msra.mxu0 0
    %3306 = vmatprep.subr.bf16.mxu0 0
    %3307 = vmatpush2.bf16.msra.mxu0 0
    %3308 = vmatprep.subr.bf16.mxu0 0
    %3309 = vmatpush2.bf16.msra.mxu0 0
    %3310 = vmatprep.mubr.bf16.mxu0 0
    %3311 = vmatmul.mubr.bf16.gmra.mxu0 %v2296
    %v3312 = vpop.f32.mrf.mxu0
    %v3313 = vadd.f32 %v2456, %v3312
    %v3314 = vpop.f32.mrf.mxu0
    %v3315 = vadd.f32 %v2460, %v3314
    %v3316 = vpop.f32.mrf.mxu0
    %v3317 = vadd.f32 %v2456, %v3316
    %v3318 = vpop.f32.mrf.mxu0
    %v3319 = vadd.f32 %v2460, %v3318
    %3320 = vdwg.mxu0
    %3321 = vmatprep.subr.bf16.mxu0 %v3014
    %3322 = vmatpush1.bf16.msra.mxu0 %v3013
    %3323 = vmatprep.subr.bf16.mxu0 %v2998
    %3324 = vmatpush1.bf16.msra.mxu0 %v2997
    %3325 = vmatprep.subr.bf16.mxu0 %v2982
    %3326 = vmatpush1.bf16.msra.mxu0 %v2981
    %3327 = vmatprep.subr.bf16.mxu0 %v2966
    %3328 = vmatpush1.bf16.msra.mxu0 %v2965
    %3329 = vmatprep.subr.bf16.mxu0 %v2950
    %3330 = vmatpush1.bf16.msra.mxu0 %v2949
    %3331 = vmatprep.subr.bf16.mxu0 %v2934
    %3332 = vmatpush1.bf16.msra.mxu0 %v2933
    %3333 = vmatprep.subr.bf16.mxu0 %v2918
    %3334 = vmatpush1.bf16.msra.mxu0 %v2917
    %3335 = vmatprep.subr.bf16.mxu0 %v2902
    %3336 = vmatpush1.bf16.msra.mxu0 %v2901
    %3337 = vmatprep.subr.bf16.mxu0 0
    %3338 = vmatpush2.bf16.msra.mxu0 0
    %3339 = vmatprep.subr.bf16.mxu0 0
    %3340 = vmatpush2.bf16.msra.mxu0 0
    %3341 = vmatprep.subr.bf16.mxu0 0
    %3342 = vmatpush2.bf16.msra.mxu0 0
    %3343 = vmatprep.subr.bf16.mxu0 0
    %3344 = vmatpush2.bf16.msra.mxu0 0
    %3345 = vmatprep.subr.bf16.mxu0 0
    %3346 = vmatpush2.bf16.msra.mxu0 0
    %3347 = vmatprep.subr.bf16.mxu0 0
    %3348 = vmatpush2.bf16.msra.mxu0 0
    %3349 = vmatprep.subr.bf16.mxu0 0
    %3350 = vmatpush2.bf16.msra.mxu0 0
    %3351 = vmatprep.subr.bf16.mxu0 0
    %3352 = vmatpush2.bf16.msra.mxu0 0
    %3353 = vmatprep.mubr.bf16.mxu0 0
    %3354 = vmatmul.mubr.bf16.gmra.mxu0 %v2296
    %v3355 = vpop.f32.mrf.mxu0
    %v3356 = vadd.f32 %v2464, %v3355
    %v3357 = vpop.f32.mrf.mxu0
    %v3358 = vadd.f32 %v2468, %v3357
    %v3359 = vpop.f32.mrf.mxu0
    %v3360 = vadd.f32 %v2464, %v3359
    %v3361 = vpop.f32.mrf.mxu0
    %v3362 = vadd.f32 %v2468, %v3361
    %3363 = vdwg.mxu0
    %3364 = vmatprep.subr.bf16.mxu0 %v3016
    %3365 = vmatpush1.bf16.msra.mxu0 %v3015
    %3366 = vmatprep.subr.bf16.mxu0 %v3000
    %3367 = vmatpush1.bf16.msra.mxu0 %v2999
    %3368 = vmatprep.subr.bf16.mxu0 %v2984
    %3369 = vmatpush1.bf16.msra.mxu0 %v2983
    %3370 = vmatprep.subr.bf16.mxu0 %v2968
    %3371 = vmatpush1.bf16.msra.mxu0 %v2967
    %3372 = vmatprep.subr.bf16.mxu0 %v2952
    %3373 = vmatpush1.bf16.msra.mxu0 %v2951
    %3374 = vmatprep.subr.bf16.mxu0 %v2936
    %3375 = vmatpush1.bf16.msra.mxu0 %v2935
    %3376 = vmatprep.subr.bf16.mxu0 %v2920
    %3377 = vmatpush1.bf16.msra.mxu0 %v2919
    %3378 = vmatprep.subr.bf16.mxu0 %v2904
    %3379 = vmatpush1.bf16.msra.mxu0 %v2903
    %3380 = vmatprep.subr.bf16.mxu0 0
    %3381 = vmatpush2.bf16.msra.mxu0 0
    %3382 = vmatprep.subr.bf16.mxu0 0
    %3383 = vmatpush2.bf16.msra.mxu0 0
    %3384 = vmatprep.subr.bf16.mxu0 0
    %3385 = vmatpush2.bf16.msra.mxu0 0
    %3386 = vmatprep.subr.bf16.mxu0 0
    %3387 = vmatpush2.bf16.msra.mxu0 0
    %3388 = vmatprep.subr.bf16.mxu0 0
    %3389 = vmatpush2.bf16.msra.mxu0 0
    %3390 = vmatprep.subr.bf16.mxu0 0
    %3391 = vmatpush2.bf16.msra.mxu0 0
    %3392 = vmatprep.subr.bf16.mxu0 0
    %3393 = vmatpush2.bf16.msra.mxu0 0
    %3394 = vmatprep.subr.bf16.mxu0 0
    %3395 = vmatpush2.bf16.msra.mxu0 0
    %3396 = vmatprep.mubr.bf16.mxu0 0
    %3397 = vmatmul.mubr.bf16.gmra.mxu0 %v2296
    %v3398 = vpop.f32.mrf.mxu0
    %v3399 = vadd.f32 %v2472, %v3398
    %v3400 = vpop.f32.mrf.mxu0
    %v3401 = vadd.f32 %v2476, %v3400
    %v3402 = vpop.f32.mrf.mxu0
    %v3403 = vadd.f32 %v2472, %v3402
    %v3404 = vpop.f32.mrf.mxu0
    %v3405 = vadd.f32 %v2476, %v3404
    %3406 = vdwg.mxu0
    %3407 = vmatprep.subr.bf16.mxu0 %v3018
    %3408 = vmatpush1.bf16.msra.mxu0 %v3017
    %3409 = vmatprep.subr.bf16.mxu0 %v3002
    %3410 = vmatpush1.bf16.msra.mxu0 %v3001
    %3411 = vmatprep.subr.bf16.mxu0 %v2986
    %3412 = vmatpush1.bf16.msra.mxu0 %v2985
    %3413 = vmatprep.subr.bf16.mxu0 %v2970
    %3414 = vmatpush1.bf16.msra.mxu0 %v2969
    %3415 = vmatprep.subr.bf16.mxu0 %v2954
    %3416 = vmatpush1.bf16.msra.mxu0 %v2953
    %3417 = vmatprep.subr.bf16.mxu0 %v2938
    %3418 = vmatpush1.bf16.msra.mxu0 %v2937
    %3419 = vmatprep.subr.bf16.mxu0 %v2922
    %3420 = vmatpush1.bf16.msra.mxu0 %v2921
    %3421 = vmatprep.subr.bf16.mxu0 %v2906
    %3422 = vmatpush1.bf16.msra.mxu0 %v2905
    %3423 = vmatprep.subr.bf16.mxu0 0
    %3424 = vmatpush2.bf16.msra.mxu0 0
    %3425 = vmatprep.subr.bf16.mxu0 0
    %3426 = vmatpush2.bf16.msra.mxu0 0
    %3427 = vmatprep.subr.bf16.mxu0 0
    %3428 = vmatpush2.bf16.msra.mxu0 0
    %3429 = vmatprep.subr.bf16.mxu0 0
    %3430 = vmatpush2.bf16.msra.mxu0 0
    %3431 = vmatprep.subr.bf16.mxu0 0
    %3432 = vmatpush2.bf16.msra.mxu0 0
    %3433 = vmatprep.subr.bf16.mxu0 0
    %3434 = vmatpush2.bf16.msra.mxu0 0
    %3435 = vmatprep.subr.bf16.mxu0 0
    %3436 = vmatpush2.bf16.msra.mxu0 0
    %3437 = vmatprep.subr.bf16.mxu0 0
    %3438 = vmatpush2.bf16.msra.mxu0 0
    %3439 = vmatprep.mubr.bf16.mxu0 0
    %3440 = vmatmul.mubr.bf16.gmra.mxu0 %v2296
    %v3441 = vpop.f32.mrf.mxu0
    %v3442 = vadd.f32 %v2480, %v3441
    %v3443 = vpop.f32.mrf.mxu0
    %v3444 = vadd.f32 %v2484, %v3443
    %v3445 = vpop.f32.mrf.mxu0
    %v3446 = vadd.f32 %v2480, %v3445
    %v3447 = vpop.f32.mrf.mxu0
    %v3448 = vadd.f32 %v2484, %v3447
    %3449 = vdwg.mxu0
    %3450 = vmatprep.subr.bf16.mxu0 %v3020
    %3451 = vmatpush1.bf16.msra.mxu0 %v3019
    %3452 = vmatprep.subr.bf16.mxu0 %v3004
    %3453 = vmatpush1.bf16.msra.mxu0 %v3003
    %3454 = vmatprep.subr.bf16.mxu0 %v2988
    %3455 = vmatpush1.bf16.msra.mxu0 %v2987
    %3456 = vmatprep.subr.bf16.mxu0 %v2972
    %3457 = vmatpush1.bf16.msra.mxu0 %v2971
    %3458 = vmatprep.subr.bf16.mxu0 %v2956
    %3459 = vmatpush1.bf16.msra.mxu0 %v2955
    %3460 = vmatprep.subr.bf16.mxu0 %v2940
    %3461 = vmatpush1.bf16.msra.mxu0 %v2939
    %3462 = vmatprep.subr.bf16.mxu0 %v2924
    %3463 = vmatpush1.bf16.msra.mxu0 %v2923
    %3464 = vmatprep.subr.bf16.mxu0 %v2908
    %3465 = vmatpush1.bf16.msra.mxu0 %v2907
    %3466 = vmatprep.subr.bf16.mxu0 0
    %3467 = vmatpush2.bf16.msra.mxu0 0
    %3468 = vmatprep.subr.bf16.mxu0 0
    %3469 = vmatpush2.bf16.msra.mxu0 0
    %3470 = vmatprep.subr.bf16.mxu0 0
    %3471 = vmatpush2.bf16.msra.mxu0 0
    %3472 = vmatprep.subr.bf16.mxu0 0
    %3473 = vmatpush2.bf16.msra.mxu0 0
    %3474 = vmatprep.subr.bf16.mxu0 0
    %3475 = vmatpush2.bf16.msra.mxu0 0
    %3476 = vmatprep.subr.bf16.mxu0 0
    %3477 = vmatpush2.bf16.msra.mxu0 0
    %3478 = vmatprep.subr.bf16.mxu0 0
    %3479 = vmatpush2.bf16.msra.mxu0 0
    %3480 = vmatprep.subr.bf16.mxu0 0
    %3481 = vmatpush2.bf16.msra.mxu0 0
    %3482 = vmatprep.mubr.bf16.mxu0 0
    %3483 = vmatmul.mubr.bf16.gmra.mxu0 %v2296
    %v3484 = vpop.f32.mrf.mxu0
    %v3485 = vadd.f32 %v2488, %v3484
    %v3486 = vpop.f32.mrf.mxu0
    %v3487 = vadd.f32 %v2492, %v3486
    %v3488 = vpop.f32.mrf.mxu0
    %v3489 = vadd.f32 %v2488, %v3488
    %v3490 = vpop.f32.mrf.mxu0
    %v3491 = vadd.f32 %v2492, %v3490
    %3492 = vdwg.mxu0
    %v3493 = vmax.f32 %v3184, 0.0
    %v3494 = vmax.f32 %v3186, 0.0
    %v3495 = vmax.f32 %v3227, 0.0
    %v3496 = vmax.f32 %v3229, 0.0
    %v3497 = vmax.f32 %v3270, 0.0
    %v3498 = vmax.f32 %v3272, 0.0
    %v3499 = vmax.f32 %v3313, 0.0
    %v3500 = vmax.f32 %v3315, 0.0
    %v3501 = vmax.f32 %v3356, 0.0
    %v3502 = vmax.f32 %v3358, 0.0
    %v3503 = vmax.f32 %v3399, 0.0
    %v3504 = vmax.f32 %v3401, 0.0
    %v3505 = vmax.f32 %v3442, 0.0
    %v3506 = vmax.f32 %v3444, 0.0
    %v3507 = vmax.f32 %v3485, 0.0
    %v3508 = vmax.f32 %v3487, 0.0
    %v3509 = vmax.f32 %v3188, 0.0
    %v3510 = vmax.f32 %v3190, 0.0
    %v3511 = vmax.f32 %v3231, 0.0
    %v3512 = vmax.f32 %v3233, 0.0
    %v3513 = vmax.f32 %v3274, 0.0
    %v3514 = vmax.f32 %v3276, 0.0
    %v3515 = vmax.f32 %v3317, 0.0
    %v3516 = vmax.f32 %v3319, 0.0
    %v3517 = vmax.f32 %v3360, 0.0
    %v3518 = vmax.f32 %v3362, 0.0
    %v3519 = vmax.f32 %v3403, 0.0
    %v3520 = vmax.f32 %v3405, 0.0
    %v3521 = vmax.f32 %v3446, 0.0
    %v3522 = vmax.f32 %v3448, 0.0
    %v3523 = vmax.f32 %v3489, 0.0
    %v3524 = vmax.f32 %v3491, 0.0
    %v3525 = vpack.c.bf16 %v3509, %v3493
    %v3526 = vpack.c.bf16 %v3510, %v3494
    %v3527 = vpack.c.bf16 %v3511, %v3495
    %v3528 = vpack.c.bf16 %v3512, %v3496
    %v3529 = vpack.c.bf16 %v3513, %v3497
    %v3530 = vpack.c.bf16 %v3514, %v3498
    %v3531 = vpack.c.bf16 %v3515, %v3499
    %v3532 = vpack.c.bf16 %v3516, %v3500
    %v3533 = vpack.c.bf16 %v3517, %v3501
    %v3534 = vpack.c.bf16 %v3518, %v3502
    %v3535 = vpack.c.bf16 %v3519, %v3503
    %v3536 = vpack.c.bf16 %v3520, %v3504
    %v3537 = vpack.c.bf16 %v3521, %v3505
    %v3538 = vpack.c.bf16 %v3522, %v3506
    %v3539 = vpack.c.bf16 %v3523, %v3507
    %v3540 = vpack.c.bf16 %v3524, %v3508
    %v3541 = vld [vmem:[#allocation22] sm:$0xf]
    %v3542 = vld [vmem:[#allocation22 + $0x4] sm:$0xf]
    %v3543 = vld [vmem:[#allocation22 + $0x8] sm:$0xf]
    %v3544 = vld [vmem:[#allocation22 + $0xc] sm:$0xf]
    %v3545 = vld [vmem:[#allocation22 + $0x10] sm:$0xf]
    %v3546 = vld [vmem:[#allocation22 + $0x14] sm:$0xf]
    %v3547 = vld [vmem:[#allocation22 + $0x18] sm:$0xf]
    %v3548 = vld [vmem:[#allocation22 + $0x1c] sm:$0xf]
    %v3549 = vld [vmem:[#allocation22 + $0x20] sm:$0xf]
    %v3550 = vld [vmem:[#allocation22 + $0x24] sm:$0xf]
    %v3551 = vld [vmem:[#allocation22 + $0x28] sm:$0xf]
    %v3552 = vld [vmem:[#allocation22 + $0x2c] sm:$0xf]
    %v3553 = vld [vmem:[#allocation22 + $0x30] sm:$0xf]
    %v3554 = vld [vmem:[#allocation22 + $0x34] sm:$0xf]
    %v3555 = vld [vmem:[#allocation22 + $0x38] sm:$0xf]
    %v3556 = vld [vmem:[#allocation22 + $0x3c] sm:$0xf]
    %v3557 = vld [vmem:[#allocation22 + $0x40] sm:$0xf]
    %v3558 = vld [vmem:[#allocation22 + $0x44] sm:$0xf]
    %v3559 = vld [vmem:[#allocation22 + $0x48] sm:$0xf]
    %v3560 = vld [vmem:[#allocation22 + $0x4c] sm:$0xf]
    %v3561 = vld [vmem:[#allocation22 + $0x50] sm:$0xf]
    %v3562 = vld [vmem:[#allocation22 + $0x54] sm:$0xf]
    %v3563 = vld [vmem:[#allocation22 + $0x58] sm:$0xf]
    %v3564 = vld [vmem:[#allocation22 + $0x5c] sm:$0xf]
    %v3565 = vld [vmem:[#allocation22 + $0x60] sm:$0xf]
    %v3566 = vld [vmem:[#allocation22 + $0x64] sm:$0xf]
    %v3567 = vld [vmem:[#allocation22 + $0x68] sm:$0xf]
    %v3568 = vld [vmem:[#allocation22 + $0x6c] sm:$0xf]
    %v3569 = vld [vmem:[#allocation22 + $0x70] sm:$0xf]
    %v3570 = vld [vmem:[#allocation22 + $0x74] sm:$0xf]
    %v3571 = vld [vmem:[#allocation22 + $0x78] sm:$0xf]
    %v3572 = vld [vmem:[#allocation22 + $0x7c] sm:$0xf]
    %v3573 = vld [vmem:[#allocation22 + $0x80] sm:$0xf]
    %v3574 = vld [vmem:[#allocation22 + $0x84] sm:$0xf]
    %v3575 = vld [vmem:[#allocation22 + $0x88] sm:$0xf]
    %v3576 = vld [vmem:[#allocation22 + $0x8c] sm:$0xf]
    %v3577 = vld [vmem:[#allocation22 + $0x90] sm:$0xf]
    %v3578 = vld [vmem:[#allocation22 + $0x94] sm:$0xf]
    %v3579 = vld [vmem:[#allocation22 + $0x98] sm:$0xf]
    %v3580 = vld [vmem:[#allocation22 + $0x9c] sm:$0xf]
    %v3581 = vld [vmem:[#allocation22 + $0xa0] sm:$0xf]
    %v3582 = vld [vmem:[#allocation22 + $0xa4] sm:$0xf]
    %v3583 = vld [vmem:[#allocation22 + $0xa8] sm:$0xf]
    %v3584 = vld [vmem:[#allocation22 + $0xac] sm:$0xf]
    %v3585 = vld [vmem:[#allocation22 + $0xb0] sm:$0xf]
    %v3586 = vld [vmem:[#allocation22 + $0xb4] sm:$0xf]
    %v3587 = vld [vmem:[#allocation22 + $0xb8] sm:$0xf]
    %v3588 = vld [vmem:[#allocation22 + $0xbc] sm:$0xf]
    %v3589 = vld [vmem:[#allocation22 + $0xc0] sm:$0xf]
    %v3590 = vld [vmem:[#allocation22 + $0xc4] sm:$0xf]
    %v3591 = vld [vmem:[#allocation22 + $0xc8] sm:$0xf]
    %v3592 = vld [vmem:[#allocation22 + $0xcc] sm:$0xf]
    %v3593 = vld [vmem:[#allocation22 + $0xd0] sm:$0xf]
    %v3594 = vld [vmem:[#allocation22 + $0xd4] sm:$0xf]
    %v3595 = vld [vmem:[#allocation22 + $0xd8] sm:$0xf]
    %v3596 = vld [vmem:[#allocation22 + $0xdc] sm:$0xf]
    %v3597 = vld [vmem:[#allocation22 + $0xe0] sm:$0xf]
    %v3598 = vld [vmem:[#allocation22 + $0xe4] sm:$0xf]
    %v3599 = vld [vmem:[#allocation22 + $0xe8] sm:$0xf]
    %v3600 = vld [vmem:[#allocation22 + $0xec] sm:$0xf]
    %v3601 = vld [vmem:[#allocation22 + $0xf0] sm:$0xf]
    %v3602 = vld [vmem:[#allocation22 + $0xf4] sm:$0xf]
    %v3603 = vld [vmem:[#allocation22 + $0xf8] sm:$0xf]
    %v3604 = vld [vmem:[#allocation22 + $0xfc] sm:$0xf]
    %v3605 = vld [vmem:[#allocation22 + $0x100] sm:$0xf]
    %v3606 = vld [vmem:[#allocation22 + $0x104] sm:$0xf]
    %v3607 = vld [vmem:[#allocation22 + $0x108] sm:$0xf]
    %v3608 = vld [vmem:[#allocation22 + $0x10c] sm:$0xf]
    %v3609 = vld [vmem:[#allocation22 + $0x110] sm:$0xf]
    %v3610 = vld [vmem:[#allocation22 + $0x114] sm:$0xf]
    %v3611 = vld [vmem:[#allocation22 + $0x118] sm:$0xf]
    %v3612 = vld [vmem:[#allocation22 + $0x11c] sm:$0xf]
    %v3613 = vld [vmem:[#allocation22 + $0x120] sm:$0xf]
    %v3614 = vld [vmem:[#allocation22 + $0x124] sm:$0xf]
    %v3615 = vld [vmem:[#allocation22 + $0x128] sm:$0xf]
    %v3616 = vld [vmem:[#allocation22 + $0x12c] sm:$0xf]
    %v3617 = vld [vmem:[#allocation22 + $0x130] sm:$0xf]
    %v3618 = vld [vmem:[#allocation22 + $0x134] sm:$0xf]
    %v3619 = vld [vmem:[#allocation22 + $0x138] sm:$0xf]
    %v3620 = vld [vmem:[#allocation22 + $0x13c] sm:$0xf]
    %v3621 = vld [vmem:[#allocation22 + $0x140] sm:$0xf]
    %v3622 = vld [vmem:[#allocation22 + $0x144] sm:$0xf]
    %v3623 = vld [vmem:[#allocation22 + $0x148] sm:$0xf]
    %v3624 = vld [vmem:[#allocation22 + $0x14c] sm:$0xf]
    %v3625 = vld [vmem:[#allocation22 + $0x150] sm:$0xf]
    %v3626 = vld [vmem:[#allocation22 + $0x154] sm:$0xf]
    %v3627 = vld [vmem:[#allocation22 + $0x158] sm:$0xf]
    %v3628 = vld [vmem:[#allocation22 + $0x15c] sm:$0xf]
    %v3629 = vld [vmem:[#allocation22 + $0x160] sm:$0xf]
    %v3630 = vld [vmem:[#allocation22 + $0x164] sm:$0xf]
    %v3631 = vld [vmem:[#allocation22 + $0x168] sm:$0xf]
    %v3632 = vld [vmem:[#allocation22 + $0x16c] sm:$0xf]
    %v3633 = vld [vmem:[#allocation22 + $0x170] sm:$0xf]
    %v3634 = vld [vmem:[#allocation22 + $0x174] sm:$0xf]
    %v3635 = vld [vmem:[#allocation22 + $0x178] sm:$0xf]
    %v3636 = vld [vmem:[#allocation22 + $0x17c] sm:$0xf]
    %v3637 = vld [vmem:[#allocation22 + $0x180] sm:$0xf]
    %v3638 = vld [vmem:[#allocation22 + $0x184] sm:$0xf]
    %v3639 = vld [vmem:[#allocation22 + $0x188] sm:$0xf]
    %v3640 = vld [vmem:[#allocation22 + $0x18c] sm:$0xf]
    %v3641 = vld [vmem:[#allocation22 + $0x190] sm:$0xf]
    %v3642 = vld [vmem:[#allocation22 + $0x194] sm:$0xf]
    %v3643 = vld [vmem:[#allocation22 + $0x198] sm:$0xf]
    %v3644 = vld [vmem:[#allocation22 + $0x19c] sm:$0xf]
    %v3645 = vld [vmem:[#allocation22 + $0x1a0] sm:$0xf]
    %v3646 = vld [vmem:[#allocation22 + $0x1a4] sm:$0xf]
    %v3647 = vld [vmem:[#allocation22 + $0x1a8] sm:$0xf]
    %v3648 = vld [vmem:[#allocation22 + $0x1ac] sm:$0xf]
    %v3649 = vld [vmem:[#allocation22 + $0x1b0] sm:$0xf]
    %v3650 = vld [vmem:[#allocation22 + $0x1b4] sm:$0xf]
    %v3651 = vld [vmem:[#allocation22 + $0x1b8] sm:$0xf]
    %v3652 = vld [vmem:[#allocation22 + $0x1bc] sm:$0xf]
    %v3653 = vld [vmem:[#allocation22 + $0x1c0] sm:$0xf]
    %v3654 = vld [vmem:[#allocation22 + $0x1c4] sm:$0xf]
    %v3655 = vld [vmem:[#allocation22 + $0x1c8] sm:$0xf]
    %v3656 = vld [vmem:[#allocation22 + $0x1cc] sm:$0xf]
    %v3657 = vld [vmem:[#allocation22 + $0x1d0] sm:$0xf]
    %v3658 = vld [vmem:[#allocation22 + $0x1d4] sm:$0xf]
    %v3659 = vld [vmem:[#allocation22 + $0x1d8] sm:$0xf]
    %v3660 = vld [vmem:[#allocation22 + $0x1dc] sm:$0xf]
    %v3661 = vld [vmem:[#allocation22 + $0x1e0] sm:$0xf]
    %v3662 = vld [vmem:[#allocation22 + $0x1e4] sm:$0xf]
    %v3663 = vld [vmem:[#allocation22 + $0x1e8] sm:$0xf]
    %v3664 = vld [vmem:[#allocation22 + $0x1ec] sm:$0xf]
    %v3665 = vld [vmem:[#allocation22 + $0x1f0] sm:$0xf]
    %v3666 = vld [vmem:[#allocation22 + $0x1f4] sm:$0xf]
    %v3667 = vld [vmem:[#allocation22 + $0x1f8] sm:$0xf]
    %v3668 = vld [vmem:[#allocation22 + $0x1fc] sm:$0xf]
    %v3669 = vld [vmem:[#allocation22 + $0x200] sm:$0xf]
    %v3670 = vld [vmem:[#allocation22 + $0x204] sm:$0xf]
    %v3671 = vld [vmem:[#allocation22 + $0x208] sm:$0xf]
    %v3672 = vld [vmem:[#allocation22 + $0x20c] sm:$0xf]
    %v3673 = vld [vmem:[#allocation22 + $0x210] sm:$0xf]
    %v3674 = vld [vmem:[#allocation22 + $0x214] sm:$0xf]
    %v3675 = vld [vmem:[#allocation22 + $0x218] sm:$0xf]
    %v3676 = vld [vmem:[#allocation22 + $0x21c] sm:$0xf]
    %v3677 = vld [vmem:[#allocation22 + $0x220] sm:$0xf]
    %v3678 = vld [vmem:[#allocation22 + $0x224] sm:$0xf]
    %v3679 = vld [vmem:[#allocation22 + $0x228] sm:$0xf]
    %v3680 = vld [vmem:[#allocation22 + $0x22c] sm:$0xf]
    %v3681 = vld [vmem:[#allocation22 + $0x230] sm:$0xf]
    %v3682 = vld [vmem:[#allocation22 + $0x234] sm:$0xf]
    %v3683 = vld [vmem:[#allocation22 + $0x238] sm:$0xf]
    %v3684 = vld [vmem:[#allocation22 + $0x23c] sm:$0xf]
    %v3685 = vld [vmem:[#allocation22 + $0x240] sm:$0xf]
    %v3686 = vld [vmem:[#allocation22 + $0x244] sm:$0xf]
    %v3687 = vld [vmem:[#allocation22 + $0x248] sm:$0xf]
    %v3688 = vld [vmem:[#allocation22 + $0x24c] sm:$0xf]
    %v3689 = vld [vmem:[#allocation22 + $0x250] sm:$0xf]
    %v3690 = vld [vmem:[#allocation22 + $0x254] sm:$0xf]
    %v3691 = vld [vmem:[#allocation22 + $0x258] sm:$0xf]
    %v3692 = vld [vmem:[#allocation22 + $0x25c] sm:$0xf]
    %v3693 = vld [vmem:[#allocation22 + $0x260] sm:$0xf]
    %v3694 = vld [vmem:[#allocation22 + $0x264] sm:$0xf]
    %v3695 = vld [vmem:[#allocation22 + $0x268] sm:$0xf]
    %v3696 = vld [vmem:[#allocation22 + $0x26c] sm:$0xf]
    %v3697 = vld [vmem:[#allocation22 + $0x270] sm:$0xf]
    %v3698 = vld [vmem:[#allocation22 + $0x274] sm:$0xf]
    %v3699 = vld [vmem:[#allocation22 + $0x278] sm:$0xf]
    %v3700 = vld [vmem:[#allocation22 + $0x27c] sm:$0xf]
    %v3701 = vld [vmem:[#allocation22 + $0x280] sm:$0xf]
    %v3702 = vld [vmem:[#allocation22 + $0x284] sm:$0xf]
    %v3703 = vld [vmem:[#allocation22 + $0x288] sm:$0xf]
    %v3704 = vld [vmem:[#allocation22 + $0x28c] sm:$0xf]
    %v3705 = vld [vmem:[#allocation22 + $0x290] sm:$0xf]
    %v3706 = vld [vmem:[#allocation22 + $0x294] sm:$0xf]
    %v3707 = vld [vmem:[#allocation22 + $0x298] sm:$0xf]
    %v3708 = vld [vmem:[#allocation22 + $0x29c] sm:$0xf]
    %v3709 = vld [vmem:[#allocation22 + $0x2a0] sm:$0xf]
    %v3710 = vld [vmem:[#allocation22 + $0x2a4] sm:$0xf]
    %v3711 = vld [vmem:[#allocation22 + $0x2a8] sm:$0xf]
    %v3712 = vld [vmem:[#allocation22 + $0x2ac] sm:$0xf]
    %v3713 = vld [vmem:[#allocation22 + $0x2b0] sm:$0xf]
    %v3714 = vld [vmem:[#allocation22 + $0x2b4] sm:$0xf]
    %v3715 = vld [vmem:[#allocation22 + $0x2b8] sm:$0xf]
    %v3716 = vld [vmem:[#allocation22 + $0x2bc] sm:$0xf]
    %v3717 = vld [vmem:[#allocation22 + $0x2c0] sm:$0xf]
    %v3718 = vld [vmem:[#allocation22 + $0x2c4] sm:$0xf]
    %v3719 = vld [vmem:[#allocation22 + $0x2c8] sm:$0xf]
    %v3720 = vld [vmem:[#allocation22 + $0x2cc] sm:$0xf]
    %v3721 = vld [vmem:[#allocation22 + $0x2d0] sm:$0xf]
    %v3722 = vld [vmem:[#allocation22 + $0x2d4] sm:$0xf]
    %v3723 = vld [vmem:[#allocation22 + $0x2d8] sm:$0xf]
    %v3724 = vld [vmem:[#allocation22 + $0x2dc] sm:$0xf]
    %v3725 = vld [vmem:[#allocation22 + $0x2e0] sm:$0xf]
    %v3726 = vld [vmem:[#allocation22 + $0x2e4] sm:$0xf]
    %v3727 = vld [vmem:[#allocation22 + $0x2e8] sm:$0xf]
    %v3728 = vld [vmem:[#allocation22 + $0x2ec] sm:$0xf]
    %v3729 = vld [vmem:[#allocation22 + $0x2f0] sm:$0xf]
    %v3730 = vld [vmem:[#allocation22 + $0x2f4] sm:$0xf]
    %v3731 = vld [vmem:[#allocation22 + $0x2f8] sm:$0xf]
    %v3732 = vld [vmem:[#allocation22 + $0x2fc] sm:$0xf]
    %v3733 = vld [vmem:[#allocation22 + $0x300] sm:$0xf]
    %v3734 = vld [vmem:[#allocation22 + $0x304] sm:$0xf]
    %v3735 = vld [vmem:[#allocation22 + $0x308] sm:$0xf]
    %v3736 = vld [vmem:[#allocation22 + $0x30c] sm:$0xf]
    %v3737 = vld [vmem:[#allocation22 + $0x310] sm:$0xf]
    %v3738 = vld [vmem:[#allocation22 + $0x314] sm:$0xf]
    %v3739 = vld [vmem:[#allocation22 + $0x318] sm:$0xf]
    %v3740 = vld [vmem:[#allocation22 + $0x31c] sm:$0xf]
    %v3741 = vld [vmem:[#allocation22 + $0x320] sm:$0xf]
    %v3742 = vld [vmem:[#allocation22 + $0x324] sm:$0xf]
    %v3743 = vld [vmem:[#allocation22 + $0x328] sm:$0xf]
    %v3744 = vld [vmem:[#allocation22 + $0x32c] sm:$0xf]
    %v3745 = vld [vmem:[#allocation22 + $0x330] sm:$0xf]
    %v3746 = vld [vmem:[#allocation22 + $0x334] sm:$0xf]
    %v3747 = vld [vmem:[#allocation22 + $0x338] sm:$0xf]
    %v3748 = vld [vmem:[#allocation22 + $0x33c] sm:$0xf]
    %v3749 = vld [vmem:[#allocation22 + $0x340] sm:$0xf]
    %v3750 = vld [vmem:[#allocation22 + $0x344] sm:$0xf]
    %v3751 = vld [vmem:[#allocation22 + $0x348] sm:$0xf]
    %v3752 = vld [vmem:[#allocation22 + $0x34c] sm:$0xf]
    %v3753 = vld [vmem:[#allocation22 + $0x350] sm:$0xf]
    %v3754 = vld [vmem:[#allocation22 + $0x354] sm:$0xf]
    %v3755 = vld [vmem:[#allocation22 + $0x358] sm:$0xf]
    %v3756 = vld [vmem:[#allocation22 + $0x35c] sm:$0xf]
    %v3757 = vld [vmem:[#allocation22 + $0x360] sm:$0xf]
    %v3758 = vld [vmem:[#allocation22 + $0x364] sm:$0xf]
    %v3759 = vld [vmem:[#allocation22 + $0x368] sm:$0xf]
    %v3760 = vld [vmem:[#allocation22 + $0x36c] sm:$0xf]
    %v3761 = vld [vmem:[#allocation22 + $0x370] sm:$0xf]
    %v3762 = vld [vmem:[#allocation22 + $0x374] sm:$0xf]
    %v3763 = vld [vmem:[#allocation22 + $0x378] sm:$0xf]
    %v3764 = vld [vmem:[#allocation22 + $0x37c] sm:$0xf]
    %v3765 = vld [vmem:[#allocation22 + $0x380] sm:$0xf]
    %v3766 = vld [vmem:[#allocation22 + $0x384] sm:$0xf]
    %v3767 = vld [vmem:[#allocation22 + $0x388] sm:$0xf]
    %v3768 = vld [vmem:[#allocation22 + $0x38c] sm:$0xf]
    %v3769 = vld [vmem:[#allocation22 + $0x390] sm:$0xf]
    %v3770 = vld [vmem:[#allocation22 + $0x394] sm:$0xf]
    %v3771 = vld [vmem:[#allocation22 + $0x398] sm:$0xf]
    %v3772 = vld [vmem:[#allocation22 + $0x39c] sm:$0xf]
    %v3773 = vld [vmem:[#allocation22 + $0x3a0] sm:$0xf]
    %v3774 = vld [vmem:[#allocation22 + $0x3a4] sm:$0xf]
    %v3775 = vld [vmem:[#allocation22 + $0x3a8] sm:$0xf]
    %v3776 = vld [vmem:[#allocation22 + $0x3ac] sm:$0xf]
    %v3777 = vld [vmem:[#allocation22 + $0x3b0] sm:$0xf]
    %v3778 = vld [vmem:[#allocation22 + $0x3b4] sm:$0xf]
    %v3779 = vld [vmem:[#allocation22 + $0x3b8] sm:$0xf]
    %v3780 = vld [vmem:[#allocation22 + $0x3bc] sm:$0xf]
    %v3781 = vld [vmem:[#allocation22 + $0x3c0] sm:$0xf]
    %v3782 = vld [vmem:[#allocation22 + $0x3c4] sm:$0xf]
    %v3783 = vld [vmem:[#allocation22 + $0x3c8] sm:$0xf]
    %v3784 = vld [vmem:[#allocation22 + $0x3cc] sm:$0xf]
    %v3785 = vld [vmem:[#allocation22 + $0x3d0] sm:$0xf]
    %v3786 = vld [vmem:[#allocation22 + $0x3d4] sm:$0xf]
    %v3787 = vld [vmem:[#allocation22 + $0x3d8] sm:$0xf]
    %v3788 = vld [vmem:[#allocation22 + $0x3dc] sm:$0xf]
    %v3789 = vld [vmem:[#allocation22 + $0x3e0] sm:$0xf]
    %v3790 = vld [vmem:[#allocation22 + $0x3e4] sm:$0xf]
    %v3791 = vld [vmem:[#allocation22 + $0x3e8] sm:$0xf]
    %v3792 = vld [vmem:[#allocation22 + $0x3ec] sm:$0xf]
    %v3793 = vld [vmem:[#allocation22 + $0x3f0] sm:$0xf]
    %v3794 = vld [vmem:[#allocation22 + $0x3f4] sm:$0xf]
    %v3795 = vld [vmem:[#allocation22 + $0x3f8] sm:$0xf]
    %v3796 = vld [vmem:[#allocation22 + $0x3fc] sm:$0xf]
    %v3797 = vld [vmem:[#allocation23] sm:$0x1]
    %v3799 = vlaneseq
    %v3800 = vshrl.u32 %v3799, 7
    %v3801 = vsub.s32 0, %v3800
    %v3802 = vrot.slane %v3797, %v3801
    %v4060 = vunpack.c.l.b16 %v3541
    %v4061 = vunpack.c.l.b16 %v3542
    %v4062 = vunpack.c.l.b16 %v3543
    %v4063 = vunpack.c.l.b16 %v3544
    %v4064 = vunpack.c.l.b16 %v3545
    %v4065 = vunpack.c.l.b16 %v3546
    %v4066 = vunpack.c.l.b16 %v3547
    %v4067 = vunpack.c.l.b16 %v3548
    %v4068 = vunpack.c.l.b16 %v3549
    %v4069 = vunpack.c.l.b16 %v3550
    %v4070 = vunpack.c.l.b16 %v3551
    %v4071 = vunpack.c.l.b16 %v3552
    %v4072 = vunpack.c.l.b16 %v3553
    %v4073 = vunpack.c.l.b16 %v3554
    %v4074 = vunpack.c.l.b16 %v3555
    %v4075 = vunpack.c.l.b16 %v3556
    %v4076 = vunpack.c.l.b16 %v3557
    %v4077 = vunpack.c.l.b16 %v3558
    %v4078 = vunpack.c.l.b16 %v3559
    %v4079 = vunpack.c.l.b16 %v3560
    %v4080 = vunpack.c.l.b16 %v3561
    %v4081 = vunpack.c.l.b16 %v3562
    %v4082 = vunpack.c.l.b16 %v3563
    %v4083 = vunpack.c.l.b16 %v3564
    %v4084 = vunpack.c.l.b16 %v3565
    %v4085 = vunpack.c.l.b16 %v3566
    %v4086 = vunpack.c.l.b16 %v3567
    %v4087 = vunpack.c.l.b16 %v3568
    %v4088 = vunpack.c.l.b16 %v3569
    %v4089 = vunpack.c.l.b16 %v3570
    %v4090 = vunpack.c.l.b16 %v3571
    %v4091 = vunpack.c.l.b16 %v3572
    %v4092 = vunpack.c.l.b16 %v3573
    %v4093 = vunpack.c.l.b16 %v3574
    %v4094 = vunpack.c.l.b16 %v3575
    %v4095 = vunpack.c.l.b16 %v3576
    %v4096 = vunpack.c.l.b16 %v3577
    %v4097 = vunpack.c.l.b16 %v3578
    %v4098 = vunpack.c.l.b16 %v3579
    %v4099 = vunpack.c.l.b16 %v3580
    %v4100 = vunpack.c.l.b16 %v3581
    %v4101 = vunpack.c.l.b16 %v3582
    %v4102 = vunpack.c.l.b16 %v3583
    %v4103 = vunpack.c.l.b16 %v3584
    %v4104 = vunpack.c.l.b16 %v3585
    %v4105 = vunpack.c.l.b16 %v3586
    %v4106 = vunpack.c.l.b16 %v3587
    %v4107 = vunpack.c.l.b16 %v3588
    %v4108 = vunpack.c.l.b16 %v3589
    %v4109 = vunpack.c.l.b16 %v3590
    %v4110 = vunpack.c.l.b16 %v3591
    %v4111 = vunpack.c.l.b16 %v3592
    %v4112 = vunpack.c.l.b16 %v3593
    %v4113 = vunpack.c.l.b16 %v3594
    %v4114 = vunpack.c.l.b16 %v3595
    %v4115 = vunpack.c.l.b16 %v3596
    %v4116 = vunpack.c.l.b16 %v3597
    %v4117 = vunpack.c.l.b16 %v3598
    %v4118 = vunpack.c.l.b16 %v3599
    %v4119 = vunpack.c.l.b16 %v3600
    %v4120 = vunpack.c.l.b16 %v3601
    %v4121 = vunpack.c.l.b16 %v3602
    %v4122 = vunpack.c.l.b16 %v3603
    %v4123 = vunpack.c.l.b16 %v3604
    %v4124 = vunpack.c.l.b16 %v3605
    %v4125 = vunpack.c.l.b16 %v3606
    %v4126 = vunpack.c.l.b16 %v3607
    %v4127 = vunpack.c.l.b16 %v3608
    %v4128 = vunpack.c.l.b16 %v3609
    %v4129 = vunpack.c.l.b16 %v3610
    %v4130 = vunpack.c.l.b16 %v3611
    %v4131 = vunpack.c.l.b16 %v3612
    %v4132 = vunpack.c.l.b16 %v3613
    %v4133 = vunpack.c.l.b16 %v3614
    %v4134 = vunpack.c.l.b16 %v3615
    %v4135 = vunpack.c.l.b16 %v3616
    %v4136 = vunpack.c.l.b16 %v3617
    %v4137 = vunpack.c.l.b16 %v3618
    %v4138 = vunpack.c.l.b16 %v3619
    %v4139 = vunpack.c.l.b16 %v3620
    %v4140 = vunpack.c.l.b16 %v3621
    %v4141 = vunpack.c.l.b16 %v3622
    %v4142 = vunpack.c.l.b16 %v3623
    %v4143 = vunpack.c.l.b16 %v3624
    %v4144 = vunpack.c.l.b16 %v3625
    %v4145 = vunpack.c.l.b16 %v3626
    %v4146 = vunpack.c.l.b16 %v3627
    %v4147 = vunpack.c.l.b16 %v3628
    %v4148 = vunpack.c.l.b16 %v3629
    %v4149 = vunpack.c.l.b16 %v3630
    %v4150 = vunpack.c.l.b16 %v3631
    %v4151 = vunpack.c.l.b16 %v3632
    %v4152 = vunpack.c.l.b16 %v3633
    %v4153 = vunpack.c.l.b16 %v3634
    %v4154 = vunpack.c.l.b16 %v3635
    %v4155 = vunpack.c.l.b16 %v3636
    %v4156 = vunpack.c.l.b16 %v3637
    %v4157 = vunpack.c.l.b16 %v3638
    %v4158 = vunpack.c.l.b16 %v3639
    %v4159 = vunpack.c.l.b16 %v3640
    %v4160 = vunpack.c.l.b16 %v3641
    %v4161 = vunpack.c.l.b16 %v3642
    %v4162 = vunpack.c.l.b16 %v3643
    %v4163 = vunpack.c.l.b16 %v3644
    %v4164 = vunpack.c.l.b16 %v3645
    %v4165 = vunpack.c.l.b16 %v3646
    %v4166 = vunpack.c.l.b16 %v3647
    %v4167 = vunpack.c.l.b16 %v3648
    %v4168 = vunpack.c.l.b16 %v3649
    %v4169 = vunpack.c.l.b16 %v3650
    %v4170 = vunpack.c.l.b16 %v3651
    %v4171 = vunpack.c.l.b16 %v3652
    %v4172 = vunpack.c.l.b16 %v3653
    %v4173 = vunpack.c.l.b16 %v3654
    %v4174 = vunpack.c.l.b16 %v3655
    %v4175 = vunpack.c.l.b16 %v3656
    %v4176 = vunpack.c.l.b16 %v3657
    %v4177 = vunpack.c.l.b16 %v3658
    %v4178 = vunpack.c.l.b16 %v3659
    %v4179 = vunpack.c.l.b16 %v3660
    %v4180 = vunpack.c.l.b16 %v3661
    %v4181 = vunpack.c.l.b16 %v3662
    %v4182 = vunpack.c.l.b16 %v3663
    %v4183 = vunpack.c.l.b16 %v3664
    %v4184 = vunpack.c.l.b16 %v3665
    %v4185 = vunpack.c.l.b16 %v3666
    %v4186 = vunpack.c.l.b16 %v3667
    %v4187 = vunpack.c.l.b16 %v3668
    %v4188 = vunpack.c.l.b16 %v3669
    %v4189 = vunpack.c.l.b16 %v3670
    %v4190 = vunpack.c.l.b16 %v3671
    %v4191 = vunpack.c.l.b16 %v3672
    %v4192 = vunpack.c.l.b16 %v3673
    %v4193 = vunpack.c.l.b16 %v3674
    %v4194 = vunpack.c.l.b16 %v3675
    %v4195 = vunpack.c.l.b16 %v3676
    %v4196 = vunpack.c.l.b16 %v3677
    %v4197 = vunpack.c.l.b16 %v3678
    %v4198 = vunpack.c.l.b16 %v3679
    %v4199 = vunpack.c.l.b16 %v3680
    %v4200 = vunpack.c.l.b16 %v3681
    %v4201 = vunpack.c.l.b16 %v3682
    %v4202 = vunpack.c.l.b16 %v3683
    %v4203 = vunpack.c.l.b16 %v3684
    %v4204 = vunpack.c.l.b16 %v3685
    %v4205 = vunpack.c.l.b16 %v3686
    %v4206 = vunpack.c.l.b16 %v3687
    %v4207 = vunpack.c.l.b16 %v3688
    %v4208 = vunpack.c.l.b16 %v3689
    %v4209 = vunpack.c.l.b16 %v3690
    %v4210 = vunpack.c.l.b16 %v3691
    %v4211 = vunpack.c.l.b16 %v3692
    %v4212 = vunpack.c.l.b16 %v3693
    %v4213 = vunpack.c.l.b16 %v3694
    %v4214 = vunpack.c.l.b16 %v3695
    %v4215 = vunpack.c.l.b16 %v3696
    %v4216 = vunpack.c.l.b16 %v3697
    %v4217 = vunpack.c.l.b16 %v3698
    %v4218 = vunpack.c.l.b16 %v3699
    %v4219 = vunpack.c.l.b16 %v3700
    %v4220 = vunpack.c.l.b16 %v3701
    %v4221 = vunpack.c.l.b16 %v3702
    %v4222 = vunpack.c.l.b16 %v3703
    %v4223 = vunpack.c.l.b16 %v3704
    %v4224 = vunpack.c.l.b16 %v3705
    %v4225 = vunpack.c.l.b16 %v3706
    %v4226 = vunpack.c.l.b16 %v3707
    %v4227 = vunpack.c.l.b16 %v3708
    %v4228 = vunpack.c.l.b16 %v3709
    %v4229 = vunpack.c.l.b16 %v3710
    %v4230 = vunpack.c.l.b16 %v3711
    %v4231 = vunpack.c.l.b16 %v3712
    %v4232 = vunpack.c.l.b16 %v3713
    %v4233 = vunpack.c.l.b16 %v3714
    %v4234 = vunpack.c.l.b16 %v3715
    %v4235 = vunpack.c.l.b16 %v3716
    %v4236 = vunpack.c.l.b16 %v3717
    %v4237 = vunpack.c.l.b16 %v3718
    %v4238 = vunpack.c.l.b16 %v3719
    %v4239 = vunpack.c.l.b16 %v3720
    %v4240 = vunpack.c.l.b16 %v3721
    %v4241 = vunpack.c.l.b16 %v3722
    %v4242 = vunpack.c.l.b16 %v3723
    %v4243 = vunpack.c.l.b16 %v3724
    %v4244 = vunpack.c.l.b16 %v3725
    %v4245 = vunpack.c.l.b16 %v3726
    %v4246 = vunpack.c.l.b16 %v3727
    %v4247 = vunpack.c.l.b16 %v3728
    %v4248 = vunpack.c.l.b16 %v3729
    %v4249 = vunpack.c.l.b16 %v3730
    %v4250 = vunpack.c.l.b16 %v3731
    %v4251 = vunpack.c.l.b16 %v3732
    %v4252 = vunpack.c.l.b16 %v3733
    %v4253 = vunpack.c.l.b16 %v3734
    %v4254 = vunpack.c.l.b16 %v3735
    %v4255 = vunpack.c.l.b16 %v3736
    %v4256 = vunpack.c.l.b16 %v3737
    %v4257 = vunpack.c.l.b16 %v3738
    %v4258 = vunpack.c.l.b16 %v3739
    %v4259 = vunpack.c.l.b16 %v3740
    %v4260 = vunpack.c.l.b16 %v3741
    %v4261 = vunpack.c.l.b16 %v3742
    %v4262 = vunpack.c.l.b16 %v3743
    %v4263 = vunpack.c.l.b16 %v3744
    %v4264 = vunpack.c.l.b16 %v3745
    %v4265 = vunpack.c.l.b16 %v3746
    %v4266 = vunpack.c.l.b16 %v3747
    %v4267 = vunpack.c.l.b16 %v3748
    %v4268 = vunpack.c.l.b16 %v3749
    %v4269 = vunpack.c.l.b16 %v3750
    %v4270 = vunpack.c.l.b16 %v3751
    %v4271 = vunpack.c.l.b16 %v3752
    %v4272 = vunpack.c.l.b16 %v3753
    %v4273 = vunpack.c.l.b16 %v3754
    %v4274 = vunpack.c.l.b16 %v3755
    %v4275 = vunpack.c.l.b16 %v3756
    %v4276 = vunpack.c.l.b16 %v3757
    %v4277 = vunpack.c.l.b16 %v3758
    %v4278 = vunpack.c.l.b16 %v3759
    %v4279 = vunpack.c.l.b16 %v3760
    %v4280 = vunpack.c.l.b16 %v3761
    %v4281 = vunpack.c.l.b16 %v3762
    %v4282 = vunpack.c.l.b16 %v3763
    %v4283 = vunpack.c.l.b16 %v3764
    %v4284 = vunpack.c.l.b16 %v3765
    %v4285 = vunpack.c.l.b16 %v3766
    %v4286 = vunpack.c.l.b16 %v3767
    %v4287 = vunpack.c.l.b16 %v3768
    %v4288 = vunpack.c.l.b16 %v3769
    %v4289 = vunpack.c.l.b16 %v3770
    %v4290 = vunpack.c.l.b16 %v3771
    %v4291 = vunpack.c.l.b16 %v3772
    %v4292 = vunpack.c.l.b16 %v3773
    %v4293 = vunpack.c.l.b16 %v3774
    %v4294 = vunpack.c.l.b16 %v3775
    %v4295 = vunpack.c.l.b16 %v3776
    %v4296 = vunpack.c.l.b16 %v3777
    %v4297 = vunpack.c.l.b16 %v3778
    %v4298 = vunpack.c.l.b16 %v3779
    %v4299 = vunpack.c.l.b16 %v3780
    %v4300 = vunpack.c.l.b16 %v3781
    %v4301 = vunpack.c.l.b16 %v3782
    %v4302 = vunpack.c.l.b16 %v3783
    %v4303 = vunpack.c.l.b16 %v3784
    %v4304 = vunpack.c.l.b16 %v3785
    %v4305 = vunpack.c.l.b16 %v3786
    %v4306 = vunpack.c.l.b16 %v3787
    %v4307 = vunpack.c.l.b16 %v3788
    %v4308 = vunpack.c.l.b16 %v3789
    %v4309 = vunpack.c.l.b16 %v3790
    %v4310 = vunpack.c.l.b16 %v3791
    %v4311 = vunpack.c.l.b16 %v3792
    %v4312 = vunpack.c.l.b16 %v3793
    %v4313 = vunpack.c.l.b16 %v3794
    %v4314 = vunpack.c.l.b16 %v3795
    %v4315 = vunpack.c.l.b16 %v3796
    %v4316 = vpack.c.b16 %v4061, %v4060
    %v4317 = vpack.c.b16 %v4063, %v4062
    %v4318 = vpack.c.b16 %v4065, %v4064
    %v4319 = vpack.c.b16 %v4067, %v4066
    %v4320 = vpack.c.b16 %v4069, %v4068
    %v4321 = vpack.c.b16 %v4071, %v4070
    %v4322 = vpack.c.b16 %v4073, %v4072
    %v4323 = vpack.c.b16 %v4075, %v4074
    %v4324 = vpack.c.b16 %v4077, %v4076
    %v4325 = vpack.c.b16 %v4079, %v4078
    %v4326 = vpack.c.b16 %v4081, %v4080
    %v4327 = vpack.c.b16 %v4083, %v4082
    %v4328 = vpack.c.b16 %v4085, %v4084
    %v4329 = vpack.c.b16 %v4087, %v4086
    %v4330 = vpack.c.b16 %v4089, %v4088
    %v4331 = vpack.c.b16 %v4091, %v4090
    %v4332 = vpack.c.b16 %v4093, %v4092
    %v4333 = vpack.c.b16 %v4095, %v4094
    %v4334 = vpack.c.b16 %v4097, %v4096
    %v4335 = vpack.c.b16 %v4099, %v4098
    %v4336 = vpack.c.b16 %v4101, %v4100
    %v4337 = vpack.c.b16 %v4103, %v4102
    %v4338 = vpack.c.b16 %v4105, %v4104
    %v4339 = vpack.c.b16 %v4107, %v4106
    %v4340 = vpack.c.b16 %v4109, %v4108
    %v4341 = vpack.c.b16 %v4111, %v4110
    %v4342 = vpack.c.b16 %v4113, %v4112
    %v4343 = vpack.c.b16 %v4115, %v4114
    %v4344 = vpack.c.b16 %v4117, %v4116
    %v4345 = vpack.c.b16 %v4119, %v4118
    %v4346 = vpack.c.b16 %v4121, %v4120
    %v4347 = vpack.c.b16 %v4123, %v4122
    %v4348 = vpack.c.b16 %v4125, %v4124
    %v4349 = vpack.c.b16 %v4127, %v4126
    %v4350 = vpack.c.b16 %v4129, %v4128
    %v4351 = vpack.c.b16 %v4131, %v4130
    %v4352 = vpack.c.b16 %v4133, %v4132
    %v4353 = vpack.c.b16 %v4135, %v4134
    %v4354 = vpack.c.b16 %v4137, %v4136
    %v4355 = vpack.c.b16 %v4139, %v4138
    %v4356 = vpack.c.b16 %v4141, %v4140
    %v4357 = vpack.c.b16 %v4143, %v4142
    %v4358 = vpack.c.b16 %v4145, %v4144
    %v4359 = vpack.c.b16 %v4147, %v4146
    %v4360 = vpack.c.b16 %v4149, %v4148
    %v4361 = vpack.c.b16 %v4151, %v4150
    %v4362 = vpack.c.b16 %v4153, %v4152
    %v4363 = vpack.c.b16 %v4155, %v4154
    %v4364 = vpack.c.b16 %v4157, %v4156
    %v4365 = vpack.c.b16 %v4159, %v4158
    %v4366 = vpack.c.b16 %v4161, %v4160
    %v4367 = vpack.c.b16 %v4163, %v4162
    %v4368 = vpack.c.b16 %v4165, %v4164
    %v4369 = vpack.c.b16 %v4167, %v4166
    %v4370 = vpack.c.b16 %v4169, %v4168
    %v4371 = vpack.c.b16 %v4171, %v4170
    %v4372 = vpack.c.b16 %v4173, %v4172
    %v4373 = vpack.c.b16 %v4175, %v4174
    %v4374 = vpack.c.b16 %v4177, %v4176
    %v4375 = vpack.c.b16 %v4179, %v4178
    %v4376 = vpack.c.b16 %v4181, %v4180
    %v4377 = vpack.c.b16 %v4183, %v4182
    %v4378 = vpack.c.b16 %v4185, %v4184
    %v4379 = vpack.c.b16 %v4187, %v4186
    %v4380 = vpack.c.b16 %v4189, %v4188
    %v4381 = vpack.c.b16 %v4191, %v4190
    %v4382 = vpack.c.b16 %v4193, %v4192
    %v4383 = vpack.c.b16 %v4195, %v4194
    %v4384 = vpack.c.b16 %v4197, %v4196
    %v4385 = vpack.c.b16 %v4199, %v4198
    %v4386 = vpack.c.b16 %v4201, %v4200
    %v4387 = vpack.c.b16 %v4203, %v4202
    %v4388 = vpack.c.b16 %v4205, %v4204
    %v4389 = vpack.c.b16 %v4207, %v4206
    %v4390 = vpack.c.b16 %v4209, %v4208
    %v4391 = vpack.c.b16 %v4211, %v4210
    %v4392 = vpack.c.b16 %v4213, %v4212
    %v4393 = vpack.c.b16 %v4215, %v4214
    %v4394 = vpack.c.b16 %v4217, %v4216
    %v4395 = vpack.c.b16 %v4219, %v4218
    %v4396 = vpack.c.b16 %v4221, %v4220
    %v4397 = vpack.c.b16 %v4223, %v4222
    %v4398 = vpack.c.b16 %v4225, %v4224
    %v4399 = vpack.c.b16 %v4227, %v4226
    %v4400 = vpack.c.b16 %v4229, %v4228
    %v4401 = vpack.c.b16 %v4231, %v4230
    %v4402 = vpack.c.b16 %v4233, %v4232
    %v4403 = vpack.c.b16 %v4235, %v4234
    %v4404 = vpack.c.b16 %v4237, %v4236
    %v4405 = vpack.c.b16 %v4239, %v4238
    %v4406 = vpack.c.b16 %v4241, %v4240
    %v4407 = vpack.c.b16 %v4243, %v4242
    %v4408 = vpack.c.b16 %v4245, %v4244
    %v4409 = vpack.c.b16 %v4247, %v4246
    %v4410 = vpack.c.b16 %v4249, %v4248
    %v4411 = vpack.c.b16 %v4251, %v4250
    %v4412 = vpack.c.b16 %v4253, %v4252
    %v4413 = vpack.c.b16 %v4255, %v4254
    %v4414 = vpack.c.b16 %v4257, %v4256
    %v4415 = vpack.c.b16 %v4259, %v4258
    %v4416 = vpack.c.b16 %v4261, %v4260
    %v4417 = vpack.c.b16 %v4263, %v4262
    %v4418 = vpack.c.b16 %v4265, %v4264
    %v4419 = vpack.c.b16 %v4267, %v4266
    %v4420 = vpack.c.b16 %v4269, %v4268
    %v4421 = vpack.c.b16 %v4271, %v4270
    %v4422 = vpack.c.b16 %v4273, %v4272
    %v4423 = vpack.c.b16 %v4275, %v4274
    %v4424 = vpack.c.b16 %v4277, %v4276
    %v4425 = vpack.c.b16 %v4279, %v4278
    %v4426 = vpack.c.b16 %v4281, %v4280
    %v4427 = vpack.c.b16 %v4283, %v4282
    %v4428 = vpack.c.b16 %v4285, %v4284
    %v4429 = vpack.c.b16 %v4287, %v4286
    %v4430 = vpack.c.b16 %v4289, %v4288
    %v4431 = vpack.c.b16 %v4291, %v4290
    %v4432 = vpack.c.b16 %v4293, %v4292
    %v4433 = vpack.c.b16 %v4295, %v4294
    %v4434 = vpack.c.b16 %v4297, %v4296
    %v4435 = vpack.c.b16 %v4299, %v4298
    %v4436 = vpack.c.b16 %v4301, %v4300
    %v4437 = vpack.c.b16 %v4303, %v4302
    %v4438 = vpack.c.b16 %v4305, %v4304
    %v4439 = vpack.c.b16 %v4307, %v4306
    %v4440 = vpack.c.b16 %v4309, %v4308
    %v4441 = vpack.c.b16 %v4311, %v4310
    %v4442 = vpack.c.b16 %v4313, %v4312
    %v4443 = vpack.c.b16 %v4315, %v4314
    %4572 = vmatprep.subr.bf16.mxu0 0
    %4573 = vmatpush1.bf16.msra.mxu0 %v4323
    %4574 = vmatprep.subr.bf16.mxu0 0
    %4575 = vmatpush1.bf16.msra.mxu0 %v4322
    %4576 = vmatprep.subr.bf16.mxu0 0
    %4577 = vmatpush1.bf16.msra.mxu0 %v4321
    %4578 = vmatprep.subr.bf16.mxu0 0
    %4579 = vmatpush1.bf16.msra.mxu0 %v4320
    %4580 = vmatprep.subr.bf16.mxu0 0
    %4581 = vmatpush1.bf16.msra.mxu0 %v4319
    %4582 = vmatprep.subr.bf16.mxu0 0
    %4583 = vmatpush1.bf16.msra.mxu0 %v4318
    %4584 = vmatprep.subr.bf16.mxu0 0
    %4585 = vmatpush1.bf16.msra.mxu0 %v4317
    %4586 = vmatprep.subr.bf16.mxu0 0
    %4587 = vmatpush1.bf16.msra.mxu0 %v4316
    %4588 = vmatprep.subr.bf16.mxu0 0
    %4589 = vmatpush2.bf16.msra.mxu0 %v4331
    %4590 = vmatprep.subr.bf16.mxu0 0
    %4591 = vmatpush2.bf16.msra.mxu0 %v4330
    %4592 = vmatprep.subr.bf16.mxu0 0
    %4593 = vmatpush2.bf16.msra.mxu0 %v4329
    %4594 = vmatprep.subr.bf16.mxu0 0
    %4595 = vmatpush2.bf16.msra.mxu0 %v4328
    %4596 = vmatprep.subr.bf16.mxu0 0
    %4597 = vmatpush2.bf16.msra.mxu0 %v4327
    %4598 = vmatprep.subr.bf16.mxu0 0
    %4599 = vmatpush2.bf16.msra.mxu0 %v4326
    %4600 = vmatprep.subr.bf16.mxu0 0
    %4601 = vmatpush2.bf16.msra.mxu0 %v4325
    %4602 = vmatprep.subr.bf16.mxu0 0
    %4603 = vmatpush2.bf16.msra.mxu0 %v4324
    %4604 = vmatprep.mubr.bf16.mxu0 %v3526
    %4605 = vmatmul.mubr.bf16.gmra.mxu0 %v3525
    %v4606 = vpop.f32.mrf.mxu0
    %v4607 = vadd.f32 %v3802, %v4606
    %v4608 = vpop.f32.mrf.mxu0
    %v4609 = vpop.f32.mrf.mxu0
    %v4610 = vadd.f32 %v3802, %v4609
    %v4611 = vpop.f32.mrf.mxu0
    %4612 = vdwg.mxu0
    %4613 = vmatprep.subr.bf16.mxu0 0
    %4614 = vmatpush1.bf16.msra.mxu0 %v4339
    %4615 = vmatprep.subr.bf16.mxu0 0
    %4616 = vmatpush1.bf16.msra.mxu0 %v4338
    %4617 = vmatprep.subr.bf16.mxu0 0
    %4618 = vmatpush1.bf16.msra.mxu0 %v4337
    %4619 = vmatprep.subr.bf16.mxu0 0
    %4620 = vmatpush1.bf16.msra.mxu0 %v4336
    %4621 = vmatprep.subr.bf16.mxu0 0
    %4622 = vmatpush1.bf16.msra.mxu0 %v4335
    %4623 = vmatprep.subr.bf16.mxu0 0
    %4624 = vmatpush1.bf16.msra.mxu0 %v4334
    %4625 = vmatprep.subr.bf16.mxu0 0
    %4626 = vmatpush1.bf16.msra.mxu0 %v4333
    %4627 = vmatprep.subr.bf16.mxu0 0
    %4628 = vmatpush1.bf16.msra.mxu0 %v4332
    %4629 = vmatprep.subr.bf16.mxu0 0
    %4630 = vmatpush2.bf16.msra.mxu0 %v4347
    %4631 = vmatprep.subr.bf16.mxu0 0
    %4632 = vmatpush2.bf16.msra.mxu0 %v4346
    %4633 = vmatprep.subr.bf16.mxu0 0
    %4634 = vmatpush2.bf16.msra.mxu0 %v4345
    %4635 = vmatprep.subr.bf16.mxu0 0
    %4636 = vmatpush2.bf16.msra.mxu0 %v4344
    %4637 = vmatprep.subr.bf16.mxu0 0
    %4638 = vmatpush2.bf16.msra.mxu0 %v4343
    %4639 = vmatprep.subr.bf16.mxu0 0
    %4640 = vmatpush2.bf16.msra.mxu0 %v4342
    %4641 = vmatprep.subr.bf16.mxu0 0
    %4642 = vmatpush2.bf16.msra.mxu0 %v4341
    %4643 = vmatprep.subr.bf16.mxu0 0
    %4644 = vmatpush2.bf16.msra.mxu0 %v4340
    %4645 = vmatprep.mubr.bf16.mxu0 %v3528
    %4646 = vmatmul.mubr.bf16.gmra.mxu0 %v3527
    %v4647 = vpop.f32.mrf.mxu0
    %v4648 = vadd.f32 %v4607, %v4647
    %v4649 = vpop.f32.mrf.mxu0
    %v4650 = vpop.f32.mrf.mxu0
    %v4651 = vadd.f32 %v4610, %v4650
    %v4652 = vpop.f32.mrf.mxu0
    %4653 = vdwg.mxu0
    %4654 = vmatprep.subr.bf16.mxu0 0
    %4655 = vmatpush1.bf16.msra.mxu0 %v4355
    %4656 = vmatprep.subr.bf16.mxu0 0
    %4657 = vmatpush1.bf16.msra.mxu0 %v4354
    %4658 = vmatprep.subr.bf16.mxu0 0
    %4659 = vmatpush1.bf16.msra.mxu0 %v4353
    %4660 = vmatprep.subr.bf16.mxu0 0
    %4661 = vmatpush1.bf16.msra.mxu0 %v4352
    %4662 = vmatprep.subr.bf16.mxu0 0
    %4663 = vmatpush1.bf16.msra.mxu0 %v4351
    %4664 = vmatprep.subr.bf16.mxu0 0
    %4665 = vmatpush1.bf16.msra.mxu0 %v4350
    %4666 = vmatprep.subr.bf16.mxu0 0
    %4667 = vmatpush1.bf16.msra.mxu0 %v4349
    %4668 = vmatprep.subr.bf16.mxu0 0
    %4669 = vmatpush1.bf16.msra.mxu0 %v4348
    %4670 = vmatprep.subr.bf16.mxu0 0
    %4671 = vmatpush2.bf16.msra.mxu0 %v4363
    %4672 = vmatprep.subr.bf16.mxu0 0
    %4673 = vmatpush2.bf16.msra.mxu0 %v4362
    %4674 = vmatprep.subr.bf16.mxu0 0
    %4675 = vmatpush2.bf16.msra.mxu0 %v4361
    %4676 = vmatprep.subr.bf16.mxu0 0
    %4677 = vmatpush2.bf16.msra.mxu0 %v4360
    %4678 = vmatprep.subr.bf16.mxu0 0
    %4679 = vmatpush2.bf16.msra.mxu0 %v4359
    %4680 = vmatprep.subr.bf16.mxu0 0
    %4681 = vmatpush2.bf16.msra.mxu0 %v4358
    %4682 = vmatprep.subr.bf16.mxu0 0
    %4683 = vmatpush2.bf16.msra.mxu0 %v4357
    %4684 = vmatprep.subr.bf16.mxu0 0
    %4685 = vmatpush2.bf16.msra.mxu0 %v4356
    %4686 = vmatprep.mubr.bf16.mxu0 %v3530
    %4687 = vmatmul.mubr.bf16.gmra.mxu0 %v3529
    %v4688 = vpop.f32.mrf.mxu0
    %v4689 = vadd.f32 %v4648, %v4688
    %v4690 = vpop.f32.mrf.mxu0
    %v4691 = vpop.f32.mrf.mxu0
    %v4692 = vadd.f32 %v4651, %v4691
    %v4693 = vpop.f32.mrf.mxu0
    %4694 = vdwg.mxu0
    %4695 = vmatprep.subr.bf16.mxu0 0
    %4696 = vmatpush1.bf16.msra.mxu0 %v4371
    %4697 = vmatprep.subr.bf16.mxu0 0
    %4698 = vmatpush1.bf16.msra.mxu0 %v4370
    %4699 = vmatprep.subr.bf16.mxu0 0
    %4700 = vmatpush1.bf16.msra.mxu0 %v4369
    %4701 = vmatprep.subr.bf16.mxu0 0
    %4702 = vmatpush1.bf16.msra.mxu0 %v4368
    %4703 = vmatprep.subr.bf16.mxu0 0
    %4704 = vmatpush1.bf16.msra.mxu0 %v4367
    %4705 = vmatprep.subr.bf16.mxu0 0
    %4706 = vmatpush1.bf16.msra.mxu0 %v4366
    %4707 = vmatprep.subr.bf16.mxu0 0
    %4708 = vmatpush1.bf16.msra.mxu0 %v4365
    %4709 = vmatprep.subr.bf16.mxu0 0
    %4710 = vmatpush1.bf16.msra.mxu0 %v4364
    %4711 = vmatprep.subr.bf16.mxu0 0
    %4712 = vmatpush2.bf16.msra.mxu0 %v4379
    %4713 = vmatprep.subr.bf16.mxu0 0
    %4714 = vmatpush2.bf16.msra.mxu0 %v4378
    %4715 = vmatprep.subr.bf16.mxu0 0
    %4716 = vmatpush2.bf16.msra.mxu0 %v4377
    %4717 = vmatprep.subr.bf16.mxu0 0
    %4718 = vmatpush2.bf16.msra.mxu0 %v4376
    %4719 = vmatprep.subr.bf16.mxu0 0
    %4720 = vmatpush2.bf16.msra.mxu0 %v4375
    %4721 = vmatprep.subr.bf16.mxu0 0
    %4722 = vmatpush2.bf16.msra.mxu0 %v4374
    %4723 = vmatprep.subr.bf16.mxu0 0
    %4724 = vmatpush2.bf16.msra.mxu0 %v4373
    %4725 = vmatprep.subr.bf16.mxu0 0
    %4726 = vmatpush2.bf16.msra.mxu0 %v4372
    %4727 = vmatprep.mubr.bf16.mxu0 %v3532
    %4728 = vmatmul.mubr.bf16.gmra.mxu0 %v3531
    %v4729 = vpop.f32.mrf.mxu0
    %v4730 = vadd.f32 %v4689, %v4729
    %v4731 = vpop.f32.mrf.mxu0
    %v4732 = vpop.f32.mrf.mxu0
    %v4733 = vadd.f32 %v4692, %v4732
    %v4734 = vpop.f32.mrf.mxu0
    %4735 = vdwg.mxu0
    %4736 = vmatprep.subr.bf16.mxu0 0
    %4737 = vmatpush1.bf16.msra.mxu0 %v4387
    %4738 = vmatprep.subr.bf16.mxu0 0
    %4739 = vmatpush1.bf16.msra.mxu0 %v4386
    %4740 = vmatprep.subr.bf16.mxu0 0
    %4741 = vmatpush1.bf16.msra.mxu0 %v4385
    %4742 = vmatprep.subr.bf16.mxu0 0
    %4743 = vmatpush1.bf16.msra.mxu0 %v4384
    %4744 = vmatprep.subr.bf16.mxu0 0
    %4745 = vmatpush1.bf16.msra.mxu0 %v4383
    %4746 = vmatprep.subr.bf16.mxu0 0
    %4747 = vmatpush1.bf16.msra.mxu0 %v4382
    %4748 = vmatprep.subr.bf16.mxu0 0
    %4749 = vmatpush1.bf16.msra.mxu0 %v4381
    %4750 = vmatprep.subr.bf16.mxu0 0
    %4751 = vmatpush1.bf16.msra.mxu0 %v4380
    %4752 = vmatprep.subr.bf16.mxu0 0
    %4753 = vmatpush2.bf16.msra.mxu0 %v4395
    %4754 = vmatprep.subr.bf16.mxu0 0
    %4755 = vmatpush2.bf16.msra.mxu0 %v4394
    %4756 = vmatprep.subr.bf16.mxu0 0
    %4757 = vmatpush2.bf16.msra.mxu0 %v4393
    %4758 = vmatprep.subr.bf16.mxu0 0
    %4759 = vmatpush2.bf16.msra.mxu0 %v4392
    %4760 = vmatprep.subr.bf16.mxu0 0
    %4761 = vmatpush2.bf16.msra.mxu0 %v4391
    %4762 = vmatprep.subr.bf16.mxu0 0
    %4763 = vmatpush2.bf16.msra.mxu0 %v4390
    %4764 = vmatprep.subr.bf16.mxu0 0
    %4765 = vmatpush2.bf16.msra.mxu0 %v4389
    %4766 = vmatprep.subr.bf16.mxu0 0
    %4767 = vmatpush2.bf16.msra.mxu0 %v4388
    %4768 = vmatprep.mubr.bf16.mxu0 %v3534
    %4769 = vmatmul.mubr.bf16.gmra.mxu0 %v3533
    %v4770 = vpop.f32.mrf.mxu0
    %v4771 = vadd.f32 %v4730, %v4770
    %v4772 = vpop.f32.mrf.mxu0
    %v4773 = vpop.f32.mrf.mxu0
    %v4774 = vadd.f32 %v4733, %v4773
    %v4775 = vpop.f32.mrf.mxu0
    %4776 = vdwg.mxu0
    %4777 = vmatprep.subr.bf16.mxu0 0
    %4778 = vmatpush1.bf16.msra.mxu0 %v4403
    %4779 = vmatprep.subr.bf16.mxu0 0
    %4780 = vmatpush1.bf16.msra.mxu0 %v4402
    %4781 = vmatprep.subr.bf16.mxu0 0
    %4782 = vmatpush1.bf16.msra.mxu0 %v4401
    %4783 = vmatprep.subr.bf16.mxu0 0
    %4784 = vmatpush1.bf16.msra.mxu0 %v4400
    %4785 = vmatprep.subr.bf16.mxu0 0
    %4786 = vmatpush1.bf16.msra.mxu0 %v4399
    %4787 = vmatprep.subr.bf16.mxu0 0
    %4788 = vmatpush1.bf16.msra.mxu0 %v4398
    %4789 = vmatprep.subr.bf16.mxu0 0
    %4790 = vmatpush1.bf16.msra.mxu0 %v4397
    %4791 = vmatprep.subr.bf16.mxu0 0
    %4792 = vmatpush1.bf16.msra.mxu0 %v4396
    %4793 = vmatprep.subr.bf16.mxu0 0
    %4794 = vmatpush2.bf16.msra.mxu0 %v4411
    %4795 = vmatprep.subr.bf16.mxu0 0
    %4796 = vmatpush2.bf16.msra.mxu0 %v4410
    %4797 = vmatprep.subr.bf16.mxu0 0
    %4798 = vmatpush2.bf16.msra.mxu0 %v4409
    %4799 = vmatprep.subr.bf16.mxu0 0
    %4800 = vmatpush2.bf16.msra.mxu0 %v4408
    %4801 = vmatprep.subr.bf16.mxu0 0
    %4802 = vmatpush2.bf16.msra.mxu0 %v4407
    %4803 = vmatprep.subr.bf16.mxu0 0
    %4804 = vmatpush2.bf16.msra.mxu0 %v4406
    %4805 = vmatprep.subr.bf16.mxu0 0
    %4806 = vmatpush2.bf16.msra.mxu0 %v4405
    %4807 = vmatprep.subr.bf16.mxu0 0
    %4808 = vmatpush2.bf16.msra.mxu0 %v4404
    %4809 = vmatprep.mubr.bf16.mxu0 %v3536
    %4810 = vmatmul.mubr.bf16.gmra.mxu0 %v3535
    %v4811 = vpop.f32.mrf.mxu0
    %v4812 = vadd.f32 %v4771, %v4811
    %v4813 = vpop.f32.mrf.mxu0
    %v4814 = vpop.f32.mrf.mxu0
    %v4815 = vadd.f32 %v4774, %v4814
    %v4816 = vpop.f32.mrf.mxu0
    %4817 = vdwg.mxu0
    %4818 = vmatprep.subr.bf16.mxu0 0
    %4819 = vmatpush1.bf16.msra.mxu0 %v4419
    %4820 = vmatprep.subr.bf16.mxu0 0
    %4821 = vmatpush1.bf16.msra.mxu0 %v4418
    %4822 = vmatprep.subr.bf16.mxu0 0
    %4823 = vmatpush1.bf16.msra.mxu0 %v4417
    %4824 = vmatprep.subr.bf16.mxu0 0
    %4825 = vmatpush1.bf16.msra.mxu0 %v4416
    %4826 = vmatprep.subr.bf16.mxu0 0
    %4827 = vmatpush1.bf16.msra.mxu0 %v4415
    %4828 = vmatprep.subr.bf16.mxu0 0
    %4829 = vmatpush1.bf16.msra.mxu0 %v4414
    %4830 = vmatprep.subr.bf16.mxu0 0
    %4831 = vmatpush1.bf16.msra.mxu0 %v4413
    %4832 = vmatprep.subr.bf16.mxu0 0
    %4833 = vmatpush1.bf16.msra.mxu0 %v4412
    %4834 = vmatprep.subr.bf16.mxu0 0
    %4835 = vmatpush2.bf16.msra.mxu0 %v4427
    %4836 = vmatprep.subr.bf16.mxu0 0
    %4837 = vmatpush2.bf16.msra.mxu0 %v4426
    %4838 = vmatprep.subr.bf16.mxu0 0
    %4839 = vmatpush2.bf16.msra.mxu0 %v4425
    %4840 = vmatprep.subr.bf16.mxu0 0
    %4841 = vmatpush2.bf16.msra.mxu0 %v4424
    %4842 = vmatprep.subr.bf16.mxu0 0
    %4843 = vmatpush2.bf16.msra.mxu0 %v4423
    %4844 = vmatprep.subr.bf16.mxu0 0
    %4845 = vmatpush2.bf16.msra.mxu0 %v4422
    %4846 = vmatprep.subr.bf16.mxu0 0
    %4847 = vmatpush2.bf16.msra.mxu0 %v4421
    %4848 = vmatprep.subr.bf16.mxu0 0
    %4849 = vmatpush2.bf16.msra.mxu0 %v4420
    %4850 = vmatprep.mubr.bf16.mxu0 %v3538
    %4851 = vmatmul.mubr.bf16.gmra.mxu0 %v3537
    %v4852 = vpop.f32.mrf.mxu0
    %v4853 = vadd.f32 %v4812, %v4852
    %v4854 = vpop.f32.mrf.mxu0
    %v4855 = vpop.f32.mrf.mxu0
    %v4856 = vadd.f32 %v4815, %v4855
    %v4857 = vpop.f32.mrf.mxu0
    %4858 = vdwg.mxu0
    %4859 = vmatprep.subr.bf16.mxu0 0
    %4860 = vmatpush1.bf16.msra.mxu0 %v4435
    %4861 = vmatprep.subr.bf16.mxu0 0
    %4862 = vmatpush1.bf16.msra.mxu0 %v4434
    %4863 = vmatprep.subr.bf16.mxu0 0
    %4864 = vmatpush1.bf16.msra.mxu0 %v4433
    %4865 = vmatprep.subr.bf16.mxu0 0
    %4866 = vmatpush1.bf16.msra.mxu0 %v4432
    %4867 = vmatprep.subr.bf16.mxu0 0
    %4868 = vmatpush1.bf16.msra.mxu0 %v4431
    %4869 = vmatprep.subr.bf16.mxu0 0
    %4870 = vmatpush1.bf16.msra.mxu0 %v4430
    %4871 = vmatprep.subr.bf16.mxu0 0
    %4872 = vmatpush1.bf16.msra.mxu0 %v4429
    %4873 = vmatprep.subr.bf16.mxu0 0
    %4874 = vmatpush1.bf16.msra.mxu0 %v4428
    %4875 = vmatprep.subr.bf16.mxu0 0
    %4876 = vmatpush2.bf16.msra.mxu0 %v4443
    %4877 = vmatprep.subr.bf16.mxu0 0
    %4878 = vmatpush2.bf16.msra.mxu0 %v4442
    %4879 = vmatprep.subr.bf16.mxu0 0
    %4880 = vmatpush2.bf16.msra.mxu0 %v4441
    %4881 = vmatprep.subr.bf16.mxu0 0
    %4882 = vmatpush2.bf16.msra.mxu0 %v4440
    %4883 = vmatprep.subr.bf16.mxu0 0
    %4884 = vmatpush2.bf16.msra.mxu0 %v4439
    %4885 = vmatprep.subr.bf16.mxu0 0
    %4886 = vmatpush2.bf16.msra.mxu0 %v4438
    %4887 = vmatprep.subr.bf16.mxu0 0
    %4888 = vmatpush2.bf16.msra.mxu0 %v4437
    %4889 = vmatprep.subr.bf16.mxu0 0
    %4890 = vmatpush2.bf16.msra.mxu0 %v4436
    %4891 = vmatprep.mubr.bf16.mxu0 %v3540
    %4892 = vmatmul.mubr.bf16.gmra.mxu0 %v3539
    %v4893 = vpop.f32.mrf.mxu0
    %v4894 = vadd.f32 %v4853, %v4893
    %v4895 = vpop.f32.mrf.mxu0
    %v4896 = vpop.f32.mrf.mxu0
    %v4897 = vadd.f32 %v4856, %v4896
    %v4898 = vpop.f32.mrf.mxu0
    %4899 = vdwg.mxu0
    %v4900 = vadd.f32 %v2294, %v4894
    %v4901 = vadd.f32 %v2295, %v4897
    %v4902 = vld [vmem:[#allocation25] sm:$0x1]
    %v4903 = vld [vmem:[#allocation26] sm:$0x1]
    %4904 = vadd.xlane.f32.xlu0 %v4900
    %v4905 = vpop.xlane.xlu0 %4904
    %4906 = vadd.xlane.f32.xlu0 %v4901
    %v4907 = vpop.xlane.xlu0 %4906
    %v4908 = vmul.f32 %v4905, %v2261
    %v4909 = vmul.f32 %v4907, %v2261
    %v4910 = vsub.f32 %v4900, %v4908
    %v4911 = vsub.f32 %v4901, %v4909
    %v4912 = vmul.f32 %v4910, %v4910
    %v4913 = vmul.f32 %v4911, %v4911
    %4914 = vadd.xlane.f32.xlu0 %v4912
    %v4915 = vpop.xlane.xlu0 %4914
    %4916 = vadd.xlane.f32.xlu0 %v4913
    %v4917 = vpop.xlane.xlu0 %4916
    %v4918 = vmul.f32 %v4915, %v2261
    %v4919 = vmul.f32 %v4917, %v2261
    %v4920 = vadd.f32 %v4918, 1e-05
    %v4921 = vadd.f32 %v4919, 1e-05
    %v4922 = vrsqrt.pop %v4920
    %v4923 = vrsqrt.pop %v4921
    %v4924 = vmul.f32 %v4910, %v4922
    %v4925 = vmul.f32 %v4911, %v4923
    %v4927 = vlaneseq
    %v4928 = vshrl.u32 %v4927, 7
    %v4929 = vsub.s32 0, %v4928
    %v4930 = vrot.slane %v4902, %v4929
    %v4932 = vmul.f32 %v4924, %v4930
    %v4933 = vmul.f32 %v4925, %v4930
    %v4935 = vlaneseq
    %v4936 = vshrl.u32 %v4935, 7
    %v4937 = vsub.s32 0, %v4936
    %v4938 = vrot.slane %v4903, %v4937
    %v4940 = vadd.f32 %v4932, %v4938
    %v4941 = vadd.f32 %v4933, %v4938
    %v4942 = vpack.c.bf16 %v4941, %v4940
    %v4943 = vld [vmem:[#allocation31] sm:$0xf]
    %v4944 = vld [vmem:[#allocation31 + $0x4] sm:$0xf]
    %v4945 = vld [vmem:[#allocation31 + $0x8] sm:$0xf]
    %v4946 = vld [vmem:[#allocation31 + $0xc] sm:$0xf]
    %v4947 = vld [vmem:[#allocation31 + $0x10] sm:$0xf]
    %v4948 = vld [vmem:[#allocation31 + $0x14] sm:$0xf]
    %v4949 = vld [vmem:[#allocation31 + $0x18] sm:$0xf]
    %v4950 = vld [vmem:[#allocation31 + $0x1c] sm:$0xf]
    %v4951 = vld [vmem:[#allocation31 + $0x20] sm:$0xf]
    %v4952 = vld [vmem:[#allocation31 + $0x24] sm:$0xf]
    %v4953 = vld [vmem:[#allocation31 + $0x28] sm:$0xf]
    %v4954 = vld [vmem:[#allocation31 + $0x2c] sm:$0xf]
    %v4955 = vld [vmem:[#allocation31 + $0x30] sm:$0xf]
    %v4956 = vld [vmem:[#allocation31 + $0x34] sm:$0xf]
    %v4957 = vld [vmem:[#allocation31 + $0x38] sm:$0xf]
    %v4958 = vld [vmem:[#allocation31 + $0x3c] sm:$0xf]
    %v4959 = vld [vmem:[%s41] sm:$0x1]
    %v4961 = vlaneseq
    %v4962 = vshrl.u32 %v4961, 7
    %v4963 = vsub.s32 0, %v4962
    %v4964 = vrot.slane %v4959, %v4963
    %v4982 = vunpack.c.l.b16 %v4943
    %v4983 = vunpack.c.l.b16 %v4944
    %v4984 = vunpack.c.l.b16 %v4945
    %v4985 = vunpack.c.l.b16 %v4946
    %v4986 = vunpack.c.l.b16 %v4947
    %v4987 = vunpack.c.l.b16 %v4948
    %v4988 = vunpack.c.l.b16 %v4949
    %v4989 = vunpack.c.l.b16 %v4950
    %v4990 = vunpack.c.l.b16 %v4951
    %v4991 = vunpack.c.l.b16 %v4952
    %v4992 = vunpack.c.l.b16 %v4953
    %v4993 = vunpack.c.l.b16 %v4954
    %v4994 = vunpack.c.l.b16 %v4955
    %v4995 = vunpack.c.l.b16 %v4956
    %v4996 = vunpack.c.l.b16 %v4957
    %v4997 = vunpack.c.l.b16 %v4958
    %v4998 = vpack.c.b16 %v4983, %v4982
    %v4999 = vpack.c.b16 %v4985, %v4984
    %v5000 = vpack.c.b16 %v4987, %v4986
    %v5001 = vpack.c.b16 %v4989, %v4988
    %v5002 = vpack.c.b16 %v4991, %v4990
    %v5003 = vpack.c.b16 %v4993, %v4992
    %v5004 = vpack.c.b16 %v4995, %v4994
    %v5005 = vpack.c.b16 %v4997, %v4996
    %5014 = vmatprep.subr.bf16.mxu0 0
    %5015 = vmatpush1.bf16.msra.mxu0 %v5005
    %5016 = vmatprep.subr.bf16.mxu0 0
    %5017 = vmatpush1.bf16.msra.mxu0 %v5004
    %5018 = vmatprep.subr.bf16.mxu0 0
    %5019 = vmatpush1.bf16.msra.mxu0 %v5003
    %5020 = vmatprep.subr.bf16.mxu0 0
    %5021 = vmatpush1.bf16.msra.mxu0 %v5002
    %5022 = vmatprep.subr.bf16.mxu0 0
    %5023 = vmatpush1.bf16.msra.mxu0 %v5001
    %5024 = vmatprep.subr.bf16.mxu0 0
    %5025 = vmatpush1.bf16.msra.mxu0 %v5000
    %5026 = vmatprep.subr.bf16.mxu0 0
    %5027 = vmatpush1.bf16.msra.mxu0 %v4999
    %5028 = vmatprep.subr.bf16.mxu0 0
    %5029 = vmatpush1.bf16.msra.mxu0 %v4998
    %5030 = vmatprep.subr.bf16.mxu0 0
    %5031 = vmatpush2.bf16.msra.mxu0 0
    %5032 = vmatprep.subr.bf16.mxu0 0
    %5033 = vmatpush2.bf16.msra.mxu0 0
    %5034 = vmatprep.subr.bf16.mxu0 0
    %5035 = vmatpush2.bf16.msra.mxu0 0
    %5036 = vmatprep.subr.bf16.mxu0 0
    %5037 = vmatpush2.bf16.msra.mxu0 0
    %5038 = vmatprep.subr.bf16.mxu0 0
    %5039 = vmatpush2.bf16.msra.mxu0 0
    %5040 = vmatprep.subr.bf16.mxu0 0
    %5041 = vmatpush2.bf16.msra.mxu0 0
    %5042 = vmatprep.subr.bf16.mxu0 0
    %5043 = vmatpush2.bf16.msra.mxu0 0
    %5044 = vmatprep.subr.bf16.mxu0 0
    %5045 = vmatpush2.bf16.msra.mxu0 0
    %5046 = vmatprep.mubr.bf16.mxu0 0
    %5047 = vmatmul.mubr.bf16.gmra.mxu0 %v4942
    %v5048 = vpop.f32.mrf.mxu0
    %v5049 = vadd.f32 %v4964, %v5048
    %v5050 = vpop.f32.mrf.mxu0
    %v5051 = vpop.f32.mrf.mxu0
    %v5052 = vadd.f32 %v4964, %v5051
    %v5053 = vpop.f32.mrf.mxu0
    %5054 = vdwg.mxu0
    %v5055 = vld [vmem:[#allocation32] sm:$0xf]
    %v5056 = vld [vmem:[#allocation32 + $0x4] sm:$0xf]
    %v5057 = vld [vmem:[#allocation32 + $0x8] sm:$0xf]
    %v5058 = vld [vmem:[#allocation32 + $0xc] sm:$0xf]
    %v5059 = vld [vmem:[#allocation32 + $0x10] sm:$0xf]
    %v5060 = vld [vmem:[#allocation32 + $0x14] sm:$0xf]
    %v5061 = vld [vmem:[#allocation32 + $0x18] sm:$0xf]
    %v5062 = vld [vmem:[#allocation32 + $0x1c] sm:$0xf]
    %v5063 = vld [vmem:[#allocation32 + $0x20] sm:$0xf]
    %v5064 = vld [vmem:[#allocation32 + $0x24] sm:$0xf]
    %v5065 = vld [vmem:[#allocation32 + $0x28] sm:$0xf]
    %v5066 = vld [vmem:[#allocation32 + $0x2c] sm:$0xf]
    %v5067 = vld [vmem:[#allocation32 + $0x30] sm:$0xf]
    %v5068 = vld [vmem:[#allocation32 + $0x34] sm:$0xf]
    %v5069 = vld [vmem:[#allocation32 + $0x38] sm:$0xf]
    %v5070 = vld [vmem:[#allocation32 + $0x3c] sm:$0xf]
    %v5071 = vld [vmem:[%s45] sm:$0x1]
    %v5073 = vlaneseq
    %v5074 = vshrl.u32 %v5073, 7
    %v5075 = vsub.s32 0, %v5074
    %v5076 = vrot.slane %v5071, %v5075
    %v5094 = vunpack.c.l.b16 %v5055
    %v5095 = vunpack.c.l.b16 %v5056
    %v5096 = vunpack.c.l.b16 %v5057
    %v5097 = vunpack.c.l.b16 %v5058
    %v5098 = vunpack.c.l.b16 %v5059
    %v5099 = vunpack.c.l.b16 %v5060
    %v5100 = vunpack.c.l.b16 %v5061
    %v5101 = vunpack.c.l.b16 %v5062
    %v5102 = vunpack.c.l.b16 %v5063
    %v5103 = vunpack.c.l.b16 %v5064
    %v5104 = vunpack.c.l.b16 %v5065
    %v5105 = vunpack.c.l.b16 %v5066
    %v5106 = vunpack.c.l.b16 %v5067
    %v5107 = vunpack.c.l.b16 %v5068
    %v5108 = vunpack.c.l.b16 %v5069
    %v5109 = vunpack.c.l.b16 %v5070
    %v5110 = vpack.c.b16 %v5095, %v5094
    %v5111 = vpack.c.b16 %v5097, %v5096
    %v5112 = vpack.c.b16 %v5099, %v5098
    %v5113 = vpack.c.b16 %v5101, %v5100
    %v5114 = vpack.c.b16 %v5103, %v5102
    %v5115 = vpack.c.b16 %v5105, %v5104
    %v5116 = vpack.c.b16 %v5107, %v5106
    %v5117 = vpack.c.b16 %v5109, %v5108
    %5126 = vmatprep.subr.bf16.mxu0 0
    %5127 = vmatpush1.bf16.msra.mxu0 %v5117
    %5128 = vmatprep.subr.bf16.mxu0 0
    %5129 = vmatpush1.bf16.msra.mxu0 %v5116
    %5130 = vmatprep.subr.bf16.mxu0 0
    %5131 = vmatpush1.bf16.msra.mxu0 %v5115
    %5132 = vmatprep.subr.bf16.mxu0 0
    %5133 = vmatpush1.bf16.msra.mxu0 %v5114
    %5134 = vmatprep.subr.bf16.mxu0 0
    %5135 = vmatpush1.bf16.msra.mxu0 %v5113
    %5136 = vmatprep.subr.bf16.mxu0 0
    %5137 = vmatpush1.bf16.msra.mxu0 %v5112
    %5138 = vmatprep.subr.bf16.mxu0 0
    %5139 = vmatpush1.bf16.msra.mxu0 %v5111
    %5140 = vmatprep.subr.bf16.mxu0 0
    %5141 = vmatpush1.bf16.msra.mxu0 %v5110
    %5142 = vmatprep.subr.bf16.mxu0 0
    %5143 = vmatpush2.bf16.msra.mxu0 0
    %5144 = vmatprep.subr.bf16.mxu0 0
    %5145 = vmatpush2.bf16.msra.mxu0 0
    %5146 = vmatprep.subr.bf16.mxu0 0
    %5147 = vmatpush2.bf16.msra.mxu0 0
    %5148 = vmatprep.subr.bf16.mxu0 0
    %5149 = vmatpush2.bf16.msra.mxu0 0
    %5150 = vmatprep.subr.bf16.mxu0 0
    %5151 = vmatpush2.bf16.msra.mxu0 0
    %5152 = vmatprep.subr.bf16.mxu0 0
    %5153 = vmatpush2.bf16.msra.mxu0 0
    %5154 = vmatprep.subr.bf16.mxu0 0
    %5155 = vmatpush2.bf16.msra.mxu0 0
    %5156 = vmatprep.subr.bf16.mxu0 0
    %5157 = vmatpush2.bf16.msra.mxu0 0
    %5158 = vmatprep.mubr.bf16.mxu0 0
    %5159 = vmatmul.mubr.bf16.gmra.mxu0 %v4942
    %v5160 = vpop.f32.mrf.mxu0
    %v5161 = vadd.f32 %v5076, %v5160
    %v5162 = vpop.f32.mrf.mxu0
    %v5163 = vpop.f32.mrf.mxu0
    %v5164 = vadd.f32 %v5076, %v5163
    %v5165 = vpop.f32.mrf.mxu0
    %5166 = vdwg.mxu0
    %v5167 = vpack.c.bf16 %v4940, %v4940
    %v5168 = vpack.c.bf16 %v4941, %v4941
    %v5169 = vld [vmem:[#allocation28] sm:$0xf]
    %v5170 = vld [vmem:[#allocation28 + $0x4] sm:$0xf]
    %v5171 = vld [vmem:[#allocation28 + $0x8] sm:$0xf]
    %v5172 = vld [vmem:[#allocation28 + $0xc] sm:$0xf]
    %v5173 = vld [vmem:[#allocation28 + $0x10] sm:$0xf]
    %v5174 = vld [vmem:[#allocation28 + $0x14] sm:$0xf]
    %v5175 = vld [vmem:[#allocation28 + $0x18] sm:$0xf]
    %v5176 = vld [vmem:[#allocation28 + $0x1c] sm:$0xf]
    %v5177 = vld [vmem:[#allocation28 + $0x20] sm:$0xf]
    %v5178 = vld [vmem:[#allocation28 + $0x24] sm:$0xf]
    %v5179 = vld [vmem:[#allocation28 + $0x28] sm:$0xf]
    %v5180 = vld [vmem:[#allocation28 + $0x2c] sm:$0xf]
    %v5181 = vld [vmem:[#allocation28 + $0x30] sm:$0xf]
    %v5182 = vld [vmem:[#allocation28 + $0x34] sm:$0xf]
    %v5183 = vld [vmem:[#allocation28 + $0x38] sm:$0xf]
    %v5184 = vld [vmem:[#allocation28 + $0x3c] sm:$0xf]
    %v5185 = vld [vmem:[#allocation29] sm:$0x1]
    %v5187 = vlaneseq
    %v5188 = vshrl.u32 %v5187, 7
    %v5189 = vsub.s32 0, %v5188
    %v5190 = vrot.slane %v5185, %v5189
    %v5194 = vunpack.c.l.b16 %v5167
    %v5195 = vunpack.c.l.b16 %v5168
    %v5196 = vrot.slane %v5194, 7
    %v5197 = vrot.slane %v5195, 6
    %vm5198 = vcmask 1041409
    %v5199 = vsel %vm5198, %v5197, %v5196
    %v5200 = vpack.c.b16 %v5199, %v5199
    %v5218 = vunpack.c.l.b16 %v5169
    %v5219 = vunpack.c.l.b16 %v5170
    %v5220 = vunpack.c.l.b16 %v5171
    %v5221 = vunpack.c.l.b16 %v5172
    %v5222 = vunpack.c.l.b16 %v5173
    %v5223 = vunpack.c.l.b16 %v5174
    %v5224 = vunpack.c.l.b16 %v5175
    %v5225 = vunpack.c.l.b16 %v5176
    %v5226 = vunpack.c.l.b16 %v5177
    %v5227 = vunpack.c.l.b16 %v5178
    %v5228 = vunpack.c.l.b16 %v5179
    %v5229 = vunpack.c.l.b16 %v5180
    %v5230 = vunpack.c.l.b16 %v5181
    %v5231 = vunpack.c.l.b16 %v5182
    %v5232 = vunpack.c.l.b16 %v5183
    %v5233 = vunpack.c.l.b16 %v5184
    %v5234 = vpack.c.b16 %v5219, %v5218
    %v5235 = vpack.c.b16 %v5221, %v5220
    %v5236 = vpack.c.b16 %v5223, %v5222
    %v5237 = vpack.c.b16 %v5225, %v5224
    %v5238 = vpack.c.b16 %v5227, %v5226
    %v5239 = vpack.c.b16 %v5229, %v5228
    %v5240 = vpack.c.b16 %v5231, %v5230
    %v5241 = vpack.c.b16 %v5233, %v5232
    %5250 = vmatprep.subr.bf16.mxu0 0
    %5251 = vmatpush1.bf16.msra.mxu0 %v5241
    %5252 = vmatprep.subr.bf16.mxu0 0
    %5253 = vmatpush1.bf16.msra.mxu0 %v5240
    %5254 = vmatprep.subr.bf16.mxu0 0
    %5255 = vmatpush1.bf16.msra.mxu0 %v5239
    %5256 = vmatprep.subr.bf16.mxu0 0
    %5257 = vmatpush1.bf16.msra.mxu0 %v5238
    %5258 = vmatprep.subr.bf16.mxu0 0
    %5259 = vmatpush1.bf16.msra.mxu0 %v5237
    %5260 = vmatprep.subr.bf16.mxu0 0
    %5261 = vmatpush1.bf16.msra.mxu0 %v5236
    %5262 = vmatprep.subr.bf16.mxu0 0
    %5263 = vmatpush1.bf16.msra.mxu0 %v5235
    %5264 = vmatprep.subr.bf16.mxu0 0
    %5265 = vmatpush1.bf16.msra.mxu0 %v5234
    %5266 = vmatprep.subr.bf16.mxu0 0
    %5267 = vmatpush2.bf16.msra.mxu0 0
    %5268 = vmatprep.subr.bf16.mxu0 0
    %5269 = vmatpush2.bf16.msra.mxu0 0
    %5270 = vmatprep.subr.bf16.mxu0 0
    %5271 = vmatpush2.bf16.msra.mxu0 0
    %5272 = vmatprep.subr.bf16.mxu0 0
    %5273 = vmatpush2.bf16.msra.mxu0 0
    %5274 = vmatprep.subr.bf16.mxu0 0
    %5275 = vmatpush2.bf16.msra.mxu0 0
    %5276 = vmatprep.subr.bf16.mxu0 0
    %5277 = vmatpush2.bf16.msra.mxu0 0
    %5278 = vmatprep.subr.bf16.mxu0 0
    %5279 = vmatpush2.bf16.msra.mxu0 0
    %5280 = vmatprep.subr.bf16.mxu0 0
    %5281 = vmatpush2.bf16.msra.mxu0 0
    %5282 = vmatprep.mubr.bf16.mxu0 0
    %5283 = vmatmul.mubr.bf16.gmra.mxu0 %v5200
    %v5284 = vpop.f32.mrf.mxu0
    %v5285 = vadd.f32 %v5190, %v5284
    %v5286 = vpop.f32.mrf.mxu0
    %v5287 = vpop.f32.mrf.mxu0
    %v5288 = vpop.f32.mrf.mxu0
    %5289 = vdwg.mxu0
    %v5290 = vmul.f32 %v5285, 0.17677669
    %v5293 = vunpack.c.l.s4 1966171168
    %v5294 = vunpack.c.0.s8 %v5293
    %v5295 = vlaneseq
    %v5296 = vshrl.u32 %v5295, 7
    %v5297 = vsub.s32 %v5294, %v5296
    %v5298 = vrot.slane %v5290, %v5297
    %v5299 = vcombine.high %v5298, %v5298
    %v5301 = vunpack.c.l.s4 1966171168
    %v5302 = vunpack.c.0.s8 %v5301
    %v5303 = vlaneseq
    %v5304 = vshrl.u32 %v5303, 7
    %v5305 = vsub.s32 %v5302, %v5304
    %v5306 = vrot.slane %v5298, %v5305
    %v5308 = vunpack.c.l.s4 1966171168
    %v5309 = vunpack.c.0.s8 %v5308
    %v5310 = vlaneseq
    %v5311 = vshrl.u32 %v5310, 7
    %v5312 = vsub.s32 %v5309, %v5311
    %v5313 = vrot.slane %v5299, %v5312
    %v5314 = vsel %vm794, %v5306, 0
    %v5317 = vsel %vm794, %v5049, 0
    %5319 = vmatprep.subr.mxu0 0.0
    %5320 = vmatpush1.xpose.msra.mxu0 0.0
    %5321 = vmatprep.subr.mxu0 0.0
    %5322 = vmatpush1.xpose.msra.mxu0 0.0
    %5323 = vmatprep.subr.mxu0 0.0
    %5324 = vmatpush1.xpose.msra.mxu0 0.0
    %5325 = vmatprep.subr.mxu0 0.0
    %5326 = vmatpush1.xpose.msra.mxu0 0.0
    %5327 = vmatprep.subr.mxu0 0.0
    %5328 = vmatpush1.xpose.msra.mxu0 0.0
    %5329 = vmatprep.subr.mxu0 0.0
    %5330 = vmatpush1.xpose.msra.mxu0 0.0
    %5331 = vmatprep.subr.mxu0 0.0
    %5332 = vmatpush1.xpose.msra.mxu0 0.0
    %5333 = vmatprep.subr.mxu0 0.0
    %5334 = vmatpush1.xpose.msra.mxu0 0.0
    %5335 = vmatprep.subr.mxu0 0.0
    %5336 = vmatpush1.xpose.msra.mxu0 0.0
    %5337 = vmatprep.subr.mxu0 0.0
    %5338 = vmatpush1.xpose.msra.mxu0 0.0
    %5339 = vmatprep.subr.mxu0 0.0
    %5340 = vmatpush1.xpose.msra.mxu0 0.0
    %5341 = vmatprep.subr.mxu0 0.0
    %5342 = vmatpush1.xpose.msra.mxu0 0.0
    %5343 = vmatprep.subr.mxu0 0.0
    %5344 = vmatpush1.xpose.msra.mxu0 0.0
    %5345 = vmatprep.subr.mxu0 0.0
    %5346 = vmatpush1.xpose.msra.mxu0 0.0
    %5347 = vmatprep.subr.mxu0 0.0
    %5348 = vmatpush1.xpose.msra.mxu0 0.0
    %5349 = vmatprep.subr.mxu0 0.0
    %5350 = vmatpush1.xpose.msra.mxu0 %v5317
    %5351 = vmatprep.subr.mxu0 0.0
    %5352 = vmatpush2.xpose.msra.mxu0 0.0
    %5353 = vmatprep.subr.mxu0 0.0
    %5354 = vmatpush2.xpose.msra.mxu0 0.0
    %5355 = vmatprep.subr.mxu0 0.0
    %5356 = vmatpush2.xpose.msra.mxu0 0.0
    %5357 = vmatprep.subr.mxu0 0.0
    %5358 = vmatpush2.xpose.msra.mxu0 0.0
    %5359 = vmatprep.subr.mxu0 0.0
    %5360 = vmatpush2.xpose.msra.mxu0 0.0
    %5361 = vmatprep.subr.mxu0 0.0
    %5362 = vmatpush2.xpose.msra.mxu0 0.0
    %5363 = vmatprep.subr.mxu0 0.0
    %5364 = vmatpush2.xpose.msra.mxu0 0.0
    %5365 = vmatprep.subr.mxu0 0.0
    %5366 = vmatpush2.xpose.msra.mxu0 0.0
    %5367 = vmatprep.subr.mxu0 0.0
    %5368 = vmatpush2.xpose.msra.mxu0 0.0
    %5369 = vmatprep.subr.mxu0 0.0
    %5370 = vmatpush2.xpose.msra.mxu0 0.0
    %5371 = vmatprep.subr.mxu0 0.0
    %5372 = vmatpush2.xpose.msra.mxu0 0.0
    %5373 = vmatprep.subr.mxu0 0.0
    %5374 = vmatpush2.xpose.msra.mxu0 0.0
    %5375 = vmatprep.subr.mxu0 0.0
    %5376 = vmatpush2.xpose.msra.mxu0 0.0
    %5377 = vmatprep.subr.mxu0 0.0
    %5378 = vmatpush2.xpose.msra.mxu0 0.0
    %5379 = vmatprep.subr.mxu0 0.0
    %5380 = vmatpush2.xpose.msra.mxu0 0.0
    %5381 = vmatprep.subr.mxu0 0.0
    %5382 = vmatpush2.xpose.msra.mxu0 0.0
    %5383 = vmatprep.mubr.f32.mxu0 0.0
    %5384 = vmatmul.mubr.f32.gmra.mxu0 %v5314
    %v5385 = vpop.f32.mrf.mxu0
    %v5386 = vadd.f32 0.0, %v5385
    %v5387 = vpop.f32.mrf.mxu0
    %5388 = vdwg.mxu0
    %v5389 = vsel %vm794, %v5313, 0
    %v5392 = vsel %vm794, %v5052, 0
    %5394 = vmatprep.subr.mxu0 0.0
    %5395 = vmatpush1.xpose.msra.mxu0 0.0
    %5396 = vmatprep.subr.mxu0 0.0
    %5397 = vmatpush1.xpose.msra.mxu0 0.0
    %5398 = vmatprep.subr.mxu0 0.0
    %5399 = vmatpush1.xpose.msra.mxu0 0.0
    %5400 = vmatprep.subr.mxu0 0.0
    %5401 = vmatpush1.xpose.msra.mxu0 0.0
    %5402 = vmatprep.subr.mxu0 0.0
    %5403 = vmatpush1.xpose.msra.mxu0 0.0
    %5404 = vmatprep.subr.mxu0 0.0
    %5405 = vmatpush1.xpose.msra.mxu0 0.0
    %5406 = vmatprep.subr.mxu0 0.0
    %5407 = vmatpush1.xpose.msra.mxu0 0.0
    %5408 = vmatprep.subr.mxu0 0.0
    %5409 = vmatpush1.xpose.msra.mxu0 0.0
    %5410 = vmatprep.subr.mxu0 0.0
    %5411 = vmatpush1.xpose.msra.mxu0 0.0
    %5412 = vmatprep.subr.mxu0 0.0
    %5413 = vmatpush1.xpose.msra.mxu0 0.0
    %5414 = vmatprep.subr.mxu0 0.0
    %5415 = vmatpush1.xpose.msra.mxu0 0.0
    %5416 = vmatprep.subr.mxu0 0.0
    %5417 = vmatpush1.xpose.msra.mxu0 0.0
    %5418 = vmatprep.subr.mxu0 0.0
    %5419 = vmatpush1.xpose.msra.mxu0 0.0
    %5420 = vmatprep.subr.mxu0 0.0
    %5421 = vmatpush1.xpose.msra.mxu0 0.0
    %5422 = vmatprep.subr.mxu0 0.0
    %5423 = vmatpush1.xpose.msra.mxu0 0.0
    %5424 = vmatprep.subr.mxu0 0.0
    %5425 = vmatpush1.xpose.msra.mxu0 %v5392
    %5426 = vmatprep.subr.mxu0 0.0
    %5427 = vmatpush2.xpose.msra.mxu0 0.0
    %5428 = vmatprep.subr.mxu0 0.0
    %5429 = vmatpush2.xpose.msra.mxu0 0.0
    %5430 = vmatprep.subr.mxu0 0.0
    %5431 = vmatpush2.xpose.msra.mxu0 0.0
    %5432 = vmatprep.subr.mxu0 0.0
    %5433 = vmatpush2.xpose.msra.mxu0 0.0
    %5434 = vmatprep.subr.mxu0 0.0
    %5435 = vmatpush2.xpose.msra.mxu0 0.0
    %5436 = vmatprep.subr.mxu0 0.0
    %5437 = vmatpush2.xpose.msra.mxu0 0.0
    %5438 = vmatprep.subr.mxu0 0.0
    %5439 = vmatpush2.xpose.msra.mxu0 0.0
    %5440 = vmatprep.subr.mxu0 0.0
    %5441 = vmatpush2.xpose.msra.mxu0 0.0
    %5442 = vmatprep.subr.mxu0 0.0
    %5443 = vmatpush2.xpose.msra.mxu0 0.0
    %5444 = vmatprep.subr.mxu0 0.0
    %5445 = vmatpush2.xpose.msra.mxu0 0.0
    %5446 = vmatprep.subr.mxu0 0.0
    %5447 = vmatpush2.xpose.msra.mxu0 0.0
    %5448 = vmatprep.subr.mxu0 0.0
    %5449 = vmatpush2.xpose.msra.mxu0 0.0
    %5450 = vmatprep.subr.mxu0 0.0
    %5451 = vmatpush2.xpose.msra.mxu0 0.0
    %5452 = vmatprep.subr.mxu0 0.0
    %5453 = vmatpush2.xpose.msra.mxu0 0.0
    %5454 = vmatprep.subr.mxu0 0.0
    %5455 = vmatpush2.xpose.msra.mxu0 0.0
    %5456 = vmatprep.subr.mxu0 0.0
    %5457 = vmatpush2.xpose.msra.mxu0 0.0
    %5458 = vmatprep.mubr.f32.mxu0 0.0
    %5459 = vmatmul.mubr.f32.gmra.mxu0 %v5389
    %v5460 = vpop.f32.mrf.mxu0
    %v5461 = vadd.f32 0.0, %v5460
    %v5462 = vpop.f32.mrf.mxu0
    %5463 = vdwg.mxu0
    %vm5464 = vcmask 57344
    %v5465 = vsel %vm5464, %v5386, -inf
    %5466 = vmax.xlane.f32.xlu0 %v5465
    %v5467 = vpop.xlane.xlu0 %5466
    %v5468 = vsel %vm5464, %v5461, -inf
    %5469 = vmax.xlane.f32.xlu0 %v5468
    %v5470 = vpop.xlane.xlu0 %5469
    %v5471 = vsub.f32 %v5386, %v5467
    %v5472 = vsub.f32 %v5461, %v5470
    %v5473 = vmul.f32 %v5471, 1.442695
    %v5474 = vpow.pop %v5473
    %v5475 = vmul.f32 %v5472, 1.442695
    %v5476 = vpow.pop %v5475
    %v5477 = vsel %vm5464, %v5474, 0.0
    %5478 = vadd.xlane.f32.xlu0 %v5477
    %v5479 = vpop.xlane.xlu0 %5478
    %v5480 = vsel %vm5464, %v5476, 0.0
    %5481 = vadd.xlane.f32.xlu0 %v5480
    %v5482 = vpop.xlane.xlu0 %5481
    %v5483 = vrcp.pop %v5479
    %v5484 = vrcp.pop %v5482
    %v5485 = vmul.f32 %v5474, %v5483
    %v5486 = vmul.f32 %v5476, %v5484
    %v5488 = vsel %vm947, %v5485, 0
    %5490 = vmatprep.subr.mxu0 0.0
    %5491 = vmatpush1.msra.mxu0 0.0
    %5492 = vmatprep.subr.mxu0 0.0
    %5493 = vmatpush1.msra.mxu0 0.0
    %5494 = vmatprep.subr.mxu0 0.0
    %5495 = vmatpush1.msra.mxu0 0.0
    %5496 = vmatprep.subr.mxu0 0.0
    %5497 = vmatpush1.msra.mxu0 0.0
    %5498 = vmatprep.subr.mxu0 0.0
    %5499 = vmatpush1.msra.mxu0 0.0
    %5500 = vmatprep.subr.mxu0 0.0
    %5501 = vmatpush1.msra.mxu0 0.0
    %5502 = vmatprep.subr.mxu0 0.0
    %5503 = vmatpush1.msra.mxu0 0.0
    %5504 = vmatprep.subr.mxu0 0.0
    %5505 = vmatpush1.msra.mxu0 0.0
    %5506 = vmatprep.subr.mxu0 0.0
    %5507 = vmatpush1.msra.mxu0 0.0
    %5508 = vmatprep.subr.mxu0 0.0
    %5509 = vmatpush1.msra.mxu0 0.0
    %5510 = vmatprep.subr.mxu0 0.0
    %5511 = vmatpush1.msra.mxu0 0.0
    %5512 = vmatprep.subr.mxu0 0.0
    %5513 = vmatpush1.msra.mxu0 0.0
    %5514 = vmatprep.subr.mxu0 0.0
    %5515 = vmatpush1.msra.mxu0 0.0
    %5516 = vmatprep.subr.mxu0 0.0
    %5517 = vmatpush1.msra.mxu0 0.0
    %5518 = vmatprep.subr.mxu0 0.0
    %5519 = vmatpush1.msra.mxu0 0.0
    %5520 = vmatprep.subr.mxu0 0.0
    %5521 = vmatpush1.msra.mxu0 %v5161
    %5522 = vmatprep.subr.mxu0 0.0
    %5523 = vmatpush2.msra.mxu0 0.0
    %5524 = vmatprep.subr.mxu0 0.0
    %5525 = vmatpush2.msra.mxu0 0.0
    %5526 = vmatprep.subr.mxu0 0.0
    %5527 = vmatpush2.msra.mxu0 0.0
    %5528 = vmatprep.subr.mxu0 0.0
    %5529 = vmatpush2.msra.mxu0 0.0
    %5530 = vmatprep.subr.mxu0 0.0
    %5531 = vmatpush2.msra.mxu0 0.0
    %5532 = vmatprep.subr.mxu0 0.0
    %5533 = vmatpush2.msra.mxu0 0.0
    %5534 = vmatprep.subr.mxu0 0.0
    %5535 = vmatpush2.msra.mxu0 0.0
    %5536 = vmatprep.subr.mxu0 0.0
    %5537 = vmatpush2.msra.mxu0 0.0
    %5538 = vmatprep.subr.mxu0 0.0
    %5539 = vmatpush2.msra.mxu0 0.0
    %5540 = vmatprep.subr.mxu0 0.0
    %5541 = vmatpush2.msra.mxu0 0.0
    %5542 = vmatprep.subr.mxu0 0.0
    %5543 = vmatpush2.msra.mxu0 0.0
    %5544 = vmatprep.subr.mxu0 0.0
    %5545 = vmatpush2.msra.mxu0 0.0
    %5546 = vmatprep.subr.mxu0 0.0
    %5547 = vmatpush2.msra.mxu0 0.0
    %5548 = vmatprep.subr.mxu0 0.0
    %5549 = vmatpush2.msra.mxu0 0.0
    %5550 = vmatprep.subr.mxu0 0.0
    %5551 = vmatpush2.msra.mxu0 0.0
    %5552 = vmatprep.subr.mxu0 0.0
    %5553 = vmatpush2.msra.mxu0 0.0
    %5554 = vmatprep.mubr.f32.mxu0 0.0
    %5555 = vmatmul.mubr.f32.gmra.mxu0 %v5488
    %v5556 = vpop.f32.mrf.mxu0
    %v5557 = vadd.f32 0.0, %v5556
    %v5558 = vpop.f32.mrf.mxu0
    %5559 = vdwg.mxu0
    %v5561 = vsel %vm947, %v5486, 0
    %5563 = vmatprep.subr.mxu0 0.0
    %5564 = vmatpush1.msra.mxu0 0.0
    %5565 = vmatprep.subr.mxu0 0.0
    %5566 = vmatpush1.msra.mxu0 0.0
    %5567 = vmatprep.subr.mxu0 0.0
    %5568 = vmatpush1.msra.mxu0 0.0
    %5569 = vmatprep.subr.mxu0 0.0
    %5570 = vmatpush1.msra.mxu0 0.0
    %5571 = vmatprep.subr.mxu0 0.0
    %5572 = vmatpush1.msra.mxu0 0.0
    %5573 = vmatprep.subr.mxu0 0.0
    %5574 = vmatpush1.msra.mxu0 0.0
    %5575 = vmatprep.subr.mxu0 0.0
    %5576 = vmatpush1.msra.mxu0 0.0
    %5577 = vmatprep.subr.mxu0 0.0
    %5578 = vmatpush1.msra.mxu0 0.0
    %5579 = vmatprep.subr.mxu0 0.0
    %5580 = vmatpush1.msra.mxu0 0.0
    %5581 = vmatprep.subr.mxu0 0.0
    %5582 = vmatpush1.msra.mxu0 0.0
    %5583 = vmatprep.subr.mxu0 0.0
    %5584 = vmatpush1.msra.mxu0 0.0
    %5585 = vmatprep.subr.mxu0 0.0
    %5586 = vmatpush1.msra.mxu0 0.0
    %5587 = vmatprep.subr.mxu0 0.0
    %5588 = vmatpush1.msra.mxu0 0.0
    %5589 = vmatprep.subr.mxu0 0.0
    %5590 = vmatpush1.msra.mxu0 0.0
    %5591 = vmatprep.subr.mxu0 0.0
    %5592 = vmatpush1.msra.mxu0 0.0
    %5593 = vmatprep.subr.mxu0 0.0
    %5594 = vmatpush1.msra.mxu0 %v5164
    %5595 = vmatprep.subr.mxu0 0.0
    %5596 = vmatpush2.msra.mxu0 0.0
    %5597 = vmatprep.subr.mxu0 0.0
    %5598 = vmatpush2.msra.mxu0 0.0
    %5599 = vmatprep.subr.mxu0 0.0
    %5600 = vmatpush2.msra.mxu0 0.0
    %5601 = vmatprep.subr.mxu0 0.0
    %5602 = vmatpush2.msra.mxu0 0.0
    %5603 = vmatprep.subr.mxu0 0.0
    %5604 = vmatpush2.msra.mxu0 0.0
    %5605 = vmatprep.subr.mxu0 0.0
    %5606 = vmatpush2.msra.mxu0 0.0
    %5607 = vmatprep.subr.mxu0 0.0
    %5608 = vmatpush2.msra.mxu0 0.0
    %5609 = vmatprep.subr.mxu0 0.0
    %5610 = vmatpush2.msra.mxu0 0.0
    %5611 = vmatprep.subr.mxu0 0.0
    %5612 = vmatpush2.msra.mxu0 0.0
    %5613 = vmatprep.subr.mxu0 0.0
    %5614 = vmatpush2.msra.mxu0 0.0
    %5615 = vmatprep.subr.mxu0 0.0
    %5616 = vmatpush2.msra.mxu0 0.0
    %5617 = vmatprep.subr.mxu0 0.0
    %5618 = vmatpush2.msra.mxu0 0.0
    %5619 = vmatprep.subr.mxu0 0.0
    %5620 = vmatpush2.msra.mxu0 0.0
    %5621 = vmatprep.subr.mxu0 0.0
    %5622 = vmatpush2.msra.mxu0 0.0
    %5623 = vmatprep.subr.mxu0 0.0
    %5624 = vmatpush2.msra.mxu0 0.0
    %5625 = vmatprep.subr.mxu0 0.0
    %5626 = vmatpush2.msra.mxu0 0.0
    %5627 = vmatprep.mubr.f32.mxu0 0.0
    %5628 = vmatmul.mubr.f32.gmra.mxu0 %v5561
    %v5629 = vpop.f32.mrf.mxu0
    %v5630 = vadd.f32 0.0, %v5629
    %v5631 = vpop.f32.mrf.mxu0
    %5632 = vdwg.mxu0
    %v5633 = vlaneseq
    %v5634 = vshrl.u32 %v5633, 7
    %v5635 = vsub.s32 0, %v5634
    %v5636 = vrot.slane %v5306, %v5635
    %5637 = vrot.lane.b32.xlu0 %v5636, 96
    %v5638 = vpop.permute.xlu0 %5637
    %5639 = vrot.lane.b32.xlu0 %v5049, 96
    %v5640 = vpop.permute.xlu0 %5639
    %v5641 = vsel %vm794, %v5638, 0
    %v5643 = vsel %vm794, %v5640, 0
    %5645 = vmatprep.subr.mxu0 0.0
    %5646 = vmatpush1.xpose.msra.mxu0 0.0
    %5647 = vmatprep.subr.mxu0 0.0
    %5648 = vmatpush1.xpose.msra.mxu0 0.0
    %5649 = vmatprep.subr.mxu0 0.0
    %5650 = vmatpush1.xpose.msra.mxu0 0.0
    %5651 = vmatprep.subr.mxu0 0.0
    %5652 = vmatpush1.xpose.msra.mxu0 0.0
    %5653 = vmatprep.subr.mxu0 0.0
    %5654 = vmatpush1.xpose.msra.mxu0 0.0
    %5655 = vmatprep.subr.mxu0 0.0
    %5656 = vmatpush1.xpose.msra.mxu0 0.0
    %5657 = vmatprep.subr.mxu0 0.0
    %5658 = vmatpush1.xpose.msra.mxu0 0.0
    %5659 = vmatprep.subr.mxu0 0.0
    %5660 = vmatpush1.xpose.msra.mxu0 0.0
    %5661 = vmatprep.subr.mxu0 0.0
    %5662 = vmatpush1.xpose.msra.mxu0 0.0
    %5663 = vmatprep.subr.mxu0 0.0
    %5664 = vmatpush1.xpose.msra.mxu0 0.0
    %5665 = vmatprep.subr.mxu0 0.0
    %5666 = vmatpush1.xpose.msra.mxu0 0.0
    %5667 = vmatprep.subr.mxu0 0.0
    %5668 = vmatpush1.xpose.msra.mxu0 0.0
    %5669 = vmatprep.subr.mxu0 0.0
    %5670 = vmatpush1.xpose.msra.mxu0 0.0
    %5671 = vmatprep.subr.mxu0 0.0
    %5672 = vmatpush1.xpose.msra.mxu0 0.0
    %5673 = vmatprep.subr.mxu0 0.0
    %5674 = vmatpush1.xpose.msra.mxu0 0.0
    %5675 = vmatprep.subr.mxu0 0.0
    %5676 = vmatpush1.xpose.msra.mxu0 %v5643
    %5677 = vmatprep.subr.mxu0 0.0
    %5678 = vmatpush2.xpose.msra.mxu0 0.0
    %5679 = vmatprep.subr.mxu0 0.0
    %5680 = vmatpush2.xpose.msra.mxu0 0.0
    %5681 = vmatprep.subr.mxu0 0.0
    %5682 = vmatpush2.xpose.msra.mxu0 0.0
    %5683 = vmatprep.subr.mxu0 0.0
    %5684 = vmatpush2.xpose.msra.mxu0 0.0
    %5685 = vmatprep.subr.mxu0 0.0
    %5686 = vmatpush2.xpose.msra.mxu0 0.0
    %5687 = vmatprep.subr.mxu0 0.0
    %5688 = vmatpush2.xpose.msra.mxu0 0.0
    %5689 = vmatprep.subr.mxu0 0.0
    %5690 = vmatpush2.xpose.msra.mxu0 0.0
    %5691 = vmatprep.subr.mxu0 0.0
    %5692 = vmatpush2.xpose.msra.mxu0 0.0
    %5693 = vmatprep.subr.mxu0 0.0
    %5694 = vmatpush2.xpose.msra.mxu0 0.0
    %5695 = vmatprep.subr.mxu0 0.0
    %5696 = vmatpush2.xpose.msra.mxu0 0.0
    %5697 = vmatprep.subr.mxu0 0.0
    %5698 = vmatpush2.xpose.msra.mxu0 0.0
    %5699 = vmatprep.subr.mxu0 0.0
    %5700 = vmatpush2.xpose.msra.mxu0 0.0
    %5701 = vmatprep.subr.mxu0 0.0
    %5702 = vmatpush2.xpose.msra.mxu0 0.0
    %5703 = vmatprep.subr.mxu0 0.0
    %5704 = vmatpush2.xpose.msra.mxu0 0.0
    %5705 = vmatprep.subr.mxu0 0.0
    %5706 = vmatpush2.xpose.msra.mxu0 0.0
    %5707 = vmatprep.subr.mxu0 0.0
    %5708 = vmatpush2.xpose.msra.mxu0 0.0
    %5709 = vmatprep.mubr.f32.mxu0 0.0
    %5710 = vmatmul.mubr.f32.gmra.mxu0 %v5641
    %v5711 = vpop.f32.mrf.mxu0
    %v5712 = vadd.f32 0.0, %v5711
    %v5713 = vpop.f32.mrf.mxu0
    %5714 = vdwg.mxu0
    %v5715 = vlaneseq
    %v5716 = vshrl.u32 %v5715, 7
    %v5717 = vsub.s32 0, %v5716
    %v5718 = vrot.slane %v5313, %v5717
    %5719 = vrot.lane.b32.xlu0 %v5718, 96
    %v5720 = vpop.permute.xlu0 %5719
    %5721 = vrot.lane.b32.xlu0 %v5052, 96
    %v5722 = vpop.permute.xlu0 %5721
    %v5723 = vsel %vm794, %v5720, 0
    %v5725 = vsel %vm794, %v5722, 0
    %5727 = vmatprep.subr.mxu0 0.0
    %5728 = vmatpush1.xpose.msra.mxu0 0.0
    %5729 = vmatprep.subr.mxu0 0.0
    %5730 = vmatpush1.xpose.msra.mxu0 0.0
    %5731 = vmatprep.subr.mxu0 0.0
    %5732 = vmatpush1.xpose.msra.mxu0 0.0
    %5733 = vmatprep.subr.mxu0 0.0
    %5734 = vmatpush1.xpose.msra.mxu0 0.0
    %5735 = vmatprep.subr.mxu0 0.0
    %5736 = vmatpush1.xpose.msra.mxu0 0.0
    %5737 = vmatprep.subr.mxu0 0.0
    %5738 = vmatpush1.xpose.msra.mxu0 0.0
    %5739 = vmatprep.subr.mxu0 0.0
    %5740 = vmatpush1.xpose.msra.mxu0 0.0
    %5741 = vmatprep.subr.mxu0 0.0
    %5742 = vmatpush1.xpose.msra.mxu0 0.0
    %5743 = vmatprep.subr.mxu0 0.0
    %5744 = vmatpush1.xpose.msra.mxu0 0.0
    %5745 = vmatprep.subr.mxu0 0.0
    %5746 = vmatpush1.xpose.msra.mxu0 0.0
    %5747 = vmatprep.subr.mxu0 0.0
    %5748 = vmatpush1.xpose.msra.mxu0 0.0
    %5749 = vmatprep.subr.mxu0 0.0
    %5750 = vmatpush1.xpose.msra.mxu0 0.0
    %5751 = vmatprep.subr.mxu0 0.0
    %5752 = vmatpush1.xpose.msra.mxu0 0.0
    %5753 = vmatprep.subr.mxu0 0.0
    %5754 = vmatpush1.xpose.msra.mxu0 0.0
    %5755 = vmatprep.subr.mxu0 0.0
    %5756 = vmatpush1.xpose.msra.mxu0 0.0
    %5757 = vmatprep.subr.mxu0 0.0
    %5758 = vmatpush1.xpose.msra.mxu0 %v5725
    %5759 = vmatprep.subr.mxu0 0.0
    %5760 = vmatpush2.xpose.msra.mxu0 0.0
    %5761 = vmatprep.subr.mxu0 0.0
    %5762 = vmatpush2.xpose.msra.mxu0 0.0
    %5763 = vmatprep.subr.mxu0 0.0
    %5764 = vmatpush2.xpose.msra.mxu0 0.0
    %5765 = vmatprep.subr.mxu0 0.0
    %5766 = vmatpush2.xpose.msra.mxu0 0.0
    %5767 = vmatprep.subr.mxu0 0.0
    %5768 = vmatpush2.xpose.msra.mxu0 0.0
    %5769 = vmatprep.subr.mxu0 0.0
    %5770 = vmatpush2.xpose.msra.mxu0 0.0
    %5771 = vmatprep.subr.mxu0 0.0
    %5772 = vmatpush2.xpose.msra.mxu0 0.0
    %5773 = vmatprep.subr.mxu0 0.0
    %5774 = vmatpush2.xpose.msra.mxu0 0.0
    %5775 = vmatprep.subr.mxu0 0.0
    %5776 = vmatpush2.xpose.msra.mxu0 0.0
    %5777 = vmatprep.subr.mxu0 0.0
    %5778 = vmatpush2.xpose.msra.mxu0 0.0
    %5779 = vmatprep.subr.mxu0 0.0
    %5780 = vmatpush2.xpose.msra.mxu0 0.0
    %5781 = vmatprep.subr.mxu0 0.0
    %5782 = vmatpush2.xpose.msra.mxu0 0.0
    %5783 = vmatprep.subr.mxu0 0.0
    %5784 = vmatpush2.xpose.msra.mxu0 0.0
    %5785 = vmatprep.subr.mxu0 0.0
    %5786 = vmatpush2.xpose.msra.mxu0 0.0
    %5787 = vmatprep.subr.mxu0 0.0
    %5788 = vmatpush2.xpose.msra.mxu0 0.0
    %5789 = vmatprep.subr.mxu0 0.0
    %5790 = vmatpush2.xpose.msra.mxu0 0.0
    %5791 = vmatprep.mubr.f32.mxu0 0.0
    %5792 = vmatmul.mubr.f32.gmra.mxu0 %v5723
    %v5793 = vpop.f32.mrf.mxu0
    %v5794 = vadd.f32 0.0, %v5793
    %v5795 = vpop.f32.mrf.mxu0
    %5796 = vdwg.mxu0
    %v5797 = vsel %vm5464, %v5712, -inf
    %5798 = vmax.xlane.f32.xlu0 %v5797
    %v5799 = vpop.xlane.xlu0 %5798
    %v5800 = vsel %vm5464, %v5794, -inf
    %5801 = vmax.xlane.f32.xlu0 %v5800
    %v5802 = vpop.xlane.xlu0 %5801
    %v5803 = vsub.f32 %v5712, %v5799
    %v5804 = vsub.f32 %v5794, %v5802
    %v5805 = vmul.f32 %v5803, 1.442695
    %v5806 = vpow.pop %v5805
    %v5807 = vmul.f32 %v5804, 1.442695
    %v5808 = vpow.pop %v5807
    %v5809 = vsel %vm5464, %v5806, 0.0
    %5810 = vadd.xlane.f32.xlu0 %v5809
    %v5811 = vpop.xlane.xlu0 %5810
    %v5812 = vsel %vm5464, %v5808, 0.0
    %5813 = vadd.xlane.f32.xlu0 %v5812
    %v5814 = vpop.xlane.xlu0 %5813
    %v5815 = vrcp.pop %v5811
    %v5816 = vrcp.pop %v5814
    %v5817 = vmul.f32 %v5806, %v5815
    %v5818 = vmul.f32 %v5808, %v5816
    %5820 = vrot.lane.b32.xlu0 %v5161, 96
    %v5821 = vpop.permute.xlu0 %5820
    %v5824 = vsel %vm947, %v5817, 0
    %5826 = vmatprep.subr.mxu0 0.0
    %5827 = vmatpush1.msra.mxu0 0.0
    %5828 = vmatprep.subr.mxu0 0.0
    %5829 = vmatpush1.msra.mxu0 0.0
    %5830 = vmatprep.subr.mxu0 0.0
    %5831 = vmatpush1.msra.mxu0 0.0
    %5832 = vmatprep.subr.mxu0 0.0
    %5833 = vmatpush1.msra.mxu0 0.0
    %5834 = vmatprep.subr.mxu0 0.0
    %5835 = vmatpush1.msra.mxu0 0.0
    %5836 = vmatprep.subr.mxu0 0.0
    %5837 = vmatpush1.msra.mxu0 0.0
    %5838 = vmatprep.subr.mxu0 0.0
    %5839 = vmatpush1.msra.mxu0 0.0
    %5840 = vmatprep.subr.mxu0 0.0
    %5841 = vmatpush1.msra.mxu0 0.0
    %5842 = vmatprep.subr.mxu0 0.0
    %5843 = vmatpush1.msra.mxu0 0.0
    %5844 = vmatprep.subr.mxu0 0.0
    %5845 = vmatpush1.msra.mxu0 0.0
    %5846 = vmatprep.subr.mxu0 0.0
    %5847 = vmatpush1.msra.mxu0 0.0
    %5848 = vmatprep.subr.mxu0 0.0
    %5849 = vmatpush1.msra.mxu0 0.0
    %5850 = vmatprep.subr.mxu0 0.0
    %5851 = vmatpush1.msra.mxu0 0.0
    %5852 = vmatprep.subr.mxu0 0.0
    %5853 = vmatpush1.msra.mxu0 0.0
    %5854 = vmatprep.subr.mxu0 0.0
    %5855 = vmatpush1.msra.mxu0 0.0
    %5856 = vmatprep.subr.mxu0 0.0
    %5857 = vmatpush1.msra.mxu0 %v5821
    %5858 = vmatprep.subr.mxu0 0.0
    %5859 = vmatpush2.msra.mxu0 0.0
    %5860 = vmatprep.subr.mxu0 0.0
    %5861 = vmatpush2.msra.mxu0 0.0
    %5862 = vmatprep.subr.mxu0 0.0
    %5863 = vmatpush2.msra.mxu0 0.0
    %5864 = vmatprep.subr.mxu0 0.0
    %5865 = vmatpush2.msra.mxu0 0.0
    %5866 = vmatprep.subr.mxu0 0.0
    %5867 = vmatpush2.msra.mxu0 0.0
    %5868 = vmatprep.subr.mxu0 0.0
    %5869 = vmatpush2.msra.mxu0 0.0
    %5870 = vmatprep.subr.mxu0 0.0
    %5871 = vmatpush2.msra.mxu0 0.0
    %5872 = vmatprep.subr.mxu0 0.0
    %5873 = vmatpush2.msra.mxu0 0.0
    %5874 = vmatprep.subr.mxu0 0.0
    %5875 = vmatpush2.msra.mxu0 0.0
    %5876 = vmatprep.subr.mxu0 0.0
    %5877 = vmatpush2.msra.mxu0 0.0
    %5878 = vmatprep.subr.mxu0 0.0
    %5879 = vmatpush2.msra.mxu0 0.0
    %5880 = vmatprep.subr.mxu0 0.0
    %5881 = vmatpush2.msra.mxu0 0.0
    %5882 = vmatprep.subr.mxu0 0.0
    %5883 = vmatpush2.msra.mxu0 0.0
    %5884 = vmatprep.subr.mxu0 0.0
    %5885 = vmatpush2.msra.mxu0 0.0
    %5886 = vmatprep.subr.mxu0 0.0
    %5887 = vmatpush2.msra.mxu0 0.0
    %5888 = vmatprep.subr.mxu0 0.0
    %5889 = vmatpush2.msra.mxu0 0.0
    %5890 = vmatprep.mubr.f32.mxu0 0.0
    %5891 = vmatmul.mubr.f32.gmra.mxu0 %v5824
    %v5892 = vpop.f32.mrf.mxu0
    %v5893 = vadd.f32 0.0, %v5892
    %v5894 = vpop.f32.mrf.mxu0
    %5895 = vdwg.mxu0
    %5897 = vrot.lane.b32.xlu0 %v5164, 96
    %v5898 = vpop.permute.xlu0 %5897
    %v5901 = vsel %vm947, %v5818, 0
    %5903 = vmatprep.subr.mxu0 0.0
    %5904 = vmatpush1.msra.mxu0 0.0
    %5905 = vmatprep.subr.mxu0 0.0
    %5906 = vmatpush1.msra.mxu0 0.0
    %5907 = vmatprep.subr.mxu0 0.0
    %5908 = vmatpush1.msra.mxu0 0.0
    %5909 = vmatprep.subr.mxu0 0.0
    %5910 = vmatpush1.msra.mxu0 0.0
    %5911 = vmatprep.subr.mxu0 0.0
    %5912 = vmatpush1.msra.mxu0 0.0
    %5913 = vmatprep.subr.mxu0 0.0
    %5914 = vmatpush1.msra.mxu0 0.0
    %5915 = vmatprep.subr.mxu0 0.0
    %5916 = vmatpush1.msra.mxu0 0.0
    %5917 = vmatprep.subr.mxu0 0.0
    %5918 = vmatpush1.msra.mxu0 0.0
    %5919 = vmatprep.subr.mxu0 0.0
    %5920 = vmatpush1.msra.mxu0 0.0
    %5921 = vmatprep.subr.mxu0 0.0
    %5922 = vmatpush1.msra.mxu0 0.0
    %5923 = vmatprep.subr.mxu0 0.0
    %5924 = vmatpush1.msra.mxu0 0.0
    %5925 = vmatprep.subr.mxu0 0.0
    %5926 = vmatpush1.msra.mxu0 0.0
    %5927 = vmatprep.subr.mxu0 0.0
    %5928 = vmatpush1.msra.mxu0 0.0
    %5929 = vmatprep.subr.mxu0 0.0
    %5930 = vmatpush1.msra.mxu0 0.0
    %5931 = vmatprep.subr.mxu0 0.0
    %5932 = vmatpush1.msra.mxu0 0.0
    %5933 = vmatprep.subr.mxu0 0.0
    %5934 = vmatpush1.msra.mxu0 %v5898
    %5935 = vmatprep.subr.mxu0 0.0
    %5936 = vmatpush2.msra.mxu0 0.0
    %5937 = vmatprep.subr.mxu0 0.0
    %5938 = vmatpush2.msra.mxu0 0.0
    %5939 = vmatprep.subr.mxu0 0.0
    %5940 = vmatpush2.msra.mxu0 0.0
    %5941 = vmatprep.subr.mxu0 0.0
    %5942 = vmatpush2.msra.mxu0 0.0
    %5943 = vmatprep.subr.mxu0 0.0
    %5944 = vmatpush2.msra.mxu0 0.0
    %5945 = vmatprep.subr.mxu0 0.0
    %5946 = vmatpush2.msra.mxu0 0.0
    %5947 = vmatprep.subr.mxu0 0.0
    %5948 = vmatpush2.msra.mxu0 0.0
    %5949 = vmatprep.subr.mxu0 0.0
    %5950 = vmatpush2.msra.mxu0 0.0
    %5951 = vmatprep.subr.mxu0 0.0
    %5952 = vmatpush2.msra.mxu0 0.0
    %5953 = vmatprep.subr.mxu0 0.0
    %5954 = vmatpush2.msra.mxu0 0.0
    %5955 = vmatprep.subr.mxu0 0.0
    %5956 = vmatpush2.msra.mxu0 0.0
    %5957 = vmatprep.subr.mxu0 0.0
    %5958 = vmatpush2.msra.mxu0 0.0
    %5959 = vmatprep.subr.mxu0 0.0
    %5960 = vmatpush2.msra.mxu0 0.0
    %5961 = vmatprep.subr.mxu0 0.0
    %5962 = vmatpush2.msra.mxu0 0.0
    %5963 = vmatprep.subr.mxu0 0.0
    %5964 = vmatpush2.msra.mxu0 0.0
    %5965 = vmatprep.subr.mxu0 0.0
    %5966 = vmatpush2.msra.mxu0 0.0
    %5967 = vmatprep.mubr.f32.mxu0 0.0
    %5968 = vmatmul.mubr.f32.gmra.mxu0 %v5901
    %v5969 = vpop.f32.mrf.mxu0
    %v5970 = vadd.f32 0.0, %v5969
    %v5971 = vpop.f32.mrf.mxu0
    %5972 = vdwg.mxu0
    %5973 = vrot.lane.b32.xlu0 %v5636, 64
    %v5974 = vpop.permute.xlu0 %5973
    %5975 = vrot.lane.b32.xlu0 %v5049, 64
    %v5976 = vpop.permute.xlu0 %5975
    %v5977 = vsel %vm794, %v5974, 0
    %v5979 = vsel %vm794, %v5976, 0
    %5981 = vmatprep.subr.mxu0 0.0
    %5982 = vmatpush1.xpose.msra.mxu0 0.0
    %5983 = vmatprep.subr.mxu0 0.0
    %5984 = vmatpush1.xpose.msra.mxu0 0.0
    %5985 = vmatprep.subr.mxu0 0.0
    %5986 = vmatpush1.xpose.msra.mxu0 0.0
    %5987 = vmatprep.subr.mxu0 0.0
    %5988 = vmatpush1.xpose.msra.mxu0 0.0
    %5989 = vmatprep.subr.mxu0 0.0
    %5990 = vmatpush1.xpose.msra.mxu0 0.0
    %5991 = vmatprep.subr.mxu0 0.0
    %5992 = vmatpush1.xpose.msra.mxu0 0.0
    %5993 = vmatprep.subr.mxu0 0.0
    %5994 = vmatpush1.xpose.msra.mxu0 0.0
    %5995 = vmatprep.subr.mxu0 0.0
    %5996 = vmatpush1.xpose.msra.mxu0 0.0
    %5997 = vmatprep.subr.mxu0 0.0
    %5998 = vmatpush1.xpose.msra.mxu0 0.0
    %5999 = vmatprep.subr.mxu0 0.0
    %6000 = vmatpush1.xpose.msra.mxu0 0.0
    %6001 = vmatprep.subr.mxu0 0.0
    %6002 = vmatpush1.xpose.msra.mxu0 0.0
    %6003 = vmatprep.subr.mxu0 0.0
    %6004 = vmatpush1.xpose.msra.mxu0 0.0
    %6005 = vmatprep.subr.mxu0 0.0
    %6006 = vmatpush1.xpose.msra.mxu0 0.0
    %6007 = vmatprep.subr.mxu0 0.0
    %6008 = vmatpush1.xpose.msra.mxu0 0.0
    %6009 = vmatprep.subr.mxu0 0.0
    %6010 = vmatpush1.xpose.msra.mxu0 0.0
    %6011 = vmatprep.subr.mxu0 0.0
    %6012 = vmatpush1.xpose.msra.mxu0 %v5979
    %6013 = vmatprep.subr.mxu0 0.0
    %6014 = vmatpush2.xpose.msra.mxu0 0.0
    %6015 = vmatprep.subr.mxu0 0.0
    %6016 = vmatpush2.xpose.msra.mxu0 0.0
    %6017 = vmatprep.subr.mxu0 0.0
    %6018 = vmatpush2.xpose.msra.mxu0 0.0
    %6019 = vmatprep.subr.mxu0 0.0
    %6020 = vmatpush2.xpose.msra.mxu0 0.0
    %6021 = vmatprep.subr.mxu0 0.0
    %6022 = vmatpush2.xpose.msra.mxu0 0.0
    %6023 = vmatprep.subr.mxu0 0.0
    %6024 = vmatpush2.xpose.msra.mxu0 0.0
    %6025 = vmatprep.subr.mxu0 0.0
    %6026 = vmatpush2.xpose.msra.mxu0 0.0
    %6027 = vmatprep.subr.mxu0 0.0
    %6028 = vmatpush2.xpose.msra.mxu0 0.0
    %6029 = vmatprep.subr.mxu0 0.0
    %6030 = vmatpush2.xpose.msra.mxu0 0.0
    %6031 = vmatprep.subr.mxu0 0.0
    %6032 = vmatpush2.xpose.msra.mxu0 0.0
    %6033 = vmatprep.subr.mxu0 0.0
    %6034 = vmatpush2.xpose.msra.mxu0 0.0
    %6035 = vmatprep.subr.mxu0 0.0
    %6036 = vmatpush2.xpose.msra.mxu0 0.0
    %6037 = vmatprep.subr.mxu0 0.0
    %6038 = vmatpush2.xpose.msra.mxu0 0.0
    %6039 = vmatprep.subr.mxu0 0.0
    %6040 = vmatpush2.xpose.msra.mxu0 0.0
    %6041 = vmatprep.subr.mxu0 0.0
    %6042 = vmatpush2.xpose.msra.mxu0 0.0
    %6043 = vmatprep.subr.mxu0 0.0
    %6044 = vmatpush2.xpose.msra.mxu0 0.0
    %6045 = vmatprep.mubr.f32.mxu0 0.0
    %6046 = vmatmul.mubr.f32.gmra.mxu0 %v5977
    %v6047 = vpop.f32.mrf.mxu0
    %v6048 = vadd.f32 0.0, %v6047
    %v6049 = vpop.f32.mrf.mxu0
    %6050 = vdwg.mxu0
    %6051 = vrot.lane.b32.xlu0 %v5718, 64
    %v6052 = vpop.permute.xlu0 %6051
    %6053 = vrot.lane.b32.xlu0 %v5052, 64
    %v6054 = vpop.permute.xlu0 %6053
    %v6055 = vsel %vm794, %v6052, 0
    %v6057 = vsel %vm794, %v6054, 0
    %6059 = vmatprep.subr.mxu0 0.0
    %6060 = vmatpush1.xpose.msra.mxu0 0.0
    %6061 = vmatprep.subr.mxu0 0.0
    %6062 = vmatpush1.xpose.msra.mxu0 0.0
    %6063 = vmatprep.subr.mxu0 0.0
    %6064 = vmatpush1.xpose.msra.mxu0 0.0
    %6065 = vmatprep.subr.mxu0 0.0
    %6066 = vmatpush1.xpose.msra.mxu0 0.0
    %6067 = vmatprep.subr.mxu0 0.0
    %6068 = vmatpush1.xpose.msra.mxu0 0.0
    %6069 = vmatprep.subr.mxu0 0.0
    %6070 = vmatpush1.xpose.msra.mxu0 0.0
    %6071 = vmatprep.subr.mxu0 0.0
    %6072 = vmatpush1.xpose.msra.mxu0 0.0
    %6073 = vmatprep.subr.mxu0 0.0
    %6074 = vmatpush1.xpose.msra.mxu0 0.0
    %6075 = vmatprep.subr.mxu0 0.0
    %6076 = vmatpush1.xpose.msra.mxu0 0.0
    %6077 = vmatprep.subr.mxu0 0.0
    %6078 = vmatpush1.xpose.msra.mxu0 0.0
    %6079 = vmatprep.subr.mxu0 0.0
    %6080 = vmatpush1.xpose.msra.mxu0 0.0
    %6081 = vmatprep.subr.mxu0 0.0
    %6082 = vmatpush1.xpose.msra.mxu0 0.0
    %6083 = vmatprep.subr.mxu0 0.0
    %6084 = vmatpush1.xpose.msra.mxu0 0.0
    %6085 = vmatprep.subr.mxu0 0.0
    %6086 = vmatpush1.xpose.msra.mxu0 0.0
    %6087 = vmatprep.subr.mxu0 0.0
    %6088 = vmatpush1.xpose.msra.mxu0 0.0
    %6089 = vmatprep.subr.mxu0 0.0
    %6090 = vmatpush1.xpose.msra.mxu0 %v6057
    %6091 = vmatprep.subr.mxu0 0.0
    %6092 = vmatpush2.xpose.msra.mxu0 0.0
    %6093 = vmatprep.subr.mxu0 0.0
    %6094 = vmatpush2.xpose.msra.mxu0 0.0
    %6095 = vmatprep.subr.mxu0 0.0
    %6096 = vmatpush2.xpose.msra.mxu0 0.0
    %6097 = vmatprep.subr.mxu0 0.0
    %6098 = vmatpush2.xpose.msra.mxu0 0.0
    %6099 = vmatprep.subr.mxu0 0.0
    %6100 = vmatpush2.xpose.msra.mxu0 0.0
    %6101 = vmatprep.subr.mxu0 0.0
    %6102 = vmatpush2.xpose.msra.mxu0 0.0
    %6103 = vmatprep.subr.mxu0 0.0
    %6104 = vmatpush2.xpose.msra.mxu0 0.0
    %6105 = vmatprep.subr.mxu0 0.0
    %6106 = vmatpush2.xpose.msra.mxu0 0.0
    %6107 = vmatprep.subr.mxu0 0.0
    %6108 = vmatpush2.xpose.msra.mxu0 0.0
    %6109 = vmatprep.subr.mxu0 0.0
    %6110 = vmatpush2.xpose.msra.mxu0 0.0
    %6111 = vmatprep.subr.mxu0 0.0
    %6112 = vmatpush2.xpose.msra.mxu0 0.0
    %6113 = vmatprep.subr.mxu0 0.0
    %6114 = vmatpush2.xpose.msra.mxu0 0.0
    %6115 = vmatprep.subr.mxu0 0.0
    %6116 = vmatpush2.xpose.msra.mxu0 0.0
    %6117 = vmatprep.subr.mxu0 0.0
    %6118 = vmatpush2.xpose.msra.mxu0 0.0
    %6119 = vmatprep.subr.mxu0 0.0
    %6120 = vmatpush2.xpose.msra.mxu0 0.0
    %6121 = vmatprep.subr.mxu0 0.0
    %6122 = vmatpush2.xpose.msra.mxu0 0.0
    %6123 = vmatprep.mubr.f32.mxu0 0.0
    %6124 = vmatmul.mubr.f32.gmra.mxu0 %v6055
    %v6125 = vpop.f32.mrf.mxu0
    %v6126 = vadd.f32 0.0, %v6125
    %v6127 = vpop.f32.mrf.mxu0
    %6128 = vdwg.mxu0
    %v6129 = vsel %vm5464, %v6048, -inf
    %6130 = vmax.xlane.f32.xlu0 %v6129
    %v6131 = vpop.xlane.xlu0 %6130
    %v6132 = vsel %vm5464, %v6126, -inf
    %6133 = vmax.xlane.f32.xlu0 %v6132
    %v6134 = vpop.xlane.xlu0 %6133
    %v6135 = vsub.f32 %v6048, %v6131
    %v6136 = vsub.f32 %v6126, %v6134
    %v6137 = vmul.f32 %v6135, 1.442695
    %v6138 = vpow.pop %v6137
    %v6139 = vmul.f32 %v6136, 1.442695
    %v6140 = vpow.pop %v6139
    %v6141 = vsel %vm5464, %v6138, 0.0
    %6142 = vadd.xlane.f32.xlu0 %v6141
    %v6143 = vpop.xlane.xlu0 %6142
    %v6144 = vsel %vm5464, %v6140, 0.0
    %6145 = vadd.xlane.f32.xlu0 %v6144
    %v6146 = vpop.xlane.xlu0 %6145
    %v6147 = vrcp.pop %v6143
    %v6148 = vrcp.pop %v6146
    %v6149 = vmul.f32 %v6138, %v6147
    %v6150 = vmul.f32 %v6140, %v6148
    %6151 = vrot.lane.b32.xlu0 %v5161, 64
    %v6152 = vpop.permute.xlu0 %6151
    %v6155 = vsel %vm947, %v6149, 0
    %6157 = vmatprep.subr.mxu0 0.0
    %6158 = vmatpush1.msra.mxu0 0.0
    %6159 = vmatprep.subr.mxu0 0.0
    %6160 = vmatpush1.msra.mxu0 0.0
    %6161 = vmatprep.subr.mxu0 0.0
    %6162 = vmatpush1.msra.mxu0 0.0
    %6163 = vmatprep.subr.mxu0 0.0
    %6164 = vmatpush1.msra.mxu0 0.0
    %6165 = vmatprep.subr.mxu0 0.0
    %6166 = vmatpush1.msra.mxu0 0.0
    %6167 = vmatprep.subr.mxu0 0.0
    %6168 = vmatpush1.msra.mxu0 0.0
    %6169 = vmatprep.subr.mxu0 0.0
    %6170 = vmatpush1.msra.mxu0 0.0
    %6171 = vmatprep.subr.mxu0 0.0
    %6172 = vmatpush1.msra.mxu0 0.0
    %6173 = vmatprep.subr.mxu0 0.0
    %6174 = vmatpush1.msra.mxu0 0.0
    %6175 = vmatprep.subr.mxu0 0.0
    %6176 = vmatpush1.msra.mxu0 0.0
    %6177 = vmatprep.subr.mxu0 0.0
    %6178 = vmatpush1.msra.mxu0 0.0
    %6179 = vmatprep.subr.mxu0 0.0
    %6180 = vmatpush1.msra.mxu0 0.0
    %6181 = vmatprep.subr.mxu0 0.0
    %6182 = vmatpush1.msra.mxu0 0.0
    %6183 = vmatprep.subr.mxu0 0.0
    %6184 = vmatpush1.msra.mxu0 0.0
    %6185 = vmatprep.subr.mxu0 0.0
    %6186 = vmatpush1.msra.mxu0 0.0
    %6187 = vmatprep.subr.mxu0 0.0
    %6188 = vmatpush1.msra.mxu0 %v6152
    %6189 = vmatprep.subr.mxu0 0.0
    %6190 = vmatpush2.msra.mxu0 0.0
    %6191 = vmatprep.subr.mxu0 0.0
    %6192 = vmatpush2.msra.mxu0 0.0
    %6193 = vmatprep.subr.mxu0 0.0
    %6194 = vmatpush2.msra.mxu0 0.0
    %6195 = vmatprep.subr.mxu0 0.0
    %6196 = vmatpush2.msra.mxu0 0.0
    %6197 = vmatprep.subr.mxu0 0.0
    %6198 = vmatpush2.msra.mxu0 0.0
    %6199 = vmatprep.subr.mxu0 0.0
    %6200 = vmatpush2.msra.mxu0 0.0
    %6201 = vmatprep.subr.mxu0 0.0
    %6202 = vmatpush2.msra.mxu0 0.0
    %6203 = vmatprep.subr.mxu0 0.0
    %6204 = vmatpush2.msra.mxu0 0.0
    %6205 = vmatprep.subr.mxu0 0.0
    %6206 = vmatpush2.msra.mxu0 0.0
    %6207 = vmatprep.subr.mxu0 0.0
    %6208 = vmatpush2.msra.mxu0 0.0
    %6209 = vmatprep.subr.mxu0 0.0
    %6210 = vmatpush2.msra.mxu0 0.0
    %6211 = vmatprep.subr.mxu0 0.0
    %6212 = vmatpush2.msra.mxu0 0.0
    %6213 = vmatprep.subr.mxu0 0.0
    %6214 = vmatpush2.msra.mxu0 0.0
    %6215 = vmatprep.subr.mxu0 0.0
    %6216 = vmatpush2.msra.mxu0 0.0
    %6217 = vmatprep.subr.mxu0 0.0
    %6218 = vmatpush2.msra.mxu0 0.0
    %6219 = vmatprep.subr.mxu0 0.0
    %6220 = vmatpush2.msra.mxu0 0.0
    %6221 = vmatprep.mubr.f32.mxu0 0.0
    %6222 = vmatmul.mubr.f32.gmra.mxu0 %v6155
    %v6223 = vpop.f32.mrf.mxu0
    %v6224 = vadd.f32 0.0, %v6223
    %v6225 = vpop.f32.mrf.mxu0
    %6226 = vdwg.mxu0
    %6227 = vrot.lane.b32.xlu0 %v5164, 64
    %v6228 = vpop.permute.xlu0 %6227
    %v6231 = vsel %vm947, %v6150, 0
    %6233 = vmatprep.subr.mxu0 0.0
    %6234 = vmatpush1.msra.mxu0 0.0
    %6235 = vmatprep.subr.mxu0 0.0
    %6236 = vmatpush1.msra.mxu0 0.0
    %6237 = vmatprep.subr.mxu0 0.0
    %6238 = vmatpush1.msra.mxu0 0.0
    %6239 = vmatprep.subr.mxu0 0.0
    %6240 = vmatpush1.msra.mxu0 0.0
    %6241 = vmatprep.subr.mxu0 0.0
    %6242 = vmatpush1.msra.mxu0 0.0
    %6243 = vmatprep.subr.mxu0 0.0
    %6244 = vmatpush1.msra.mxu0 0.0
    %6245 = vmatprep.subr.mxu0 0.0
    %6246 = vmatpush1.msra.mxu0 0.0
    %6247 = vmatprep.subr.mxu0 0.0
    %6248 = vmatpush1.msra.mxu0 0.0
    %6249 = vmatprep.subr.mxu0 0.0
    %6250 = vmatpush1.msra.mxu0 0.0
    %6251 = vmatprep.subr.mxu0 0.0
    %6252 = vmatpush1.msra.mxu0 0.0
    %6253 = vmatprep.subr.mxu0 0.0
    %6254 = vmatpush1.msra.mxu0 0.0
    %6255 = vmatprep.subr.mxu0 0.0
    %6256 = vmatpush1.msra.mxu0 0.0
    %6257 = vmatprep.subr.mxu0 0.0
    %6258 = vmatpush1.msra.mxu0 0.0
    %6259 = vmatprep.subr.mxu0 0.0
    %6260 = vmatpush1.msra.mxu0 0.0
    %6261 = vmatprep.subr.mxu0 0.0
    %6262 = vmatpush1.msra.mxu0 0.0
    %6263 = vmatprep.subr.mxu0 0.0
    %6264 = vmatpush1.msra.mxu0 %v6228
    %6265 = vmatprep.subr.mxu0 0.0
    %6266 = vmatpush2.msra.mxu0 0.0
    %6267 = vmatprep.subr.mxu0 0.0
    %6268 = vmatpush2.msra.mxu0 0.0
    %6269 = vmatprep.subr.mxu0 0.0
    %6270 = vmatpush2.msra.mxu0 0.0
    %6271 = vmatprep.subr.mxu0 0.0
    %6272 = vmatpush2.msra.mxu0 0.0
    %6273 = vmatprep.subr.mxu0 0.0
    %6274 = vmatpush2.msra.mxu0 0.0
    %6275 = vmatprep.subr.mxu0 0.0
    %6276 = vmatpush2.msra.mxu0 0.0
    %6277 = vmatprep.subr.mxu0 0.0
    %6278 = vmatpush2.msra.mxu0 0.0
    %6279 = vmatprep.subr.mxu0 0.0
    %6280 = vmatpush2.msra.mxu0 0.0
    %6281 = vmatprep.subr.mxu0 0.0
    %6282 = vmatpush2.msra.mxu0 0.0
    %6283 = vmatprep.subr.mxu0 0.0
    %6284 = vmatpush2.msra.mxu0 0.0
    %6285 = vmatprep.subr.mxu0 0.0
    %6286 = vmatpush2.msra.mxu0 0.0
    %6287 = vmatprep.subr.mxu0 0.0
    %6288 = vmatpush2.msra.mxu0 0.0
    %6289 = vmatprep.subr.mxu0 0.0
    %6290 = vmatpush2.msra.mxu0 0.0
    %6291 = vmatprep.subr.mxu0 0.0
    %6292 = vmatpush2.msra.mxu0 0.0
    %6293 = vmatprep.subr.mxu0 0.0
    %6294 = vmatpush2.msra.mxu0 0.0
    %6295 = vmatprep.subr.mxu0 0.0
    %6296 = vmatpush2.msra.mxu0 0.0
    %6297 = vmatprep.mubr.f32.mxu0 0.0
    %6298 = vmatmul.mubr.f32.gmra.mxu0 %v6231
    %v6299 = vpop.f32.mrf.mxu0
    %v6300 = vadd.f32 0.0, %v6299
    %v6301 = vpop.f32.mrf.mxu0
    %6302 = vdwg.mxu0
    %6303 = vrot.lane.b32.xlu0 %v5636, 32
    %v6304 = vpop.permute.xlu0 %6303
    %6305 = vrot.lane.b32.xlu0 %v5049, 32
    %v6306 = vpop.permute.xlu0 %6305
    %v6307 = vsel %vm794, %v6304, 0
    %v6309 = vsel %vm794, %v6306, 0
    %6311 = vmatprep.subr.mxu0 0.0
    %6312 = vmatpush1.xpose.msra.mxu0 0.0
    %6313 = vmatprep.subr.mxu0 0.0
    %6314 = vmatpush1.xpose.msra.mxu0 0.0
    %6315 = vmatprep.subr.mxu0 0.0
    %6316 = vmatpush1.xpose.msra.mxu0 0.0
    %6317 = vmatprep.subr.mxu0 0.0
    %6318 = vmatpush1.xpose.msra.mxu0 0.0
    %6319 = vmatprep.subr.mxu0 0.0
    %6320 = vmatpush1.xpose.msra.mxu0 0.0
    %6321 = vmatprep.subr.mxu0 0.0
    %6322 = vmatpush1.xpose.msra.mxu0 0.0
    %6323 = vmatprep.subr.mxu0 0.0
    %6324 = vmatpush1.xpose.msra.mxu0 0.0
    %6325 = vmatprep.subr.mxu0 0.0
    %6326 = vmatpush1.xpose.msra.mxu0 0.0
    %6327 = vmatprep.subr.mxu0 0.0
    %6328 = vmatpush1.xpose.msra.mxu0 0.0
    %6329 = vmatprep.subr.mxu0 0.0
    %6330 = vmatpush1.xpose.msra.mxu0 0.0
    %6331 = vmatprep.subr.mxu0 0.0
    %6332 = vmatpush1.xpose.msra.mxu0 0.0
    %6333 = vmatprep.subr.mxu0 0.0
    %6334 = vmatpush1.xpose.msra.mxu0 0.0
    %6335 = vmatprep.subr.mxu0 0.0
    %6336 = vmatpush1.xpose.msra.mxu0 0.0
    %6337 = vmatprep.subr.mxu0 0.0
    %6338 = vmatpush1.xpose.msra.mxu0 0.0
    %6339 = vmatprep.subr.mxu0 0.0
    %6340 = vmatpush1.xpose.msra.mxu0 0.0
    %6341 = vmatprep.subr.mxu0 0.0
    %6342 = vmatpush1.xpose.msra.mxu0 %v6309
    %6343 = vmatprep.subr.mxu0 0.0
    %6344 = vmatpush2.xpose.msra.mxu0 0.0
    %6345 = vmatprep.subr.mxu0 0.0
    %6346 = vmatpush2.xpose.msra.mxu0 0.0
    %6347 = vmatprep.subr.mxu0 0.0
    %6348 = vmatpush2.xpose.msra.mxu0 0.0
    %6349 = vmatprep.subr.mxu0 0.0
    %6350 = vmatpush2.xpose.msra.mxu0 0.0
    %6351 = vmatprep.subr.mxu0 0.0
    %6352 = vmatpush2.xpose.msra.mxu0 0.0
    %6353 = vmatprep.subr.mxu0 0.0
    %6354 = vmatpush2.xpose.msra.mxu0 0.0
    %6355 = vmatprep.subr.mxu0 0.0
    %6356 = vmatpush2.xpose.msra.mxu0 0.0
    %6357 = vmatprep.subr.mxu0 0.0
    %6358 = vmatpush2.xpose.msra.mxu0 0.0
    %6359 = vmatprep.subr.mxu0 0.0
    %6360 = vmatpush2.xpose.msra.mxu0 0.0
    %6361 = vmatprep.subr.mxu0 0.0
    %6362 = vmatpush2.xpose.msra.mxu0 0.0
    %6363 = vmatprep.subr.mxu0 0.0
    %6364 = vmatpush2.xpose.msra.mxu0 0.0
    %6365 = vmatprep.subr.mxu0 0.0
    %6366 = vmatpush2.xpose.msra.mxu0 0.0
    %6367 = vmatprep.subr.mxu0 0.0
    %6368 = vmatpush2.xpose.msra.mxu0 0.0
    %6369 = vmatprep.subr.mxu0 0.0
    %6370 = vmatpush2.xpose.msra.mxu0 0.0
    %6371 = vmatprep.subr.mxu0 0.0
    %6372 = vmatpush2.xpose.msra.mxu0 0.0
    %6373 = vmatprep.subr.mxu0 0.0
    %6374 = vmatpush2.xpose.msra.mxu0 0.0
    %6375 = vmatprep.mubr.f32.mxu0 0.0
    %6376 = vmatmul.mubr.f32.gmra.mxu0 %v6307
    %v6377 = vpop.f32.mrf.mxu0
    %v6378 = vadd.f32 0.0, %v6377
    %v6379 = vpop.f32.mrf.mxu0
    %6380 = vdwg.mxu0
    %6381 = vrot.lane.b32.xlu0 %v5718, 32
    %v6382 = vpop.permute.xlu0 %6381
    %6383 = vrot.lane.b32.xlu0 %v5052, 32
    %v6384 = vpop.permute.xlu0 %6383
    %v6385 = vsel %vm794, %v6382, 0
    %v6387 = vsel %vm794, %v6384, 0
    %6389 = vmatprep.subr.mxu0 0.0
    %6390 = vmatpush1.xpose.msra.mxu0 0.0
    %6391 = vmatprep.subr.mxu0 0.0
    %6392 = vmatpush1.xpose.msra.mxu0 0.0
    %6393 = vmatprep.subr.mxu0 0.0
    %6394 = vmatpush1.xpose.msra.mxu0 0.0
    %6395 = vmatprep.subr.mxu0 0.0
    %6396 = vmatpush1.xpose.msra.mxu0 0.0
    %6397 = vmatprep.subr.mxu0 0.0
    %6398 = vmatpush1.xpose.msra.mxu0 0.0
    %6399 = vmatprep.subr.mxu0 0.0
    %6400 = vmatpush1.xpose.msra.mxu0 0.0
    %6401 = vmatprep.subr.mxu0 0.0
    %6402 = vmatpush1.xpose.msra.mxu0 0.0
    %6403 = vmatprep.subr.mxu0 0.0
    %6404 = vmatpush1.xpose.msra.mxu0 0.0
    %6405 = vmatprep.subr.mxu0 0.0
    %6406 = vmatpush1.xpose.msra.mxu0 0.0
    %6407 = vmatprep.subr.mxu0 0.0
    %6408 = vmatpush1.xpose.msra.mxu0 0.0
    %6409 = vmatprep.subr.mxu0 0.0
    %6410 = vmatpush1.xpose.msra.mxu0 0.0
    %6411 = vmatprep.subr.mxu0 0.0
    %6412 = vmatpush1.xpose.msra.mxu0 0.0
    %6413 = vmatprep.subr.mxu0 0.0
    %6414 = vmatpush1.xpose.msra.mxu0 0.0
    %6415 = vmatprep.subr.mxu0 0.0
    %6416 = vmatpush1.xpose.msra.mxu0 0.0
    %6417 = vmatprep.subr.mxu0 0.0
    %6418 = vmatpush1.xpose.msra.mxu0 0.0
    %6419 = vmatprep.subr.mxu0 0.0
    %6420 = vmatpush1.xpose.msra.mxu0 %v6387
    %6421 = vmatprep.subr.mxu0 0.0
    %6422 = vmatpush2.xpose.msra.mxu0 0.0
    %6423 = vmatprep.subr.mxu0 0.0
    %6424 = vmatpush2.xpose.msra.mxu0 0.0
    %6425 = vmatprep.subr.mxu0 0.0
    %6426 = vmatpush2.xpose.msra.mxu0 0.0
    %6427 = vmatprep.subr.mxu0 0.0
    %6428 = vmatpush2.xpose.msra.mxu0 0.0
    %6429 = vmatprep.subr.mxu0 0.0
    %6430 = vmatpush2.xpose.msra.mxu0 0.0
    %6431 = vmatprep.subr.mxu0 0.0
    %6432 = vmatpush2.xpose.msra.mxu0 0.0
    %6433 = vmatprep.subr.mxu0 0.0
    %6434 = vmatpush2.xpose.msra.mxu0 0.0
    %6435 = vmatprep.subr.mxu0 0.0
    %6436 = vmatpush2.xpose.msra.mxu0 0.0
    %6437 = vmatprep.subr.mxu0 0.0
    %6438 = vmatpush2.xpose.msra.mxu0 0.0
    %6439 = vmatprep.subr.mxu0 0.0
    %6440 = vmatpush2.xpose.msra.mxu0 0.0
    %6441 = vmatprep.subr.mxu0 0.0
    %6442 = vmatpush2.xpose.msra.mxu0 0.0
    %6443 = vmatprep.subr.mxu0 0.0
    %6444 = vmatpush2.xpose.msra.mxu0 0.0
    %6445 = vmatprep.subr.mxu0 0.0
    %6446 = vmatpush2.xpose.msra.mxu0 0.0
    %6447 = vmatprep.subr.mxu0 0.0
    %6448 = vmatpush2.xpose.msra.mxu0 0.0
    %6449 = vmatprep.subr.mxu0 0.0
    %6450 = vmatpush2.xpose.msra.mxu0 0.0
    %6451 = vmatprep.subr.mxu0 0.0
    %6452 = vmatpush2.xpose.msra.mxu0 0.0
    %6453 = vmatprep.mubr.f32.mxu0 0.0
    %6454 = vmatmul.mubr.f32.gmra.mxu0 %v6385
    %v6455 = vpop.f32.mrf.mxu0
    %v6456 = vadd.f32 0.0, %v6455
    %v6457 = vpop.f32.mrf.mxu0
    %6458 = vdwg.mxu0
    %v6459 = vsel %vm5464, %v6378, -inf
    %6460 = vmax.xlane.f32.xlu0 %v6459
    %v6461 = vpop.xlane.xlu0 %6460
    %v6462 = vsel %vm5464, %v6456, -inf
    %6463 = vmax.xlane.f32.xlu0 %v6462
    %v6464 = vpop.xlane.xlu0 %6463
    %v6465 = vsub.f32 %v6378, %v6461
    %v6466 = vsub.f32 %v6456, %v6464
    %v6467 = vmul.f32 %v6465, 1.442695
    %v6468 = vpow.pop %v6467
    %v6469 = vmul.f32 %v6466, 1.442695
    %v6470 = vpow.pop %v6469
    %v6471 = vsel %vm5464, %v6468, 0.0
    %6472 = vadd.xlane.f32.xlu0 %v6471
    %v6473 = vpop.xlane.xlu0 %6472
    %v6474 = vsel %vm5464, %v6470, 0.0
    %6475 = vadd.xlane.f32.xlu0 %v6474
    %v6476 = vpop.xlane.xlu0 %6475
    %v6477 = vrcp.pop %v6473
    %v6478 = vrcp.pop %v6476
    %v6479 = vmul.f32 %v6468, %v6477
    %v6480 = vmul.f32 %v6470, %v6478
    %6481 = vrot.lane.b32.xlu0 %v5161, 32
    %v6482 = vpop.permute.xlu0 %6481
    %v6485 = vsel %vm947, %v6479, 0
    %6487 = vmatprep.subr.mxu0 0.0
    %6488 = vmatpush1.msra.mxu0 0.0
    %6489 = vmatprep.subr.mxu0 0.0
    %6490 = vmatpush1.msra.mxu0 0.0
    %6491 = vmatprep.subr.mxu0 0.0
    %6492 = vmatpush1.msra.mxu0 0.0
    %6493 = vmatprep.subr.mxu0 0.0
    %6494 = vmatpush1.msra.mxu0 0.0
    %6495 = vmatprep.subr.mxu0 0.0
    %6496 = vmatpush1.msra.mxu0 0.0
    %6497 = vmatprep.subr.mxu0 0.0
    %6498 = vmatpush1.msra.mxu0 0.0
    %6499 = vmatprep.subr.mxu0 0.0
    %6500 = vmatpush1.msra.mxu0 0.0
    %6501 = vmatprep.subr.mxu0 0.0
    %6502 = vmatpush1.msra.mxu0 0.0
    %6503 = vmatprep.subr.mxu0 0.0
    %6504 = vmatpush1.msra.mxu0 0.0
    %6505 = vmatprep.subr.mxu0 0.0
    %6506 = vmatpush1.msra.mxu0 0.0
    %6507 = vmatprep.subr.mxu0 0.0
    %6508 = vmatpush1.msra.mxu0 0.0
    %6509 = vmatprep.subr.mxu0 0.0
    %6510 = vmatpush1.msra.mxu0 0.0
    %6511 = vmatprep.subr.mxu0 0.0
    %6512 = vmatpush1.msra.mxu0 0.0
    %6513 = vmatprep.subr.mxu0 0.0
    %6514 = vmatpush1.msra.mxu0 0.0
    %6515 = vmatprep.subr.mxu0 0.0
    %6516 = vmatpush1.msra.mxu0 0.0
    %6517 = vmatprep.subr.mxu0 0.0
    %6518 = vmatpush1.msra.mxu0 %v6482
    %6519 = vmatprep.subr.mxu0 0.0
    %6520 = vmatpush2.msra.mxu0 0.0
    %6521 = vmatprep.subr.mxu0 0.0
    %6522 = vmatpush2.msra.mxu0 0.0
    %6523 = vmatprep.subr.mxu0 0.0
    %6524 = vmatpush2.msra.mxu0 0.0
    %6525 = vmatprep.subr.mxu0 0.0
    %6526 = vmatpush2.msra.mxu0 0.0
    %6527 = vmatprep.subr.mxu0 0.0
    %6528 = vmatpush2.msra.mxu0 0.0
    %6529 = vmatprep.subr.mxu0 0.0
    %6530 = vmatpush2.msra.mxu0 0.0
    %6531 = vmatprep.subr.mxu0 0.0
    %6532 = vmatpush2.msra.mxu0 0.0
    %6533 = vmatprep.subr.mxu0 0.0
    %6534 = vmatpush2.msra.mxu0 0.0
    %6535 = vmatprep.subr.mxu0 0.0
    %6536 = vmatpush2.msra.mxu0 0.0
    %6537 = vmatprep.subr.mxu0 0.0
    %6538 = vmatpush2.msra.mxu0 0.0
    %6539 = vmatprep.subr.mxu0 0.0
    %6540 = vmatpush2.msra.mxu0 0.0
    %6541 = vmatprep.subr.mxu0 0.0
    %6542 = vmatpush2.msra.mxu0 0.0
    %6543 = vmatprep.subr.mxu0 0.0
    %6544 = vmatpush2.msra.mxu0 0.0
    %6545 = vmatprep.subr.mxu0 0.0
    %6546 = vmatpush2.msra.mxu0 0.0
    %6547 = vmatprep.subr.mxu0 0.0
    %6548 = vmatpush2.msra.mxu0 0.0
    %6549 = vmatprep.subr.mxu0 0.0
    %6550 = vmatpush2.msra.mxu0 0.0
    %6551 = vmatprep.mubr.f32.mxu0 0.0
    %6552 = vmatmul.mubr.f32.gmra.mxu0 %v6485
    %v6553 = vpop.f32.mrf.mxu0
    %v6554 = vadd.f32 0.0, %v6553
    %v6555 = vpop.f32.mrf.mxu0
    %6556 = vdwg.mxu0
    %6557 = vrot.lane.b32.xlu0 %v5164, 32
    %v6558 = vpop.permute.xlu0 %6557
    %v6561 = vsel %vm947, %v6480, 0
    %6563 = vmatprep.subr.mxu0 0.0
    %6564 = vmatpush1.msra.mxu0 0.0
    %6565 = vmatprep.subr.mxu0 0.0
    %6566 = vmatpush1.msra.mxu0 0.0
    %6567 = vmatprep.subr.mxu0 0.0
    %6568 = vmatpush1.msra.mxu0 0.0
    %6569 = vmatprep.subr.mxu0 0.0
    %6570 = vmatpush1.msra.mxu0 0.0
    %6571 = vmatprep.subr.mxu0 0.0
    %6572 = vmatpush1.msra.mxu0 0.0
    %6573 = vmatprep.subr.mxu0 0.0
    %6574 = vmatpush1.msra.mxu0 0.0
    %6575 = vmatprep.subr.mxu0 0.0
    %6576 = vmatpush1.msra.mxu0 0.0
    %6577 = vmatprep.subr.mxu0 0.0
    %6578 = vmatpush1.msra.mxu0 0.0
    %6579 = vmatprep.subr.mxu0 0.0
    %6580 = vmatpush1.msra.mxu0 0.0
    %6581 = vmatprep.subr.mxu0 0.0
    %6582 = vmatpush1.msra.mxu0 0.0
    %6583 = vmatprep.subr.mxu0 0.0
    %6584 = vmatpush1.msra.mxu0 0.0
    %6585 = vmatprep.subr.mxu0 0.0
    %6586 = vmatpush1.msra.mxu0 0.0
    %6587 = vmatprep.subr.mxu0 0.0
    %6588 = vmatpush1.msra.mxu0 0.0
    %6589 = vmatprep.subr.mxu0 0.0
    %6590 = vmatpush1.msra.mxu0 0.0
    %6591 = vmatprep.subr.mxu0 0.0
    %6592 = vmatpush1.msra.mxu0 0.0
    %6593 = vmatprep.subr.mxu0 0.0
    %6594 = vmatpush1.msra.mxu0 %v6558
    %6595 = vmatprep.subr.mxu0 0.0
    %6596 = vmatpush2.msra.mxu0 0.0
    %6597 = vmatprep.subr.mxu0 0.0
    %6598 = vmatpush2.msra.mxu0 0.0
    %6599 = vmatprep.subr.mxu0 0.0
    %6600 = vmatpush2.msra.mxu0 0.0
    %6601 = vmatprep.subr.mxu0 0.0
    %6602 = vmatpush2.msra.mxu0 0.0
    %6603 = vmatprep.subr.mxu0 0.0
    %6604 = vmatpush2.msra.mxu0 0.0
    %6605 = vmatprep.subr.mxu0 0.0
    %6606 = vmatpush2.msra.mxu0 0.0
    %6607 = vmatprep.subr.mxu0 0.0
    %6608 = vmatpush2.msra.mxu0 0.0
    %6609 = vmatprep.subr.mxu0 0.0
    %6610 = vmatpush2.msra.mxu0 0.0
    %6611 = vmatprep.subr.mxu0 0.0
    %6612 = vmatpush2.msra.mxu0 0.0
    %6613 = vmatprep.subr.mxu0 0.0
    %6614 = vmatpush2.msra.mxu0 0.0
    %6615 = vmatprep.subr.mxu0 0.0
    %6616 = vmatpush2.msra.mxu0 0.0
    %6617 = vmatprep.subr.mxu0 0.0
    %6618 = vmatpush2.msra.mxu0 0.0
    %6619 = vmatprep.subr.mxu0 0.0
    %6620 = vmatpush2.msra.mxu0 0.0
    %6621 = vmatprep.subr.mxu0 0.0
    %6622 = vmatpush2.msra.mxu0 0.0
    %6623 = vmatprep.subr.mxu0 0.0
    %6624 = vmatpush2.msra.mxu0 0.0
    %6625 = vmatprep.subr.mxu0 0.0
    %6626 = vmatpush2.msra.mxu0 0.0
    %6627 = vmatprep.mubr.f32.mxu0 0.0
    %6628 = vmatmul.mubr.f32.gmra.mxu0 %v6561
    %v6629 = vpop.f32.mrf.mxu0
    %v6630 = vadd.f32 0.0, %v6629
    %v6631 = vpop.f32.mrf.mxu0
    %6632 = vdwg.mxu0
    %6635 = vrot.lane.b32.xlu0 %v5893, 32
    %v6636 = vpop.permute.xlu0 %6635
    %6637 = vrot.lane.b32.xlu0 %v5970, 32
    %v6638 = vpop.permute.xlu0 %6637
    %6643 = vrot.lane.b32.xlu0 %v6224, 64
    %v6644 = vpop.permute.xlu0 %6643
    %6645 = vrot.lane.b32.xlu0 %v6300, 64
    %v6646 = vpop.permute.xlu0 %6645
    %6651 = vrot.lane.b32.xlu0 %v6554, 96
    %v6652 = vpop.permute.xlu0 %6651
    %6653 = vrot.lane.b32.xlu0 %v6630, 96
    %v6654 = vpop.permute.xlu0 %6653
    %v6657 = vsel %vm794, %v5557, %v6636
    %v6658 = vsel %vm794, %v5630, %v6638
    %v6659 = vsel %vm2134, %v6657, %v6644
    %v6660 = vsel %vm2134, %v6658, %v6646
    %v6661 = vsel %vm2137, %v6659, %v6652
    %v6662 = vsel %vm2137, %v6660, %v6654
    %v6663 = vpack.c.bf16 %v6661, %v6661
    %v6664 = vpack.c.bf16 %v6662, %v6662
    %v6665 = vld [vmem:[#allocation34] sm:$0xf]
    %v6666 = vld [vmem:[#allocation34 + $0x4] sm:$0xf]
    %v6667 = vld [vmem:[#allocation34 + $0x8] sm:$0xf]
    %v6668 = vld [vmem:[#allocation34 + $0xc] sm:$0xf]
    %v6669 = vld [vmem:[#allocation34 + $0x10] sm:$0xf]
    %v6670 = vld [vmem:[#allocation34 + $0x14] sm:$0xf]
    %v6671 = vld [vmem:[#allocation34 + $0x18] sm:$0xf]
    %v6672 = vld [vmem:[#allocation34 + $0x1c] sm:$0xf]
    %v6673 = vld [vmem:[#allocation34 + $0x20] sm:$0xf]
    %v6674 = vld [vmem:[#allocation34 + $0x24] sm:$0xf]
    %v6675 = vld [vmem:[#allocation34 + $0x28] sm:$0xf]
    %v6676 = vld [vmem:[#allocation34 + $0x2c] sm:$0xf]
    %v6677 = vld [vmem:[#allocation34 + $0x30] sm:$0xf]
    %v6678 = vld [vmem:[#allocation34 + $0x34] sm:$0xf]
    %v6679 = vld [vmem:[#allocation34 + $0x38] sm:$0xf]
    %v6680 = vld [vmem:[#allocation34 + $0x3c] sm:$0xf]
    %v6681 = vld [vmem:[%s49] sm:$0x1]
    %v6683 = vlaneseq
    %v6684 = vshrl.u32 %v6683, 7
    %v6685 = vsub.s32 0, %v6684
    %v6686 = vrot.slane %v6681, %v6685
    %v6690 = vunpack.c.l.b16 %v6663
    %v6691 = vunpack.c.l.b16 %v6664
    %v6692 = vrot.slane %v6691, 7
    %v6693 = vsel %vm5198, %v6692, %v6690
    %v6694 = vpack.c.b16 %v6693, %v6693
    %v6712 = vunpack.c.l.b16 %v6665
    %v6713 = vunpack.c.l.b16 %v6666
    %v6714 = vunpack.c.l.b16 %v6667
    %v6715 = vunpack.c.l.b16 %v6668
    %v6716 = vunpack.c.l.b16 %v6669
    %v6717 = vunpack.c.l.b16 %v6670
    %v6718 = vunpack.c.l.b16 %v6671
    %v6719 = vunpack.c.l.b16 %v6672
    %v6720 = vunpack.c.l.b16 %v6673
    %v6721 = vunpack.c.l.b16 %v6674
    %v6722 = vunpack.c.l.b16 %v6675
    %v6723 = vunpack.c.l.b16 %v6676
    %v6724 = vunpack.c.l.b16 %v6677
    %v6725 = vunpack.c.l.b16 %v6678
    %v6726 = vunpack.c.l.b16 %v6679
    %v6727 = vunpack.c.l.b16 %v6680
    %v6728 = vpack.c.b16 %v6713, %v6712
    %v6729 = vpack.c.b16 %v6715, %v6714
    %v6730 = vpack.c.b16 %v6717, %v6716
    %v6731 = vpack.c.b16 %v6719, %v6718
    %v6732 = vpack.c.b16 %v6721, %v6720
    %v6733 = vpack.c.b16 %v6723, %v6722
    %v6734 = vpack.c.b16 %v6725, %v6724
    %v6735 = vpack.c.b16 %v6727, %v6726
    %6744 = vmatprep.subr.bf16.mxu0 0
    %6745 = vmatpush1.bf16.msra.mxu0 %v6735
    %6746 = vmatprep.subr.bf16.mxu0 0
    %6747 = vmatpush1.bf16.msra.mxu0 %v6734
    %6748 = vmatprep.subr.bf16.mxu0 0
    %6749 = vmatpush1.bf16.msra.mxu0 %v6733
    %6750 = vmatprep.subr.bf16.mxu0 0
    %6751 = vmatpush1.bf16.msra.mxu0 %v6732
    %6752 = vmatprep.subr.bf16.mxu0 0
    %6753 = vmatpush1.bf16.msra.mxu0 %v6731
    %6754 = vmatprep.subr.bf16.mxu0 0
    %6755 = vmatpush1.bf16.msra.mxu0 %v6730
    %6756 = vmatprep.subr.bf16.mxu0 0
    %6757 = vmatpush1.bf16.msra.mxu0 %v6729
    %6758 = vmatprep.subr.bf16.mxu0 0
    %6759 = vmatpush1.bf16.msra.mxu0 %v6728
    %6760 = vmatprep.subr.bf16.mxu0 0
    %6761 = vmatpush2.bf16.msra.mxu0 0
    %6762 = vmatprep.subr.bf16.mxu0 0
    %6763 = vmatpush2.bf16.msra.mxu0 0
    %6764 = vmatprep.subr.bf16.mxu0 0
    %6765 = vmatpush2.bf16.msra.mxu0 0
    %6766 = vmatprep.subr.bf16.mxu0 0
    %6767 = vmatpush2.bf16.msra.mxu0 0
    %6768 = vmatprep.subr.bf16.mxu0 0
    %6769 = vmatpush2.bf16.msra.mxu0 0
    %6770 = vmatprep.subr.bf16.mxu0 0
    %6771 = vmatpush2.bf16.msra.mxu0 0
    %6772 = vmatprep.subr.bf16.mxu0 0
    %6773 = vmatpush2.bf16.msra.mxu0 0
    %6774 = vmatprep.subr.bf16.mxu0 0
    %6775 = vmatpush2.bf16.msra.mxu0 0
    %6776 = vmatprep.mubr.bf16.mxu0 0
    %6777 = vmatmul.mubr.bf16.gmra.mxu0 %v6694
    %v6778 = vpop.f32.mrf.mxu0
    %v6779 = vadd.f32 %v6686, %v6778
    %v6780 = vpop.f32.mrf.mxu0
    %v6781 = vpop.f32.mrf.mxu0
    %v6782 = vpop.f32.mrf.mxu0
    %6783 = vdwg.mxu0
    %v6785 = vrot.slane %v6779, 1
    %v6786 = vrot.slane %v6779, 2
    %v6789 = vadd.f32 %v4940, %v6785
    %v6790 = vadd.f32 %v4941, %v6786
    %v6791 = vld [vmem:[%s51] sm:$0x1]
    %v6792 = vld [vmem:[%s53] sm:$0x1]
    %v6795 = vrot.slane %v6790, 7
    %vm6798 = vcmask 1047559
    %v6799 = vsel %vm6798, %v6789, 0.0
    %6800 = vadd.xlane.f32.xlu0 %v6799
    %v6801 = vpop.xlane.xlu0 %6800
    %vm6802 = vcmask 1040384
    %v6803 = vsel %vm6802, %v6795, 0.0
    %6804 = vadd.xlane.f32.xlu0 %v6803
    %v6805 = vpop.xlane.xlu0 %6804
    %v6806 = vmul.f32 %v6801, %v2261
    %v6807 = vmul.f32 %v6805, %v2261
    %v6810 = vrot.slane %v6807, 1
    %v6813 = vsub.f32 %v6789, %v6806
    %v6814 = vsub.f32 %v6790, %v6810
    %v6815 = vmul.f32 %v6813, %v6813
    %v6816 = vmul.f32 %v6814, %v6814
    %v6819 = vrot.slane %v6816, 7
    %v6822 = vsel %vm6798, %v6815, 0.0
    %6823 = vadd.xlane.f32.xlu0 %v6822
    %v6824 = vpop.xlane.xlu0 %6823
    %v6825 = vsel %vm6802, %v6819, 0.0
    %6826 = vadd.xlane.f32.xlu0 %v6825
    %v6827 = vpop.xlane.xlu0 %6826
    %v6828 = vmul.f32 %v6824, %v2261
    %v6829 = vmul.f32 %v6827, %v2261
    %v6830 = vadd.f32 %v6828, 1e-05
    %v6831 = vadd.f32 %v6829, 1e-05
    %v6832 = vrsqrt.pop %v6830
    %v6833 = vrsqrt.pop %v6831
    %v6836 = vrot.slane %v6833, 1
    %v6839 = vmul.f32 %v6813, %v6832
    %v6840 = vmul.f32 %v6814, %v6836
    %v6842 = vlaneseq
    %v6843 = vshrl.u32 %v6842, 7
    %v6844 = vsub.s32 0, %v6843
    %v6845 = vrot.slane %v6791, %v6844
    %v6847 = vmul.f32 %v6839, %v6845
    %v6848 = vmul.f32 %v6840, %v6845
    %v6850 = vlaneseq
    %v6851 = vshrl.u32 %v6850, 7
    %v6852 = vsub.s32 0, %v6851
    %v6853 = vrot.slane %v6792, %v6852
    %v6855 = vadd.f32 %v6847, %v6853
    %v6856 = vadd.f32 %v6848, %v6853
    %v6857 = vpack.c.bf16 %v6855, %v6855
    %v6858 = vpack.c.bf16 %v6856, %v6856
    %v6859 = vld [vmem:[#allocation35] sm:$0xff]
    %v6860 = vld [vmem:[#allocation35 + $0x8] sm:$0xff]
    %v6861 = vld [vmem:[#allocation35 + $0x10] sm:$0xff]
    %v6862 = vld [vmem:[#allocation35 + $0x18] sm:$0xff]
    %v6863 = vld [vmem:[#allocation35 + $0x20] sm:$0xff]
    %v6864 = vld [vmem:[#allocation35 + $0x28] sm:$0xff]
    %v6865 = vld [vmem:[#allocation35 + $0x30] sm:$0xff]
    %v6866 = vld [vmem:[#allocation35 + $0x38] sm:$0xff]
    %v6867 = vld [vmem:[#allocation35 + $0x40] sm:$0xff]
    %v6868 = vld [vmem:[#allocation35 + $0x48] sm:$0xff]
    %v6869 = vld [vmem:[#allocation35 + $0x50] sm:$0xff]
    %v6870 = vld [vmem:[#allocation35 + $0x58] sm:$0xff]
    %v6871 = vld [vmem:[#allocation35 + $0x60] sm:$0xff]
    %v6872 = vld [vmem:[#allocation35 + $0x68] sm:$0xff]
    %v6873 = vld [vmem:[#allocation35 + $0x70] sm:$0xff]
    %v6874 = vld [vmem:[#allocation35 + $0x78] sm:$0xff]
    %v6875 = vld [vmem:[#allocation35 + $0x80] sm:$0xff]
    %v6876 = vld [vmem:[#allocation35 + $0x88] sm:$0xff]
    %v6877 = vld [vmem:[#allocation35 + $0x90] sm:$0xff]
    %v6878 = vld [vmem:[#allocation35 + $0x98] sm:$0xff]
    %v6879 = vld [vmem:[#allocation35 + $0xa0] sm:$0xff]
    %v6880 = vld [vmem:[#allocation35 + $0xa8] sm:$0xff]
    %v6881 = vld [vmem:[#allocation35 + $0xb0] sm:$0xff]
    %v6882 = vld [vmem:[#allocation35 + $0xb8] sm:$0xff]
    %v6883 = vld [vmem:[#allocation35 + $0xc0] sm:$0xff]
    %v6884 = vld [vmem:[#allocation35 + $0xc8] sm:$0xff]
    %v6885 = vld [vmem:[#allocation35 + $0xd0] sm:$0xff]
    %v6886 = vld [vmem:[#allocation35 + $0xd8] sm:$0xff]
    %v6887 = vld [vmem:[#allocation35 + $0xe0] sm:$0xff]
    %v6888 = vld [vmem:[#allocation35 + $0xe8] sm:$0xff]
    %v6889 = vld [vmem:[#allocation35 + $0xf0] sm:$0xff]
    %v6890 = vld [vmem:[#allocation35 + $0xf8] sm:$0xff]
    %v6891 = vld [vmem:[#allocation35 + $0x100] sm:$0xff]
    %v6892 = vld [vmem:[#allocation35 + $0x108] sm:$0xff]
    %v6893 = vld [vmem:[#allocation35 + $0x110] sm:$0xff]
    %v6894 = vld [vmem:[#allocation35 + $0x118] sm:$0xff]
    %v6895 = vld [vmem:[#allocation35 + $0x120] sm:$0xff]
    %v6896 = vld [vmem:[#allocation35 + $0x128] sm:$0xff]
    %v6897 = vld [vmem:[#allocation35 + $0x130] sm:$0xff]
    %v6898 = vld [vmem:[#allocation35 + $0x138] sm:$0xff]
    %v6899 = vld [vmem:[#allocation35 + $0x140] sm:$0xff]
    %v6900 = vld [vmem:[#allocation35 + $0x148] sm:$0xff]
    %v6901 = vld [vmem:[#allocation35 + $0x150] sm:$0xff]
    %v6902 = vld [vmem:[#allocation35 + $0x158] sm:$0xff]
    %v6903 = vld [vmem:[#allocation35 + $0x160] sm:$0xff]
    %v6904 = vld [vmem:[#allocation35 + $0x168] sm:$0xff]
    %v6905 = vld [vmem:[#allocation35 + $0x170] sm:$0xff]
    %v6906 = vld [vmem:[#allocation35 + $0x178] sm:$0xff]
    %v6907 = vld [vmem:[#allocation35 + $0x180] sm:$0xff]
    %v6908 = vld [vmem:[#allocation35 + $0x188] sm:$0xff]
    %v6909 = vld [vmem:[#allocation35 + $0x190] sm:$0xff]
    %v6910 = vld [vmem:[#allocation35 + $0x198] sm:$0xff]
    %v6911 = vld [vmem:[#allocation35 + $0x1a0] sm:$0xff]
    %v6912 = vld [vmem:[#allocation35 + $0x1a8] sm:$0xff]
    %v6913 = vld [vmem:[#allocation35 + $0x1b0] sm:$0xff]
    %v6914 = vld [vmem:[#allocation35 + $0x1b8] sm:$0xff]
    %v6915 = vld [vmem:[#allocation35 + $0x1c0] sm:$0xff]
    %v6916 = vld [vmem:[#allocation35 + $0x1c8] sm:$0xff]
    %v6917 = vld [vmem:[#allocation35 + $0x1d0] sm:$0xff]
    %v6918 = vld [vmem:[#allocation35 + $0x1d8] sm:$0xff]
    %v6919 = vld [vmem:[#allocation35 + $0x1e0] sm:$0xff]
    %v6920 = vld [vmem:[#allocation35 + $0x1e8] sm:$0xff]
    %v6921 = vld [vmem:[#allocation35 + $0x1f0] sm:$0xff]
    %v6922 = vld [vmem:[#allocation35 + $0x1f8] sm:$0xff]
    %v6923 = vld [vmem:[#allocation35 + $0x200] sm:$0xff]
    %v6924 = vld [vmem:[#allocation35 + $0x208] sm:$0xff]
    %v6925 = vld [vmem:[#allocation35 + $0x210] sm:$0xff]
    %v6926 = vld [vmem:[#allocation35 + $0x218] sm:$0xff]
    %v6927 = vld [vmem:[#allocation35 + $0x220] sm:$0xff]
    %v6928 = vld [vmem:[#allocation35 + $0x228] sm:$0xff]
    %v6929 = vld [vmem:[#allocation35 + $0x230] sm:$0xff]
    %v6930 = vld [vmem:[#allocation35 + $0x238] sm:$0xff]
    %v6931 = vld [vmem:[#allocation35 + $0x240] sm:$0xff]
    %v6932 = vld [vmem:[#allocation35 + $0x248] sm:$0xff]
    %v6933 = vld [vmem:[#allocation35 + $0x250] sm:$0xff]
    %v6934 = vld [vmem:[#allocation35 + $0x258] sm:$0xff]
    %v6935 = vld [vmem:[#allocation35 + $0x260] sm:$0xff]
    %v6936 = vld [vmem:[#allocation35 + $0x268] sm:$0xff]
    %v6937 = vld [vmem:[#allocation35 + $0x270] sm:$0xff]
    %v6938 = vld [vmem:[#allocation35 + $0x278] sm:$0xff]
    %v6939 = vld [vmem:[#allocation35 + $0x280] sm:$0xff]
    %v6940 = vld [vmem:[#allocation35 + $0x288] sm:$0xff]
    %v6941 = vld [vmem:[#allocation35 + $0x290] sm:$0xff]
    %v6942 = vld [vmem:[#allocation35 + $0x298] sm:$0xff]
    %v6943 = vld [vmem:[#allocation35 + $0x2a0] sm:$0xff]
    %v6944 = vld [vmem:[#allocation35 + $0x2a8] sm:$0xff]
    %v6945 = vld [vmem:[#allocation35 + $0x2b0] sm:$0xff]
    %v6946 = vld [vmem:[#allocation35 + $0x2b8] sm:$0xff]
    %v6947 = vld [vmem:[#allocation35 + $0x2c0] sm:$0xff]
    %v6948 = vld [vmem:[#allocation35 + $0x2c8] sm:$0xff]
    %v6949 = vld [vmem:[#allocation35 + $0x2d0] sm:$0xff]
    %v6950 = vld [vmem:[#allocation35 + $0x2d8] sm:$0xff]
    %v6951 = vld [vmem:[#allocation35 + $0x2e0] sm:$0xff]
    %v6952 = vld [vmem:[#allocation35 + $0x2e8] sm:$0xff]
    %v6953 = vld [vmem:[#allocation35 + $0x2f0] sm:$0xff]
    %v6954 = vld [vmem:[#allocation35 + $0x2f8] sm:$0xff]
    %v6955 = vld [vmem:[#allocation35 + $0x300] sm:$0xff]
    %v6956 = vld [vmem:[#allocation35 + $0x308] sm:$0xff]
    %v6957 = vld [vmem:[#allocation35 + $0x310] sm:$0xff]
    %v6958 = vld [vmem:[#allocation35 + $0x318] sm:$0xff]
    %v6959 = vld [vmem:[#allocation35 + $0x320] sm:$0xff]
    %v6960 = vld [vmem:[#allocation35 + $0x328] sm:$0xff]
    %v6961 = vld [vmem:[#allocation35 + $0x330] sm:$0xff]
    %v6962 = vld [vmem:[#allocation35 + $0x338] sm:$0xff]
    %v6963 = vld [vmem:[#allocation35 + $0x340] sm:$0xff]
    %v6964 = vld [vmem:[#allocation35 + $0x348] sm:$0xff]
    %v6965 = vld [vmem:[#allocation35 + $0x350] sm:$0xff]
    %v6966 = vld [vmem:[#allocation35 + $0x358] sm:$0xff]
    %v6967 = vld [vmem:[#allocation35 + $0x360] sm:$0xff]
    %v6968 = vld [vmem:[#allocation35 + $0x368] sm:$0xff]
    %v6969 = vld [vmem:[#allocation35 + $0x370] sm:$0xff]
    %v6970 = vld [vmem:[#allocation35 + $0x378] sm:$0xff]
    %v6971 = vld [vmem:[#allocation35 + $0x380] sm:$0xff]
    %v6972 = vld [vmem:[#allocation35 + $0x388] sm:$0xff]
    %v6973 = vld [vmem:[#allocation35 + $0x390] sm:$0xff]
    %v6974 = vld [vmem:[#allocation35 + $0x398] sm:$0xff]
    %v6975 = vld [vmem:[#allocation35 + $0x3a0] sm:$0xff]
    %v6976 = vld [vmem:[#allocation35 + $0x3a8] sm:$0xff]
    %v6977 = vld [vmem:[#allocation35 + $0x3b0] sm:$0xff]
    %v6978 = vld [vmem:[#allocation35 + $0x3b8] sm:$0xff]
    %v6979 = vld [vmem:[#allocation35 + $0x3c0] sm:$0xff]
    %v6980 = vld [vmem:[#allocation35 + $0x3c8] sm:$0xff]
    %v6981 = vld [vmem:[#allocation35 + $0x3d0] sm:$0xff]
    %v6982 = vld [vmem:[#allocation35 + $0x3d8] sm:$0xff]
    %v6983 = vld [vmem:[#allocation35 + $0x3e0] sm:$0xff]
    %v6984 = vld [vmem:[#allocation35 + $0x3e8] sm:$0xff]
    %v6985 = vld [vmem:[#allocation35 + $0x3f0] sm:$0xff]
    %v6986 = vld [vmem:[#allocation35 + $0x3f8] sm:$0xff]
    %v6987 = vld [vmem:[%s57] sm:$0xff]
    %v6988 = vld [vmem:[%s57 + $0x8] sm:$0xff]
    %v6991 = vlaneseq
    %v6992 = vshrl.u32 %v6991, 7
    %v6993 = vsub.s32 0, %v6992
    %v6994 = vrot.slane %v6987, %v6993
    %v6995 = vlaneseq
    %v6996 = vshrl.u32 %v6995, 7
    %v6997 = vsub.s32 1, %v6996
    %v6998 = vrot.slane %v6987, %v6997
    %v6999 = vlaneseq
    %v7000 = vshrl.u32 %v6999, 7
    %v7001 = vsub.s32 2, %v7000
    %v7002 = vrot.slane %v6987, %v7001
    %v7003 = vlaneseq
    %v7004 = vshrl.u32 %v7003, 7
    %v7005 = vsub.s32 3, %v7004
    %v7006 = vrot.slane %v6987, %v7005
    %v7007 = vlaneseq
    %v7008 = vshrl.u32 %v7007, 7
    %v7009 = vsub.s32 4, %v7008
    %v7010 = vrot.slane %v6987, %v7009
    %v7011 = vlaneseq
    %v7012 = vshrl.u32 %v7011, 7
    %v7013 = vsub.s32 5, %v7012
    %v7014 = vrot.slane %v6987, %v7013
    %v7015 = vlaneseq
    %v7016 = vshrl.u32 %v7015, 7
    %v7017 = vsub.s32 6, %v7016
    %v7018 = vrot.slane %v6987, %v7017
    %v7019 = vlaneseq
    %v7020 = vshrl.u32 %v7019, 7
    %v7021 = vsub.s32 7, %v7020
    %v7022 = vrot.slane %v6987, %v7021
    %v7023 = vlaneseq
    %v7024 = vshrl.u32 %v7023, 7
    %v7025 = vsub.s32 0, %v7024
    %v7026 = vrot.slane %v6988, %v7025
    %v7027 = vlaneseq
    %v7028 = vshrl.u32 %v7027, 7
    %v7029 = vsub.s32 1, %v7028
    %v7030 = vrot.slane %v6988, %v7029
    %v7031 = vlaneseq
    %v7032 = vshrl.u32 %v7031, 7
    %v7033 = vsub.s32 2, %v7032
    %v7034 = vrot.slane %v6988, %v7033
    %v7035 = vlaneseq
    %v7036 = vshrl.u32 %v7035, 7
    %v7037 = vsub.s32 3, %v7036
    %v7038 = vrot.slane %v6988, %v7037
    %v7039 = vlaneseq
    %v7040 = vshrl.u32 %v7039, 7
    %v7041 = vsub.s32 4, %v7040
    %v7042 = vrot.slane %v6988, %v7041
    %v7043 = vlaneseq
    %v7044 = vshrl.u32 %v7043, 7
    %v7045 = vsub.s32 5, %v7044
    %v7046 = vrot.slane %v6988, %v7045
    %v7047 = vlaneseq
    %v7048 = vshrl.u32 %v7047, 7
    %v7049 = vsub.s32 6, %v7048
    %v7050 = vrot.slane %v6988, %v7049
    %v7051 = vlaneseq
    %v7052 = vshrl.u32 %v7051, 7
    %v7053 = vsub.s32 7, %v7052
    %v7054 = vrot.slane %v6988, %v7053
    %v7073 = vunpack.c.l.b16 %v6857
    %v7074 = vunpack.c.l.b16 %v6858
    %v7075 = vrot.slane %v7073, 7
    %v7076 = vrot.slane %v7074, 6
    %v7077 = vsel %vm5198, %v7076, %v7075
    %v7078 = vpack.c.b16 %v7077, %v7077
    %v7208 = vunpack.c.l.b16 %v6859
    %v7209 = vunpack.c.h.b16 %v6859
    %v7210 = vunpack.c.l.b16 %v6860
    %v7211 = vunpack.c.h.b16 %v6860
    %v7212 = vunpack.c.l.b16 %v6861
    %v7213 = vunpack.c.h.b16 %v6861
    %v7214 = vunpack.c.l.b16 %v6862
    %v7215 = vunpack.c.h.b16 %v6862
    %v7216 = vunpack.c.l.b16 %v6863
    %v7217 = vunpack.c.h.b16 %v6863
    %v7218 = vunpack.c.l.b16 %v6864
    %v7219 = vunpack.c.h.b16 %v6864
    %v7220 = vunpack.c.l.b16 %v6865
    %v7221 = vunpack.c.h.b16 %v6865
    %v7222 = vunpack.c.l.b16 %v6866
    %v7223 = vunpack.c.h.b16 %v6866
    %v7224 = vunpack.c.l.b16 %v6867
    %v7225 = vunpack.c.h.b16 %v6867
    %v7226 = vunpack.c.l.b16 %v6868
    %v7227 = vunpack.c.h.b16 %v6868
    %v7228 = vunpack.c.l.b16 %v6869
    %v7229 = vunpack.c.h.b16 %v6869
    %v7230 = vunpack.c.l.b16 %v6870
    %v7231 = vunpack.c.h.b16 %v6870
    %v7232 = vunpack.c.l.b16 %v6871
    %v7233 = vunpack.c.h.b16 %v6871
    %v7234 = vunpack.c.l.b16 %v6872
    %v7235 = vunpack.c.h.b16 %v6872
    %v7236 = vunpack.c.l.b16 %v6873
    %v7237 = vunpack.c.h.b16 %v6873
    %v7238 = vunpack.c.l.b16 %v6874
    %v7239 = vunpack.c.h.b16 %v6874
    %v7240 = vunpack.c.l.b16 %v6875
    %v7241 = vunpack.c.h.b16 %v6875
    %v7242 = vunpack.c.l.b16 %v6876
    %v7243 = vunpack.c.h.b16 %v6876
    %v7244 = vunpack.c.l.b16 %v6877
    %v7245 = vunpack.c.h.b16 %v6877
    %v7246 = vunpack.c.l.b16 %v6878
    %v7247 = vunpack.c.h.b16 %v6878
    %v7248 = vunpack.c.l.b16 %v6879
    %v7249 = vunpack.c.h.b16 %v6879
    %v7250 = vunpack.c.l.b16 %v6880
    %v7251 = vunpack.c.h.b16 %v6880
    %v7252 = vunpack.c.l.b16 %v6881
    %v7253 = vunpack.c.h.b16 %v6881
    %v7254 = vunpack.c.l.b16 %v6882
    %v7255 = vunpack.c.h.b16 %v6882
    %v7256 = vunpack.c.l.b16 %v6883
    %v7257 = vunpack.c.h.b16 %v6883
    %v7258 = vunpack.c.l.b16 %v6884
    %v7259 = vunpack.c.h.b16 %v6884
    %v7260 = vunpack.c.l.b16 %v6885
    %v7261 = vunpack.c.h.b16 %v6885
    %v7262 = vunpack.c.l.b16 %v6886
    %v7263 = vunpack.c.h.b16 %v6886
    %v7264 = vunpack.c.l.b16 %v6887
    %v7265 = vunpack.c.h.b16 %v6887
    %v7266 = vunpack.c.l.b16 %v6888
    %v7267 = vunpack.c.h.b16 %v6888
    %v7268 = vunpack.c.l.b16 %v6889
    %v7269 = vunpack.c.h.b16 %v6889
    %v7270 = vunpack.c.l.b16 %v6890
    %v7271 = vunpack.c.h.b16 %v6890
    %v7272 = vunpack.c.l.b16 %v6891
    %v7273 = vunpack.c.h.b16 %v6891
    %v7274 = vunpack.c.l.b16 %v6892
    %v7275 = vunpack.c.h.b16 %v6892
    %v7276 = vunpack.c.l.b16 %v6893
    %v7277 = vunpack.c.h.b16 %v6893
    %v7278 = vunpack.c.l.b16 %v6894
    %v7279 = vunpack.c.h.b16 %v6894
    %v7280 = vunpack.c.l.b16 %v6895
    %v7281 = vunpack.c.h.b16 %v6895
    %v7282 = vunpack.c.l.b16 %v6896
    %v7283 = vunpack.c.h.b16 %v6896
    %v7284 = vunpack.c.l.b16 %v6897
    %v7285 = vunpack.c.h.b16 %v6897
    %v7286 = vunpack.c.l.b16 %v6898
    %v7287 = vunpack.c.h.b16 %v6898
    %v7288 = vunpack.c.l.b16 %v6899
    %v7289 = vunpack.c.h.b16 %v6899
    %v7290 = vunpack.c.l.b16 %v6900
    %v7291 = vunpack.c.h.b16 %v6900
    %v7292 = vunpack.c.l.b16 %v6901
    %v7293 = vunpack.c.h.b16 %v6901
    %v7294 = vunpack.c.l.b16 %v6902
    %v7295 = vunpack.c.h.b16 %v6902
    %v7296 = vunpack.c.l.b16 %v6903
    %v7297 = vunpack.c.h.b16 %v6903
    %v7298 = vunpack.c.l.b16 %v6904
    %v7299 = vunpack.c.h.b16 %v6904
    %v7300 = vunpack.c.l.b16 %v6905
    %v7301 = vunpack.c.h.b16 %v6905
    %v7302 = vunpack.c.l.b16 %v6906
    %v7303 = vunpack.c.h.b16 %v6906
    %v7304 = vunpack.c.l.b16 %v6907
    %v7305 = vunpack.c.h.b16 %v6907
    %v7306 = vunpack.c.l.b16 %v6908
    %v7307 = vunpack.c.h.b16 %v6908
    %v7308 = vunpack.c.l.b16 %v6909
    %v7309 = vunpack.c.h.b16 %v6909
    %v7310 = vunpack.c.l.b16 %v6910
    %v7311 = vunpack.c.h.b16 %v6910
    %v7312 = vunpack.c.l.b16 %v6911
    %v7313 = vunpack.c.h.b16 %v6911
    %v7314 = vunpack.c.l.b16 %v6912
    %v7315 = vunpack.c.h.b16 %v6912
    %v7316 = vunpack.c.l.b16 %v6913
    %v7317 = vunpack.c.h.b16 %v6913
    %v7318 = vunpack.c.l.b16 %v6914
    %v7319 = vunpack.c.h.b16 %v6914
    %v7320 = vunpack.c.l.b16 %v6915
    %v7321 = vunpack.c.h.b16 %v6915
    %v7322 = vunpack.c.l.b16 %v6916
    %v7323 = vunpack.c.h.b16 %v6916
    %v7324 = vunpack.c.l.b16 %v6917
    %v7325 = vunpack.c.h.b16 %v6917
    %v7326 = vunpack.c.l.b16 %v6918
    %v7327 = vunpack.c.h.b16 %v6918
    %v7328 = vunpack.c.l.b16 %v6919
    %v7329 = vunpack.c.h.b16 %v6919
    %v7330 = vunpack.c.l.b16 %v6920
    %v7331 = vunpack.c.h.b16 %v6920
    %v7332 = vunpack.c.l.b16 %v6921
    %v7333 = vunpack.c.h.b16 %v6921
    %v7334 = vunpack.c.l.b16 %v6922
    %v7335 = vunpack.c.h.b16 %v6922
    %v7336 = vunpack.c.l.b16 %v6923
    %v7337 = vunpack.c.h.b16 %v6923
    %v7338 = vunpack.c.l.b16 %v6924
    %v7339 = vunpack.c.h.b16 %v6924
    %v7340 = vunpack.c.l.b16 %v6925
    %v7341 = vunpack.c.h.b16 %v6925
    %v7342 = vunpack.c.l.b16 %v6926
    %v7343 = vunpack.c.h.b16 %v6926
    %v7344 = vunpack.c.l.b16 %v6927
    %v7345 = vunpack.c.h.b16 %v6927
    %v7346 = vunpack.c.l.b16 %v6928
    %v7347 = vunpack.c.h.b16 %v6928
    %v7348 = vunpack.c.l.b16 %v6929
    %v7349 = vunpack.c.h.b16 %v6929
    %v7350 = vunpack.c.l.b16 %v6930
    %v7351 = vunpack.c.h.b16 %v6930
    %v7352 = vunpack.c.l.b16 %v6931
    %v7353 = vunpack.c.h.b16 %v6931
    %v7354 = vunpack.c.l.b16 %v6932
    %v7355 = vunpack.c.h.b16 %v6932
    %v7356 = vunpack.c.l.b16 %v6933
    %v7357 = vunpack.c.h.b16 %v6933
    %v7358 = vunpack.c.l.b16 %v6934
    %v7359 = vunpack.c.h.b16 %v6934
    %v7360 = vunpack.c.l.b16 %v6935
    %v7361 = vunpack.c.h.b16 %v6935
    %v7362 = vunpack.c.l.b16 %v6936
    %v7363 = vunpack.c.h.b16 %v6936
    %v7364 = vunpack.c.l.b16 %v6937
    %v7365 = vunpack.c.h.b16 %v6937
    %v7366 = vunpack.c.l.b16 %v6938
    %v7367 = vunpack.c.h.b16 %v6938
    %v7368 = vunpack.c.l.b16 %v6939
    %v7369 = vunpack.c.h.b16 %v6939
    %v7370 = vunpack.c.l.b16 %v6940
    %v7371 = vunpack.c.h.b16 %v6940
    %v7372 = vunpack.c.l.b16 %v6941
    %v7373 = vunpack.c.h.b16 %v6941
    %v7374 = vunpack.c.l.b16 %v6942
    %v7375 = vunpack.c.h.b16 %v6942
    %v7376 = vunpack.c.l.b16 %v6943
    %v7377 = vunpack.c.h.b16 %v6943
    %v7378 = vunpack.c.l.b16 %v6944
    %v7379 = vunpack.c.h.b16 %v6944
    %v7380 = vunpack.c.l.b16 %v6945
    %v7381 = vunpack.c.h.b16 %v6945
    %v7382 = vunpack.c.l.b16 %v6946
    %v7383 = vunpack.c.h.b16 %v6946
    %v7384 = vunpack.c.l.b16 %v6947
    %v7385 = vunpack.c.h.b16 %v6947
    %v7386 = vunpack.c.l.b16 %v6948
    %v7387 = vunpack.c.h.b16 %v6948
    %v7388 = vunpack.c.l.b16 %v6949
    %v7389 = vunpack.c.h.b16 %v6949
    %v7390 = vunpack.c.l.b16 %v6950
    %v7391 = vunpack.c.h.b16 %v6950
    %v7392 = vunpack.c.l.b16 %v6951
    %v7393 = vunpack.c.h.b16 %v6951
    %v7394 = vunpack.c.l.b16 %v6952
    %v7395 = vunpack.c.h.b16 %v6952
    %v7396 = vunpack.c.l.b16 %v6953
    %v7397 = vunpack.c.h.b16 %v6953
    %v7398 = vunpack.c.l.b16 %v6954
    %v7399 = vunpack.c.h.b16 %v6954
    %v7400 = vunpack.c.l.b16 %v6955
    %v7401 = vunpack.c.h.b16 %v6955
    %v7402 = vunpack.c.l.b16 %v6956
    %v7403 = vunpack.c.h.b16 %v6956
    %v7404 = vunpack.c.l.b16 %v6957
    %v7405 = vunpack.c.h.b16 %v6957
    %v7406 = vunpack.c.l.b16 %v6958
    %v7407 = vunpack.c.h.b16 %v6958
    %v7408 = vunpack.c.l.b16 %v6959
    %v7409 = vunpack.c.h.b16 %v6959
    %v7410 = vunpack.c.l.b16 %v6960
    %v7411 = vunpack.c.h.b16 %v6960
    %v7412 = vunpack.c.l.b16 %v6961
    %v7413 = vunpack.c.h.b16 %v6961
    %v7414 = vunpack.c.l.b16 %v6962
    %v7415 = vunpack.c.h.b16 %v6962
    %v7416 = vunpack.c.l.b16 %v6963
    %v7417 = vunpack.c.h.b16 %v6963
    %v7418 = vunpack.c.l.b16 %v6964
    %v7419 = vunpack.c.h.b16 %v6964
    %v7420 = vunpack.c.l.b16 %v6965
    %v7421 = vunpack.c.h.b16 %v6965
    %v7422 = vunpack.c.l.b16 %v6966
    %v7423 = vunpack.c.h.b16 %v6966
    %v7424 = vunpack.c.l.b16 %v6967
    %v7425 = vunpack.c.h.b16 %v6967
    %v7426 = vunpack.c.l.b16 %v6968
    %v7427 = vunpack.c.h.b16 %v6968
    %v7428 = vunpack.c.l.b16 %v6969
    %v7429 = vunpack.c.h.b16 %v6969
    %v7430 = vunpack.c.l.b16 %v6970
    %v7431 = vunpack.c.h.b16 %v6970
    %v7432 = vunpack.c.l.b16 %v6971
    %v7433 = vunpack.c.h.b16 %v6971
    %v7434 = vunpack.c.l.b16 %v6972
    %v7435 = vunpack.c.h.b16 %v6972
    %v7436 = vunpack.c.l.b16 %v6973
    %v7437 = vunpack.c.h.b16 %v6973
    %v7438 = vunpack.c.l.b16 %v6974
    %v7439 = vunpack.c.h.b16 %v6974
    %v7440 = vunpack.c.l.b16 %v6975
    %v7441 = vunpack.c.h.b16 %v6975
    %v7442 = vunpack.c.l.b16 %v6976
    %v7443 = vunpack.c.h.b16 %v6976
    %v7444 = vunpack.c.l.b16 %v6977
    %v7445 = vunpack.c.h.b16 %v6977
    %v7446 = vunpack.c.l.b16 %v6978
    %v7447 = vunpack.c.h.b16 %v6978
    %v7448 = vunpack.c.l.b16 %v6979
    %v7449 = vunpack.c.h.b16 %v6979
    %v7450 = vunpack.c.l.b16 %v6980
    %v7451 = vunpack.c.h.b16 %v6980
    %v7452 = vunpack.c.l.b16 %v6981
    %v7453 = vunpack.c.h.b16 %v6981
    %v7454 = vunpack.c.l.b16 %v6982
    %v7455 = vunpack.c.h.b16 %v6982
    %v7456 = vunpack.c.l.b16 %v6983
    %v7457 = vunpack.c.h.b16 %v6983
    %v7458 = vunpack.c.l.b16 %v6984
    %v7459 = vunpack.c.h.b16 %v6984
    %v7460 = vunpack.c.l.b16 %v6985
    %v7461 = vunpack.c.h.b16 %v6985
    %v7462 = vunpack.c.l.b16 %v6986
    %v7463 = vunpack.c.h.b16 %v6986
    %v7464 = vpack.c.b16 %v7224, %v7208
    %v7465 = vpack.c.b16 %v7225, %v7209
    %v7466 = vpack.c.b16 %v7226, %v7210
    %v7467 = vpack.c.b16 %v7227, %v7211
    %v7468 = vpack.c.b16 %v7228, %v7212
    %v7469 = vpack.c.b16 %v7229, %v7213
    %v7470 = vpack.c.b16 %v7230, %v7214
    %v7471 = vpack.c.b16 %v7231, %v7215
    %v7472 = vpack.c.b16 %v7232, %v7216
    %v7473 = vpack.c.b16 %v7233, %v7217
    %v7474 = vpack.c.b16 %v7234, %v7218
    %v7475 = vpack.c.b16 %v7235, %v7219
    %v7476 = vpack.c.b16 %v7236, %v7220
    %v7477 = vpack.c.b16 %v7237, %v7221
    %v7478 = vpack.c.b16 %v7238, %v7222
    %v7479 = vpack.c.b16 %v7239, %v7223
    %v7480 = vpack.c.b16 %v7256, %v7240
    %v7481 = vpack.c.b16 %v7257, %v7241
    %v7482 = vpack.c.b16 %v7258, %v7242
    %v7483 = vpack.c.b16 %v7259, %v7243
    %v7484 = vpack.c.b16 %v7260, %v7244
    %v7485 = vpack.c.b16 %v7261, %v7245
    %v7486 = vpack.c.b16 %v7262, %v7246
    %v7487 = vpack.c.b16 %v7263, %v7247
    %v7488 = vpack.c.b16 %v7264, %v7248
    %v7489 = vpack.c.b16 %v7265, %v7249
    %v7490 = vpack.c.b16 %v7266, %v7250
    %v7491 = vpack.c.b16 %v7267, %v7251
    %v7492 = vpack.c.b16 %v7268, %v7252
    %v7493 = vpack.c.b16 %v7269, %v7253
    %v7494 = vpack.c.b16 %v7270, %v7254
    %v7495 = vpack.c.b16 %v7271, %v7255
    %v7496 = vpack.c.b16 %v7288, %v7272
    %v7497 = vpack.c.b16 %v7289, %v7273
    %v7498 = vpack.c.b16 %v7290, %v7274
    %v7499 = vpack.c.b16 %v7291, %v7275
    %v7500 = vpack.c.b16 %v7292, %v7276
    %v7501 = vpack.c.b16 %v7293, %v7277
    %v7502 = vpack.c.b16 %v7294, %v7278
    %v7503 = vpack.c.b16 %v7295, %v7279
    %v7504 = vpack.c.b16 %v7296, %v7280
    %v7505 = vpack.c.b16 %v7297, %v7281
    %v7506 = vpack.c.b16 %v7298, %v7282
    %v7507 = vpack.c.b16 %v7299, %v7283
    %v7508 = vpack.c.b16 %v7300, %v7284
    %v7509 = vpack.c.b16 %v7301, %v7285
    %v7510 = vpack.c.b16 %v7302, %v7286
    %v7511 = vpack.c.b16 %v7303, %v7287
    %v7512 = vpack.c.b16 %v7320, %v7304
    %v7513 = vpack.c.b16 %v7321, %v7305
    %v7514 = vpack.c.b16 %v7322, %v7306
    %v7515 = vpack.c.b16 %v7323, %v7307
    %v7516 = vpack.c.b16 %v7324, %v7308
    %v7517 = vpack.c.b16 %v7325, %v7309
    %v7518 = vpack.c.b16 %v7326, %v7310
    %v7519 = vpack.c.b16 %v7327, %v7311
    %v7520 = vpack.c.b16 %v7328, %v7312
    %v7521 = vpack.c.b16 %v7329, %v7313
    %v7522 = vpack.c.b16 %v7330, %v7314
    %v7523 = vpack.c.b16 %v7331, %v7315
    %v7524 = vpack.c.b16 %v7332, %v7316
    %v7525 = vpack.c.b16 %v7333, %v7317
    %v7526 = vpack.c.b16 %v7334, %v7318
    %v7527 = vpack.c.b16 %v7335, %v7319
    %v7528 = vpack.c.b16 %v7352, %v7336
    %v7529 = vpack.c.b16 %v7353, %v7337
    %v7530 = vpack.c.b16 %v7354, %v7338
    %v7531 = vpack.c.b16 %v7355, %v7339
    %v7532 = vpack.c.b16 %v7356, %v7340
    %v7533 = vpack.c.b16 %v7357, %v7341
    %v7534 = vpack.c.b16 %v7358, %v7342
    %v7535 = vpack.c.b16 %v7359, %v7343
    %v7536 = vpack.c.b16 %v7360, %v7344
    %v7537 = vpack.c.b16 %v7361, %v7345
    %v7538 = vpack.c.b16 %v7362, %v7346
    %v7539 = vpack.c.b16 %v7363, %v7347
    %v7540 = vpack.c.b16 %v7364, %v7348
    %v7541 = vpack.c.b16 %v7365, %v7349
    %v7542 = vpack.c.b16 %v7366, %v7350
    %v7543 = vpack.c.b16 %v7367, %v7351
    %v7544 = vpack.c.b16 %v7384, %v7368
    %v7545 = vpack.c.b16 %v7385, %v7369
    %v7546 = vpack.c.b16 %v7386, %v7370
    %v7547 = vpack.c.b16 %v7387, %v7371
    %v7548 = vpack.c.b16 %v7388, %v7372
    %v7549 = vpack.c.b16 %v7389, %v7373
    %v7550 = vpack.c.b16 %v7390, %v7374
    %v7551 = vpack.c.b16 %v7391, %v7375
    %v7552 = vpack.c.b16 %v7392, %v7376
    %v7553 = vpack.c.b16 %v7393, %v7377
    %v7554 = vpack.c.b16 %v7394, %v7378
    %v7555 = vpack.c.b16 %v7395, %v7379
    %v7556 = vpack.c.b16 %v7396, %v7380
    %v7557 = vpack.c.b16 %v7397, %v7381
    %v7558 = vpack.c.b16 %v7398, %v7382
    %v7559 = vpack.c.b16 %v7399, %v7383
    %v7560 = vpack.c.b16 %v7416, %v7400
    %v7561 = vpack.c.b16 %v7417, %v7401
    %v7562 = vpack.c.b16 %v7418, %v7402
    %v7563 = vpack.c.b16 %v7419, %v7403
    %v7564 = vpack.c.b16 %v7420, %v7404
    %v7565 = vpack.c.b16 %v7421, %v7405
    %v7566 = vpack.c.b16 %v7422, %v7406
    %v7567 = vpack.c.b16 %v7423, %v7407
    %v7568 = vpack.c.b16 %v7424, %v7408
    %v7569 = vpack.c.b16 %v7425, %v7409
    %v7570 = vpack.c.b16 %v7426, %v7410
    %v7571 = vpack.c.b16 %v7427, %v7411
    %v7572 = vpack.c.b16 %v7428, %v7412
    %v7573 = vpack.c.b16 %v7429, %v7413
    %v7574 = vpack.c.b16 %v7430, %v7414
    %v7575 = vpack.c.b16 %v7431, %v7415
    %v7576 = vpack.c.b16 %v7448, %v7432
    %v7577 = vpack.c.b16 %v7449, %v7433
    %v7578 = vpack.c.b16 %v7450, %v7434
    %v7579 = vpack.c.b16 %v7451, %v7435
    %v7580 = vpack.c.b16 %v7452, %v7436
    %v7581 = vpack.c.b16 %v7453, %v7437
    %v7582 = vpack.c.b16 %v7454, %v7438
    %v7583 = vpack.c.b16 %v7455, %v7439
    %v7584 = vpack.c.b16 %v7456, %v7440
    %v7585 = vpack.c.b16 %v7457, %v7441
    %v7586 = vpack.c.b16 %v7458, %v7442
    %v7587 = vpack.c.b16 %v7459, %v7443
    %v7588 = vpack.c.b16 %v7460, %v7444
    %v7589 = vpack.c.b16 %v7461, %v7445
    %v7590 = vpack.c.b16 %v7462, %v7446
    %v7591 = vpack.c.b16 %v7463, %v7447
    %7720 = vmatprep.subr.bf16.mxu0 %v7577
    %7721 = vmatpush1.bf16.msra.mxu0 %v7576
    %7722 = vmatprep.subr.bf16.mxu0 %v7561
    %7723 = vmatpush1.bf16.msra.mxu0 %v7560
    %7724 = vmatprep.subr.bf16.mxu0 %v7545
    %7725 = vmatpush1.bf16.msra.mxu0 %v7544
    %7726 = vmatprep.subr.bf16.mxu0 %v7529
    %7727 = vmatpush1.bf16.msra.mxu0 %v7528
    %7728 = vmatprep.subr.bf16.mxu0 %v7513
    %7729 = vmatpush1.bf16.msra.mxu0 %v7512
    %7730 = vmatprep.subr.bf16.mxu0 %v7497
    %7731 = vmatpush1.bf16.msra.mxu0 %v7496
    %7732 = vmatprep.subr.bf16.mxu0 %v7481
    %7733 = vmatpush1.bf16.msra.mxu0 %v7480
    %7734 = vmatprep.subr.bf16.mxu0 %v7465
    %7735 = vmatpush1.bf16.msra.mxu0 %v7464
    %7736 = vmatprep.subr.bf16.mxu0 0
    %7737 = vmatpush2.bf16.msra.mxu0 0
    %7738 = vmatprep.subr.bf16.mxu0 0
    %7739 = vmatpush2.bf16.msra.mxu0 0
    %7740 = vmatprep.subr.bf16.mxu0 0
    %7741 = vmatpush2.bf16.msra.mxu0 0
    %7742 = vmatprep.subr.bf16.mxu0 0
    %7743 = vmatpush2.bf16.msra.mxu0 0
    %7744 = vmatprep.subr.bf16.mxu0 0
    %7745 = vmatpush2.bf16.msra.mxu0 0
    %7746 = vmatprep.subr.bf16.mxu0 0
    %7747 = vmatpush2.bf16.msra.mxu0 0
    %7748 = vmatprep.subr.bf16.mxu0 0
    %7749 = vmatpush2.bf16.msra.mxu0 0
    %7750 = vmatprep.subr.bf16.mxu0 0
    %7751 = vmatpush2.bf16.msra.mxu0 0
    %7752 = vmatprep.mubr.bf16.mxu0 0
    %7753 = vmatmul.mubr.bf16.gmra.mxu0 %v7078
    %v7754 = vpop.f32.mrf.mxu0
    %v7755 = vadd.f32 %v6994, %v7754
    %v7756 = vpop.f32.mrf.mxu0
    %v7757 = vadd.f32 %v6998, %v7756
    %v7758 = vpop.f32.mrf.mxu0
    %v7759 = vpop.f32.mrf.mxu0
    %7760 = vdwg.mxu0
    %7761 = vmatprep.subr.bf16.mxu0 %v7579
    %7762 = vmatpush1.bf16.msra.mxu0 %v7578
    %7763 = vmatprep.subr.bf16.mxu0 %v7563
    %7764 = vmatpush1.bf16.msra.mxu0 %v7562
    %7765 = vmatprep.subr.bf16.mxu0 %v7547
    %7766 = vmatpush1.bf16.msra.mxu0 %v7546
    %7767 = vmatprep.subr.bf16.mxu0 %v7531
    %7768 = vmatpush1.bf16.msra.mxu0 %v7530
    %7769 = vmatprep.subr.bf16.mxu0 %v7515
    %7770 = vmatpush1.bf16.msra.mxu0 %v7514
    %7771 = vmatprep.subr.bf16.mxu0 %v7499
    %7772 = vmatpush1.bf16.msra.mxu0 %v7498
    %7773 = vmatprep.subr.bf16.mxu0 %v7483
    %7774 = vmatpush1.bf16.msra.mxu0 %v7482
    %7775 = vmatprep.subr.bf16.mxu0 %v7467
    %7776 = vmatpush1.bf16.msra.mxu0 %v7466
    %7777 = vmatprep.subr.bf16.mxu0 0
    %7778 = vmatpush2.bf16.msra.mxu0 0
    %7779 = vmatprep.subr.bf16.mxu0 0
    %7780 = vmatpush2.bf16.msra.mxu0 0
    %7781 = vmatprep.subr.bf16.mxu0 0
    %7782 = vmatpush2.bf16.msra.mxu0 0
    %7783 = vmatprep.subr.bf16.mxu0 0
    %7784 = vmatpush2.bf16.msra.mxu0 0
    %7785 = vmatprep.subr.bf16.mxu0 0
    %7786 = vmatpush2.bf16.msra.mxu0 0
    %7787 = vmatprep.subr.bf16.mxu0 0
    %7788 = vmatpush2.bf16.msra.mxu0 0
    %7789 = vmatprep.subr.bf16.mxu0 0
    %7790 = vmatpush2.bf16.msra.mxu0 0
    %7791 = vmatprep.subr.bf16.mxu0 0
    %7792 = vmatpush2.bf16.msra.mxu0 0
    %7793 = vmatprep.mubr.bf16.mxu0 0
    %7794 = vmatmul.mubr.bf16.gmra.mxu0 %v7078
    %v7795 = vpop.f32.mrf.mxu0
    %v7796 = vadd.f32 %v7002, %v7795
    %v7797 = vpop.f32.mrf.mxu0
    %v7798 = vadd.f32 %v7006, %v7797
    %v7799 = vpop.f32.mrf.mxu0
    %v7800 = vpop.f32.mrf.mxu0
    %7801 = vdwg.mxu0
    %7802 = vmatprep.subr.bf16.mxu0 %v7581
    %7803 = vmatpush1.bf16.msra.mxu0 %v7580
    %7804 = vmatprep.subr.bf16.mxu0 %v7565
    %7805 = vmatpush1.bf16.msra.mxu0 %v7564
    %7806 = vmatprep.subr.bf16.mxu0 %v7549
    %7807 = vmatpush1.bf16.msra.mxu0 %v7548
    %7808 = vmatprep.subr.bf16.mxu0 %v7533
    %7809 = vmatpush1.bf16.msra.mxu0 %v7532
    %7810 = vmatprep.subr.bf16.mxu0 %v7517
    %7811 = vmatpush1.bf16.msra.mxu0 %v7516
    %7812 = vmatprep.subr.bf16.mxu0 %v7501
    %7813 = vmatpush1.bf16.msra.mxu0 %v7500
    %7814 = vmatprep.subr.bf16.mxu0 %v7485
    %7815 = vmatpush1.bf16.msra.mxu0 %v7484
    %7816 = vmatprep.subr.bf16.mxu0 %v7469
    %7817 = vmatpush1.bf16.msra.mxu0 %v7468
    %7818 = vmatprep.subr.bf16.mxu0 0
    %7819 = vmatpush2.bf16.msra.mxu0 0
    %7820 = vmatprep.subr.bf16.mxu0 0
    %7821 = vmatpush2.bf16.msra.mxu0 0
    %7822 = vmatprep.subr.bf16.mxu0 0
    %7823 = vmatpush2.bf16.msra.mxu0 0
    %7824 = vmatprep.subr.bf16.mxu0 0
    %7825 = vmatpush2.bf16.msra.mxu0 0
    %7826 = vmatprep.subr.bf16.mxu0 0
    %7827 = vmatpush2.bf16.msra.mxu0 0
    %7828 = vmatprep.subr.bf16.mxu0 0
    %7829 = vmatpush2.bf16.msra.mxu0 0
    %7830 = vmatprep.subr.bf16.mxu0 0
    %7831 = vmatpush2.bf16.msra.mxu0 0
    %7832 = vmatprep.subr.bf16.mxu0 0
    %7833 = vmatpush2.bf16.msra.mxu0 0
    %7834 = vmatprep.mubr.bf16.mxu0 0
    %7835 = vmatmul.mubr.bf16.gmra.mxu0 %v7078
    %v7836 = vpop.f32.mrf.mxu0
    %v7837 = vadd.f32 %v7010, %v7836
    %v7838 = vpop.f32.mrf.mxu0
    %v7839 = vadd.f32 %v7014, %v7838
    %v7840 = vpop.f32.mrf.mxu0
    %v7841 = vpop.f32.mrf.mxu0
    %7842 = vdwg.mxu0
    %7843 = vmatprep.subr.bf16.mxu0 %v7583
    %7844 = vmatpush1.bf16.msra.mxu0 %v7582
    %7845 = vmatprep.subr.bf16.mxu0 %v7567
    %7846 = vmatpush1.bf16.msra.mxu0 %v7566
    %7847 = vmatprep.subr.bf16.mxu0 %v7551
    %7848 = vmatpush1.bf16.msra.mxu0 %v7550
    %7849 = vmatprep.subr.bf16.mxu0 %v7535
    %7850 = vmatpush1.bf16.msra.mxu0 %v7534
    %7851 = vmatprep.subr.bf16.mxu0 %v7519
    %7852 = vmatpush1.bf16.msra.mxu0 %v7518
    %7853 = vmatprep.subr.bf16.mxu0 %v7503
    %7854 = vmatpush1.bf16.msra.mxu0 %v7502
    %7855 = vmatprep.subr.bf16.mxu0 %v7487
    %7856 = vmatpush1.bf16.msra.mxu0 %v7486
    %7857 = vmatprep.subr.bf16.mxu0 %v7471
    %7858 = vmatpush1.bf16.msra.mxu0 %v7470
    %7859 = vmatprep.subr.bf16.mxu0 0
    %7860 = vmatpush2.bf16.msra.mxu0 0
    %7861 = vmatprep.subr.bf16.mxu0 0
    %7862 = vmatpush2.bf16.msra.mxu0 0
    %7863 = vmatprep.subr.bf16.mxu0 0
    %7864 = vmatpush2.bf16.msra.mxu0 0
    %7865 = vmatprep.subr.bf16.mxu0 0
    %7866 = vmatpush2.bf16.msra.mxu0 0
    %7867 = vmatprep.subr.bf16.mxu0 0
    %7868 = vmatpush2.bf16.msra.mxu0 0
    %7869 = vmatprep.subr.bf16.mxu0 0
    %7870 = vmatpush2.bf16.msra.mxu0 0
    %7871 = vmatprep.subr.bf16.mxu0 0
    %7872 = vmatpush2.bf16.msra.mxu0 0
    %7873 = vmatprep.subr.bf16.mxu0 0
    %7874 = vmatpush2.bf16.msra.mxu0 0
    %7875 = vmatprep.mubr.bf16.mxu0 0
    %7876 = vmatmul.mubr.bf16.gmra.mxu0 %v7078
    %v7877 = vpop.f32.mrf.mxu0
    %v7878 = vadd.f32 %v7018, %v7877
    %v7879 = vpop.f32.mrf.mxu0
    %v7880 = vadd.f32 %v7022, %v7879
    %v7881 = vpop.f32.mrf.mxu0
    %v7882 = vpop.f32.mrf.mxu0
    %7883 = vdwg.mxu0
    %7884 = vmatprep.subr.bf16.mxu0 %v7585
    %7885 = vmatpush1.bf16.msra.mxu0 %v7584
    %7886 = vmatprep.subr.bf16.mxu0 %v7569
    %7887 = vmatpush1.bf16.msra.mxu0 %v7568
    %7888 = vmatprep.subr.bf16.mxu0 %v7553
    %7889 = vmatpush1.bf16.msra.mxu0 %v7552
    %7890 = vmatprep.subr.bf16.mxu0 %v7537
    %7891 = vmatpush1.bf16.msra.mxu0 %v7536
    %7892 = vmatprep.subr.bf16.mxu0 %v7521
    %7893 = vmatpush1.bf16.msra.mxu0 %v7520
    %7894 = vmatprep.subr.bf16.mxu0 %v7505
    %7895 = vmatpush1.bf16.msra.mxu0 %v7504
    %7896 = vmatprep.subr.bf16.mxu0 %v7489
    %7897 = vmatpush1.bf16.msra.mxu0 %v7488
    %7898 = vmatprep.subr.bf16.mxu0 %v7473
    %7899 = vmatpush1.bf16.msra.mxu0 %v7472
    %7900 = vmatprep.subr.bf16.mxu0 0
    %7901 = vmatpush2.bf16.msra.mxu0 0
    %7902 = vmatprep.subr.bf16.mxu0 0
    %7903 = vmatpush2.bf16.msra.mxu0 0
    %7904 = vmatprep.subr.bf16.mxu0 0
    %7905 = vmatpush2.bf16.msra.mxu0 0
    %7906 = vmatprep.subr.bf16.mxu0 0
    %7907 = vmatpush2.bf16.msra.mxu0 0
    %7908 = vmatprep.subr.bf16.mxu0 0
    %7909 = vmatpush2.bf16.msra.mxu0 0
    %7910 = vmatprep.subr.bf16.mxu0 0
    %7911 = vmatpush2.bf16.msra.mxu0 0
    %7912 = vmatprep.subr.bf16.mxu0 0
    %7913 = vmatpush2.bf16.msra.mxu0 0
    %7914 = vmatprep.subr.bf16.mxu0 0
    %7915 = vmatpush2.bf16.msra.mxu0 0
    %7916 = vmatprep.mubr.bf16.mxu0 0
    %7917 = vmatmul.mubr.bf16.gmra.mxu0 %v7078
    %v7918 = vpop.f32.mrf.mxu0
    %v7919 = vadd.f32 %v7026, %v7918
    %v7920 = vpop.f32.mrf.mxu0
    %v7921 = vadd.f32 %v7030, %v7920
    %v7922 = vpop.f32.mrf.mxu0
    %v7923 = vpop.f32.mrf.mxu0
    %7924 = vdwg.mxu0
    %7925 = vmatprep.subr.bf16.mxu0 %v7587
    %7926 = vmatpush1.bf16.msra.mxu0 %v7586
    %7927 = vmatprep.subr.bf16.mxu0 %v7571
    %7928 = vmatpush1.bf16.msra.mxu0 %v7570
    %7929 = vmatprep.subr.bf16.mxu0 %v7555
    %7930 = vmatpush1.bf16.msra.mxu0 %v7554
    %7931 = vmatprep.subr.bf16.mxu0 %v7539
    %7932 = vmatpush1.bf16.msra.mxu0 %v7538
    %7933 = vmatprep.subr.bf16.mxu0 %v7523
    %7934 = vmatpush1.bf16.msra.mxu0 %v7522
    %7935 = vmatprep.subr.bf16.mxu0 %v7507
    %7936 = vmatpush1.bf16.msra.mxu0 %v7506
    %7937 = vmatprep.subr.bf16.mxu0 %v7491
    %7938 = vmatpush1.bf16.msra.mxu0 %v7490
    %7939 = vmatprep.subr.bf16.mxu0 %v7475
    %7940 = vmatpush1.bf16.msra.mxu0 %v7474
    %7941 = vmatprep.subr.bf16.mxu0 0
    %7942 = vmatpush2.bf16.msra.mxu0 0
    %7943 = vmatprep.subr.bf16.mxu0 0
    %7944 = vmatpush2.bf16.msra.mxu0 0
    %7945 = vmatprep.subr.bf16.mxu0 0
    %7946 = vmatpush2.bf16.msra.mxu0 0
    %7947 = vmatprep.subr.bf16.mxu0 0
    %7948 = vmatpush2.bf16.msra.mxu0 0
    %7949 = vmatprep.subr.bf16.mxu0 0
    %7950 = vmatpush2.bf16.msra.mxu0 0
    %7951 = vmatprep.subr.bf16.mxu0 0
    %7952 = vmatpush2.bf16.msra.mxu0 0
    %7953 = vmatprep.subr.bf16.mxu0 0
    %7954 = vmatpush2.bf16.msra.mxu0 0
    %7955 = vmatprep.subr.bf16.mxu0 0
    %7956 = vmatpush2.bf16.msra.mxu0 0
    %7957 = vmatprep.mubr.bf16.mxu0 0
    %7958 = vmatmul.mubr.bf16.gmra.mxu0 %v7078
    %v7959 = vpop.f32.mrf.mxu0
    %v7960 = vadd.f32 %v7034, %v7959
    %v7961 = vpop.f32.mrf.mxu0
    %v7962 = vadd.f32 %v7038, %v7961
    %v7963 = vpop.f32.mrf.mxu0
    %v7964 = vpop.f32.mrf.mxu0
    %7965 = vdwg.mxu0
    %7966 = vmatprep.subr.bf16.mxu0 %v7589
    %7967 = vmatpush1.bf16.msra.mxu0 %v7588
    %7968 = vmatprep.subr.bf16.mxu0 %v7573
    %7969 = vmatpush1.bf16.msra.mxu0 %v7572
    %7970 = vmatprep.subr.bf16.mxu0 %v7557
    %7971 = vmatpush1.bf16.msra.mxu0 %v7556
    %7972 = vmatprep.subr.bf16.mxu0 %v7541
    %7973 = vmatpush1.bf16.msra.mxu0 %v7540
    %7974 = vmatprep.subr.bf16.mxu0 %v7525
    %7975 = vmatpush1.bf16.msra.mxu0 %v7524
    %7976 = vmatprep.subr.bf16.mxu0 %v7509
    %7977 = vmatpush1.bf16.msra.mxu0 %v7508
    %7978 = vmatprep.subr.bf16.mxu0 %v7493
    %7979 = vmatpush1.bf16.msra.mxu0 %v7492
    %7980 = vmatprep.subr.bf16.mxu0 %v7477
    %7981 = vmatpush1.bf16.msra.mxu0 %v7476
    %7982 = vmatprep.subr.bf16.mxu0 0
    %7983 = vmatpush2.bf16.msra.mxu0 0
    %7984 = vmatprep.subr.bf16.mxu0 0
    %7985 = vmatpush2.bf16.msra.mxu0 0
    %7986 = vmatprep.subr.bf16.mxu0 0
    %7987 = vmatpush2.bf16.msra.mxu0 0
    %7988 = vmatprep.subr.bf16.mxu0 0
    %7989 = vmatpush2.bf16.msra.mxu0 0
    %7990 = vmatprep.subr.bf16.mxu0 0
    %7991 = vmatpush2.bf16.msra.mxu0 0
    %7992 = vmatprep.subr.bf16.mxu0 0
    %7993 = vmatpush2.bf16.msra.mxu0 0
    %7994 = vmatprep.subr.bf16.mxu0 0
    %7995 = vmatpush2.bf16.msra.mxu0 0
    %7996 = vmatprep.subr.bf16.mxu0 0
    %7997 = vmatpush2.bf16.msra.mxu0 0
    %7998 = vmatprep.mubr.bf16.mxu0 0
    %7999 = vmatmul.mubr.bf16.gmra.mxu0 %v7078
    %v8000 = vpop.f32.mrf.mxu0
    %v8001 = vadd.f32 %v7042, %v8000
    %v8002 = vpop.f32.mrf.mxu0
    %v8003 = vadd.f32 %v7046, %v8002
    %v8004 = vpop.f32.mrf.mxu0
    %v8005 = vpop.f32.mrf.mxu0
    %8006 = vdwg.mxu0
    %8007 = vmatprep.subr.bf16.mxu0 %v7591
    %8008 = vmatpush1.bf16.msra.mxu0 %v7590
    %8009 = vmatprep.subr.bf16.mxu0 %v7575
    %8010 = vmatpush1.bf16.msra.mxu0 %v7574
    %8011 = vmatprep.subr.bf16.mxu0 %v7559
    %8012 = vmatpush1.bf16.msra.mxu0 %v7558
    %8013 = vmatprep.subr.bf16.mxu0 %v7543
    %8014 = vmatpush1.bf16.msra.mxu0 %v7542
    %8015 = vmatprep.subr.bf16.mxu0 %v7527
    %8016 = vmatpush1.bf16.msra.mxu0 %v7526
    %8017 = vmatprep.subr.bf16.mxu0 %v7511
    %8018 = vmatpush1.bf16.msra.mxu0 %v7510
    %8019 = vmatprep.subr.bf16.mxu0 %v7495
    %8020 = vmatpush1.bf16.msra.mxu0 %v7494
    %8021 = vmatprep.subr.bf16.mxu0 %v7479
    %8022 = vmatpush1.bf16.msra.mxu0 %v7478
    %8023 = vmatprep.subr.bf16.mxu0 0
    %8024 = vmatpush2.bf16.msra.mxu0 0
    %8025 = vmatprep.subr.bf16.mxu0 0
    %8026 = vmatpush2.bf16.msra.mxu0 0
    %8027 = vmatprep.subr.bf16.mxu0 0
    %8028 = vmatpush2.bf16.msra.mxu0 0
    %8029 = vmatprep.subr.bf16.mxu0 0
    %8030 = vmatpush2.bf16.msra.mxu0 0
    %8031 = vmatprep.subr.bf16.mxu0 0
    %8032 = vmatpush2.bf16.msra.mxu0 0
    %8033 = vmatprep.subr.bf16.mxu0 0
    %8034 = vmatpush2.bf16.msra.mxu0 0
    %8035 = vmatprep.subr.bf16.mxu0 0
    %8036 = vmatpush2.bf16.msra.mxu0 0
    %8037 = vmatprep.subr.bf16.mxu0 0
    %8038 = vmatpush2.bf16.msra.mxu0 0
    %8039 = vmatprep.mubr.bf16.mxu0 0
    %8040 = vmatmul.mubr.bf16.gmra.mxu0 %v7078
    %v8041 = vpop.f32.mrf.mxu0
    %v8042 = vadd.f32 %v7050, %v8041
    %v8043 = vpop.f32.mrf.mxu0
    %v8044 = vadd.f32 %v7054, %v8043
    %v8045 = vpop.f32.mrf.mxu0
    %v8046 = vpop.f32.mrf.mxu0
    %8047 = vdwg.mxu0
    %v8048 = vmax.f32 %v7755, 0.0
    %v8049 = vmax.f32 %v7757, 0.0
    %v8050 = vmax.f32 %v7796, 0.0
    %v8051 = vmax.f32 %v7798, 0.0
    %v8052 = vmax.f32 %v7837, 0.0
    %v8053 = vmax.f32 %v7839, 0.0
    %v8054 = vmax.f32 %v7878, 0.0
    %v8055 = vmax.f32 %v7880, 0.0
    %v8056 = vmax.f32 %v7919, 0.0
    %v8057 = vmax.f32 %v7921, 0.0
    %v8058 = vmax.f32 %v7960, 0.0
    %v8059 = vmax.f32 %v7962, 0.0
    %v8060 = vmax.f32 %v8001, 0.0
    %v8061 = vmax.f32 %v8003, 0.0
    %v8062 = vmax.f32 %v8042, 0.0
    %v8063 = vmax.f32 %v8044, 0.0
    %v8064 = vpack.c.bf16 %v8048, %v8048
    %v8065 = vpack.c.bf16 %v8049, %v8049
    %v8066 = vpack.c.bf16 %v8050, %v8050
    %v8067 = vpack.c.bf16 %v8051, %v8051
    %v8068 = vpack.c.bf16 %v8052, %v8052
    %v8069 = vpack.c.bf16 %v8053, %v8053
    %v8070 = vpack.c.bf16 %v8054, %v8054
    %v8071 = vpack.c.bf16 %v8055, %v8055
    %v8072 = vpack.c.bf16 %v8056, %v8056
    %v8073 = vpack.c.bf16 %v8057, %v8057
    %v8074 = vpack.c.bf16 %v8058, %v8058
    %v8075 = vpack.c.bf16 %v8059, %v8059
    %v8076 = vpack.c.bf16 %v8060, %v8060
    %v8077 = vpack.c.bf16 %v8061, %v8061
    %v8078 = vpack.c.bf16 %v8062, %v8062
    %v8079 = vpack.c.bf16 %v8063, %v8063
    %v8080 = vld [vmem:[#allocation37] sm:$0xf]
    %v8081 = vld [vmem:[#allocation37 + $0x4] sm:$0xf]
    %v8082 = vld [vmem:[#allocation37 + $0x8] sm:$0xf]
    %v8083 = vld [vmem:[#allocation37 + $0xc] sm:$0xf]
    %v8084 = vld [vmem:[#allocation37 + $0x10] sm:$0xf]
    %v8085 = vld [vmem:[#allocation37 + $0x14] sm:$0xf]
    %v8086 = vld [vmem:[#allocation37 + $0x18] sm:$0xf]
    %v8087 = vld [vmem:[#allocation37 + $0x1c] sm:$0xf]
    %v8088 = vld [vmem:[#allocation37 + $0x20] sm:$0xf]
    %v8089 = vld [vmem:[#allocation37 + $0x24] sm:$0xf]
    %v8090 = vld [vmem:[#allocation37 + $0x28] sm:$0xf]
    %v8091 = vld [vmem:[#allocation37 + $0x2c] sm:$0xf]
    %v8092 = vld [vmem:[#allocation37 + $0x30] sm:$0xf]
    %v8093 = vld [vmem:[#allocation37 + $0x34] sm:$0xf]
    %v8094 = vld [vmem:[#allocation37 + $0x38] sm:$0xf]
    %v8095 = vld [vmem:[#allocation37 + $0x3c] sm:$0xf]
    %v8096 = vld [vmem:[#allocation37 + $0x40] sm:$0xf]
    %v8097 = vld [vmem:[#allocation37 + $0x44] sm:$0xf]
    %v8098 = vld [vmem:[#allocation37 + $0x48] sm:$0xf]
    %v8099 = vld [vmem:[#allocation37 + $0x4c] sm:$0xf]
    %v8100 = vld [vmem:[#allocation37 + $0x50] sm:$0xf]
    %v8101 = vld [vmem:[#allocation37 + $0x54] sm:$0xf]
    %v8102 = vld [vmem:[#allocation37 + $0x58] sm:$0xf]
    %v8103 = vld [vmem:[#allocation37 + $0x5c] sm:$0xf]
    %v8104 = vld [vmem:[#allocation37 + $0x60] sm:$0xf]
    %v8105 = vld [vmem:[#allocation37 + $0x64] sm:$0xf]
    %v8106 = vld [vmem:[#allocation37 + $0x68] sm:$0xf]
    %v8107 = vld [vmem:[#allocation37 + $0x6c] sm:$0xf]
    %v8108 = vld [vmem:[#allocation37 + $0x70] sm:$0xf]
    %v8109 = vld [vmem:[#allocation37 + $0x74] sm:$0xf]
    %v8110 = vld [vmem:[#allocation37 + $0x78] sm:$0xf]
    %v8111 = vld [vmem:[#allocation37 + $0x7c] sm:$0xf]
    %v8112 = vld [vmem:[#allocation37 + $0x80] sm:$0xf]
    %v8113 = vld [vmem:[#allocation37 + $0x84] sm:$0xf]
    %v8114 = vld [vmem:[#allocation37 + $0x88] sm:$0xf]
    %v8115 = vld [vmem:[#allocation37 + $0x8c] sm:$0xf]
    %v8116 = vld [vmem:[#allocation37 + $0x90] sm:$0xf]
    %v8117 = vld [vmem:[#allocation37 + $0x94] sm:$0xf]
    %v8118 = vld [vmem:[#allocation37 + $0x98] sm:$0xf]
    %v8119 = vld [vmem:[#allocation37 + $0x9c] sm:$0xf]
    %v8120 = vld [vmem:[#allocation37 + $0xa0] sm:$0xf]
    %v8121 = vld [vmem:[#allocation37 + $0xa4] sm:$0xf]
    %v8122 = vld [vmem:[#allocation37 + $0xa8] sm:$0xf]
    %v8123 = vld [vmem:[#allocation37 + $0xac] sm:$0xf]
    %v8124 = vld [vmem:[#allocation37 + $0xb0] sm:$0xf]
    %v8125 = vld [vmem:[#allocation37 + $0xb4] sm:$0xf]
    %v8126 = vld [vmem:[#allocation37 + $0xb8] sm:$0xf]
    %v8127 = vld [vmem:[#allocation37 + $0xbc] sm:$0xf]
    %v8128 = vld [vmem:[#allocation37 + $0xc0] sm:$0xf]
    %v8129 = vld [vmem:[#allocation37 + $0xc4] sm:$0xf]
    %v8130 = vld [vmem:[#allocation37 + $0xc8] sm:$0xf]
    %v8131 = vld [vmem:[#allocation37 + $0xcc] sm:$0xf]
    %v8132 = vld [vmem:[#allocation37 + $0xd0] sm:$0xf]
    %v8133 = vld [vmem:[#allocation37 + $0xd4] sm:$0xf]
    %v8134 = vld [vmem:[#allocation37 + $0xd8] sm:$0xf]
    %v8135 = vld [vmem:[#allocation37 + $0xdc] sm:$0xf]
    %v8136 = vld [vmem:[#allocation37 + $0xe0] sm:$0xf]
    %v8137 = vld [vmem:[#allocation37 + $0xe4] sm:$0xf]
    %v8138 = vld [vmem:[#allocation37 + $0xe8] sm:$0xf]
    %v8139 = vld [vmem:[#allocation37 + $0xec] sm:$0xf]
    %v8140 = vld [vmem:[#allocation37 + $0xf0] sm:$0xf]
    %v8141 = vld [vmem:[#allocation37 + $0xf4] sm:$0xf]
    %v8142 = vld [vmem:[#allocation37 + $0xf8] sm:$0xf]
    %v8143 = vld [vmem:[#allocation37 + $0xfc] sm:$0xf]
    %v8144 = vld [vmem:[#allocation37 + $0x100] sm:$0xf]
    %v8145 = vld [vmem:[#allocation37 + $0x104] sm:$0xf]
    %v8146 = vld [vmem:[#allocation37 + $0x108] sm:$0xf]
    %v8147 = vld [vmem:[#allocation37 + $0x10c] sm:$0xf]
    %v8148 = vld [vmem:[#allocation37 + $0x110] sm:$0xf]
    %v8149 = vld [vmem:[#allocation37 + $0x114] sm:$0xf]
    %v8150 = vld [vmem:[#allocation37 + $0x118] sm:$0xf]
    %v8151 = vld [vmem:[#allocation37 + $0x11c] sm:$0xf]
    %v8152 = vld [vmem:[#allocation37 + $0x120] sm:$0xf]
    %v8153 = vld [vmem:[#allocation37 + $0x124] sm:$0xf]
    %v8154 = vld [vmem:[#allocation37 + $0x128] sm:$0xf]
    %v8155 = vld [vmem:[#allocation37 + $0x12c] sm:$0xf]
    %v8156 = vld [vmem:[#allocation37 + $0x130] sm:$0xf]
    %v8157 = vld [vmem:[#allocation37 + $0x134] sm:$0xf]
    %v8158 = vld [vmem:[#allocation37 + $0x138] sm:$0xf]
    %v8159 = vld [vmem:[#allocation37 + $0x13c] sm:$0xf]
    %v8160 = vld [vmem:[#allocation37 + $0x140] sm:$0xf]
    %v8161 = vld [vmem:[#allocation37 + $0x144] sm:$0xf]
    %v8162 = vld [vmem:[#allocation37 + $0x148] sm:$0xf]
    %v8163 = vld [vmem:[#allocation37 + $0x14c] sm:$0xf]
    %v8164 = vld [vmem:[#allocation37 + $0x150] sm:$0xf]
    %v8165 = vld [vmem:[#allocation37 + $0x154] sm:$0xf]
    %v8166 = vld [vmem:[#allocation37 + $0x158] sm:$0xf]
    %v8167 = vld [vmem:[#allocation37 + $0x15c] sm:$0xf]
    %v8168 = vld [vmem:[#allocation37 + $0x160] sm:$0xf]
    %v8169 = vld [vmem:[#allocation37 + $0x164] sm:$0xf]
    %v8170 = vld [vmem:[#allocation37 + $0x168] sm:$0xf]
    %v8171 = vld [vmem:[#allocation37 + $0x16c] sm:$0xf]
    %v8172 = vld [vmem:[#allocation37 + $0x170] sm:$0xf]
    %v8173 = vld [vmem:[#allocation37 + $0x174] sm:$0xf]
    %v8174 = vld [vmem:[#allocation37 + $0x178] sm:$0xf]
    %v8175 = vld [vmem:[#allocation37 + $0x17c] sm:$0xf]
    %v8176 = vld [vmem:[#allocation37 + $0x180] sm:$0xf]
    %v8177 = vld [vmem:[#allocation37 + $0x184] sm:$0xf]
    %v8178 = vld [vmem:[#allocation37 + $0x188] sm:$0xf]
    %v8179 = vld [vmem:[#allocation37 + $0x18c] sm:$0xf]
    %v8180 = vld [vmem:[#allocation37 + $0x190] sm:$0xf]
    %v8181 = vld [vmem:[#allocation37 + $0x194] sm:$0xf]
    %v8182 = vld [vmem:[#allocation37 + $0x198] sm:$0xf]
    %v8183 = vld [vmem:[#allocation37 + $0x19c] sm:$0xf]
    %v8184 = vld [vmem:[#allocation37 + $0x1a0] sm:$0xf]
    %v8185 = vld [vmem:[#allocation37 + $0x1a4] sm:$0xf]
    %v8186 = vld [vmem:[#allocation37 + $0x1a8] sm:$0xf]
    %v8187 = vld [vmem:[#allocation37 + $0x1ac] sm:$0xf]
    %v8188 = vld [vmem:[#allocation37 + $0x1b0] sm:$0xf]
    %v8189 = vld [vmem:[#allocation37 + $0x1b4] sm:$0xf]
    %v8190 = vld [vmem:[#allocation37 + $0x1b8] sm:$0xf]
    %v8191 = vld [vmem:[#allocation37 + $0x1bc] sm:$0xf]
    %v8192 = vld [vmem:[#allocation37 + $0x1c0] sm:$0xf]
    %v8193 = vld [vmem:[#allocation37 + $0x1c4] sm:$0xf]
    %v8194 = vld [vmem:[#allocation37 + $0x1c8] sm:$0xf]
    %v8195 = vld [vmem:[#allocation37 + $0x1cc] sm:$0xf]
    %v8196 = vld [vmem:[#allocation37 + $0x1d0] sm:$0xf]
    %v8197 = vld [vmem:[#allocation37 + $0x1d4] sm:$0xf]
    %v8198 = vld [vmem:[#allocation37 + $0x1d8] sm:$0xf]
    %v8199 = vld [vmem:[#allocation37 + $0x1dc] sm:$0xf]
    %v8200 = vld [vmem:[#allocation37 + $0x1e0] sm:$0xf]
    %v8201 = vld [vmem:[#allocation37 + $0x1e4] sm:$0xf]
    %v8202 = vld [vmem:[#allocation37 + $0x1e8] sm:$0xf]
    %v8203 = vld [vmem:[#allocation37 + $0x1ec] sm:$0xf]
    %v8204 = vld [vmem:[#allocation37 + $0x1f0] sm:$0xf]
    %v8205 = vld [vmem:[#allocation37 + $0x1f4] sm:$0xf]
    %v8206 = vld [vmem:[#allocation37 + $0x1f8] sm:$0xf]
    %v8207 = vld [vmem:[#allocation37 + $0x1fc] sm:$0xf]
    %v8208 = vld [vmem:[#allocation37 + $0x200] sm:$0xf]
    %v8209 = vld [vmem:[#allocation37 + $0x204] sm:$0xf]
    %v8210 = vld [vmem:[#allocation37 + $0x208] sm:$0xf]
    %v8211 = vld [vmem:[#allocation37 + $0x20c] sm:$0xf]
    %v8212 = vld [vmem:[#allocation37 + $0x210] sm:$0xf]
    %v8213 = vld [vmem:[#allocation37 + $0x214] sm:$0xf]
    %v8214 = vld [vmem:[#allocation37 + $0x218] sm:$0xf]
    %v8215 = vld [vmem:[#allocation37 + $0x21c] sm:$0xf]
    %v8216 = vld [vmem:[#allocation37 + $0x220] sm:$0xf]
    %v8217 = vld [vmem:[#allocation37 + $0x224] sm:$0xf]
    %v8218 = vld [vmem:[#allocation37 + $0x228] sm:$0xf]
    %v8219 = vld [vmem:[#allocation37 + $0x22c] sm:$0xf]
    %v8220 = vld [vmem:[#allocation37 + $0x230] sm:$0xf]
    %v8221 = vld [vmem:[#allocation37 + $0x234] sm:$0xf]
    %v8222 = vld [vmem:[#allocation37 + $0x238] sm:$0xf]
    %v8223 = vld [vmem:[#allocation37 + $0x23c] sm:$0xf]
    %v8224 = vld [vmem:[#allocation37 + $0x240] sm:$0xf]
    %v8225 = vld [vmem:[#allocation37 + $0x244] sm:$0xf]
    %v8226 = vld [vmem:[#allocation37 + $0x248] sm:$0xf]
    %v8227 = vld [vmem:[#allocation37 + $0x24c] sm:$0xf]
    %v8228 = vld [vmem:[#allocation37 + $0x250] sm:$0xf]
    %v8229 = vld [vmem:[#allocation37 + $0x254] sm:$0xf]
    %v8230 = vld [vmem:[#allocation37 + $0x258] sm:$0xf]
    %v8231 = vld [vmem:[#allocation37 + $0x25c] sm:$0xf]
    %v8232 = vld [vmem:[#allocation37 + $0x260] sm:$0xf]
    %v8233 = vld [vmem:[#allocation37 + $0x264] sm:$0xf]
    %v8234 = vld [vmem:[#allocation37 + $0x268] sm:$0xf]
    %v8235 = vld [vmem:[#allocation37 + $0x26c] sm:$0xf]
    %v8236 = vld [vmem:[#allocation37 + $0x270] sm:$0xf]
    %v8237 = vld [vmem:[#allocation37 + $0x274] sm:$0xf]
    %v8238 = vld [vmem:[#allocation37 + $0x278] sm:$0xf]
    %v8239 = vld [vmem:[#allocation37 + $0x27c] sm:$0xf]
    %v8240 = vld [vmem:[#allocation37 + $0x280] sm:$0xf]
    %v8241 = vld [vmem:[#allocation37 + $0x284] sm:$0xf]
    %v8242 = vld [vmem:[#allocation37 + $0x288] sm:$0xf]
    %v8243 = vld [vmem:[#allocation37 + $0x28c] sm:$0xf]
    %v8244 = vld [vmem:[#allocation37 + $0x290] sm:$0xf]
    %v8245 = vld [vmem:[#allocation37 + $0x294] sm:$0xf]
    %v8246 = vld [vmem:[#allocation37 + $0x298] sm:$0xf]
    %v8247 = vld [vmem:[#allocation37 + $0x29c] sm:$0xf]
    %v8248 = vld [vmem:[#allocation37 + $0x2a0] sm:$0xf]
    %v8249 = vld [vmem:[#allocation37 + $0x2a4] sm:$0xf]
    %v8250 = vld [vmem:[#allocation37 + $0x2a8] sm:$0xf]
    %v8251 = vld [vmem:[#allocation37 + $0x2ac] sm:$0xf]
    %v8252 = vld [vmem:[#allocation37 + $0x2b0] sm:$0xf]
    %v8253 = vld [vmem:[#allocation37 + $0x2b4] sm:$0xf]
    %v8254 = vld [vmem:[#allocation37 + $0x2b8] sm:$0xf]
    %v8255 = vld [vmem:[#allocation37 + $0x2bc] sm:$0xf]
    %v8256 = vld [vmem:[#allocation37 + $0x2c0] sm:$0xf]
    %v8257 = vld [vmem:[#allocation37 + $0x2c4] sm:$0xf]
    %v8258 = vld [vmem:[#allocation37 + $0x2c8] sm:$0xf]
    %v8259 = vld [vmem:[#allocation37 + $0x2cc] sm:$0xf]
    %v8260 = vld [vmem:[#allocation37 + $0x2d0] sm:$0xf]
    %v8261 = vld [vmem:[#allocation37 + $0x2d4] sm:$0xf]
    %v8262 = vld [vmem:[#allocation37 + $0x2d8] sm:$0xf]
    %v8263 = vld [vmem:[#allocation37 + $0x2dc] sm:$0xf]
    %v8264 = vld [vmem:[#allocation37 + $0x2e0] sm:$0xf]
    %v8265 = vld [vmem:[#allocation37 + $0x2e4] sm:$0xf]
    %v8266 = vld [vmem:[#allocation37 + $0x2e8] sm:$0xf]
    %v8267 = vld [vmem:[#allocation37 + $0x2ec] sm:$0xf]
    %v8268 = vld [vmem:[#allocation37 + $0x2f0] sm:$0xf]
    %v8269 = vld [vmem:[#allocation37 + $0x2f4] sm:$0xf]
    %v8270 = vld [vmem:[#allocation37 + $0x2f8] sm:$0xf]
    %v8271 = vld [vmem:[#allocation37 + $0x2fc] sm:$0xf]
    %v8272 = vld [vmem:[#allocation37 + $0x300] sm:$0xf]
    %v8273 = vld [vmem:[#allocation37 + $0x304] sm:$0xf]
    %v8274 = vld [vmem:[#allocation37 + $0x308] sm:$0xf]
    %v8275 = vld [vmem:[#allocation37 + $0x30c] sm:$0xf]
    %v8276 = vld [vmem:[#allocation37 + $0x310] sm:$0xf]
    %v8277 = vld [vmem:[#allocation37 + $0x314] sm:$0xf]
    %v8278 = vld [vmem:[#allocation37 + $0x318] sm:$0xf]
    %v8279 = vld [vmem:[#allocation37 + $0x31c] sm:$0xf]
    %v8280 = vld [vmem:[#allocation37 + $0x320] sm:$0xf]
    %v8281 = vld [vmem:[#allocation37 + $0x324] sm:$0xf]
    %v8282 = vld [vmem:[#allocation37 + $0x328] sm:$0xf]
    %v8283 = vld [vmem:[#allocation37 + $0x32c] sm:$0xf]
    %v8284 = vld [vmem:[#allocation37 + $0x330] sm:$0xf]
    %v8285 = vld [vmem:[#allocation37 + $0x334] sm:$0xf]
    %v8286 = vld [vmem:[#allocation37 + $0x338] sm:$0xf]
    %v8287 = vld [vmem:[#allocation37 + $0x33c] sm:$0xf]
    %v8288 = vld [vmem:[#allocation37 + $0x340] sm:$0xf]
    %v8289 = vld [vmem:[#allocation37 + $0x344] sm:$0xf]
    %v8290 = vld [vmem:[#allocation37 + $0x348] sm:$0xf]
    %v8291 = vld [vmem:[#allocation37 + $0x34c] sm:$0xf]
    %v8292 = vld [vmem:[#allocation37 + $0x350] sm:$0xf]
    %v8293 = vld [vmem:[#allocation37 + $0x354] sm:$0xf]
    %v8294 = vld [vmem:[#allocation37 + $0x358] sm:$0xf]
    %v8295 = vld [vmem:[#allocation37 + $0x35c] sm:$0xf]
    %v8296 = vld [vmem:[#allocation37 + $0x360] sm:$0xf]
    %v8297 = vld [vmem:[#allocation37 + $0x364] sm:$0xf]
    %v8298 = vld [vmem:[#allocation37 + $0x368] sm:$0xf]
    %v8299 = vld [vmem:[#allocation37 + $0x36c] sm:$0xf]
    %v8300 = vld [vmem:[#allocation37 + $0x370] sm:$0xf]
    %v8301 = vld [vmem:[#allocation37 + $0x374] sm:$0xf]
    %v8302 = vld [vmem:[#allocation37 + $0x378] sm:$0xf]
    %v8303 = vld [vmem:[#allocation37 + $0x37c] sm:$0xf]
    %v8304 = vld [vmem:[#allocation37 + $0x380] sm:$0xf]
    %v8305 = vld [vmem:[#allocation37 + $0x384] sm:$0xf]
    %v8306 = vld [vmem:[#allocation37 + $0x388] sm:$0xf]
    %v8307 = vld [vmem:[#allocation37 + $0x38c] sm:$0xf]
    %v8308 = vld [vmem:[#allocation37 + $0x390] sm:$0xf]
    %v8309 = vld [vmem:[#allocation37 + $0x394] sm:$0xf]
    %v8310 = vld [vmem:[#allocation37 + $0x398] sm:$0xf]
    %v8311 = vld [vmem:[#allocation37 + $0x39c] sm:$0xf]
    %v8312 = vld [vmem:[#allocation37 + $0x3a0] sm:$0xf]
    %v8313 = vld [vmem:[#allocation37 + $0x3a4] sm:$0xf]
    %v8314 = vld [vmem:[#allocation37 + $0x3a8] sm:$0xf]
    %v8315 = vld [vmem:[#allocation37 + $0x3ac] sm:$0xf]
    %v8316 = vld [vmem:[#allocation37 + $0x3b0] sm:$0xf]
    %v8317 = vld [vmem:[#allocation37 + $0x3b4] sm:$0xf]
    %v8318 = vld [vmem:[#allocation37 + $0x3b8] sm:$0xf]
    %v8319 = vld [vmem:[#allocation37 + $0x3bc] sm:$0xf]
    %v8320 = vld [vmem:[#allocation37 + $0x3c0] sm:$0xf]
    %v8321 = vld [vmem:[#allocation37 + $0x3c4] sm:$0xf]
    %v8322 = vld [vmem:[#allocation37 + $0x3c8] sm:$0xf]
    %v8323 = vld [vmem:[#allocation37 + $0x3cc] sm:$0xf]
    %v8324 = vld [vmem:[#allocation37 + $0x3d0] sm:$0xf]
    %v8325 = vld [vmem:[#allocation37 + $0x3d4] sm:$0xf]
    %v8326 = vld [vmem:[#allocation37 + $0x3d8] sm:$0xf]
    %v8327 = vld [vmem:[#allocation37 + $0x3dc] sm:$0xf]
    %v8328 = vld [vmem:[#allocation37 + $0x3e0] sm:$0xf]
    %v8329 = vld [vmem:[#allocation37 + $0x3e4] sm:$0xf]
    %v8330 = vld [vmem:[#allocation37 + $0x3e8] sm:$0xf]
    %v8331 = vld [vmem:[#allocation37 + $0x3ec] sm:$0xf]
    %v8332 = vld [vmem:[#allocation37 + $0x3f0] sm:$0xf]
    %v8333 = vld [vmem:[#allocation37 + $0x3f4] sm:$0xf]
    %v8334 = vld [vmem:[#allocation37 + $0x3f8] sm:$0xf]
    %v8335 = vld [vmem:[#allocation37 + $0x3fc] sm:$0xf]
    %v8336 = vld [vmem:[%s61] sm:$0x1]
    %v8338 = vlaneseq
    %v8339 = vshrl.u32 %v8338, 7
    %v8340 = vsub.s32 0, %v8339
    %v8341 = vrot.slane %v8336, %v8340
    %v8599 = vunpack.c.l.b16 %v8080
    %v8600 = vunpack.c.l.b16 %v8081
    %v8601 = vunpack.c.l.b16 %v8082
    %v8602 = vunpack.c.l.b16 %v8083
    %v8603 = vunpack.c.l.b16 %v8084
    %v8604 = vunpack.c.l.b16 %v8085
    %v8605 = vunpack.c.l.b16 %v8086
    %v8606 = vunpack.c.l.b16 %v8087
    %v8607 = vunpack.c.l.b16 %v8088
    %v8608 = vunpack.c.l.b16 %v8089
    %v8609 = vunpack.c.l.b16 %v8090
    %v8610 = vunpack.c.l.b16 %v8091
    %v8611 = vunpack.c.l.b16 %v8092
    %v8612 = vunpack.c.l.b16 %v8093
    %v8613 = vunpack.c.l.b16 %v8094
    %v8614 = vunpack.c.l.b16 %v8095
    %v8615 = vunpack.c.l.b16 %v8096
    %v8616 = vunpack.c.l.b16 %v8097
    %v8617 = vunpack.c.l.b16 %v8098
    %v8618 = vunpack.c.l.b16 %v8099
    %v8619 = vunpack.c.l.b16 %v8100
    %v8620 = vunpack.c.l.b16 %v8101
    %v8621 = vunpack.c.l.b16 %v8102
    %v8622 = vunpack.c.l.b16 %v8103
    %v8623 = vunpack.c.l.b16 %v8104
    %v8624 = vunpack.c.l.b16 %v8105
    %v8625 = vunpack.c.l.b16 %v8106
    %v8626 = vunpack.c.l.b16 %v8107
    %v8627 = vunpack.c.l.b16 %v8108
    %v8628 = vunpack.c.l.b16 %v8109
    %v8629 = vunpack.c.l.b16 %v8110
    %v8630 = vunpack.c.l.b16 %v8111
    %v8631 = vunpack.c.l.b16 %v8112
    %v8632 = vunpack.c.l.b16 %v8113
    %v8633 = vunpack.c.l.b16 %v8114
    %v8634 = vunpack.c.l.b16 %v8115
    %v8635 = vunpack.c.l.b16 %v8116
    %v8636 = vunpack.c.l.b16 %v8117
    %v8637 = vunpack.c.l.b16 %v8118
    %v8638 = vunpack.c.l.b16 %v8119
    %v8639 = vunpack.c.l.b16 %v8120
    %v8640 = vunpack.c.l.b16 %v8121
    %v8641 = vunpack.c.l.b16 %v8122
    %v8642 = vunpack.c.l.b16 %v8123
    %v8643 = vunpack.c.l.b16 %v8124
    %v8644 = vunpack.c.l.b16 %v8125
    %v8645 = vunpack.c.l.b16 %v8126
    %v8646 = vunpack.c.l.b16 %v8127
    %v8647 = vunpack.c.l.b16 %v8128
    %v8648 = vunpack.c.l.b16 %v8129
    %v8649 = vunpack.c.l.b16 %v8130
    %v8650 = vunpack.c.l.b16 %v8131
    %v8651 = vunpack.c.l.b16 %v8132
    %v8652 = vunpack.c.l.b16 %v8133
    %v8653 = vunpack.c.l.b16 %v8134
    %v8654 = vunpack.c.l.b16 %v8135
    %v8655 = vunpack.c.l.b16 %v8136
    %v8656 = vunpack.c.l.b16 %v8137
    %v8657 = vunpack.c.l.b16 %v8138
    %v8658 = vunpack.c.l.b16 %v8139
    %v8659 = vunpack.c.l.b16 %v8140
    %v8660 = vunpack.c.l.b16 %v8141
    %v8661 = vunpack.c.l.b16 %v8142
    %v8662 = vunpack.c.l.b16 %v8143
    %v8663 = vunpack.c.l.b16 %v8144
    %v8664 = vunpack.c.l.b16 %v8145
    %v8665 = vunpack.c.l.b16 %v8146
    %v8666 = vunpack.c.l.b16 %v8147
    %v8667 = vunpack.c.l.b16 %v8148
    %v8668 = vunpack.c.l.b16 %v8149
    %v8669 = vunpack.c.l.b16 %v8150
    %v8670 = vunpack.c.l.b16 %v8151
    %v8671 = vunpack.c.l.b16 %v8152
    %v8672 = vunpack.c.l.b16 %v8153
    %v8673 = vunpack.c.l.b16 %v8154
    %v8674 = vunpack.c.l.b16 %v8155
    %v8675 = vunpack.c.l.b16 %v8156
    %v8676 = vunpack.c.l.b16 %v8157
    %v8677 = vunpack.c.l.b16 %v8158
    %v8678 = vunpack.c.l.b16 %v8159
    %v8679 = vunpack.c.l.b16 %v8160
    %v8680 = vunpack.c.l.b16 %v8161
    %v8681 = vunpack.c.l.b16 %v8162
    %v8682 = vunpack.c.l.b16 %v8163
    %v8683 = vunpack.c.l.b16 %v8164
    %v8684 = vunpack.c.l.b16 %v8165
    %v8685 = vunpack.c.l.b16 %v8166
    %v8686 = vunpack.c.l.b16 %v8167
    %v8687 = vunpack.c.l.b16 %v8168
    %v8688 = vunpack.c.l.b16 %v8169
    %v8689 = vunpack.c.l.b16 %v8170
    %v8690 = vunpack.c.l.b16 %v8171
    %v8691 = vunpack.c.l.b16 %v8172
    %v8692 = vunpack.c.l.b16 %v8173
    %v8693 = vunpack.c.l.b16 %v8174
    %v8694 = vunpack.c.l.b16 %v8175
    %v8695 = vunpack.c.l.b16 %v8176
    %v8696 = vunpack.c.l.b16 %v8177
    %v8697 = vunpack.c.l.b16 %v8178
    %v8698 = vunpack.c.l.b16 %v8179
    %v8699 = vunpack.c.l.b16 %v8180
    %v8700 = vunpack.c.l.b16 %v8181
    %v8701 = vunpack.c.l.b16 %v8182
    %v8702 = vunpack.c.l.b16 %v8183
    %v8703 = vunpack.c.l.b16 %v8184
    %v8704 = vunpack.c.l.b16 %v8185
    %v8705 = vunpack.c.l.b16 %v8186
    %v8706 = vunpack.c.l.b16 %v8187
    %v8707 = vunpack.c.l.b16 %v8188
    %v8708 = vunpack.c.l.b16 %v8189
    %v8709 = vunpack.c.l.b16 %v8190
    %v8710 = vunpack.c.l.b16 %v8191
    %v8711 = vunpack.c.l.b16 %v8192
    %v8712 = vunpack.c.l.b16 %v8193
    %v8713 = vunpack.c.l.b16 %v8194
    %v8714 = vunpack.c.l.b16 %v8195
    %v8715 = vunpack.c.l.b16 %v8196
    %v8716 = vunpack.c.l.b16 %v8197
    %v8717 = vunpack.c.l.b16 %v8198
    %v8718 = vunpack.c.l.b16 %v8199
    %v8719 = vunpack.c.l.b16 %v8200
    %v8720 = vunpack.c.l.b16 %v8201
    %v8721 = vunpack.c.l.b16 %v8202
    %v8722 = vunpack.c.l.b16 %v8203
    %v8723 = vunpack.c.l.b16 %v8204
    %v8724 = vunpack.c.l.b16 %v8205
    %v8725 = vunpack.c.l.b16 %v8206
    %v8726 = vunpack.c.l.b16 %v8207
    %v8727 = vunpack.c.l.b16 %v8208
    %v8728 = vunpack.c.l.b16 %v8209
    %v8729 = vunpack.c.l.b16 %v8210
    %v8730 = vunpack.c.l.b16 %v8211
    %v8731 = vunpack.c.l.b16 %v8212
    %v8732 = vunpack.c.l.b16 %v8213
    %v8733 = vunpack.c.l.b16 %v8214
    %v8734 = vunpack.c.l.b16 %v8215
    %v8735 = vunpack.c.l.b16 %v8216
    %v8736 = vunpack.c.l.b16 %v8217
    %v8737 = vunpack.c.l.b16 %v8218
    %v8738 = vunpack.c.l.b16 %v8219
    %v8739 = vunpack.c.l.b16 %v8220
    %v8740 = vunpack.c.l.b16 %v8221
    %v8741 = vunpack.c.l.b16 %v8222
    %v8742 = vunpack.c.l.b16 %v8223
    %v8743 = vunpack.c.l.b16 %v8224
    %v8744 = vunpack.c.l.b16 %v8225
    %v8745 = vunpack.c.l.b16 %v8226
    %v8746 = vunpack.c.l.b16 %v8227
    %v8747 = vunpack.c.l.b16 %v8228
    %v8748 = vunpack.c.l.b16 %v8229
    %v8749 = vunpack.c.l.b16 %v8230
    %v8750 = vunpack.c.l.b16 %v8231
    %v8751 = vunpack.c.l.b16 %v8232
    %v8752 = vunpack.c.l.b16 %v8233
    %v8753 = vunpack.c.l.b16 %v8234
    %v8754 = vunpack.c.l.b16 %v8235
    %v8755 = vunpack.c.l.b16 %v8236
    %v8756 = vunpack.c.l.b16 %v8237
    %v8757 = vunpack.c.l.b16 %v8238
    %v8758 = vunpack.c.l.b16 %v8239
    %v8759 = vunpack.c.l.b16 %v8240
    %v8760 = vunpack.c.l.b16 %v8241
    %v8761 = vunpack.c.l.b16 %v8242
    %v8762 = vunpack.c.l.b16 %v8243
    %v8763 = vunpack.c.l.b16 %v8244
    %v8764 = vunpack.c.l.b16 %v8245
    %v8765 = vunpack.c.l.b16 %v8246
    %v8766 = vunpack.c.l.b16 %v8247
    %v8767 = vunpack.c.l.b16 %v8248
    %v8768 = vunpack.c.l.b16 %v8249
    %v8769 = vunpack.c.l.b16 %v8250
    %v8770 = vunpack.c.l.b16 %v8251
    %v8771 = vunpack.c.l.b16 %v8252
    %v8772 = vunpack.c.l.b16 %v8253
    %v8773 = vunpack.c.l.b16 %v8254
    %v8774 = vunpack.c.l.b16 %v8255
    %v8775 = vunpack.c.l.b16 %v8256
    %v8776 = vunpack.c.l.b16 %v8257
    %v8777 = vunpack.c.l.b16 %v8258
    %v8778 = vunpack.c.l.b16 %v8259
    %v8779 = vunpack.c.l.b16 %v8260
    %v8780 = vunpack.c.l.b16 %v8261
    %v8781 = vunpack.c.l.b16 %v8262
    %v8782 = vunpack.c.l.b16 %v8263
    %v8783 = vunpack.c.l.b16 %v8264
    %v8784 = vunpack.c.l.b16 %v8265
    %v8785 = vunpack.c.l.b16 %v8266
    %v8786 = vunpack.c.l.b16 %v8267
    %v8787 = vunpack.c.l.b16 %v8268
    %v8788 = vunpack.c.l.b16 %v8269
    %v8789 = vunpack.c.l.b16 %v8270
    %v8790 = vunpack.c.l.b16 %v8271
    %v8791 = vunpack.c.l.b16 %v8272
    %v8792 = vunpack.c.l.b16 %v8273
    %v8793 = vunpack.c.l.b16 %v8274
    %v8794 = vunpack.c.l.b16 %v8275
    %v8795 = vunpack.c.l.b16 %v8276
    %v8796 = vunpack.c.l.b16 %v8277
    %v8797 = vunpack.c.l.b16 %v8278
    %v8798 = vunpack.c.l.b16 %v8279
    %v8799 = vunpack.c.l.b16 %v8280
    %v8800 = vunpack.c.l.b16 %v8281
    %v8801 = vunpack.c.l.b16 %v8282
    %v8802 = vunpack.c.l.b16 %v8283
    %v8803 = vunpack.c.l.b16 %v8284
    %v8804 = vunpack.c.l.b16 %v8285
    %v8805 = vunpack.c.l.b16 %v8286
    %v8806 = vunpack.c.l.b16 %v8287
    %v8807 = vunpack.c.l.b16 %v8288
    %v8808 = vunpack.c.l.b16 %v8289
    %v8809 = vunpack.c.l.b16 %v8290
    %v8810 = vunpack.c.l.b16 %v8291
    %v8811 = vunpack.c.l.b16 %v8292
    %v8812 = vunpack.c.l.b16 %v8293
    %v8813 = vunpack.c.l.b16 %v8294
    %v8814 = vunpack.c.l.b16 %v8295
    %v8815 = vunpack.c.l.b16 %v8296
    %v8816 = vunpack.c.l.b16 %v8297
    %v8817 = vunpack.c.l.b16 %v8298
    %v8818 = vunpack.c.l.b16 %v8299
    %v8819 = vunpack.c.l.b16 %v8300
    %v8820 = vunpack.c.l.b16 %v8301
    %v8821 = vunpack.c.l.b16 %v8302
    %v8822 = vunpack.c.l.b16 %v8303
    %v8823 = vunpack.c.l.b16 %v8304
    %v8824 = vunpack.c.l.b16 %v8305
    %v8825 = vunpack.c.l.b16 %v8306
    %v8826 = vunpack.c.l.b16 %v8307
    %v8827 = vunpack.c.l.b16 %v8308
    %v8828 = vunpack.c.l.b16 %v8309
    %v8829 = vunpack.c.l.b16 %v8310
    %v8830 = vunpack.c.l.b16 %v8311
    %v8831 = vunpack.c.l.b16 %v8312
    %v8832 = vunpack.c.l.b16 %v8313
    %v8833 = vunpack.c.l.b16 %v8314
    %v8834 = vunpack.c.l.b16 %v8315
    %v8835 = vunpack.c.l.b16 %v8316
    %v8836 = vunpack.c.l.b16 %v8317
    %v8837 = vunpack.c.l.b16 %v8318
    %v8838 = vunpack.c.l.b16 %v8319
    %v8839 = vunpack.c.l.b16 %v8320
    %v8840 = vunpack.c.l.b16 %v8321
    %v8841 = vunpack.c.l.b16 %v8322
    %v8842 = vunpack.c.l.b16 %v8323
    %v8843 = vunpack.c.l.b16 %v8324
    %v8844 = vunpack.c.l.b16 %v8325
    %v8845 = vunpack.c.l.b16 %v8326
    %v8846 = vunpack.c.l.b16 %v8327
    %v8847 = vunpack.c.l.b16 %v8328
    %v8848 = vunpack.c.l.b16 %v8329
    %v8849 = vunpack.c.l.b16 %v8330
    %v8850 = vunpack.c.l.b16 %v8331
    %v8851 = vunpack.c.l.b16 %v8332
    %v8852 = vunpack.c.l.b16 %v8333
    %v8853 = vunpack.c.l.b16 %v8334
    %v8854 = vunpack.c.l.b16 %v8335
    %v8855 = vpack.c.b16 %v8600, %v8599
    %v8856 = vpack.c.b16 %v8602, %v8601
    %v8857 = vpack.c.b16 %v8604, %v8603
    %v8858 = vpack.c.b16 %v8606, %v8605
    %v8859 = vpack.c.b16 %v8608, %v8607
    %v8860 = vpack.c.b16 %v8610, %v8609
    %v8861 = vpack.c.b16 %v8612, %v8611
    %v8862 = vpack.c.b16 %v8614, %v8613
    %v8863 = vpack.c.b16 %v8616, %v8615
    %v8864 = vpack.c.b16 %v8618, %v8617
    %v8865 = vpack.c.b16 %v8620, %v8619
    %v8866 = vpack.c.b16 %v8622, %v8621
    %v8867 = vpack.c.b16 %v8624, %v8623
    %v8868 = vpack.c.b16 %v8626, %v8625
    %v8869 = vpack.c.b16 %v8628, %v8627
    %v8870 = vpack.c.b16 %v8630, %v8629
    %v8871 = vpack.c.b16 %v8632, %v8631
    %v8872 = vpack.c.b16 %v8634, %v8633
    %v8873 = vpack.c.b16 %v8636, %v8635
    %v8874 = vpack.c.b16 %v8638, %v8637
    %v8875 = vpack.c.b16 %v8640, %v8639
    %v8876 = vpack.c.b16 %v8642, %v8641
    %v8877 = vpack.c.b16 %v8644, %v8643
    %v8878 = vpack.c.b16 %v8646, %v8645
    %v8879 = vpack.c.b16 %v8648, %v8647
    %v8880 = vpack.c.b16 %v8650, %v8649
    %v8881 = vpack.c.b16 %v8652, %v8651
    %v8882 = vpack.c.b16 %v8654, %v8653
    %v8883 = vpack.c.b16 %v8656, %v8655
    %v8884 = vpack.c.b16 %v8658, %v8657
    %v8885 = vpack.c.b16 %v8660, %v8659
    %v8886 = vpack.c.b16 %v8662, %v8661
    %v8887 = vpack.c.b16 %v8664, %v8663
    %v8888 = vpack.c.b16 %v8666, %v8665
    %v8889 = vpack.c.b16 %v8668, %v8667
    %v8890 = vpack.c.b16 %v8670, %v8669
    %v8891 = vpack.c.b16 %v8672, %v8671
    %v8892 = vpack.c.b16 %v8674, %v8673
    %v8893 = vpack.c.b16 %v8676, %v8675
    %v8894 = vpack.c.b16 %v8678, %v8677
    %v8895 = vpack.c.b16 %v8680, %v8679
    %v8896 = vpack.c.b16 %v8682, %v8681
    %v8897 = vpack.c.b16 %v8684, %v8683
    %v8898 = vpack.c.b16 %v8686, %v8685
    %v8899 = vpack.c.b16 %v8688, %v8687
    %v8900 = vpack.c.b16 %v8690, %v8689
    %v8901 = vpack.c.b16 %v8692, %v8691
    %v8902 = vpack.c.b16 %v8694, %v8693
    %v8903 = vpack.c.b16 %v8696, %v8695
    %v8904 = vpack.c.b16 %v8698, %v8697
    %v8905 = vpack.c.b16 %v8700, %v8699
    %v8906 = vpack.c.b16 %v8702, %v8701
    %v8907 = vpack.c.b16 %v8704, %v8703
    %v8908 = vpack.c.b16 %v8706, %v8705
    %v8909 = vpack.c.b16 %v8708, %v8707
    %v8910 = vpack.c.b16 %v8710, %v8709
    %v8911 = vpack.c.b16 %v8712, %v8711
    %v8912 = vpack.c.b16 %v8714, %v8713
    %v8913 = vpack.c.b16 %v8716, %v8715
    %v8914 = vpack.c.b16 %v8718, %v8717
    %v8915 = vpack.c.b16 %v8720, %v8719
    %v8916 = vpack.c.b16 %v8722, %v8721
    %v8917 = vpack.c.b16 %v8724, %v8723
    %v8918 = vpack.c.b16 %v8726, %v8725
    %v8919 = vpack.c.b16 %v8728, %v8727
    %v8920 = vpack.c.b16 %v8730, %v8729
    %v8921 = vpack.c.b16 %v8732, %v8731
    %v8922 = vpack.c.b16 %v8734, %v8733
    %v8923 = vpack.c.b16 %v8736, %v8735
    %v8924 = vpack.c.b16 %v8738, %v8737
    %v8925 = vpack.c.b16 %v8740, %v8739
    %v8926 = vpack.c.b16 %v8742, %v8741
    %v8927 = vpack.c.b16 %v8744, %v8743
    %v8928 = vpack.c.b16 %v8746, %v8745
    %v8929 = vpack.c.b16 %v8748, %v8747
    %v8930 = vpack.c.b16 %v8750, %v8749
    %v8931 = vpack.c.b16 %v8752, %v8751
    %v8932 = vpack.c.b16 %v8754, %v8753
    %v8933 = vpack.c.b16 %v8756, %v8755
    %v8934 = vpack.c.b16 %v8758, %v8757
    %v8935 = vpack.c.b16 %v8760, %v8759
    %v8936 = vpack.c.b16 %v8762, %v8761
    %v8937 = vpack.c.b16 %v8764, %v8763
    %v8938 = vpack.c.b16 %v8766, %v8765
    %v8939 = vpack.c.b16 %v8768, %v8767
    %v8940 = vpack.c.b16 %v8770, %v8769
    %v8941 = vpack.c.b16 %v8772, %v8771
    %v8942 = vpack.c.b16 %v8774, %v8773
    %v8943 = vpack.c.b16 %v8776, %v8775
    %v8944 = vpack.c.b16 %v8778, %v8777
    %v8945 = vpack.c.b16 %v8780, %v8779
    %v8946 = vpack.c.b16 %v8782, %v8781
    %v8947 = vpack.c.b16 %v8784, %v8783
    %v8948 = vpack.c.b16 %v8786, %v8785
    %v8949 = vpack.c.b16 %v8788, %v8787
    %v8950 = vpack.c.b16 %v8790, %v8789
    %v8951 = vpack.c.b16 %v8792, %v8791
    %v8952 = vpack.c.b16 %v8794, %v8793
    %v8953 = vpack.c.b16 %v8796, %v8795
    %v8954 = vpack.c.b16 %v8798, %v8797
    %v8955 = vpack.c.b16 %v8800, %v8799
    %v8956 = vpack.c.b16 %v8802, %v8801
    %v8957 = vpack.c.b16 %v8804, %v8803
    %v8958 = vpack.c.b16 %v8806, %v8805
    %v8959 = vpack.c.b16 %v8808, %v8807
    %v8960 = vpack.c.b16 %v8810, %v8809
    %v8961 = vpack.c.b16 %v8812, %v8811
    %v8962 = vpack.c.b16 %v8814, %v8813
    %v8963 = vpack.c.b16 %v8816, %v8815
    %v8964 = vpack.c.b16 %v8818, %v8817
    %v8965 = vpack.c.b16 %v8820, %v8819
    %v8966 = vpack.c.b16 %v8822, %v8821
    %v8967 = vpack.c.b16 %v8824, %v8823
    %v8968 = vpack.c.b16 %v8826, %v8825
    %v8969 = vpack.c.b16 %v8828, %v8827
    %v8970 = vpack.c.b16 %v8830, %v8829
    %v8971 = vpack.c.b16 %v8832, %v8831
    %v8972 = vpack.c.b16 %v8834, %v8833
    %v8973 = vpack.c.b16 %v8836, %v8835
    %v8974 = vpack.c.b16 %v8838, %v8837
    %v8975 = vpack.c.b16 %v8840, %v8839
    %v8976 = vpack.c.b16 %v8842, %v8841
    %v8977 = vpack.c.b16 %v8844, %v8843
    %v8978 = vpack.c.b16 %v8846, %v8845
    %v8979 = vpack.c.b16 %v8848, %v8847
    %v8980 = vpack.c.b16 %v8850, %v8849
    %v8981 = vpack.c.b16 %v8852, %v8851
    %v8982 = vpack.c.b16 %v8854, %v8853
    %9111 = vmatprep.subr.bf16.mxu0 0
    %9112 = vmatpush1.bf16.msra.mxu0 %v8862
    %9113 = vmatprep.subr.bf16.mxu0 0
    %9114 = vmatpush1.bf16.msra.mxu0 %v8861
    %9115 = vmatprep.subr.bf16.mxu0 0
    %9116 = vmatpush1.bf16.msra.mxu0 %v8860
    %9117 = vmatprep.subr.bf16.mxu0 0
    %9118 = vmatpush1.bf16.msra.mxu0 %v8859
    %9119 = vmatprep.subr.bf16.mxu0 0
    %9120 = vmatpush1.bf16.msra.mxu0 %v8858
    %9121 = vmatprep.subr.bf16.mxu0 0
    %9122 = vmatpush1.bf16.msra.mxu0 %v8857
    %9123 = vmatprep.subr.bf16.mxu0 0
    %9124 = vmatpush1.bf16.msra.mxu0 %v8856
    %9125 = vmatprep.subr.bf16.mxu0 0
    %9126 = vmatpush1.bf16.msra.mxu0 %v8855
    %9127 = vmatprep.subr.bf16.mxu0 0
    %9128 = vmatpush2.bf16.msra.mxu0 %v8870
    %9129 = vmatprep.subr.bf16.mxu0 0
    %9130 = vmatpush2.bf16.msra.mxu0 %v8869
    %9131 = vmatprep.subr.bf16.mxu0 0
    %9132 = vmatpush2.bf16.msra.mxu0 %v8868
    %9133 = vmatprep.subr.bf16.mxu0 0
    %9134 = vmatpush2.bf16.msra.mxu0 %v8867
    %9135 = vmatprep.subr.bf16.mxu0 0
    %9136 = vmatpush2.bf16.msra.mxu0 %v8866
    %9137 = vmatprep.subr.bf16.mxu0 0
    %9138 = vmatpush2.bf16.msra.mxu0 %v8865
    %9139 = vmatprep.subr.bf16.mxu0 0
    %9140 = vmatpush2.bf16.msra.mxu0 %v8864
    %9141 = vmatprep.subr.bf16.mxu0 0
    %9142 = vmatpush2.bf16.msra.mxu0 %v8863
    %9143 = vmatprep.mubr.bf16.mxu0 %v8065
    %9144 = vmatmul.mubr.bf16.gmra.mxu0 %v8064
    %v9145 = vpop.f32.mrf.mxu0
    %v9146 = vadd.f32 %v8341, %v9145
    %v9147 = vpop.f32.mrf.mxu0
    %v9148 = vpop.f32.mrf.mxu0
    %v9149 = vpop.f32.mrf.mxu0
    %9150 = vdwg.mxu0
    %9151 = vmatprep.subr.bf16.mxu0 0
    %9152 = vmatpush1.bf16.msra.mxu0 %v8878
    %9153 = vmatprep.subr.bf16.mxu0 0
    %9154 = vmatpush1.bf16.msra.mxu0 %v8877
    %9155 = vmatprep.subr.bf16.mxu0 0
    %9156 = vmatpush1.bf16.msra.mxu0 %v8876
    %9157 = vmatprep.subr.bf16.mxu0 0
    %9158 = vmatpush1.bf16.msra.mxu0 %v8875
    %9159 = vmatprep.subr.bf16.mxu0 0
    %9160 = vmatpush1.bf16.msra.mxu0 %v8874
    %9161 = vmatprep.subr.bf16.mxu0 0
    %9162 = vmatpush1.bf16.msra.mxu0 %v8873
    %9163 = vmatprep.subr.bf16.mxu0 0
    %9164 = vmatpush1.bf16.msra.mxu0 %v8872
    %9165 = vmatprep.subr.bf16.mxu0 0
    %9166 = vmatpush1.bf16.msra.mxu0 %v8871
    %9167 = vmatprep.subr.bf16.mxu0 0
    %9168 = vmatpush2.bf16.msra.mxu0 %v8886
    %9169 = vmatprep.subr.bf16.mxu0 0
    %9170 = vmatpush2.bf16.msra.mxu0 %v8885
    %9171 = vmatprep.subr.bf16.mxu0 0
    %9172 = vmatpush2.bf16.msra.mxu0 %v8884
    %9173 = vmatprep.subr.bf16.mxu0 0
    %9174 = vmatpush2.bf16.msra.mxu0 %v8883
    %9175 = vmatprep.subr.bf16.mxu0 0
    %9176 = vmatpush2.bf16.msra.mxu0 %v8882
    %9177 = vmatprep.subr.bf16.mxu0 0
    %9178 = vmatpush2.bf16.msra.mxu0 %v8881
    %9179 = vmatprep.subr.bf16.mxu0 0
    %9180 = vmatpush2.bf16.msra.mxu0 %v8880
    %9181 = vmatprep.subr.bf16.mxu0 0
    %9182 = vmatpush2.bf16.msra.mxu0 %v8879
    %9183 = vmatprep.mubr.bf16.mxu0 %v8067
    %9184 = vmatmul.mubr.bf16.gmra.mxu0 %v8066
    %v9185 = vpop.f32.mrf.mxu0
    %v9186 = vadd.f32 %v9146, %v9185
    %v9187 = vpop.f32.mrf.mxu0
    %v9188 = vpop.f32.mrf.mxu0
    %v9189 = vpop.f32.mrf.mxu0
    %9190 = vdwg.mxu0
    %9191 = vmatprep.subr.bf16.mxu0 0
    %9192 = vmatpush1.bf16.msra.mxu0 %v8894
    %9193 = vmatprep.subr.bf16.mxu0 0
    %9194 = vmatpush1.bf16.msra.mxu0 %v8893
    %9195 = vmatprep.subr.bf16.mxu0 0
    %9196 = vmatpush1.bf16.msra.mxu0 %v8892
    %9197 = vmatprep.subr.bf16.mxu0 0
    %9198 = vmatpush1.bf16.msra.mxu0 %v8891
    %9199 = vmatprep.subr.bf16.mxu0 0
    %9200 = vmatpush1.bf16.msra.mxu0 %v8890
    %9201 = vmatprep.subr.bf16.mxu0 0
    %9202 = vmatpush1.bf16.msra.mxu0 %v8889
    %9203 = vmatprep.subr.bf16.mxu0 0
    %9204 = vmatpush1.bf16.msra.mxu0 %v8888
    %9205 = vmatprep.subr.bf16.mxu0 0
    %9206 = vmatpush1.bf16.msra.mxu0 %v8887
    %9207 = vmatprep.subr.bf16.mxu0 0
    %9208 = vmatpush2.bf16.msra.mxu0 %v8902
    %9209 = vmatprep.subr.bf16.mxu0 0
    %9210 = vmatpush2.bf16.msra.mxu0 %v8901
    %9211 = vmatprep.subr.bf16.mxu0 0
    %9212 = vmatpush2.bf16.msra.mxu0 %v8900
    %9213 = vmatprep.subr.bf16.mxu0 0
    %9214 = vmatpush2.bf16.msra.mxu0 %v8899
    %9215 = vmatprep.subr.bf16.mxu0 0
    %9216 = vmatpush2.bf16.msra.mxu0 %v8898
    %9217 = vmatprep.subr.bf16.mxu0 0
    %9218 = vmatpush2.bf16.msra.mxu0 %v8897
    %9219 = vmatprep.subr.bf16.mxu0 0
    %9220 = vmatpush2.bf16.msra.mxu0 %v8896
    %9221 = vmatprep.subr.bf16.mxu0 0
    %9222 = vmatpush2.bf16.msra.mxu0 %v8895
    %9223 = vmatprep.mubr.bf16.mxu0 %v8069
    %9224 = vmatmul.mubr.bf16.gmra.mxu0 %v8068
    %v9225 = vpop.f32.mrf.mxu0
    %v9226 = vadd.f32 %v9186, %v9225
    %v9227 = vpop.f32.mrf.mxu0
    %v9228 = vpop.f32.mrf.mxu0
    %v9229 = vpop.f32.mrf.mxu0
    %9230 = vdwg.mxu0
    %9231 = vmatprep.subr.bf16.mxu0 0
    %9232 = vmatpush1.bf16.msra.mxu0 %v8910
    %9233 = vmatprep.subr.bf16.mxu0 0
    %9234 = vmatpush1.bf16.msra.mxu0 %v8909
    %9235 = vmatprep.subr.bf16.mxu0 0
    %9236 = vmatpush1.bf16.msra.mxu0 %v8908
    %9237 = vmatprep.subr.bf16.mxu0 0
    %9238 = vmatpush1.bf16.msra.mxu0 %v8907
    %9239 = vmatprep.subr.bf16.mxu0 0
    %9240 = vmatpush1.bf16.msra.mxu0 %v8906
    %9241 = vmatprep.subr.bf16.mxu0 0
    %9242 = vmatpush1.bf16.msra.mxu0 %v8905
    %9243 = vmatprep.subr.bf16.mxu0 0
    %9244 = vmatpush1.bf16.msra.mxu0 %v8904
    %9245 = vmatprep.subr.bf16.mxu0 0
    %9246 = vmatpush1.bf16.msra.mxu0 %v8903
    %9247 = vmatprep.subr.bf16.mxu0 0
    %9248 = vmatpush2.bf16.msra.mxu0 %v8918
    %9249 = vmatprep.subr.bf16.mxu0 0
    %9250 = vmatpush2.bf16.msra.mxu0 %v8917
    %9251 = vmatprep.subr.bf16.mxu0 0
    %9252 = vmatpush2.bf16.msra.mxu0 %v8916
    %9253 = vmatprep.subr.bf16.mxu0 0
    %9254 = vmatpush2.bf16.msra.mxu0 %v8915
    %9255 = vmatprep.subr.bf16.mxu0 0
    %9256 = vmatpush2.bf16.msra.mxu0 %v8914
    %9257 = vmatprep.subr.bf16.mxu0 0
    %9258 = vmatpush2.bf16.msra.mxu0 %v8913
    %9259 = vmatprep.subr.bf16.mxu0 0
    %9260 = vmatpush2.bf16.msra.mxu0 %v8912
    %9261 = vmatprep.subr.bf16.mxu0 0
    %9262 = vmatpush2.bf16.msra.mxu0 %v8911
    %9263 = vmatprep.mubr.bf16.mxu0 %v8071
    %9264 = vmatmul.mubr.bf16.gmra.mxu0 %v8070
    %v9265 = vpop.f32.mrf.mxu0
    %v9266 = vadd.f32 %v9226, %v9265
    %v9267 = vpop.f32.mrf.mxu0
    %v9268 = vpop.f32.mrf.mxu0
    %v9269 = vpop.f32.mrf.mxu0
    %9270 = vdwg.mxu0
    %9271 = vmatprep.subr.bf16.mxu0 0
    %9272 = vmatpush1.bf16.msra.mxu0 %v8926
    %9273 = vmatprep.subr.bf16.mxu0 0
    %9274 = vmatpush1.bf16.msra.mxu0 %v8925
    %9275 = vmatprep.subr.bf16.mxu0 0
    %9276 = vmatpush1.bf16.msra.mxu0 %v8924
    %9277 = vmatprep.subr.bf16.mxu0 0
    %9278 = vmatpush1.bf16.msra.mxu0 %v8923
    %9279 = vmatprep.subr.bf16.mxu0 0
    %9280 = vmatpush1.bf16.msra.mxu0 %v8922
    %9281 = vmatprep.subr.bf16.mxu0 0
    %9282 = vmatpush1.bf16.msra.mxu0 %v8921
    %9283 = vmatprep.subr.bf16.mxu0 0
    %9284 = vmatpush1.bf16.msra.mxu0 %v8920
    %9285 = vmatprep.subr.bf16.mxu0 0
    %9286 = vmatpush1.bf16.msra.mxu0 %v8919
    %9287 = vmatprep.subr.bf16.mxu0 0
    %9288 = vmatpush2.bf16.msra.mxu0 %v8934
    %9289 = vmatprep.subr.bf16.mxu0 0
    %9290 = vmatpush2.bf16.msra.mxu0 %v8933
    %9291 = vmatprep.subr.bf16.mxu0 0
    %9292 = vmatpush2.bf16.msra.mxu0 %v8932
    %9293 = vmatprep.subr.bf16.mxu0 0
    %9294 = vmatpush2.bf16.msra.mxu0 %v8931
    %9295 = vmatprep.subr.bf16.mxu0 0
    %9296 = vmatpush2.bf16.msra.mxu0 %v8930
    %9297 = vmatprep.subr.bf16.mxu0 0
    %9298 = vmatpush2.bf16.msra.mxu0 %v8929
    %9299 = vmatprep.subr.bf16.mxu0 0
    %9300 = vmatpush2.bf16.msra.mxu0 %v8928
    %9301 = vmatprep.subr.bf16.mxu0 0
    %9302 = vmatpush2.bf16.msra.mxu0 %v8927
    %9303 = vmatprep.mubr.bf16.mxu0 %v8073
    %9304 = vmatmul.mubr.bf16.gmra.mxu0 %v8072
    %v9305 = vpop.f32.mrf.mxu0
    %v9306 = vadd.f32 %v9266, %v9305
    %v9307 = vpop.f32.mrf.mxu0
    %v9308 = vpop.f32.mrf.mxu0
    %v9309 = vpop.f32.mrf.mxu0
    %9310 = vdwg.mxu0
    %9311 = vmatprep.subr.bf16.mxu0 0
    %9312 = vmatpush1.bf16.msra.mxu0 %v8942
    %9313 = vmatprep.subr.bf16.mxu0 0
    %9314 = vmatpush1.bf16.msra.mxu0 %v8941
    %9315 = vmatprep.subr.bf16.mxu0 0
    %9316 = vmatpush1.bf16.msra.mxu0 %v8940
    %9317 = vmatprep.subr.bf16.mxu0 0
    %9318 = vmatpush1.bf16.msra.mxu0 %v8939
    %9319 = vmatprep.subr.bf16.mxu0 0
    %9320 = vmatpush1.bf16.msra.mxu0 %v8938
    %9321 = vmatprep.subr.bf16.mxu0 0
    %9322 = vmatpush1.bf16.msra.mxu0 %v8937
    %9323 = vmatprep.subr.bf16.mxu0 0
    %9324 = vmatpush1.bf16.msra.mxu0 %v8936
    %9325 = vmatprep.subr.bf16.mxu0 0
    %9326 = vmatpush1.bf16.msra.mxu0 %v8935
    %9327 = vmatprep.subr.bf16.mxu0 0
    %9328 = vmatpush2.bf16.msra.mxu0 %v8950
    %9329 = vmatprep.subr.bf16.mxu0 0
    %9330 = vmatpush2.bf16.msra.mxu0 %v8949
    %9331 = vmatprep.subr.bf16.mxu0 0
    %9332 = vmatpush2.bf16.msra.mxu0 %v8948
    %9333 = vmatprep.subr.bf16.mxu0 0
    %9334 = vmatpush2.bf16.msra.mxu0 %v8947
    %9335 = vmatprep.subr.bf16.mxu0 0
    %9336 = vmatpush2.bf16.msra.mxu0 %v8946
    %9337 = vmatprep.subr.bf16.mxu0 0
    %9338 = vmatpush2.bf16.msra.mxu0 %v8945
    %9339 = vmatprep.subr.bf16.mxu0 0
    %9340 = vmatpush2.bf16.msra.mxu0 %v8944
    %9341 = vmatprep.subr.bf16.mxu0 0
    %9342 = vmatpush2.bf16.msra.mxu0 %v8943
    %9343 = vmatprep.mubr.bf16.mxu0 %v8075
    %9344 = vmatmul.mubr.bf16.gmra.mxu0 %v8074
    %v9345 = vpop.f32.mrf.mxu0
    %v9346 = vadd.f32 %v9306, %v9345
    %v9347 = vpop.f32.mrf.mxu0
    %v9348 = vpop.f32.mrf.mxu0
    %v9349 = vpop.f32.mrf.mxu0
    %9350 = vdwg.mxu0
    %9351 = vmatprep.subr.bf16.mxu0 0
    %9352 = vmatpush1.bf16.msra.mxu0 %v8958
    %9353 = vmatprep.subr.bf16.mxu0 0
    %9354 = vmatpush1.bf16.msra.mxu0 %v8957
    %9355 = vmatprep.subr.bf16.mxu0 0
    %9356 = vmatpush1.bf16.msra.mxu0 %v8956
    %9357 = vmatprep.subr.bf16.mxu0 0
    %9358 = vmatpush1.bf16.msra.mxu0 %v8955
    %9359 = vmatprep.subr.bf16.mxu0 0
    %9360 = vmatpush1.bf16.msra.mxu0 %v8954
    %9361 = vmatprep.subr.bf16.mxu0 0
    %9362 = vmatpush1.bf16.msra.mxu0 %v8953
    %9363 = vmatprep.subr.bf16.mxu0 0
    %9364 = vmatpush1.bf16.msra.mxu0 %v8952
    %9365 = vmatprep.subr.bf16.mxu0 0
    %9366 = vmatpush1.bf16.msra.mxu0 %v8951
    %9367 = vmatprep.subr.bf16.mxu0 0
    %9368 = vmatpush2.bf16.msra.mxu0 %v8966
    %9369 = vmatprep.subr.bf16.mxu0 0
    %9370 = vmatpush2.bf16.msra.mxu0 %v8965
    %9371 = vmatprep.subr.bf16.mxu0 0
    %9372 = vmatpush2.bf16.msra.mxu0 %v8964
    %9373 = vmatprep.subr.bf16.mxu0 0
    %9374 = vmatpush2.bf16.msra.mxu0 %v8963
    %9375 = vmatprep.subr.bf16.mxu0 0
    %9376 = vmatpush2.bf16.msra.mxu0 %v8962
    %9377 = vmatprep.subr.bf16.mxu0 0
    %9378 = vmatpush2.bf16.msra.mxu0 %v8961
    %9379 = vmatprep.subr.bf16.mxu0 0
    %9380 = vmatpush2.bf16.msra.mxu0 %v8960
    %9381 = vmatprep.subr.bf16.mxu0 0
    %9382 = vmatpush2.bf16.msra.mxu0 %v8959
    %9383 = vmatprep.mubr.bf16.mxu0 %v8077
    %9384 = vmatmul.mubr.bf16.gmra.mxu0 %v8076
    %v9385 = vpop.f32.mrf.mxu0
    %v9386 = vadd.f32 %v9346, %v9385
    %v9387 = vpop.f32.mrf.mxu0
    %v9388 = vpop.f32.mrf.mxu0
    %v9389 = vpop.f32.mrf.mxu0
    %9390 = vdwg.mxu0
    %9391 = vmatprep.subr.bf16.mxu0 0
    %9392 = vmatpush1.bf16.msra.mxu0 %v8974
    %9393 = vmatprep.subr.bf16.mxu0 0
    %9394 = vmatpush1.bf16.msra.mxu0 %v8973
    %9395 = vmatprep.subr.bf16.mxu0 0
    %9396 = vmatpush1.bf16.msra.mxu0 %v8972
    %9397 = vmatprep.subr.bf16.mxu0 0
    %9398 = vmatpush1.bf16.msra.mxu0 %v8971
    %9399 = vmatprep.subr.bf16.mxu0 0
    %9400 = vmatpush1.bf16.msra.mxu0 %v8970
    %9401 = vmatprep.subr.bf16.mxu0 0
    %9402 = vmatpush1.bf16.msra.mxu0 %v8969
    %9403 = vmatprep.subr.bf16.mxu0 0
    %9404 = vmatpush1.bf16.msra.mxu0 %v8968
    %9405 = vmatprep.subr.bf16.mxu0 0
    %9406 = vmatpush1.bf16.msra.mxu0 %v8967
    %9407 = vmatprep.subr.bf16.mxu0 0
    %9408 = vmatpush2.bf16.msra.mxu0 %v8982
    %9409 = vmatprep.subr.bf16.mxu0 0
    %9410 = vmatpush2.bf16.msra.mxu0 %v8981
    %9411 = vmatprep.subr.bf16.mxu0 0
    %9412 = vmatpush2.bf16.msra.mxu0 %v8980
    %9413 = vmatprep.subr.bf16.mxu0 0
    %9414 = vmatpush2.bf16.msra.mxu0 %v8979
    %9415 = vmatprep.subr.bf16.mxu0 0
    %9416 = vmatpush2.bf16.msra.mxu0 %v8978
    %9417 = vmatprep.subr.bf16.mxu0 0
    %9418 = vmatpush2.bf16.msra.mxu0 %v8977
    %9419 = vmatprep.subr.bf16.mxu0 0
    %9420 = vmatpush2.bf16.msra.mxu0 %v8976
    %9421 = vmatprep.subr.bf16.mxu0 0
    %9422 = vmatpush2.bf16.msra.mxu0 %v8975
    %9423 = vmatprep.mubr.bf16.mxu0 %v8079
    %9424 = vmatmul.mubr.bf16.gmra.mxu0 %v8078
    %v9425 = vpop.f32.mrf.mxu0
    %v9426 = vadd.f32 %v9386, %v9425
    %v9427 = vpop.f32.mrf.mxu0
    %v9428 = vpop.f32.mrf.mxu0
    %v9429 = vpop.f32.mrf.mxu0
    %9430 = vdwg.mxu0
    %v9432 = vrot.slane %v9426, 1
    %v9433 = vrot.slane %v9426, 2
    %v9436 = vadd.f32 %v6855, %v9432
    %v9437 = vadd.f32 %v6856, %v9433
    %v9438 = vld [vmem:[%s63] sm:$0x1]
    %v9439 = vld [vmem:[%s65] sm:$0x1]
    %v9442 = vrot.slane %v9437, 7
    %v9445 = vsel %vm6798, %v9436, 0.0
    %9446 = vadd.xlane.f32.xlu0 %v9445
    %v9447 = vpop.xlane.xlu0 %9446
    %v9448 = vsel %vm6802, %v9442, 0.0
    %9449 = vadd.xlane.f32.xlu0 %v9448
    %v9450 = vpop.xlane.xlu0 %9449
    %v9451 = vmul.f32 %v9447, %v2261
    %v9452 = vmul.f32 %v9450, %v2261
    %v9455 = vrot.slane %v9452, 1
    %v9458 = vsub.f32 %v9436, %v9451
    %v9459 = vsub.f32 %v9437, %v9455
    %v9460 = vmul.f32 %v9458, %v9458
    %v9461 = vmul.f32 %v9459, %v9459
    %v9464 = vrot.slane %v9461, 7
    %v9467 = vsel %vm6798, %v9460, 0.0
    %9468 = vadd.xlane.f32.xlu0 %v9467
    %v9469 = vpop.xlane.xlu0 %9468
    %v9470 = vsel %vm6802, %v9464, 0.0
    %9471 = vadd.xlane.f32.xlu0 %v9470
    %v9472 = vpop.xlane.xlu0 %9471
    %v9473 = vmul.f32 %v9469, %v2261
    %v9474 = vmul.f32 %v9472, %v2261
    %v9475 = vadd.f32 %v9473, 1e-05
    %v9476 = vadd.f32 %v9474, 1e-05
    %v9477 = vrsqrt.pop %v9475
    %v9478 = vrsqrt.pop %v9476
    %v9481 = vrot.slane %v9478, 1
    %v9484 = vmul.f32 %v9458, %v9477
    %v9485 = vmul.f32 %v9459, %v9481
    %v9487 = vlaneseq
    %v9488 = vshrl.u32 %v9487, 7
    %v9489 = vsub.s32 0, %v9488
    %v9490 = vrot.slane %v9438, %v9489
    %v9492 = vmul.f32 %v9484, %v9490
    %v9493 = vmul.f32 %v9485, %v9490
    %v9495 = vlaneseq
    %v9496 = vshrl.u32 %v9495, 7
    %v9497 = vsub.s32 0, %v9496
    %v9498 = vrot.slane %v9439, %v9497
    %v9500 = vadd.f32 %v9492, %v9498
    %v9501 = vadd.f32 %v9493, %v9498
    %v9502 = vpack.c.bf16 %v9500, %v9500
    %v9503 = vpack.c.bf16 %v9501, %v9501
    %v9504 = vld [vmem:[#allocation38] sm:$0xff]
    %v9505 = vld [vmem:[#allocation38 + $0x8] sm:$0xff]
    %v9506 = vld [vmem:[#allocation38 + $0x10] sm:$0xff]
    %v9507 = vld [vmem:[#allocation38 + $0x18] sm:$0xff]
    %v9508 = vld [vmem:[#allocation38 + $0x20] sm:$0xff]
    %v9509 = vld [vmem:[#allocation38 + $0x28] sm:$0xff]
    %v9510 = vld [vmem:[#allocation38 + $0x30] sm:$0xff]
    %v9511 = vld [vmem:[#allocation38 + $0x38] sm:$0xff]
    %v9512 = vld [vmem:[#allocation38 + $0x40] sm:$0xff]
    %v9513 = vld [vmem:[#allocation38 + $0x48] sm:$0xff]
    %v9514 = vld [vmem:[#allocation38 + $0x50] sm:$0xff]
    %v9515 = vld [vmem:[#allocation38 + $0x58] sm:$0xff]
    %v9516 = vld [vmem:[#allocation38 + $0x60] sm:$0xff]
    %v9517 = vld [vmem:[#allocation38 + $0x68] sm:$0xff]
    %v9518 = vld [vmem:[#allocation38 + $0x70] sm:$0xff]
    %v9519 = vld [vmem:[#allocation38 + $0x78] sm:$0xff]
    %v9520 = vld [vmem:[%s69] sm:$0x3]
    %v9522 = vlaneseq
    %v9523 = vshrl.u32 %v9522, 7
    %v9524 = vsub.s32 0, %v9523
    %v9525 = vrot.slane %v9520, %v9524
    %v9526 = vlaneseq
    %v9527 = vshrl.u32 %v9526, 7
    %v9528 = vsub.s32 1, %v9527
    %v9529 = vrot.slane %v9520, %v9528
    %v9534 = vunpack.c.l.b16 %v9502
    %v9535 = vunpack.c.l.b16 %v9503
    %v9536 = vrot.slane %v9534, 7
    %v9537 = vrot.slane %v9535, 6
    %v9538 = vsel %vm5198, %v9537, %v9536
    %v9539 = vpack.c.b16 %v9538, %v9538
    %v9557 = vunpack.c.l.b16 %v9504
    %v9558 = vunpack.c.h.b16 %v9504
    %v9559 = vunpack.c.l.b16 %v9505
    %v9560 = vunpack.c.h.b16 %v9505
    %v9561 = vunpack.c.l.b16 %v9506
    %v9562 = vunpack.c.h.b16 %v9506
    %v9563 = vunpack.c.l.b16 %v9507
    %v9564 = vunpack.c.h.b16 %v9507
    %v9565 = vunpack.c.l.b16 %v9508
    %v9566 = vunpack.c.h.b16 %v9508
    %v9567 = vunpack.c.l.b16 %v9509
    %v9568 = vunpack.c.h.b16 %v9509
    %v9569 = vunpack.c.l.b16 %v9510
    %v9570 = vunpack.c.h.b16 %v9510
    %v9571 = vunpack.c.l.b16 %v9511
    %v9572 = vunpack.c.h.b16 %v9511
    %v9573 = vunpack.c.l.b16 %v9512
    %v9574 = vunpack.c.h.b16 %v9512
    %v9575 = vunpack.c.l.b16 %v9513
    %v9576 = vunpack.c.h.b16 %v9513
    %v9577 = vunpack.c.l.b16 %v9514
    %v9578 = vunpack.c.h.b16 %v9514
    %v9579 = vunpack.c.l.b16 %v9515
    %v9580 = vunpack.c.h.b16 %v9515
    %v9581 = vunpack.c.l.b16 %v9516
    %v9582 = vunpack.c.h.b16 %v9516
    %v9583 = vunpack.c.l.b16 %v9517
    %v9584 = vunpack.c.h.b16 %v9517
    %v9585 = vunpack.c.l.b16 %v9518
    %v9586 = vunpack.c.h.b16 %v9518
    %v9587 = vunpack.c.l.b16 %v9519
    %v9588 = vunpack.c.h.b16 %v9519
    %v9589 = vpack.c.b16 %v9559, %v9557
    %v9590 = vpack.c.b16 %v9560, %v9558
    %v9591 = vpack.c.b16 %v9563, %v9561
    %v9592 = vpack.c.b16 %v9564, %v9562
    %v9593 = vpack.c.b16 %v9567, %v9565
    %v9594 = vpack.c.b16 %v9568, %v9566
    %v9595 = vpack.c.b16 %v9571, %v9569
    %v9596 = vpack.c.b16 %v9572, %v9570
    %v9597 = vpack.c.b16 %v9575, %v9573
    %v9598 = vpack.c.b16 %v9576, %v9574
    %v9599 = vpack.c.b16 %v9579, %v9577
    %v9600 = vpack.c.b16 %v9580, %v9578
    %v9601 = vpack.c.b16 %v9583, %v9581
    %v9602 = vpack.c.b16 %v9584, %v9582
    %v9603 = vpack.c.b16 %v9587, %v9585
    %v9604 = vpack.c.b16 %v9588, %v9586
    %9621 = vmatprep.subr.bf16.mxu0 %v9604
    %9622 = vmatpush1.bf16.msra.mxu0 %v9603
    %9623 = vmatprep.subr.bf16.mxu0 %v9602
    %9624 = vmatpush1.bf16.msra.mxu0 %v9601
    %9625 = vmatprep.subr.bf16.mxu0 %v9600
    %9626 = vmatpush1.bf16.msra.mxu0 %v9599
    %9627 = vmatprep.subr.bf16.mxu0 %v9598
    %9628 = vmatpush1.bf16.msra.mxu0 %v9597
    %9629 = vmatprep.subr.bf16.mxu0 %v9596
    %9630 = vmatpush1.bf16.msra.mxu0 %v9595
    %9631 = vmatprep.subr.bf16.mxu0 %v9594
    %9632 = vmatpush1.bf16.msra.mxu0 %v9593
    %9633 = vmatprep.subr.bf16.mxu0 %v9592
    %9634 = vmatpush1.bf16.msra.mxu0 %v9591
    %9635 = vmatprep.subr.bf16.mxu0 %v9590
    %9636 = vmatpush1.bf16.msra.mxu0 %v9589
    %9637 = vmatprep.subr.bf16.mxu0 0
    %9638 = vmatpush2.bf16.msra.mxu0 0
    %9639 = vmatprep.subr.bf16.mxu0 0
    %9640 = vmatpush2.bf16.msra.mxu0 0
    %9641 = vmatprep.subr.bf16.mxu0 0
    %9642 = vmatpush2.bf16.msra.mxu0 0
    %9643 = vmatprep.subr.bf16.mxu0 0
    %9644 = vmatpush2.bf16.msra.mxu0 0
    %9645 = vmatprep.subr.bf16.mxu0 0
    %9646 = vmatpush2.bf16.msra.mxu0 0
    %9647 = vmatprep.subr.bf16.mxu0 0
    %9648 = vmatpush2.bf16.msra.mxu0 0
    %9649 = vmatprep.subr.bf16.mxu0 0
    %9650 = vmatpush2.bf16.msra.mxu0 0
    %9651 = vmatprep.subr.bf16.mxu0 0
    %9652 = vmatpush2.bf16.msra.mxu0 0
    %9653 = vmatprep.mubr.bf16.mxu0 0
    %9654 = vmatmul.mubr.bf16.gmra.mxu0 %v9539
    %v9655 = vpop.f32.mrf.mxu0
    %v9656 = vadd.f32 %v9525, %v9655
    %v9657 = vpop.f32.mrf.mxu0
    %v9658 = vadd.f32 %v9529, %v9657
    %v9659 = vpop.f32.mrf.mxu0
    %v9660 = vpop.f32.mrf.mxu0
    %9661 = vdwg.mxu0
    %v9664 = vcombine.low %v9656, %v9658
    %v9666 = vunpack.c.l.s4 1983009808
    %v9667 = vunpack.c.0.s8 %v9666
    %v9668 = vlaneseq
    %v9669 = vshrl.u32 %v9668, 7
    %v9670 = vsub.s32 %v9667, %v9669
    %v9671 = vrot.slane %v9664, %v9670
    %9673 = vst [vmem:[#allocation40] sm:$0xf] %v9671
    // Predicated region
    $region238: #{tpu_custom_call.1} parent=1 // pred_check
      _
    $region239: #{tpu_custom_call.1} parent=1 // pred_check_branch
      %9675 = sbr.rel (0) target = $region241
    $region240: #{tpu_custom_call.1} parent=1 // pred_region
      %s9677 = ssub.s32 64, 64
      %9678 = vsyncadd [#allocation4], %s9677
      %s9680 = sshll.u32 [#allocation40], 4
      %s9681 = int_to_ptr.vmem [resolvable:$true] %s9680
      %9683 = dma.vmem_to_hbm [thread:$0]  %s9681, 64, %s71, [#allocation4]
    $region241: #{tpu_custom_call.1} parent=1 // pred_fallthru
      _
    // Predicated region
    $region242: #{tpu_custom_call.1} parent=1 // pred_check
      _
    $region243: #{tpu_custom_call.1} parent=1 // pred_check_branch
      %9685 = sbr.rel (0) target = $region245
    $region244: #{tpu_custom_call.1} parent=1 // pred_region
      %9686 = dma.done [#allocation4], 64
    $region245: #{tpu_custom_call.1} parent=1 // pred_fallthru
      _
    %9687 = vsyncpa [#allocation3], 1
    %9688 = vsyncpa [#allocation6], 1
    %9689 = vsyncpa [#allocation9], 1
    %9690 = vsyncpa [#allocation12], 1
    %9691 = vsyncpa [#allocation15], 1
    %9692 = vsyncpa [#allocation18], 1
    %9693 = vsyncpa [#allocation21], 1
    %9694 = vsyncpa [#allocation24], 1
    %9695 = vsyncpa [#allocation27], 1
    %9696 = vsyncpa [#allocation30], 1
    %9697 = vsyncpa [#allocation33], 1
    %9698 = vsyncpa [#allocation36], 1
    %9699 = vsyncpa [#allocation39], 1
    %9700 = vsyncpa [#allocation4], 1

</llo_original>
